<compile_context>
chip_gen: v7x
topology: tpu7x:2x2x1
jax: 0.10.0
libtpu: 0.0.40
codegen_flags: <defaults>
</compile_context>

<pallas_src>
import jax
import jax.numpy as jnp
import numpy as np
from jax.experimental import pallas as pl
from jax.experimental.pallas import tpu as pltpu

# Model hyper-parameters (PyTorch module defaults).
INPUT_DIM = 26
HIDDEN = 64                 # H  (per-direction hidden size)
NUM_LAYERS = 3
H2 = 2 * HIDDEN             # 128 (bidirectional feature / fused-hidden width)
G = 4 * HIDDEN              # 256 (per-direction gate width)
G2 = 2 * G                  # 512 (4 gate slabs of 128 lanes: [i_f|i_b][f_f|f_b][o_f|o_b][g_f|g_b])
FC1 = 128


def _sigmoid(v):
    # Exact sigmoid via tanh: one EUP push per element (vs exp + reciprocal).
    return 0.5 * jnp.tanh(0.5 * v) + 0.5


def bilstm_classifier_kernel(x_ref, wih_ref, whh_ref, b_ref,
                             watt_ref, batt_ref, w1_ref, b1_ref, w2_ref, b2_ref,
                             out_ref, buf_a, buf_b, gx_ref):
    T, B, _ = x_ref.shape
    H = HIDDEN

    # Lane mask selecting the backward-direction half (lanes 64..127) of each
    # 128-lane gate slab.  Hoisted once (JAX does not CSE broadcast_in_dim).
    lane = jax.lax.broadcasted_iota(jnp.int32, (B, G2), 1)
    bwd_lane = (lane % H2) >= H                                   # (B, 512) bool

    # Layer l reads srcs[l] and writes dsts[l] (ping-pong; no concat / extra copy).
    srcs = (x_ref, buf_a, buf_b)
    dsts = (buf_a, buf_b, buf_a)

    for l in range(NUM_LAYERS):                       # static unroll: 3 layers
        src, dst = srcs[l], dsts[l]

        # ---- Hoisted input-to-hidden projection for BOTH directions, bias fused:
        #      one well-shaped (T*B, 128) x (128, 512) MXU matmul per layer.
        flat = src[...].reshape(T * B, H2)
        proj = (jnp.dot(flat, wih_ref[l], preferred_element_type=jnp.float32)
                + b_ref[l]).reshape(T, B, G2)
        # Store with backward-direction lanes time-reversed so the per-step add
        # inside the recurrence is a single contiguous (B, 512) add.
        for t in range(T):
            gx_ref[t] = jnp.where(bwd_lane, proj[T - 1 - t], proj[t])

        # Block-diagonal recurrent weight (fwd | bwd), hoisted over the time loop.
        whh_l = whh_ref[l]                                        # (128, 512)

        # ---- Fused fwd+bwd recurrence: ONE (B,128)x(128,512) MXU matmul per step;
        #      all gate / cell / hidden slices are 128-lane aligned.
        h = jnp.zeros((B, H2), jnp.float32)                       # [h_f | h_b]
        c = jnp.zeros((B, H2), jnp.float32)                       # [c_f | c_b]
        for t in range(T):                                        # static unroll (T small)
            gates = (jnp.dot(h, whh_l, preferred_element_type=jnp.float32)
                     + gx_ref[t])                                 # (B, 512)
            s = _sigmoid(gates[:, 0:3 * H2])                      # i,f,o : one 384-lane op
            g = jnp.tanh(gates[:, 3 * H2:])                       # g     : 128 lanes
            c = s[:, H2:2 * H2] * c + s[:, 0:H2] * g
            h = s[:, 2 * H2:3 * H2] * jnp.tanh(c)
            # Write halves of the lane-dense (T, B, 2H) next-layer input
            # (lane offsets match -> plain masked stores, no lane rotation).
            dst[t, :, 0:H] = h[:, 0:H]                            # fwd output @ t
            dst[T - 1 - t, :, H:H2] = h[:, H:H2]                  # bwd output @ T-1-t

    lstm_out = buf_a[...]                             # (T, B, 2H) after 3 layers

    # ---- Attention: scores on the MXU, softmax over time, weighted pooling.
    #      (N=1 matmuls are off the serial critical path; left lane-sparse on purpose.)
    flat = lstm_out.reshape(T * B, H2)
    scores = (jnp.dot(flat, watt_ref[...], preferred_element_type=jnp.float32)
              + batt_ref[...]).reshape(T, B, 1)
    m = jnp.max(scores, axis=0, keepdims=True)
    e = jnp.exp(scores - m)
    att = e / jnp.sum(e, axis=0, keepdims=True)       # (T, B, 1)
    pooled = jnp.sum(att * lstm_out, axis=0)          # (B, 2H)

    # ---- fc1 + relu, fc2 + sigmoid.
    h1 = jnp.maximum(
        jnp.dot(pooled, w1_ref[...], preferred_element_type=jnp.float32) + b1_ref[...],
        0.0)                                          # (B, 128)
    logit = jnp.dot(h1, w2_ref[...], preferred_element_type=jnp.float32) + b2_ref[...]
    out_ref[...] = _sigmoid(logit)                    # (B, 1)


def protein_bilstm_forward(x, packed, batch_tile=128):
    """x: (B, T, INPUT_DIM) float32 (PyTorch batch-first). Returns (B, 1)."""
    B, T, D = x.shape
    bt_cap = ((batch_tile + 7) // 8) * 8
    BT = min(((B + 7) // 8) * 8, bt_cap)              # sublane-aligned batch tile
    n_tiles = pl.cdiv(B, BT)
    B_pad = n_tiles * BT
    x_tm = jnp.transpose(x, (1, 0, 2))                # (T, B, D)
    x_tm = jnp.pad(x_tm, ((0, 0), (0, B_pad - B), (0, H2 - D)))
    wspec = pl.BlockSpec(memory_space=pltpu.MemorySpace.VMEM)
    out = pl.pallas_call(
        bilstm_classifier_kernel,
        out_shape=jax.ShapeDtypeStruct((B_pad, 1), jnp.float32),
        grid=(n_tiles,),
        in_specs=[pl.BlockSpec((T, BT, H2), lambda i: (0, i, 0))] + [wspec] * 9,
        out_specs=pl.BlockSpec((BT, 1), lambda i: (i, 0)),
        scratch_shapes=[
            pltpu.VMEM((T, BT, H2), jnp.float32),     # layer output (ping)
            pltpu.VMEM((T, BT, H2), jnp.float32),     # layer output (pong)
            pltpu.VMEM((T, BT, G2), jnp.float32),     # hoisted input-gate projection
        ],
        compiler_params=pltpu.CompilerParams(
            dimension_semantics=("parallel",)),       # batch tiles split across TCs on v7x
    )(x_tm, *packed)
    return out[:B]


# ----------------------- deterministic parameter setup -----------------------

def init_params(key):
    bound = 1.0 / np.sqrt(HIDDEN)
    keys = iter(jax.random.split(key, 64))

    def u(shape):
        return jax.random.uniform(next(keys), shape, jnp.float32, -bound, bound)

    params = {}
    for l in range(NUM_LAYERS):
        in_dim = INPUT_DIM if l == 0 else H2
        for d in range(2):
            params[f'wih_{l}_{d}'] = u((G, in_dim))   # PyTorch layout (4H, in)
            params[f'whh_{l}_{d}'] = u((G, HIDDEN))
            params[f'bih_{l}_{d}'] = u((G,))
            params[f'bhh_{l}_{d}'] = u((G,))
    params['watt'] = u((1, H2))     # nn.Linear(2H, 1) weight
    params['batt'] = u((1,))
    params['w1'] = u((FC1, H2))     # nn.Linear(2H, 128)
    params['b1'] = u((FC1,))
    params['w2'] = u((1, FC1))      # nn.Linear(128, 1)
    params['b2'] = u((1,))
    return params


def pack_params(params):
    """Pack parameters into the kernel's fused / 128-lane-slab layout.

    Gate column layout (512 lanes) = four 128-lane slabs [i_f|i_b][f_f|f_b][o_f|o_b][g_f|g_b]
    (PyTorch per-direction gate order is [i|f|g|o]).
    wih : (L, 128, 512)  input  -> gates, both directions (layer-0 rows 26:128 zero)
    whh : (L, 128, 512)  hidden -> gates, block-diagonal (rows 0:64 fwd h, 64:128 bwd h)
    b   : (L, 1, 512)    fused b_ih + b_hh, same column layout
    """
    H = HIDDEN

    def iofg(Wt):          # Wt: (rows, 4H), PyTorch gate columns [i|f|g|o] -> (i, f, o, g)
        return (Wt[:, 0:H], Wt[:, H:2 * H], Wt[:, 3 * H:4 * H], Wt[:, 2 * H:3 * H])

    wih = np.zeros((NUM_LAYERS, H2, G2), np.float32)
    whh = np.zeros((NUM_LAYERS, H2, G2), np.float32)
    b = np.zeros((NUM_LAYERS, 1, G2), np.float32)
    for l in range(NUM_LAYERS):
        for d in range(2):
            Wi = iofg(np.asarray(params[f'wih_{l}_{d}'], np.float32).T)   # (in, 4H)
            Wh = iofg(np.asarray(params[f'whh_{l}_{d}'], np.float32).T)   # (H, 4H)
            bi = iofg((np.asarray(params[f'bih_{l}_{d}'], np.float32)
                       + np.asarray(params[f'bhh_{l}_{d}'], np.float32)).reshape(1, -1))
            in_dim = Wi[0].shape[0]
            for s in range(4):                    # gate slabs: 0=i, 1=f, 2=o, 3=g
                c0 = s * H2 + d * H               # this direction's 64-lane half
                wih[l, :in_dim, c0:c0 + H] = Wi[s]
                whh[l, d * H:(d + 1) * H, c0:c0 + H] = Wh[s]
                b[l, 0, c0:c0 + H] = bi[s][0]
    watt = np.asarray(params['watt'], np.float32).T                 # (2H, 1)
    batt = np.asarray(params['batt'], np.float32).reshape(1, 1)
    w1 = np.asarray(params['w1'], np.float32).T                     # (2H, 128)
    b1 = np.asarray(params['b1'], np.float32).reshape(1, FC1)
    w2 = np.asarray(params['w2'], np.float32).T                     # (128, 1)
    b2 = np.asarray(params['b2'], np.float32).reshape(1, 1)
    return tuple(jnp.asarray(a) for a in (wih, whh, b, watt, batt, w1, b1, w2, b2))


# ----------------------------- pure-JAX reference -----------------------------

def ref_forward(x, params):
    B, T, _ = x.shape
    H = HIDDEN
    inp = x
    for l in range(NUM_LAYERS):
        hs = [[None] * T, [None] * T]
        for d in range(2):
            Wih = params[f'wih_{l}_{d}']
            Whh = params[f'whh_{l}_{d}']
            bias = params[f'bih_{l}_{d}'] + params[f'bhh_{l}_{d}']
            h = jnp.zeros((B, H), jnp.float32)
            c = jnp.zeros((B, H), jnp.float32)
            order = range(T) if d == 0 else range(T - 1, -1, -1)
            for t in order:
                g = inp[:, t, :] @ Wih.T + h @ Whh.T + bias
                i = jax.nn.sigmoid(g[:, :H])
                f = jax.nn.sigmoid(g[:, H:2 * H])
                gg = jnp.tanh(g[:, 2 * H:3 * H])
                o = jax.nn.sigmoid(g[:, 3 * H:])
                c = f * c + i * gg
                h = o * jnp.tanh(c)
                hs[d][t] = h
        inp = jnp.stack([jnp.concatenate([hs[0][t], hs[1][t]], -1)
                         for t in range(T)], axis=1)                 # (B, T, 2H)
    scores = inp @ params['watt'].T + params['batt']                 # (B, T, 1)
    w = jax.nn.softmax(scores, axis=1)
    pooled = jnp.sum(w * inp, axis=1)
    h1 = jax.nn.relu(pooled @ params['w1'].T + params['b1'])
    return jax.nn.sigmoid(h1 @ params['w2'].T + params['b2'])


if __name__ == "__main__":
    key = jax.random.PRNGKey(0)
    pkey, xkey = jax.random.split(key)
    params = init_params(pkey)
    packed = pack_params(params)

    B, T = 2, 8
    x = jax.random.normal(xkey, (B, T, INPUT_DIM), jnp.float32)

    out = protein_bilstm_forward(x, packed)
    out = jax.block_until_ready(out)

    ref = ref_forward(x, params)
    np.testing.assert_allclose(np.asarray(out), np.asarray(ref), atol=2e-4, rtol=2e-3)

    print("KERNEL_OK")
</pallas_src>

<mosaic_0001>
module attributes {stable_mosaic.version = 11 : i64} {
  func.func @bilstm_classifier_kernel(%arg0: i32, %arg1: memref<8x8x128xf32, #tpu.memory_space<vmem>>, %arg2: memref<3x128x512xf32, #tpu.memory_space<vmem>>, %arg3: memref<3x128x512xf32, #tpu.memory_space<vmem>>, %arg4: memref<3x1x512xf32, #tpu.memory_space<vmem>>, %arg5: memref<128x1xf32, #tpu.memory_space<vmem>>, %arg6: memref<1x1xf32, #tpu.memory_space<vmem>>, %arg7: memref<128x128xf32, #tpu.memory_space<vmem>>, %arg8: memref<1x128xf32, #tpu.memory_space<vmem>>, %arg9: memref<128x1xf32, #tpu.memory_space<vmem>>, %arg10: memref<1x1xf32, #tpu.memory_space<vmem>>, %arg11: memref<8x1xf32, #tpu.memory_space<vmem>>, %arg12: memref<8x8x128xf32, #tpu.memory_space<vmem>>, %arg13: memref<8x8x128xf32, #tpu.memory_space<vmem>>, %arg14: memref<8x8x512xf32, #tpu.memory_space<vmem>>) attributes {dimension_semantics = [#tpu.dimension_semantics<parallel>], iteration_bounds = array<i64: 1>, scalar_prefetch = 0 : i64, scratch_operands = 3 : i64, tpu.core_type = #tpu.core_type<tc>, window_params = [{transform_indices = @transform_0, window_bounds = array<i64: 8, 8, 128>}, {pipeline_mode = #tpu.pipeline_mode<synchronous>, transform_indices = @transform_1, window_bounds = array<i64: 3, 128, 512>}, {pipeline_mode = #tpu.pipeline_mode<synchronous>, transform_indices = @transform_2, window_bounds = array<i64: 3, 128, 512>}, {pipeline_mode = #tpu.pipeline_mode<synchronous>, transform_indices = @transform_3, window_bounds = array<i64: 3, 1, 512>}, {pipeline_mode = #tpu.pipeline_mode<synchronous>, transform_indices = @transform_4, window_bounds = array<i64: 128, 1>}, {pipeline_mode = #tpu.pipeline_mode<synchronous>, transform_indices = @transform_5, window_bounds = array<i64: 1, 1>}, {pipeline_mode = #tpu.pipeline_mode<synchronous>, transform_indices = @transform_6, window_bounds = array<i64: 128, 128>}, {pipeline_mode = #tpu.pipeline_mode<synchronous>, transform_indices = @transform_7, window_bounds = array<i64: 1, 128>}, {pipeline_mode = #tpu.pipeline_mode<synchronous>, transform_indices = @transform_8, window_bounds = array<i64: 128, 1>}, {pipeline_mode = #tpu.pipeline_mode<synchronous>, transform_indices = @transform_9, window_bounds = array<i64: 1, 1>}, {transform_indices = @transform_10, window_bounds = array<i64: 8, 1>}]} {
    %0 = tpu.iota {dimensions = array<i32: 1>} : vector<8x512xi32>
    %c128_i32 = arith.constant 128 : i32
    %c0_i32 = arith.constant 0 : i32
    %1 = arith.cmpi eq, %c128_i32, %c0_i32 : i32
    %c1_i32 = arith.constant 1 : i32
    %2 = arith.select %1, %c1_i32, %c128_i32 : i32
    %3 = vector.broadcast %2 : i32 to vector<8x512xi32>
    %4 = arith.remsi %0, %3 : vector<8x512xi32>
    %c0_i32_0 = arith.constant 0 : i32
    %5 = vector.broadcast %c0_i32_0 : i32 to vector<8x512xi32>
    %6 = arith.cmpi ne, %4, %5 : vector<8x512xi32>
    %c0_i32_1 = arith.constant 0 : i32
    %7 = vector.broadcast %c0_i32_1 : i32 to vector<8x512xi32>
    %8 = arith.cmpi slt, %4, %7 : vector<8x512xi32>
    %c0_i32_2 = arith.constant 0 : i32
    %9 = arith.cmpi slt, %2, %c0_i32_2 : i32
    %10 = vector.broadcast %9 : i1 to vector<8x512xi1>
    %11 = vector.broadcast %10 : vector<8x512xi1> to vector<8x512xi1>
    %12 = arith.xori %8, %11 : vector<8x512xi1>
    %13 = arith.andi %12, %6 : vector<8x512xi1>
    %14 = vector.broadcast %2 : i32 to vector<8x512xi32>
    %15 = arith.addi %4, %14 : vector<8x512xi32>
    %16 = arith.select %13, %15, %4 : vector<8x512xi1>, vector<8x512xi32>
    %c64_i32 = arith.constant 64 : i32
    %17 = vector.broadcast %c64_i32 : i32 to vector<8x512xi32>
    %18 = arith.cmpi sge, %16, %17 : vector<8x512xi32>
    %c0 = arith.constant 0 : index
    %c0_3 = arith.constant 0 : index
    %c0_4 = arith.constant 0 : index
    %19 = vector.load %arg1[%c0, %c0_3, %c0_4] : memref<8x8x128xf32, #tpu.memory_space<vmem>>, vector<8x8x128xf32>
    %20 = vector.shape_cast %19 : vector<8x8x128xf32> to vector<64x128xf32>
    %c0_5 = arith.constant 0 : index
    %c0_6 = arith.constant 0 : index
    %c0_7 = arith.constant 0 : index
    %21 = vector.load %arg2[%c0_5, %c0_6, %c0_7] : memref<3x128x512xf32, #tpu.memory_space<vmem>>, vector<1x128x512xf32>
    %22 = vector.shape_cast %21 : vector<1x128x512xf32> to vector<128x512xf32>
    %cst = arith.constant dense<0.000000e+00> : vector<64x512xf32>
    %23 = tpu.matmul %20, %22, %cst {dimension_numbers = #tpu.dot_dimension_numbers<[1], [0], [0], [1], [0, 0, 1, 1], [], []>} : vector<64x128xf32>, vector<128x512xf32>, vector<64x512xf32> -> vector<64x512xf32>
    %c0_8 = arith.constant 0 : index
    %c0_9 = arith.constant 0 : index
    %c0_10 = arith.constant 0 : index
    %24 = vector.load %arg4[%c0_8, %c0_9, %c0_10] : memref<3x1x512xf32, #tpu.memory_space<vmem>>, vector<1x1x512xf32>
    %25 = vector.shape_cast %24 : vector<1x1x512xf32> to vector<1x512xf32>
    %26 = vector.broadcast %25 : vector<1x512xf32> to vector<64x512xf32>
    %27 = arith.addf %23, %26 : vector<64x512xf32>
    %28 = vector.shape_cast %27 : vector<64x512xf32> to vector<8x8x512xf32>
    %29 = vector.extract_strided_slice %28 {offsets = [7, 0, 0], sizes = [1, 8, 512], strides = [1, 1, 1]} : vector<8x8x512xf32> to vector<1x8x512xf32>
    %30 = vector.shape_cast %29 : vector<1x8x512xf32> to vector<8x512xf32>
    %31 = vector.extract_strided_slice %28 {offsets = [0, 0, 0], sizes = [1, 8, 512], strides = [1, 1, 1]} : vector<8x8x512xf32> to vector<1x8x512xf32>
    %32 = vector.shape_cast %31 : vector<1x8x512xf32> to vector<8x512xf32>
    %33 = arith.select %18, %30, %32 : vector<8x512xi1>, vector<8x512xf32>
    %c0_11 = arith.constant 0 : index
    %c0_12 = arith.constant 0 : index
    %c0_13 = arith.constant 0 : index
    %34 = vector.load %arg14[%c0_11, %c0_12, %c0_13] : memref<8x8x512xf32, #tpu.memory_space<vmem>>, vector<1x8x512xf32>
    %35 = vector.shape_cast %34 : vector<1x8x512xf32> to vector<8x512xf32>
    %36 = vector.shape_cast %33 : vector<8x512xf32> to vector<1x8x512xf32>
    tpu.vector_store %arg14[%c0_11, %c0_12, %c0_13], %36 {strides = array<i32>} : memref<8x8x512xf32, #tpu.memory_space<vmem>>, vector<1x8x512xf32>,
    %37 = vector.extract_strided_slice %28 {offsets = [6, 0, 0], sizes = [1, 8, 512], strides = [1, 1, 1]} : vector<8x8x512xf32> to vector<1x8x512xf32>
    %38 = vector.shape_cast %37 : vector<1x8x512xf32> to vector<8x512xf32>
    %39 = vector.extract_strided_slice %28 {offsets = [1, 0, 0], sizes = [1, 8, 512], strides = [1, 1, 1]} : vector<8x8x512xf32> to vector<1x8x512xf32>
    %40 = vector.shape_cast %39 : vector<1x8x512xf32> to vector<8x512xf32>
    %41 = arith.select %18, %38, %40 : vector<8x512xi1>, vector<8x512xf32>
    %c1 = arith.constant 1 : index
    %c0_14 = arith.constant 0 : index
    %c0_15 = arith.constant 0 : index
    %42 = vector.load %arg14[%c1, %c0_14, %c0_15] : memref<8x8x512xf32, #tpu.memory_space<vmem>>, vector<1x8x512xf32>
    %43 = vector.shape_cast %42 : vector<1x8x512xf32> to vector<8x512xf32>
    %44 = vector.shape_cast %41 : vector<8x512xf32> to vector<1x8x512xf32>
    tpu.vector_store %arg14[%c1, %c0_14, %c0_15], %44 {strides = array<i32>} : memref<8x8x512xf32, #tpu.memory_space<vmem>>, vector<1x8x512xf32>,
    %45 = vector.extract_strided_slice %28 {offsets = [5, 0, 0], sizes = [1, 8, 512], strides = [1, 1, 1]} : vector<8x8x512xf32> to vector<1x8x512xf32>
    %46 = vector.shape_cast %45 : vector<1x8x512xf32> to vector<8x512xf32>
    %47 = vector.extract_strided_slice %28 {offsets = [2, 0, 0], sizes = [1, 8, 512], strides = [1, 1, 1]} : vector<8x8x512xf32> to vector<1x8x512xf32>
    %48 = vector.shape_cast %47 : vector<1x8x512xf32> to vector<8x512xf32>
    %49 = arith.select %18, %46, %48 : vector<8x512xi1>, vector<8x512xf32>
    %c2 = arith.constant 2 : index
    %c0_16 = arith.constant 0 : index
    %c0_17 = arith.constant 0 : index
    %50 = vector.load %arg14[%c2, %c0_16, %c0_17] : memref<8x8x512xf32, #tpu.memory_space<vmem>>, vector<1x8x512xf32>
    %51 = vector.shape_cast %50 : vector<1x8x512xf32> to vector<8x512xf32>
    %52 = vector.shape_cast %49 : vector<8x512xf32> to vector<1x8x512xf32>
    tpu.vector_store %arg14[%c2, %c0_16, %c0_17], %52 {strides = array<i32>} : memref<8x8x512xf32, #tpu.memory_space<vmem>>, vector<1x8x512xf32>,
    %53 = vector.extract_strided_slice %28 {offsets = [4, 0, 0], sizes = [1, 8, 512], strides = [1, 1, 1]} : vector<8x8x512xf32> to vector<1x8x512xf32>
    %54 = vector.shape_cast %53 : vector<1x8x512xf32> to vector<8x512xf32>
    %55 = vector.extract_strided_slice %28 {offsets = [3, 0, 0], sizes = [1, 8, 512], strides = [1, 1, 1]} : vector<8x8x512xf32> to vector<1x8x512xf32>
    %56 = vector.shape_cast %55 : vector<1x8x512xf32> to vector<8x512xf32>
    %57 = arith.select %18, %54, %56 : vector<8x512xi1>, vector<8x512xf32>
    %c3 = arith.constant 3 : index
    %c0_18 = arith.constant 0 : index
    %c0_19 = arith.constant 0 : index
    %58 = vector.load %arg14[%c3, %c0_18, %c0_19] : memref<8x8x512xf32, #tpu.memory_space<vmem>>, vector<1x8x512xf32>
    %59 = vector.shape_cast %58 : vector<1x8x512xf32> to vector<8x512xf32>
    %60 = vector.shape_cast %57 : vector<8x512xf32> to vector<1x8x512xf32>
    tpu.vector_store %arg14[%c3, %c0_18, %c0_19], %60 {strides = array<i32>} : memref<8x8x512xf32, #tpu.memory_space<vmem>>, vector<1x8x512xf32>,
    %61 = vector.extract_strided_slice %28 {offsets = [3, 0, 0], sizes = [1, 8, 512], strides = [1, 1, 1]} : vector<8x8x512xf32> to vector<1x8x512xf32>
    %62 = vector.shape_cast %61 : vector<1x8x512xf32> to vector<8x512xf32>
    %63 = vector.extract_strided_slice %28 {offsets = [4, 0, 0], sizes = [1, 8, 512], strides = [1, 1, 1]} : vector<8x8x512xf32> to vector<1x8x512xf32>
    %64 = vector.shape_cast %63 : vector<1x8x512xf32> to vector<8x512xf32>
    %65 = arith.select %18, %62, %64 : vector<8x512xi1>, vector<8x512xf32>
    %c4 = arith.constant 4 : index
    %c0_20 = arith.constant 0 : index
    %c0_21 = arith.constant 0 : index
    %66 = vector.load %arg14[%c4, %c0_20, %c0_21] : memref<8x8x512xf32, #tpu.memory_space<vmem>>, vector<1x8x512xf32>
    %67 = vector.shape_cast %66 : vector<1x8x512xf32> to vector<8x512xf32>
    %68 = vector.shape_cast %65 : vector<8x512xf32> to vector<1x8x512xf32>
    tpu.vector_store %arg14[%c4, %c0_20, %c0_21], %68 {strides = array<i32>} : memref<8x8x512xf32, #tpu.memory_space<vmem>>, vector<1x8x512xf32>,
    %69 = vector.extract_strided_slice %28 {offsets = [2, 0, 0], sizes = [1, 8, 512], strides = [1, 1, 1]} : vector<8x8x512xf32> to vector<1x8x512xf32>
    %70 = vector.shape_cast %69 : vector<1x8x512xf32> to vector<8x512xf32>
    %71 = vector.extract_strided_slice %28 {offsets = [5, 0, 0], sizes = [1, 8, 512], strides = [1, 1, 1]} : vector<8x8x512xf32> to vector<1x8x512xf32>
    %72 = vector.shape_cast %71 : vector<1x8x512xf32> to vector<8x512xf32>
    %73 = arith.select %18, %70, %72 : vector<8x512xi1>, vector<8x512xf32>
    %c5 = arith.constant 5 : index
    %c0_22 = arith.constant 0 : index
    %c0_23 = arith.constant 0 : index
    %74 = vector.load %arg14[%c5, %c0_22, %c0_23] : memref<8x8x512xf32, #tpu.memory_space<vmem>>, vector<1x8x512xf32>
    %75 = vector.shape_cast %74 : vector<1x8x512xf32> to vector<8x512xf32>
    %76 = vector.shape_cast %73 : vector<8x512xf32> to vector<1x8x512xf32>
    tpu.vector_store %arg14[%c5, %c0_22, %c0_23], %76 {strides = array<i32>} : memref<8x8x512xf32, #tpu.memory_space<vmem>>, vector<1x8x512xf32>,
    %77 = vector.extract_strided_slice %28 {offsets = [1, 0, 0], sizes = [1, 8, 512], strides = [1, 1, 1]} : vector<8x8x512xf32> to vector<1x8x512xf32>
    %78 = vector.shape_cast %77 : vector<1x8x512xf32> to vector<8x512xf32>
    %79 = vector.extract_strided_slice %28 {offsets = [6, 0, 0], sizes = [1, 8, 512], strides = [1, 1, 1]} : vector<8x8x512xf32> to vector<1x8x512xf32>
    %80 = vector.shape_cast %79 : vector<1x8x512xf32> to vector<8x512xf32>
    %81 = arith.select %18, %78, %80 : vector<8x512xi1>, vector<8x512xf32>
    %c6 = arith.constant 6 : index
    %c0_24 = arith.constant 0 : index
    %c0_25 = arith.constant 0 : index
    %82 = vector.load %arg14[%c6, %c0_24, %c0_25] : memref<8x8x512xf32, #tpu.memory_space<vmem>>, vector<1x8x512xf32>
    %83 = vector.shape_cast %82 : vector<1x8x512xf32> to vector<8x512xf32>
    %84 = vector.shape_cast %81 : vector<8x512xf32> to vector<1x8x512xf32>
    tpu.vector_store %arg14[%c6, %c0_24, %c0_25], %84 {strides = array<i32>} : memref<8x8x512xf32, #tpu.memory_space<vmem>>, vector<1x8x512xf32>,
    %85 = vector.extract_strided_slice %28 {offsets = [0, 0, 0], sizes = [1, 8, 512], strides = [1, 1, 1]} : vector<8x8x512xf32> to vector<1x8x512xf32>
    %86 = vector.shape_cast %85 : vector<1x8x512xf32> to vector<8x512xf32>
    %87 = vector.extract_strided_slice %28 {offsets = [7, 0, 0], sizes = [1, 8, 512], strides = [1, 1, 1]} : vector<8x8x512xf32> to vector<1x8x512xf32>
    %88 = vector.shape_cast %87 : vector<1x8x512xf32> to vector<8x512xf32>
    %89 = arith.select %18, %86, %88 : vector<8x512xi1>, vector<8x512xf32>
    %c7 = arith.constant 7 : index
    %c0_26 = arith.constant 0 : index
    %c0_27 = arith.constant 0 : index
    %90 = vector.load %arg14[%c7, %c0_26, %c0_27] : memref<8x8x512xf32, #tpu.memory_space<vmem>>, vector<1x8x512xf32>
    %91 = vector.shape_cast %90 : vector<1x8x512xf32> to vector<8x512xf32>
    %92 = vector.shape_cast %89 : vector<8x512xf32> to vector<1x8x512xf32>
    tpu.vector_store %arg14[%c7, %c0_26, %c0_27], %92 {strides = array<i32>} : memref<8x8x512xf32, #tpu.memory_space<vmem>>, vector<1x8x512xf32>,
    %c0_28 = arith.constant 0 : index
    %c0_29 = arith.constant 0 : index
    %c0_30 = arith.constant 0 : index
    %93 = vector.load %arg3[%c0_28, %c0_29, %c0_30] : memref<3x128x512xf32, #tpu.memory_space<vmem>>, vector<1x128x512xf32>
    %94 = vector.shape_cast %93 : vector<1x128x512xf32> to vector<128x512xf32>
    %cst_31 = arith.constant 0.000000e+00 : f32
    %95 = vector.broadcast %cst_31 : f32 to vector<8x128xf32>
    %cst_32 = arith.constant 0.000000e+00 : f32
    %96 = vector.broadcast %cst_32 : f32 to vector<8x128xf32>
    %cst_33 = arith.constant dense<0.000000e+00> : vector<8x512xf32>
    %97 = tpu.matmul %95, %94, %cst_33 {dimension_numbers = #tpu.dot_dimension_numbers<[1], [0], [0], [1], [0, 0, 1, 1], [], []>} : vector<8x128xf32>, vector<128x512xf32>, vector<8x512xf32> -> vector<8x512xf32>
    %c0_34 = arith.constant 0 : index
    %c0_35 = arith.constant 0 : index
    %c0_36 = arith.constant 0 : index
    %98 = vector.load %arg14[%c0_34, %c0_35, %c0_36] : memref<8x8x512xf32, #tpu.memory_space<vmem>>, vector<1x8x512xf32>
    %99 = vector.shape_cast %98 : vector<1x8x512xf32> to vector<8x512xf32>
    %100 = arith.addf %97, %99 : vector<8x512xf32>
    %101 = vector.extract_strided_slice %100 {offsets = [0, 0], sizes = [8, 384], strides = [1, 1]} : vector<8x512xf32> to vector<8x384xf32>
    %cst_37 = arith.constant 5.000000e-01 : f32
    %102 = vector.broadcast %cst_37 : f32 to vector<8x384xf32>
    %103 = arith.mulf %102, %101 : vector<8x384xf32>
    %104 = math.tanh %103 : vector<8x384xf32>
    %cst_38 = arith.constant 5.000000e-01 : f32
    %105 = vector.broadcast %cst_38 : f32 to vector<8x384xf32>
    %106 = arith.mulf %105, %104 : vector<8x384xf32>
    %cst_39 = arith.constant 5.000000e-01 : f32
    %107 = vector.broadcast %cst_39 : f32 to vector<8x384xf32>
    %108 = arith.addf %106, %107 : vector<8x384xf32>
    %109 = vector.extract_strided_slice %100 {offsets = [0, 384], sizes = [8, 128], strides = [1, 1]} : vector<8x512xf32> to vector<8x128xf32>
    %110 = math.tanh %109 : vector<8x128xf32>
    %111 = vector.extract_strided_slice %108 {offsets = [0, 128], sizes = [8, 128], strides = [1, 1]} : vector<8x384xf32> to vector<8x128xf32>
    %112 = arith.mulf %111, %96 : vector<8x128xf32>
    %113 = vector.extract_strided_slice %108 {offsets = [0, 0], sizes = [8, 128], strides = [1, 1]} : vector<8x384xf32> to vector<8x128xf32>
    %114 = arith.mulf %113, %110 : vector<8x128xf32>
    %115 = arith.addf %112, %114 : vector<8x128xf32>
    %116 = vector.extract_strided_slice %108 {offsets = [0, 256], sizes = [8, 128], strides = [1, 1]} : vector<8x384xf32> to vector<8x128xf32>
    %117 = math.tanh %115 : vector<8x128xf32>
    %118 = arith.mulf %116, %117 : vector<8x128xf32>
    %119 = vector.extract_strided_slice %118 {offsets = [0, 0], sizes = [8, 64], strides = [1, 1]} : vector<8x128xf32> to vector<8x64xf32>
    %c0_40 = arith.constant 0 : index
    %c0_41 = arith.constant 0 : index
    %c0_42 = arith.constant 0 : index
    %120 = vector.load %arg12[%c0_40, %c0_41, %c0_42] : memref<8x8x128xf32, #tpu.memory_space<vmem>>, vector<1x8x64xf32>
    %121 = vector.shape_cast %120 : vector<1x8x64xf32> to vector<8x64xf32>
    %122 = vector.shape_cast %119 : vector<8x64xf32> to vector<1x8x64xf32>
    tpu.vector_store %arg12[%c0_40, %c0_41, %c0_42], %122 {strides = array<i32>} : memref<8x8x128xf32, #tpu.memory_space<vmem>>, vector<1x8x64xf32>,
    %123 = vector.extract_strided_slice %118 {offsets = [0, 64], sizes = [8, 64], strides = [1, 1]} : vector<8x128xf32> to vector<8x64xf32>
    %c7_43 = arith.constant 7 : index
    %c0_44 = arith.constant 0 : index
    %c64 = arith.constant 64 : index
    %124 = vector.load %arg12[%c7_43, %c0_44, %c64] : memref<8x8x128xf32, #tpu.memory_space<vmem>>, vector<1x8x64xf32>
    %125 = vector.shape_cast %124 : vector<1x8x64xf32> to vector<8x64xf32>
    %126 = vector.shape_cast %123 : vector<8x64xf32> to vector<1x8x64xf32>
    tpu.vector_store %arg12[%c7_43, %c0_44, %c64], %126 {strides = array<i32>} : memref<8x8x128xf32, #tpu.memory_space<vmem>>, vector<1x8x64xf32>,
    %cst_45 = arith.constant dense<0.000000e+00> : vector<8x512xf32>
    %127 = tpu.matmul %118, %94, %cst_45 {dimension_numbers = #tpu.dot_dimension_numbers<[1], [0], [0], [1], [0, 0, 1, 1], [], []>} : vector<8x128xf32>, vector<128x512xf32>, vector<8x512xf32> -> vector<8x512xf32>
    %c1_46 = arith.constant 1 : index
    %c0_47 = arith.constant 0 : index
    %c0_48 = arith.constant 0 : index
    %128 = vector.load %arg14[%c1_46, %c0_47, %c0_48] : memref<8x8x512xf32, #tpu.memory_space<vmem>>, vector<1x8x512xf32>
    %129 = vector.shape_cast %128 : vector<1x8x512xf32> to vector<8x512xf32>
    %130 = arith.addf %127, %129 : vector<8x512xf32>
    %131 = vector.extract_strided_slice %130 {offsets = [0, 0], sizes = [8, 384], strides = [1, 1]} : vector<8x512xf32> to vector<8x384xf32>
    %cst_49 = arith.constant 5.000000e-01 : f32
    %132 = vector.broadcast %cst_49 : f32 to vector<8x384xf32>
    %133 = arith.mulf %132, %131 : vector<8x384xf32>
    %134 = math.tanh %133 : vector<8x384xf32>
    %cst_50 = arith.constant 5.000000e-01 : f32
    %135 = vector.broadcast %cst_50 : f32 to vector<8x384xf32>
    %136 = arith.mulf %135, %134 : vector<8x384xf32>
    %cst_51 = arith.constant 5.000000e-01 : f32
    %137 = vector.broadcast %cst_51 : f32 to vector<8x384xf32>
    %138 = arith.addf %136, %137 : vector<8x384xf32>
    %139 = vector.extract_strided_slice %130 {offsets = [0, 384], sizes = [8, 128], strides = [1, 1]} : vector<8x512xf32> to vector<8x128xf32>
    %140 = math.tanh %139 : vector<8x128xf32>
    %141 = vector.extract_strided_slice %138 {offsets = [0, 128], sizes = [8, 128], strides = [1, 1]} : vector<8x384xf32> to vector<8x128xf32>
    %142 = arith.mulf %141, %115 : vector<8x128xf32>
    %143 = vector.extract_strided_slice %138 {offsets = [0, 0], sizes = [8, 128], strides = [1, 1]} : vector<8x384xf32> to vector<8x128xf32>
    %144 = arith.mulf %143, %140 : vector<8x128xf32>
    %145 = arith.addf %142, %144 : vector<8x128xf32>
    %146 = vector.extract_strided_slice %138 {offsets = [0, 256], sizes = [8, 128], strides = [1, 1]} : vector<8x384xf32> to vector<8x128xf32>
    %147 = math.tanh %145 : vector<8x128xf32>
    %148 = arith.mulf %146, %147 : vector<8x128xf32>
    %149 = vector.extract_strided_slice %148 {offsets = [0, 0], sizes = [8, 64], strides = [1, 1]} : vector<8x128xf32> to vector<8x64xf32>
    %c1_52 = arith.constant 1 : index
    %c0_53 = arith.constant 0 : index
    %c0_54 = arith.constant 0 : index
    %150 = vector.load %arg12[%c1_52, %c0_53, %c0_54] : memref<8x8x128xf32, #tpu.memory_space<vmem>>, vector<1x8x64xf32>
    %151 = vector.shape_cast %150 : vector<1x8x64xf32> to vector<8x64xf32>
    %152 = vector.shape_cast %149 : vector<8x64xf32> to vector<1x8x64xf32>
    tpu.vector_store %arg12[%c1_52, %c0_53, %c0_54], %152 {strides = array<i32>} : memref<8x8x128xf32, #tpu.memory_space<vmem>>, vector<1x8x64xf32>,
    %153 = vector.extract_strided_slice %148 {offsets = [0, 64], sizes = [8, 64], strides = [1, 1]} : vector<8x128xf32> to vector<8x64xf32>
    %c6_55 = arith.constant 6 : index
    %c0_56 = arith.constant 0 : index
    %c64_57 = arith.constant 64 : index
    %154 = vector.load %arg12[%c6_55, %c0_56, %c64_57] : memref<8x8x128xf32, #tpu.memory_space<vmem>>, vector<1x8x64xf32>
    %155 = vector.shape_cast %154 : vector<1x8x64xf32> to vector<8x64xf32>
    %156 = vector.shape_cast %153 : vector<8x64xf32> to vector<1x8x64xf32>
    tpu.vector_store %arg12[%c6_55, %c0_56, %c64_57], %156 {strides = array<i32>} : memref<8x8x128xf32, #tpu.memory_space<vmem>>, vector<1x8x64xf32>,
    %cst_58 = arith.constant dense<0.000000e+00> : vector<8x512xf32>
    %157 = tpu.matmul %148, %94, %cst_58 {dimension_numbers = #tpu.dot_dimension_numbers<[1], [0], [0], [1], [0, 0, 1, 1], [], []>} : vector<8x128xf32>, vector<128x512xf32>, vector<8x512xf32> -> vector<8x512xf32>
    %c2_59 = arith.constant 2 : index
    %c0_60 = arith.constant 0 : index
    %c0_61 = arith.constant 0 : index
    %158 = vector.load %arg14[%c2_59, %c0_60, %c0_61] : memref<8x8x512xf32, #tpu.memory_space<vmem>>, vector<1x8x512xf32>
    %159 = vector.shape_cast %158 : vector<1x8x512xf32> to vector<8x512xf32>
    %160 = arith.addf %157, %159 : vector<8x512xf32>
    %161 = vector.extract_strided_slice %160 {offsets = [0, 0], sizes = [8, 384], strides = [1, 1]} : vector<8x512xf32> to vector<8x384xf32>
    %cst_62 = arith.constant 5.000000e-01 : f32
    %162 = vector.broadcast %cst_62 : f32 to vector<8x384xf32>
    %163 = arith.mulf %162, %161 : vector<8x384xf32>
    %164 = math.tanh %163 : vector<8x384xf32>
    %cst_63 = arith.constant 5.000000e-01 : f32
    %165 = vector.broadcast %cst_63 : f32 to vector<8x384xf32>
    %166 = arith.mulf %165, %164 : vector<8x384xf32>
    %cst_64 = arith.constant 5.000000e-01 : f32
    %167 = vector.broadcast %cst_64 : f32 to vector<8x384xf32>
    %168 = arith.addf %166, %167 : vector<8x384xf32>
    %169 = vector.extract_strided_slice %160 {offsets = [0, 384], sizes = [8, 128], strides = [1, 1]} : vector<8x512xf32> to vector<8x128xf32>
    %170 = math.tanh %169 : vector<8x128xf32>
    %171 = vector.extract_strided_slice %168 {offsets = [0, 128], sizes = [8, 128], strides = [1, 1]} : vector<8x384xf32> to vector<8x128xf32>
    %172 = arith.mulf %171, %145 : vector<8x128xf32>
    %173 = vector.extract_strided_slice %168 {offsets = [0, 0], sizes = [8, 128], strides = [1, 1]} : vector<8x384xf32> to vector<8x128xf32>
    %174 = arith.mulf %173, %170 : vector<8x128xf32>
    %175 = arith.addf %172, %174 : vector<8x128xf32>
    %176 = vector.extract_strided_slice %168 {offsets = [0, 256], sizes = [8, 128], strides = [1, 1]} : vector<8x384xf32> to vector<8x128xf32>
    %177 = math.tanh %175 : vector<8x128xf32>
    %178 = arith.mulf %176, %177 : vector<8x128xf32>
    %179 = vector.extract_strided_slice %178 {offsets = [0, 0], sizes = [8, 64], strides = [1, 1]} : vector<8x128xf32> to vector<8x64xf32>
    %c2_65 = arith.constant 2 : index
    %c0_66 = arith.constant 0 : index
    %c0_67 = arith.constant 0 : index
    %180 = vector.load %arg12[%c2_65, %c0_66, %c0_67] : memref<8x8x128xf32, #tpu.memory_space<vmem>>, vector<1x8x64xf32>
    %181 = vector.shape_cast %180 : vector<1x8x64xf32> to vector<8x64xf32>
    %182 = vector.shape_cast %179 : vector<8x64xf32> to vector<1x8x64xf32>
    tpu.vector_store %arg12[%c2_65, %c0_66, %c0_67], %182 {strides = array<i32>} : memref<8x8x128xf32, #tpu.memory_space<vmem>>, vector<1x8x64xf32>,
    %183 = vector.extract_strided_slice %178 {offsets = [0, 64], sizes = [8, 64], strides = [1, 1]} : vector<8x128xf32> to vector<8x64xf32>
    %c5_68 = arith.constant 5 : index
    %c0_69 = arith.constant 0 : index
    %c64_70 = arith.constant 64 : index
    %184 = vector.load %arg12[%c5_68, %c0_69, %c64_70] : memref<8x8x128xf32, #tpu.memory_space<vmem>>, vector<1x8x64xf32>
    %185 = vector.shape_cast %184 : vector<1x8x64xf32> to vector<8x64xf32>
    %186 = vector.shape_cast %183 : vector<8x64xf32> to vector<1x8x64xf32>
    tpu.vector_store %arg12[%c5_68, %c0_69, %c64_70], %186 {strides = array<i32>} : memref<8x8x128xf32, #tpu.memory_space<vmem>>, vector<1x8x64xf32>,
    %cst_71 = arith.constant dense<0.000000e+00> : vector<8x512xf32>
    %187 = tpu.matmul %178, %94, %cst_71 {dimension_numbers = #tpu.dot_dimension_numbers<[1], [0], [0], [1], [0, 0, 1, 1], [], []>} : vector<8x128xf32>, vector<128x512xf32>, vector<8x512xf32> -> vector<8x512xf32>
    %c3_72 = arith.constant 3 : index
    %c0_73 = arith.constant 0 : index
    %c0_74 = arith.constant 0 : index
    %188 = vector.load %arg14[%c3_72, %c0_73, %c0_74] : memref<8x8x512xf32, #tpu.memory_space<vmem>>, vector<1x8x512xf32>
    %189 = vector.shape_cast %188 : vector<1x8x512xf32> to vector<8x512xf32>
    %190 = arith.addf %187, %189 : vector<8x512xf32>
    %191 = vector.extract_strided_slice %190 {offsets = [0, 0], sizes = [8, 384], strides = [1, 1]} : vector<8x512xf32> to vector<8x384xf32>
    %cst_75 = arith.constant 5.000000e-01 : f32
    %192 = vector.broadcast %cst_75 : f32 to vector<8x384xf32>
    %193 = arith.mulf %192, %191 : vector<8x384xf32>
    %194 = math.tanh %193 : vector<8x384xf32>
    %cst_76 = arith.constant 5.000000e-01 : f32
    %195 = vector.broadcast %cst_76 : f32 to vector<8x384xf32>
    %196 = arith.mulf %195, %194 : vector<8x384xf32>
    %cst_77 = arith.constant 5.000000e-01 : f32
    %197 = vector.broadcast %cst_77 : f32 to vector<8x384xf32>
    %198 = arith.addf %196, %197 : vector<8x384xf32>
    %199 = vector.extract_strided_slice %190 {offsets = [0, 384], sizes = [8, 128], strides = [1, 1]} : vector<8x512xf32> to vector<8x128xf32>
    %200 = math.tanh %199 : vector<8x128xf32>
    %201 = vector.extract_strided_slice %198 {offsets = [0, 128], sizes = [8, 128], strides = [1, 1]} : vector<8x384xf32> to vector<8x128xf32>
    %202 = arith.mulf %201, %175 : vector<8x128xf32>
    %203 = vector.extract_strided_slice %198 {offsets = [0, 0], sizes = [8, 128], strides = [1, 1]} : vector<8x384xf32> to vector<8x128xf32>
    %204 = arith.mulf %203, %200 : vector<8x128xf32>
    %205 = arith.addf %202, %204 : vector<8x128xf32>
    %206 = vector.extract_strided_slice %198 {offsets = [0, 256], sizes = [8, 128], strides = [1, 1]} : vector<8x384xf32> to vector<8x128xf32>
    %207 = math.tanh %205 : vector<8x128xf32>
    %208 = arith.mulf %206, %207 : vector<8x128xf32>
    %209 = vector.extract_strided_slice %208 {offsets = [0, 0], sizes = [8, 64], strides = [1, 1]} : vector<8x128xf32> to vector<8x64xf32>
    %c3_78 = arith.constant 3 : index
    %c0_79 = arith.constant 0 : index
    %c0_80 = arith.constant 0 : index
    %210 = vector.load %arg12[%c3_78, %c0_79, %c0_80] : memref<8x8x128xf32, #tpu.memory_space<vmem>>, vector<1x8x64xf32>
    %211 = vector.shape_cast %210 : vector<1x8x64xf32> to vector<8x64xf32>
    %212 = vector.shape_cast %209 : vector<8x64xf32> to vector<1x8x64xf32>
    tpu.vector_store %arg12[%c3_78, %c0_79, %c0_80], %212 {strides = array<i32>} : memref<8x8x128xf32, #tpu.memory_space<vmem>>, vector<1x8x64xf32>,
    %213 = vector.extract_strided_slice %208 {offsets = [0, 64], sizes = [8, 64], strides = [1, 1]} : vector<8x128xf32> to vector<8x64xf32>
    %c4_81 = arith.constant 4 : index
    %c0_82 = arith.constant 0 : index
    %c64_83 = arith.constant 64 : index
    %214 = vector.load %arg12[%c4_81, %c0_82, %c64_83] : memref<8x8x128xf32, #tpu.memory_space<vmem>>, vector<1x8x64xf32>
    %215 = vector.shape_cast %214 : vector<1x8x64xf32> to vector<8x64xf32>
    %216 = vector.shape_cast %213 : vector<8x64xf32> to vector<1x8x64xf32>
    tpu.vector_store %arg12[%c4_81, %c0_82, %c64_83], %216 {strides = array<i32>} : memref<8x8x128xf32, #tpu.memory_space<vmem>>, vector<1x8x64xf32>,
    %cst_84 = arith.constant dense<0.000000e+00> : vector<8x512xf32>
    %217 = tpu.matmul %208, %94, %cst_84 {dimension_numbers = #tpu.dot_dimension_numbers<[1], [0], [0], [1], [0, 0, 1, 1], [], []>} : vector<8x128xf32>, vector<128x512xf32>, vector<8x512xf32> -> vector<8x512xf32>
    %c4_85 = arith.constant 4 : index
    %c0_86 = arith.constant 0 : index
    %c0_87 = arith.constant 0 : index
    %218 = vector.load %arg14[%c4_85, %c0_86, %c0_87] : memref<8x8x512xf32, #tpu.memory_space<vmem>>, vector<1x8x512xf32>
    %219 = vector.shape_cast %218 : vector<1x8x512xf32> to vector<8x512xf32>
    %220 = arith.addf %217, %219 : vector<8x512xf32>
    %221 = vector.extract_strided_slice %220 {offsets = [0, 0], sizes = [8, 384], strides = [1, 1]} : vector<8x512xf32> to vector<8x384xf32>
    %cst_88 = arith.constant 5.000000e-01 : f32
    %222 = vector.broadcast %cst_88 : f32 to vector<8x384xf32>
    %223 = arith.mulf %222, %221 : vector<8x384xf32>
    %224 = math.tanh %223 : vector<8x384xf32>
    %cst_89 = arith.constant 5.000000e-01 : f32
    %225 = vector.broadcast %cst_89 : f32 to vector<8x384xf32>
    %226 = arith.mulf %225, %224 : vector<8x384xf32>
    %cst_90 = arith.constant 5.000000e-01 : f32
    %227 = vector.broadcast %cst_90 : f32 to vector<8x384xf32>
    %228 = arith.addf %226, %227 : vector<8x384xf32>
    %229 = vector.extract_strided_slice %220 {offsets = [0, 384], sizes = [8, 128], strides = [1, 1]} : vector<8x512xf32> to vector<8x128xf32>
    %230 = math.tanh %229 : vector<8x128xf32>
    %231 = vector.extract_strided_slice %228 {offsets = [0, 128], sizes = [8, 128], strides = [1, 1]} : vector<8x384xf32> to vector<8x128xf32>
    %232 = arith.mulf %231, %205 : vector<8x128xf32>
    %233 = vector.extract_strided_slice %228 {offsets = [0, 0], sizes = [8, 128], strides = [1, 1]} : vector<8x384xf32> to vector<8x128xf32>
    %234 = arith.mulf %233, %230 : vector<8x128xf32>
    %235 = arith.addf %232, %234 : vector<8x128xf32>
    %236 = vector.extract_strided_slice %228 {offsets = [0, 256], sizes = [8, 128], strides = [1, 1]} : vector<8x384xf32> to vector<8x128xf32>
    %237 = math.tanh %235 : vector<8x128xf32>
    %238 = arith.mulf %236, %237 : vector<8x128xf32>
    %239 = vector.extract_strided_slice %238 {offsets = [0, 0], sizes = [8, 64], strides = [1, 1]} : vector<8x128xf32> to vector<8x64xf32>
    %c4_91 = arith.constant 4 : index
    %c0_92 = arith.constant 0 : index
    %c0_93 = arith.constant 0 : index
    %240 = vector.load %arg12[%c4_91, %c0_92, %c0_93] : memref<8x8x128xf32, #tpu.memory_space<vmem>>, vector<1x8x64xf32>
    %241 = vector.shape_cast %240 : vector<1x8x64xf32> to vector<8x64xf32>
    %242 = vector.shape_cast %239 : vector<8x64xf32> to vector<1x8x64xf32>
    tpu.vector_store %arg12[%c4_91, %c0_92, %c0_93], %242 {strides = array<i32>} : memref<8x8x128xf32, #tpu.memory_space<vmem>>, vector<1x8x64xf32>,
    %243 = vector.extract_strided_slice %238 {offsets = [0, 64], sizes = [8, 64], strides = [1, 1]} : vector<8x128xf32> to vector<8x64xf32>
    %c3_94 = arith.constant 3 : index
    %c0_95 = arith.constant 0 : index
    %c64_96 = arith.constant 64 : index
    %244 = vector.load %arg12[%c3_94, %c0_95, %c64_96] : memref<8x8x128xf32, #tpu.memory_space<vmem>>, vector<1x8x64xf32>
    %245 = vector.shape_cast %244 : vector<1x8x64xf32> to vector<8x64xf32>
    %246 = vector.shape_cast %243 : vector<8x64xf32> to vector<1x8x64xf32>
    tpu.vector_store %arg12[%c3_94, %c0_95, %c64_96], %246 {strides = array<i32>} : memref<8x8x128xf32, #tpu.memory_space<vmem>>, vector<1x8x64xf32>,
    %cst_97 = arith.constant dense<0.000000e+00> : vector<8x512xf32>
    %247 = tpu.matmul %238, %94, %cst_97 {dimension_numbers = #tpu.dot_dimension_numbers<[1], [0], [0], [1], [0, 0, 1, 1], [], []>} : vector<8x128xf32>, vector<128x512xf32>, vector<8x512xf32> -> vector<8x512xf32>
    %c5_98 = arith.constant 5 : index
    %c0_99 = arith.constant 0 : index
    %c0_100 = arith.constant 0 : index
    %248 = vector.load %arg14[%c5_98, %c0_99, %c0_100] : memref<8x8x512xf32, #tpu.memory_space<vmem>>, vector<1x8x512xf32>
    %249 = vector.shape_cast %248 : vector<1x8x512xf32> to vector<8x512xf32>
    %250 = arith.addf %247, %249 : vector<8x512xf32>
    %251 = vector.extract_strided_slice %250 {offsets = [0, 0], sizes = [8, 384], strides = [1, 1]} : vector<8x512xf32> to vector<8x384xf32>
    %cst_101 = arith.constant 5.000000e-01 : f32
    %252 = vector.broadcast %cst_101 : f32 to vector<8x384xf32>
    %253 = arith.mulf %252, %251 : vector<8x384xf32>
    %254 = math.tanh %253 : vector<8x384xf32>
    %cst_102 = arith.constant 5.000000e-01 : f32
    %255 = vector.broadcast %cst_102 : f32 to vector<8x384xf32>
    %256 = arith.mulf %255, %254 : vector<8x384xf32>
    %cst_103 = arith.constant 5.000000e-01 : f32
    %257 = vector.broadcast %cst_103 : f32 to vector<8x384xf32>
    %258 = arith.addf %256, %257 : vector<8x384xf32>
    %259 = vector.extract_strided_slice %250 {offsets = [0, 384], sizes = [8, 128], strides = [1, 1]} : vector<8x512xf32> to vector<8x128xf32>
    %260 = math.tanh %259 : vector<8x128xf32>
    %261 = vector.extract_strided_slice %258 {offsets = [0, 128], sizes = [8, 128], strides = [1, 1]} : vector<8x384xf32> to vector<8x128xf32>
    %262 = arith.mulf %261, %235 : vector<8x128xf32>
    %263 = vector.extract_strided_slice %258 {offsets = [0, 0], sizes = [8, 128], strides = [1, 1]} : vector<8x384xf32> to vector<8x128xf32>
    %264 = arith.mulf %263, %260 : vector<8x128xf32>
    %265 = arith.addf %262, %264 : vector<8x128xf32>
    %266 = vector.extract_strided_slice %258 {offsets = [0, 256], sizes = [8, 128], strides = [1, 1]} : vector<8x384xf32> to vector<8x128xf32>
    %267 = math.tanh %265 : vector<8x128xf32>
    %268 = arith.mulf %266, %267 : vector<8x128xf32>
    %269 = vector.extract_strided_slice %268 {offsets = [0, 0], sizes = [8, 64], strides = [1, 1]} : vector<8x128xf32> to vector<8x64xf32>
    %c5_104 = arith.constant 5 : index
    %c0_105 = arith.constant 0 : index
    %c0_106 = arith.constant 0 : index
    %270 = vector.load %arg12[%c5_104, %c0_105, %c0_106] : memref<8x8x128xf32, #tpu.memory_space<vmem>>, vector<1x8x64xf32>
    %271 = vector.shape_cast %270 : vector<1x8x64xf32> to vector<8x64xf32>
    %272 = vector.shape_cast %269 : vector<8x64xf32> to vector<1x8x64xf32>
    tpu.vector_store %arg12[%c5_104, %c0_105, %c0_106], %272 {strides = array<i32>} : memref<8x8x128xf32, #tpu.memory_space<vmem>>, vector<1x8x64xf32>,
    %273 = vector.extract_strided_slice %268 {offsets = [0, 64], sizes = [8, 64], strides = [1, 1]} : vector<8x128xf32> to vector<8x64xf32>
    %c2_107 = arith.constant 2 : index
    %c0_108 = arith.constant 0 : index
    %c64_109 = arith.constant 64 : index
    %274 = vector.load %arg12[%c2_107, %c0_108, %c64_109] : memref<8x8x128xf32, #tpu.memory_space<vmem>>, vector<1x8x64xf32>
    %275 = vector.shape_cast %274 : vector<1x8x64xf32> to vector<8x64xf32>
    %276 = vector.shape_cast %273 : vector<8x64xf32> to vector<1x8x64xf32>
    tpu.vector_store %arg12[%c2_107, %c0_108, %c64_109], %276 {strides = array<i32>} : memref<8x8x128xf32, #tpu.memory_space<vmem>>, vector<1x8x64xf32>,
    %cst_110 = arith.constant dense<0.000000e+00> : vector<8x512xf32>
    %277 = tpu.matmul %268, %94, %cst_110 {dimension_numbers = #tpu.dot_dimension_numbers<[1], [0], [0], [1], [0, 0, 1, 1], [], []>} : vector<8x128xf32>, vector<128x512xf32>, vector<8x512xf32> -> vector<8x512xf32>
    %c6_111 = arith.constant 6 : index
    %c0_112 = arith.constant 0 : index
    %c0_113 = arith.constant 0 : index
    %278 = vector.load %arg14[%c6_111, %c0_112, %c0_113] : memref<8x8x512xf32, #tpu.memory_space<vmem>>, vector<1x8x512xf32>
    %279 = vector.shape_cast %278 : vector<1x8x512xf32> to vector<8x512xf32>
    %280 = arith.addf %277, %279 : vector<8x512xf32>
    %281 = vector.extract_strided_slice %280 {offsets = [0, 0], sizes = [8, 384], strides = [1, 1]} : vector<8x512xf32> to vector<8x384xf32>
    %cst_114 = arith.constant 5.000000e-01 : f32
    %282 = vector.broadcast %cst_114 : f32 to vector<8x384xf32>
    %283 = arith.mulf %282, %281 : vector<8x384xf32>
    %284 = math.tanh %283 : vector<8x384xf32>
    %cst_115 = arith.constant 5.000000e-01 : f32
    %285 = vector.broadcast %cst_115 : f32 to vector<8x384xf32>
    %286 = arith.mulf %285, %284 : vector<8x384xf32>
    %cst_116 = arith.constant 5.000000e-01 : f32
    %287 = vector.broadcast %cst_116 : f32 to vector<8x384xf32>
    %288 = arith.addf %286, %287 : vector<8x384xf32>
    %289 = vector.extract_strided_slice %280 {offsets = [0, 384], sizes = [8, 128], strides = [1, 1]} : vector<8x512xf32> to vector<8x128xf32>
    %290 = math.tanh %289 : vector<8x128xf32>
    %291 = vector.extract_strided_slice %288 {offsets = [0, 128], sizes = [8, 128], strides = [1, 1]} : vector<8x384xf32> to vector<8x128xf32>
    %292 = arith.mulf %291, %265 : vector<8x128xf32>
    %293 = vector.extract_strided_slice %288 {offsets = [0, 0], sizes = [8, 128], strides = [1, 1]} : vector<8x384xf32> to vector<8x128xf32>
    %294 = arith.mulf %293, %290 : vector<8x128xf32>
    %295 = arith.addf %292, %294 : vector<8x128xf32>
    %296 = vector.extract_strided_slice %288 {offsets = [0, 256], sizes = [8, 128], strides = [1, 1]} : vector<8x384xf32> to vector<8x128xf32>
    %297 = math.tanh %295 : vector<8x128xf32>
    %298 = arith.mulf %296, %297 : vector<8x128xf32>
    %299 = vector.extract_strided_slice %298 {offsets = [0, 0], sizes = [8, 64], strides = [1, 1]} : vector<8x128xf32> to vector<8x64xf32>
    %c6_117 = arith.constant 6 : index
    %c0_118 = arith.constant 0 : index
    %c0_119 = arith.constant 0 : index
    %300 = vector.load %arg12[%c6_117, %c0_118, %c0_119] : memref<8x8x128xf32, #tpu.memory_space<vmem>>, vector<1x8x64xf32>
    %301 = vector.shape_cast %300 : vector<1x8x64xf32> to vector<8x64xf32>
    %302 = vector.shape_cast %299 : vector<8x64xf32> to vector<1x8x64xf32>
    tpu.vector_store %arg12[%c6_117, %c0_118, %c0_119], %302 {strides = array<i32>} : memref<8x8x128xf32, #tpu.memory_space<vmem>>, vector<1x8x64xf32>,
    %303 = vector.extract_strided_slice %298 {offsets = [0, 64], sizes = [8, 64], strides = [1, 1]} : vector<8x128xf32> to vector<8x64xf32>
    %c1_120 = arith.constant 1 : index
    %c0_121 = arith.constant 0 : index
    %c64_122 = arith.constant 64 : index
    %304 = vector.load %arg12[%c1_120, %c0_121, %c64_122] : memref<8x8x128xf32, #tpu.memory_space<vmem>>, vector<1x8x64xf32>
    %305 = vector.shape_cast %304 : vector<1x8x64xf32> to vector<8x64xf32>
    %306 = vector.shape_cast %303 : vector<8x64xf32> to vector<1x8x64xf32>
    tpu.vector_store %arg12[%c1_120, %c0_121, %c64_122], %306 {strides = array<i32>} : memref<8x8x128xf32, #tpu.memory_space<vmem>>, vector<1x8x64xf32>,
    %cst_123 = arith.constant dense<0.000000e+00> : vector<8x512xf32>
    %307 = tpu.matmul %298, %94, %cst_123 {dimension_numbers = #tpu.dot_dimension_numbers<[1], [0], [0], [1], [0, 0, 1, 1], [], []>} : vector<8x128xf32>, vector<128x512xf32>, vector<8x512xf32> -> vector<8x512xf32>
    %c7_124 = arith.constant 7 : index
    %c0_125 = arith.constant 0 : index
    %c0_126 = arith.constant 0 : index
    %308 = vector.load %arg14[%c7_124, %c0_125, %c0_126] : memref<8x8x512xf32, #tpu.memory_space<vmem>>, vector<1x8x512xf32>
    %309 = vector.shape_cast %308 : vector<1x8x512xf32> to vector<8x512xf32>
    %310 = arith.addf %307, %309 : vector<8x512xf32>
    %311 = vector.extract_strided_slice %310 {offsets = [0, 0], sizes = [8, 384], strides = [1, 1]} : vector<8x512xf32> to vector<8x384xf32>
    %cst_127 = arith.constant 5.000000e-01 : f32
    %312 = vector.broadcast %cst_127 : f32 to vector<8x384xf32>
    %313 = arith.mulf %312, %311 : vector<8x384xf32>
    %314 = math.tanh %313 : vector<8x384xf32>
    %cst_128 = arith.constant 5.000000e-01 : f32
    %315 = vector.broadcast %cst_128 : f32 to vector<8x384xf32>
    %316 = arith.mulf %315, %314 : vector<8x384xf32>
    %cst_129 = arith.constant 5.000000e-01 : f32
    %317 = vector.broadcast %cst_129 : f32 to vector<8x384xf32>
    %318 = arith.addf %316, %317 : vector<8x384xf32>
    %319 = vector.extract_strided_slice %310 {offsets = [0, 384], sizes = [8, 128], strides = [1, 1]} : vector<8x512xf32> to vector<8x128xf32>
    %320 = math.tanh %319 : vector<8x128xf32>
    %321 = vector.extract_strided_slice %318 {offsets = [0, 128], sizes = [8, 128], strides = [1, 1]} : vector<8x384xf32> to vector<8x128xf32>
    %322 = arith.mulf %321, %295 : vector<8x128xf32>
    %323 = vector.extract_strided_slice %318 {offsets = [0, 0], sizes = [8, 128], strides = [1, 1]} : vector<8x384xf32> to vector<8x128xf32>
    %324 = arith.mulf %323, %320 : vector<8x128xf32>
    %325 = arith.addf %322, %324 : vector<8x128xf32>
    %326 = vector.extract_strided_slice %318 {offsets = [0, 256], sizes = [8, 128], strides = [1, 1]} : vector<8x384xf32> to vector<8x128xf32>
    %327 = math.tanh %325 : vector<8x128xf32>
    %328 = arith.mulf %326, %327 : vector<8x128xf32>
    %329 = vector.extract_strided_slice %328 {offsets = [0, 0], sizes = [8, 64], strides = [1, 1]} : vector<8x128xf32> to vector<8x64xf32>
    %c7_130 = arith.constant 7 : index
    %c0_131 = arith.constant 0 : index
    %c0_132 = arith.constant 0 : index
    %330 = vector.load %arg12[%c7_130, %c0_131, %c0_132] : memref<8x8x128xf32, #tpu.memory_space<vmem>>, vector<1x8x64xf32>
    %331 = vector.shape_cast %330 : vector<1x8x64xf32> to vector<8x64xf32>
    %332 = vector.shape_cast %329 : vector<8x64xf32> to vector<1x8x64xf32>
    tpu.vector_store %arg12[%c7_130, %c0_131, %c0_132], %332 {strides = array<i32>} : memref<8x8x128xf32, #tpu.memory_space<vmem>>, vector<1x8x64xf32>,
    %333 = vector.extract_strided_slice %328 {offsets = [0, 64], sizes = [8, 64], strides = [1, 1]} : vector<8x128xf32> to vector<8x64xf32>
    %c0_133 = arith.constant 0 : index
    %c0_134 = arith.constant 0 : index
    %c64_135 = arith.constant 64 : index
    %334 = vector.load %arg12[%c0_133, %c0_134, %c64_135] : memref<8x8x128xf32, #tpu.memory_space<vmem>>, vector<1x8x64xf32>
    %335 = vector.shape_cast %334 : vector<1x8x64xf32> to vector<8x64xf32>
    %336 = vector.shape_cast %333 : vector<8x64xf32> to vector<1x8x64xf32>
    tpu.vector_store %arg12[%c0_133, %c0_134, %c64_135], %336 {strides = array<i32>} : memref<8x8x128xf32, #tpu.memory_space<vmem>>, vector<1x8x64xf32>,
    %c0_136 = arith.constant 0 : index
    %c0_137 = arith.constant 0 : index
    %c0_138 = arith.constant 0 : index
    %337 = vector.load %arg12[%c0_136, %c0_137, %c0_138] : memref<8x8x128xf32, #tpu.memory_space<vmem>>, vector<8x8x128xf32>
    %338 = vector.shape_cast %337 : vector<8x8x128xf32> to vector<64x128xf32>
    %c1_139 = arith.constant 1 : index
    %c0_140 = arith.constant 0 : index
    %c0_141 = arith.constant 0 : index
    %339 = vector.load %arg2[%c1_139, %c0_140, %c0_141] : memref<3x128x512xf32, #tpu.memory_space<vmem>>, vector<1x128x512xf32>
    %340 = vector.shape_cast %339 : vector<1x128x512xf32> to vector<128x512xf32>
    %cst_142 = arith.constant dense<0.000000e+00> : vector<64x512xf32>
    %341 = tpu.matmul %338, %340, %cst_142 {dimension_numbers = #tpu.dot_dimension_numbers<[1], [0], [0], [1], [0, 0, 1, 1], [], []>} : vector<64x128xf32>, vector<128x512xf32>, vector<64x512xf32> -> vector<64x512xf32>
    %c1_143 = arith.constant 1 : index
    %c0_144 = arith.constant 0 : index
    %c0_145 = arith.constant 0 : index
    %342 = vector.load %arg4[%c1_143, %c0_144, %c0_145] : memref<3x1x512xf32, #tpu.memory_space<vmem>>, vector<1x1x512xf32>
    %343 = vector.shape_cast %342 : vector<1x1x512xf32> to vector<1x512xf32>
    %344 = vector.broadcast %343 : vector<1x512xf32> to vector<64x512xf32>
    %345 = arith.addf %341, %344 : vector<64x512xf32>
    %346 = vector.shape_cast %345 : vector<64x512xf32> to vector<8x8x512xf32>
    %347 = vector.extract_strided_slice %346 {offsets = [7, 0, 0], sizes = [1, 8, 512], strides = [1, 1, 1]} : vector<8x8x512xf32> to vector<1x8x512xf32>
    %348 = vector.shape_cast %347 : vector<1x8x512xf32> to vector<8x512xf32>
    %349 = vector.extract_strided_slice %346 {offsets = [0, 0, 0], sizes = [1, 8, 512], strides = [1, 1, 1]} : vector<8x8x512xf32> to vector<1x8x512xf32>
    %350 = vector.shape_cast %349 : vector<1x8x512xf32> to vector<8x512xf32>
    %351 = arith.select %18, %348, %350 : vector<8x512xi1>, vector<8x512xf32>
    %c0_146 = arith.constant 0 : index
    %c0_147 = arith.constant 0 : index
    %c0_148 = arith.constant 0 : index
    %352 = vector.load %arg14[%c0_146, %c0_147, %c0_148] : memref<8x8x512xf32, #tpu.memory_space<vmem>>, vector<1x8x512xf32>
    %353 = vector.shape_cast %352 : vector<1x8x512xf32> to vector<8x512xf32>
    %354 = vector.shape_cast %351 : vector<8x512xf32> to vector<1x8x512xf32>
    tpu.vector_store %arg14[%c0_146, %c0_147, %c0_148], %354 {strides = array<i32>} : memref<8x8x512xf32, #tpu.memory_space<vmem>>, vector<1x8x512xf32>,
    %355 = vector.extract_strided_slice %346 {offsets = [6, 0, 0], sizes = [1, 8, 512], strides = [1, 1, 1]} : vector<8x8x512xf32> to vector<1x8x512xf32>
    %356 = vector.shape_cast %355 : vector<1x8x512xf32> to vector<8x512xf32>
    %357 = vector.extract_strided_slice %346 {offsets = [1, 0, 0], sizes = [1, 8, 512], strides = [1, 1, 1]} : vector<8x8x512xf32> to vector<1x8x512xf32>
    %358 = vector.shape_cast %357 : vector<1x8x512xf32> to vector<8x512xf32>
    %359 = arith.select %18, %356, %358 : vector<8x512xi1>, vector<8x512xf32>
    %c1_149 = arith.constant 1 : index
    %c0_150 = arith.constant 0 : index
    %c0_151 = arith.constant 0 : index
    %360 = vector.load %arg14[%c1_149, %c0_150, %c0_151] : memref<8x8x512xf32, #tpu.memory_space<vmem>>, vector<1x8x512xf32>
    %361 = vector.shape_cast %360 : vector<1x8x512xf32> to vector<8x512xf32>
    %362 = vector.shape_cast %359 : vector<8x512xf32> to vector<1x8x512xf32>
    tpu.vector_store %arg14[%c1_149, %c0_150, %c0_151], %362 {strides = array<i32>} : memref<8x8x512xf32, #tpu.memory_space<vmem>>, vector<1x8x512xf32>,
    %363 = vector.extract_strided_slice %346 {offsets = [5, 0, 0], sizes = [1, 8, 512], strides = [1, 1, 1]} : vector<8x8x512xf32> to vector<1x8x512xf32>
    %364 = vector.shape_cast %363 : vector<1x8x512xf32> to vector<8x512xf32>
    %365 = vector.extract_strided_slice %346 {offsets = [2, 0, 0], sizes = [1, 8, 512], strides = [1, 1, 1]} : vector<8x8x512xf32> to vector<1x8x512xf32>
    %366 = vector.shape_cast %365 : vector<1x8x512xf32> to vector<8x512xf32>
    %367 = arith.select %18, %364, %366 : vector<8x512xi1>, vector<8x512xf32>
    %c2_152 = arith.constant 2 : index
    %c0_153 = arith.constant 0 : index
    %c0_154 = arith.constant 0 : index
    %368 = vector.load %arg14[%c2_152, %c0_153, %c0_154] : memref<8x8x512xf32, #tpu.memory_space<vmem>>, vector<1x8x512xf32>
    %369 = vector.shape_cast %368 : vector<1x8x512xf32> to vector<8x512xf32>
    %370 = vector.shape_cast %367 : vector<8x512xf32> to vector<1x8x512xf32>
    tpu.vector_store %arg14[%c2_152, %c0_153, %c0_154], %370 {strides = array<i32>} : memref<8x8x512xf32, #tpu.memory_space<vmem>>, vector<1x8x512xf32>,
    %371 = vector.extract_strided_slice %346 {offsets = [4, 0, 0], sizes = [1, 8, 512], strides = [1, 1, 1]} : vector<8x8x512xf32> to vector<1x8x512xf32>
    %372 = vector.shape_cast %371 : vector<1x8x512xf32> to vector<8x512xf32>
    %373 = vector.extract_strided_slice %346 {offsets = [3, 0, 0], sizes = [1, 8, 512], strides = [1, 1, 1]} : vector<8x8x512xf32> to vector<1x8x512xf32>
    %374 = vector.shape_cast %373 : vector<1x8x512xf32> to vector<8x512xf32>
    %375 = arith.select %18, %372, %374 : vector<8x512xi1>, vector<8x512xf32>
    %c3_155 = arith.constant 3 : index
    %c0_156 = arith.constant 0 : index
    %c0_157 = arith.constant 0 : index
    %376 = vector.load %arg14[%c3_155, %c0_156, %c0_157] : memref<8x8x512xf32, #tpu.memory_space<vmem>>, vector<1x8x512xf32>
    %377 = vector.shape_cast %376 : vector<1x8x512xf32> to vector<8x512xf32>
    %378 = vector.shape_cast %375 : vector<8x512xf32> to vector<1x8x512xf32>
    tpu.vector_store %arg14[%c3_155, %c0_156, %c0_157], %378 {strides = array<i32>} : memref<8x8x512xf32, #tpu.memory_space<vmem>>, vector<1x8x512xf32>,
    %379 = vector.extract_strided_slice %346 {offsets = [3, 0, 0], sizes = [1, 8, 512], strides = [1, 1, 1]} : vector<8x8x512xf32> to vector<1x8x512xf32>
    %380 = vector.shape_cast %379 : vector<1x8x512xf32> to vector<8x512xf32>
    %381 = vector.extract_strided_slice %346 {offsets = [4, 0, 0], sizes = [1, 8, 512], strides = [1, 1, 1]} : vector<8x8x512xf32> to vector<1x8x512xf32>
    %382 = vector.shape_cast %381 : vector<1x8x512xf32> to vector<8x512xf32>
    %383 = arith.select %18, %380, %382 : vector<8x512xi1>, vector<8x512xf32>
    %c4_158 = arith.constant 4 : index
    %c0_159 = arith.constant 0 : index
    %c0_160 = arith.constant 0 : index
    %384 = vector.load %arg14[%c4_158, %c0_159, %c0_160] : memref<8x8x512xf32, #tpu.memory_space<vmem>>, vector<1x8x512xf32>
    %385 = vector.shape_cast %384 : vector<1x8x512xf32> to vector<8x512xf32>
    %386 = vector.shape_cast %383 : vector<8x512xf32> to vector<1x8x512xf32>
    tpu.vector_store %arg14[%c4_158, %c0_159, %c0_160], %386 {strides = array<i32>} : memref<8x8x512xf32, #tpu.memory_space<vmem>>, vector<1x8x512xf32>,
    %387 = vector.extract_strided_slice %346 {offsets = [2, 0, 0], sizes = [1, 8, 512], strides = [1, 1, 1]} : vector<8x8x512xf32> to vector<1x8x512xf32>
    %388 = vector.shape_cast %387 : vector<1x8x512xf32> to vector<8x512xf32>
    %389 = vector.extract_strided_slice %346 {offsets = [5, 0, 0], sizes = [1, 8, 512], strides = [1, 1, 1]} : vector<8x8x512xf32> to vector<1x8x512xf32>
    %390 = vector.shape_cast %389 : vector<1x8x512xf32> to vector<8x512xf32>
    %391 = arith.select %18, %388, %390 : vector<8x512xi1>, vector<8x512xf32>
    %c5_161 = arith.constant 5 : index
    %c0_162 = arith.constant 0 : index
    %c0_163 = arith.constant 0 : index
    %392 = vector.load %arg14[%c5_161, %c0_162, %c0_163] : memref<8x8x512xf32, #tpu.memory_space<vmem>>, vector<1x8x512xf32>
    %393 = vector.shape_cast %392 : vector<1x8x512xf32> to vector<8x512xf32>
    %394 = vector.shape_cast %391 : vector<8x512xf32> to vector<1x8x512xf32>
    tpu.vector_store %arg14[%c5_161, %c0_162, %c0_163], %394 {strides = array<i32>} : memref<8x8x512xf32, #tpu.memory_space<vmem>>, vector<1x8x512xf32>,
    %395 = vector.extract_strided_slice %346 {offsets = [1, 0, 0], sizes = [1, 8, 512], strides = [1, 1, 1]} : vector<8x8x512xf32> to vector<1x8x512xf32>
    %396 = vector.shape_cast %395 : vector<1x8x512xf32> to vector<8x512xf32>
    %397 = vector.extract_strided_slice %346 {offsets = [6, 0, 0], sizes = [1, 8, 512], strides = [1, 1, 1]} : vector<8x8x512xf32> to vector<1x8x512xf32>
    %398 = vector.shape_cast %397 : vector<1x8x512xf32> to vector<8x512xf32>
    %399 = arith.select %18, %396, %398 : vector<8x512xi1>, vector<8x512xf32>
    %c6_164 = arith.constant 6 : index
    %c0_165 = arith.constant 0 : index
    %c0_166 = arith.constant 0 : index
    %400 = vector.load %arg14[%c6_164, %c0_165, %c0_166] : memref<8x8x512xf32, #tpu.memory_space<vmem>>, vector<1x8x512xf32>
    %401 = vector.shape_cast %400 : vector<1x8x512xf32> to vector<8x512xf32>
    %402 = vector.shape_cast %399 : vector<8x512xf32> to vector<1x8x512xf32>
    tpu.vector_store %arg14[%c6_164, %c0_165, %c0_166], %402 {strides = array<i32>} : memref<8x8x512xf32, #tpu.memory_space<vmem>>, vector<1x8x512xf32>,
    %403 = vector.extract_strided_slice %346 {offsets = [0, 0, 0], sizes = [1, 8, 512], strides = [1, 1, 1]} : vector<8x8x512xf32> to vector<1x8x512xf32>
    %404 = vector.shape_cast %403 : vector<1x8x512xf32> to vector<8x512xf32>
    %405 = vector.extract_strided_slice %346 {offsets = [7, 0, 0], sizes = [1, 8, 512], strides = [1, 1, 1]} : vector<8x8x512xf32> to vector<1x8x512xf32>
    %406 = vector.shape_cast %405 : vector<1x8x512xf32> to vector<8x512xf32>
    %407 = arith.select %18, %404, %406 : vector<8x512xi1>, vector<8x512xf32>
    %c7_167 = arith.constant 7 : index
    %c0_168 = arith.constant 0 : index
    %c0_169 = arith.constant 0 : index
    %408 = vector.load %arg14[%c7_167, %c0_168, %c0_169] : memref<8x8x512xf32, #tpu.memory_space<vmem>>, vector<1x8x512xf32>
    %409 = vector.shape_cast %408 : vector<1x8x512xf32> to vector<8x512xf32>
    %410 = vector.shape_cast %407 : vector<8x512xf32> to vector<1x8x512xf32>
    tpu.vector_store %arg14[%c7_167, %c0_168, %c0_169], %410 {strides = array<i32>} : memref<8x8x512xf32, #tpu.memory_space<vmem>>, vector<1x8x512xf32>,
    %c1_170 = arith.constant 1 : index
    %c0_171 = arith.constant 0 : index
    %c0_172 = arith.constant 0 : index
    %411 = vector.load %arg3[%c1_170, %c0_171, %c0_172] : memref<3x128x512xf32, #tpu.memory_space<vmem>>, vector<1x128x512xf32>
    %412 = vector.shape_cast %411 : vector<1x128x512xf32> to vector<128x512xf32>
    %cst_173 = arith.constant 0.000000e+00 : f32
    %413 = vector.broadcast %cst_173 : f32 to vector<8x128xf32>
    %cst_174 = arith.constant 0.000000e+00 : f32
    %414 = vector.broadcast %cst_174 : f32 to vector<8x128xf32>
    %cst_175 = arith.constant dense<0.000000e+00> : vector<8x512xf32>
    %415 = tpu.matmul %413, %412, %cst_175 {dimension_numbers = #tpu.dot_dimension_numbers<[1], [0], [0], [1], [0, 0, 1, 1], [], []>} : vector<8x128xf32>, vector<128x512xf32>, vector<8x512xf32> -> vector<8x512xf32>
    %c0_176 = arith.constant 0 : index
    %c0_177 = arith.constant 0 : index
    %c0_178 = arith.constant 0 : index
    %416 = vector.load %arg14[%c0_176, %c0_177, %c0_178] : memref<8x8x512xf32, #tpu.memory_space<vmem>>, vector<1x8x512xf32>
    %417 = vector.shape_cast %416 : vector<1x8x512xf32> to vector<8x512xf32>
    %418 = arith.addf %415, %417 : vector<8x512xf32>
    %419 = vector.extract_strided_slice %418 {offsets = [0, 0], sizes = [8, 384], strides = [1, 1]} : vector<8x512xf32> to vector<8x384xf32>
    %cst_179 = arith.constant 5.000000e-01 : f32
    %420 = vector.broadcast %cst_179 : f32 to vector<8x384xf32>
    %421 = arith.mulf %420, %419 : vector<8x384xf32>
    %422 = math.tanh %421 : vector<8x384xf32>
    %cst_180 = arith.constant 5.000000e-01 : f32
    %423 = vector.broadcast %cst_180 : f32 to vector<8x384xf32>
    %424 = arith.mulf %423, %422 : vector<8x384xf32>
    %cst_181 = arith.constant 5.000000e-01 : f32
    %425 = vector.broadcast %cst_181 : f32 to vector<8x384xf32>
    %426 = arith.addf %424, %425 : vector<8x384xf32>
    %427 = vector.extract_strided_slice %418 {offsets = [0, 384], sizes = [8, 128], strides = [1, 1]} : vector<8x512xf32> to vector<8x128xf32>
    %428 = math.tanh %427 : vector<8x128xf32>
    %429 = vector.extract_strided_slice %426 {offsets = [0, 128], sizes = [8, 128], strides = [1, 1]} : vector<8x384xf32> to vector<8x128xf32>
    %430 = arith.mulf %429, %414 : vector<8x128xf32>
    %431 = vector.extract_strided_slice %426 {offsets = [0, 0], sizes = [8, 128], strides = [1, 1]} : vector<8x384xf32> to vector<8x128xf32>
    %432 = arith.mulf %431, %428 : vector<8x128xf32>
    %433 = arith.addf %430, %432 : vector<8x128xf32>
    %434 = vector.extract_strided_slice %426 {offsets = [0, 256], sizes = [8, 128], strides = [1, 1]} : vector<8x384xf32> to vector<8x128xf32>
    %435 = math.tanh %433 : vector<8x128xf32>
    %436 = arith.mulf %434, %435 : vector<8x128xf32>
    %437 = vector.extract_strided_slice %436 {offsets = [0, 0], sizes = [8, 64], strides = [1, 1]} : vector<8x128xf32> to vector<8x64xf32>
    %c0_182 = arith.constant 0 : index
    %c0_183 = arith.constant 0 : index
    %c0_184 = arith.constant 0 : index
    %438 = vector.load %arg13[%c0_182, %c0_183, %c0_184] : memref<8x8x128xf32, #tpu.memory_space<vmem>>, vector<1x8x64xf32>
    %439 = vector.shape_cast %438 : vector<1x8x64xf32> to vector<8x64xf32>
    %440 = vector.shape_cast %437 : vector<8x64xf32> to vector<1x8x64xf32>
    tpu.vector_store %arg13[%c0_182, %c0_183, %c0_184], %440 {strides = array<i32>} : memref<8x8x128xf32, #tpu.memory_space<vmem>>, vector<1x8x64xf32>,
    %441 = vector.extract_strided_slice %436 {offsets = [0, 64], sizes = [8, 64], strides = [1, 1]} : vector<8x128xf32> to vector<8x64xf32>
    %c7_185 = arith.constant 7 : index
    %c0_186 = arith.constant 0 : index
    %c64_187 = arith.constant 64 : index
    %442 = vector.load %arg13[%c7_185, %c0_186, %c64_187] : memref<8x8x128xf32, #tpu.memory_space<vmem>>, vector<1x8x64xf32>
    %443 = vector.shape_cast %442 : vector<1x8x64xf32> to vector<8x64xf32>
    %444 = vector.shape_cast %441 : vector<8x64xf32> to vector<1x8x64xf32>
    tpu.vector_store %arg13[%c7_185, %c0_186, %c64_187], %444 {strides = array<i32>} : memref<8x8x128xf32, #tpu.memory_space<vmem>>, vector<1x8x64xf32>,
    %cst_188 = arith.constant dense<0.000000e+00> : vector<8x512xf32>
    %445 = tpu.matmul %436, %412, %cst_188 {dimension_numbers = #tpu.dot_dimension_numbers<[1], [0], [0], [1], [0, 0, 1, 1], [], []>} : vector<8x128xf32>, vector<128x512xf32>, vector<8x512xf32> -> vector<8x512xf32>
    %c1_189 = arith.constant 1 : index
    %c0_190 = arith.constant 0 : index
    %c0_191 = arith.constant 0 : index
    %446 = vector.load %arg14[%c1_189, %c0_190, %c0_191] : memref<8x8x512xf32, #tpu.memory_space<vmem>>, vector<1x8x512xf32>
    %447 = vector.shape_cast %446 : vector<1x8x512xf32> to vector<8x512xf32>
    %448 = arith.addf %445, %447 : vector<8x512xf32>
    %449 = vector.extract_strided_slice %448 {offsets = [0, 0], sizes = [8, 384], strides = [1, 1]} : vector<8x512xf32> to vector<8x384xf32>
    %cst_192 = arith.constant 5.000000e-01 : f32
    %450 = vector.broadcast %cst_192 : f32 to vector<8x384xf32>
    %451 = arith.mulf %450, %449 : vector<8x384xf32>
    %452 = math.tanh %451 : vector<8x384xf32>
    %cst_193 = arith.constant 5.000000e-01 : f32
    %453 = vector.broadcast %cst_193 : f32 to vector<8x384xf32>
    %454 = arith.mulf %453, %452 : vector<8x384xf32>
    %cst_194 = arith.constant 5.000000e-01 : f32
    %455 = vector.broadcast %cst_194 : f32 to vector<8x384xf32>
    %456 = arith.addf %454, %455 : vector<8x384xf32>
    %457 = vector.extract_strided_slice %448 {offsets = [0, 384], sizes = [8, 128], strides = [1, 1]} : vector<8x512xf32> to vector<8x128xf32>
    %458 = math.tanh %457 : vector<8x128xf32>
    %459 = vector.extract_strided_slice %456 {offsets = [0, 128], sizes = [8, 128], strides = [1, 1]} : vector<8x384xf32> to vector<8x128xf32>
    %460 = arith.mulf %459, %433 : vector<8x128xf32>
    %461 = vector.extract_strided_slice %456 {offsets = [0, 0], sizes = [8, 128], strides = [1, 1]} : vector<8x384xf32> to vector<8x128xf32>
    %462 = arith.mulf %461, %458 : vector<8x128xf32>
    %463 = arith.addf %460, %462 : vector<8x128xf32>
    %464 = vector.extract_strided_slice %456 {offsets = [0, 256], sizes = [8, 128], strides = [1, 1]} : vector<8x384xf32> to vector<8x128xf32>
    %465 = math.tanh %463 : vector<8x128xf32>
    %466 = arith.mulf %464, %465 : vector<8x128xf32>
    %467 = vector.extract_strided_slice %466 {offsets = [0, 0], sizes = [8, 64], strides = [1, 1]} : vector<8x128xf32> to vector<8x64xf32>
    %c1_195 = arith.constant 1 : index
    %c0_196 = arith.constant 0 : index
    %c0_197 = arith.constant 0 : index
    %468 = vector.load %arg13[%c1_195, %c0_196, %c0_197] : memref<8x8x128xf32, #tpu.memory_space<vmem>>, vector<1x8x64xf32>
    %469 = vector.shape_cast %468 : vector<1x8x64xf32> to vector<8x64xf32>
    %470 = vector.shape_cast %467 : vector<8x64xf32> to vector<1x8x64xf32>
    tpu.vector_store %arg13[%c1_195, %c0_196, %c0_197], %470 {strides = array<i32>} : memref<8x8x128xf32, #tpu.memory_space<vmem>>, vector<1x8x64xf32>,
    %471 = vector.extract_strided_slice %466 {offsets = [0, 64], sizes = [8, 64], strides = [1, 1]} : vector<8x128xf32> to vector<8x64xf32>
    %c6_198 = arith.constant 6 : index
    %c0_199 = arith.constant 0 : index
    %c64_200 = arith.constant 64 : index
    %472 = vector.load %arg13[%c6_198, %c0_199, %c64_200] : memref<8x8x128xf32, #tpu.memory_space<vmem>>, vector<1x8x64xf32>
    %473 = vector.shape_cast %472 : vector<1x8x64xf32> to vector<8x64xf32>
    %474 = vector.shape_cast %471 : vector<8x64xf32> to vector<1x8x64xf32>
    tpu.vector_store %arg13[%c6_198, %c0_199, %c64_200], %474 {strides = array<i32>} : memref<8x8x128xf32, #tpu.memory_space<vmem>>, vector<1x8x64xf32>,
    %cst_201 = arith.constant dense<0.000000e+00> : vector<8x512xf32>
    %475 = tpu.matmul %466, %412, %cst_201 {dimension_numbers = #tpu.dot_dimension_numbers<[1], [0], [0], [1], [0, 0, 1, 1], [], []>} : vector<8x128xf32>, vector<128x512xf32>, vector<8x512xf32> -> vector<8x512xf32>
    %c2_202 = arith.constant 2 : index
    %c0_203 = arith.constant 0 : index
    %c0_204 = arith.constant 0 : index
    %476 = vector.load %arg14[%c2_202, %c0_203, %c0_204] : memref<8x8x512xf32, #tpu.memory_space<vmem>>, vector<1x8x512xf32>
    %477 = vector.shape_cast %476 : vector<1x8x512xf32> to vector<8x512xf32>
    %478 = arith.addf %475, %477 : vector<8x512xf32>
    %479 = vector.extract_strided_slice %478 {offsets = [0, 0], sizes = [8, 384], strides = [1, 1]} : vector<8x512xf32> to vector<8x384xf32>
    %cst_205 = arith.constant 5.000000e-01 : f32
    %480 = vector.broadcast %cst_205 : f32 to vector<8x384xf32>
    %481 = arith.mulf %480, %479 : vector<8x384xf32>
    %482 = math.tanh %481 : vector<8x384xf32>
    %cst_206 = arith.constant 5.000000e-01 : f32
    %483 = vector.broadcast %cst_206 : f32 to vector<8x384xf32>
    %484 = arith.mulf %483, %482 : vector<8x384xf32>
    %cst_207 = arith.constant 5.000000e-01 : f32
    %485 = vector.broadcast %cst_207 : f32 to vector<8x384xf32>
    %486 = arith.addf %484, %485 : vector<8x384xf32>
    %487 = vector.extract_strided_slice %478 {offsets = [0, 384], sizes = [8, 128], strides = [1, 1]} : vector<8x512xf32> to vector<8x128xf32>
    %488 = math.tanh %487 : vector<8x128xf32>
    %489 = vector.extract_strided_slice %486 {offsets = [0, 128], sizes = [8, 128], strides = [1, 1]} : vector<8x384xf32> to vector<8x128xf32>
    %490 = arith.mulf %489, %463 : vector<8x128xf32>
    %491 = vector.extract_strided_slice %486 {offsets = [0, 0], sizes = [8, 128], strides = [1, 1]} : vector<8x384xf32> to vector<8x128xf32>
    %492 = arith.mulf %491, %488 : vector<8x128xf32>
    %493 = arith.addf %490, %492 : vector<8x128xf32>
    %494 = vector.extract_strided_slice %486 {offsets = [0, 256], sizes = [8, 128], strides = [1, 1]} : vector<8x384xf32> to vector<8x128xf32>
    %495 = math.tanh %493 : vector<8x128xf32>
    %496 = arith.mulf %494, %495 : vector<8x128xf32>
    %497 = vector.extract_strided_slice %496 {offsets = [0, 0], sizes = [8, 64], strides = [1, 1]} : vector<8x128xf32> to vector<8x64xf32>
    %c2_208 = arith.constant 2 : index
    %c0_209 = arith.constant 0 : index
    %c0_210 = arith.constant 0 : index
    %498 = vector.load %arg13[%c2_208, %c0_209, %c0_210] : memref<8x8x128xf32, #tpu.memory_space<vmem>>, vector<1x8x64xf32>
    %499 = vector.shape_cast %498 : vector<1x8x64xf32> to vector<8x64xf32>
    %500 = vector.shape_cast %497 : vector<8x64xf32> to vector<1x8x64xf32>
    tpu.vector_store %arg13[%c2_208, %c0_209, %c0_210], %500 {strides = array<i32>} : memref<8x8x128xf32, #tpu.memory_space<vmem>>, vector<1x8x64xf32>,
    %501 = vector.extract_strided_slice %496 {offsets = [0, 64], sizes = [8, 64], strides = [1, 1]} : vector<8x128xf32> to vector<8x64xf32>
    %c5_211 = arith.constant 5 : index
    %c0_212 = arith.constant 0 : index
    %c64_213 = arith.constant 64 : index
    %502 = vector.load %arg13[%c5_211, %c0_212, %c64_213] : memref<8x8x128xf32, #tpu.memory_space<vmem>>, vector<1x8x64xf32>
    %503 = vector.shape_cast %502 : vector<1x8x64xf32> to vector<8x64xf32>
    %504 = vector.shape_cast %501 : vector<8x64xf32> to vector<1x8x64xf32>
    tpu.vector_store %arg13[%c5_211, %c0_212, %c64_213], %504 {strides = array<i32>} : memref<8x8x128xf32, #tpu.memory_space<vmem>>, vector<1x8x64xf32>,
    %cst_214 = arith.constant dense<0.000000e+00> : vector<8x512xf32>
    %505 = tpu.matmul %496, %412, %cst_214 {dimension_numbers = #tpu.dot_dimension_numbers<[1], [0], [0], [1], [0, 0, 1, 1], [], []>} : vector<8x128xf32>, vector<128x512xf32>, vector<8x512xf32> -> vector<8x512xf32>
    %c3_215 = arith.constant 3 : index
    %c0_216 = arith.constant 0 : index
    %c0_217 = arith.constant 0 : index
    %506 = vector.load %arg14[%c3_215, %c0_216, %c0_217] : memref<8x8x512xf32, #tpu.memory_space<vmem>>, vector<1x8x512xf32>
    %507 = vector.shape_cast %506 : vector<1x8x512xf32> to vector<8x512xf32>
    %508 = arith.addf %505, %507 : vector<8x512xf32>
    %509 = vector.extract_strided_slice %508 {offsets = [0, 0], sizes = [8, 384], strides = [1, 1]} : vector<8x512xf32> to vector<8x384xf32>
    %cst_218 = arith.constant 5.000000e-01 : f32
    %510 = vector.broadcast %cst_218 : f32 to vector<8x384xf32>
    %511 = arith.mulf %510, %509 : vector<8x384xf32>
    %512 = math.tanh %511 : vector<8x384xf32>
    %cst_219 = arith.constant 5.000000e-01 : f32
    %513 = vector.broadcast %cst_219 : f32 to vector<8x384xf32>
    %514 = arith.mulf %513, %512 : vector<8x384xf32>
    %cst_220 = arith.constant 5.000000e-01 : f32
    %515 = vector.broadcast %cst_220 : f32 to vector<8x384xf32>
    %516 = arith.addf %514, %515 : vector<8x384xf32>
    %517 = vector.extract_strided_slice %508 {offsets = [0, 384], sizes = [8, 128], strides = [1, 1]} : vector<8x512xf32> to vector<8x128xf32>
    %518 = math.tanh %517 : vector<8x128xf32>
    %519 = vector.extract_strided_slice %516 {offsets = [0, 128], sizes = [8, 128], strides = [1, 1]} : vector<8x384xf32> to vector<8x128xf32>
    %520 = arith.mulf %519, %493 : vector<8x128xf32>
    %521 = vector.extract_strided_slice %516 {offsets = [0, 0], sizes = [8, 128], strides = [1, 1]} : vector<8x384xf32> to vector<8x128xf32>
    %522 = arith.mulf %521, %518 : vector<8x128xf32>
    %523 = arith.addf %520, %522 : vector<8x128xf32>
    %524 = vector.extract_strided_slice %516 {offsets = [0, 256], sizes = [8, 128], strides = [1, 1]} : vector<8x384xf32> to vector<8x128xf32>
    %525 = math.tanh %523 : vector<8x128xf32>
    %526 = arith.mulf %524, %525 : vector<8x128xf32>
    %527 = vector.extract_strided_slice %526 {offsets = [0, 0], sizes = [8, 64], strides = [1, 1]} : vector<8x128xf32> to vector<8x64xf32>
    %c3_221 = arith.constant 3 : index
    %c0_222 = arith.constant 0 : index
    %c0_223 = arith.constant 0 : index
    %528 = vector.load %arg13[%c3_221, %c0_222, %c0_223] : memref<8x8x128xf32, #tpu.memory_space<vmem>>, vector<1x8x64xf32>
    %529 = vector.shape_cast %528 : vector<1x8x64xf32> to vector<8x64xf32>
    %530 = vector.shape_cast %527 : vector<8x64xf32> to vector<1x8x64xf32>
    tpu.vector_store %arg13[%c3_221, %c0_222, %c0_223], %530 {strides = array<i32>} : memref<8x8x128xf32, #tpu.memory_space<vmem>>, vector<1x8x64xf32>,
    %531 = vector.extract_strided_slice %526 {offsets = [0, 64], sizes = [8, 64], strides = [1, 1]} : vector<8x128xf32> to vector<8x64xf32>
    %c4_224 = arith.constant 4 : index
    %c0_225 = arith.constant 0 : index
    %c64_226 = arith.constant 64 : index
    %532 = vector.load %arg13[%c4_224, %c0_225, %c64_226] : memref<8x8x128xf32, #tpu.memory_space<vmem>>, vector<1x8x64xf32>
    %533 = vector.shape_cast %532 : vector<1x8x64xf32> to vector<8x64xf32>
    %534 = vector.shape_cast %531 : vector<8x64xf32> to vector<1x8x64xf32>
    tpu.vector_store %arg13[%c4_224, %c0_225, %c64_226], %534 {strides = array<i32>} : memref<8x8x128xf32, #tpu.memory_space<vmem>>, vector<1x8x64xf32>,
    %cst_227 = arith.constant dense<0.000000e+00> : vector<8x512xf32>
    %535 = tpu.matmul %526, %412, %cst_227 {dimension_numbers = #tpu.dot_dimension_numbers<[1], [0], [0], [1], [0, 0, 1, 1], [], []>} : vector<8x128xf32>, vector<128x512xf32>, vector<8x512xf32> -> vector<8x512xf32>
    %c4_228 = arith.constant 4 : index
    %c0_229 = arith.constant 0 : index
    %c0_230 = arith.constant 0 : index
    %536 = vector.load %arg14[%c4_228, %c0_229, %c0_230] : memref<8x8x512xf32, #tpu.memory_space<vmem>>, vector<1x8x512xf32>
    %537 = vector.shape_cast %536 : vector<1x8x512xf32> to vector<8x512xf32>
    %538 = arith.addf %535, %537 : vector<8x512xf32>
    %539 = vector.extract_strided_slice %538 {offsets = [0, 0], sizes = [8, 384], strides = [1, 1]} : vector<8x512xf32> to vector<8x384xf32>
    %cst_231 = arith.constant 5.000000e-01 : f32
    %540 = vector.broadcast %cst_231 : f32 to vector<8x384xf32>
    %541 = arith.mulf %540, %539 : vector<8x384xf32>
    %542 = math.tanh %541 : vector<8x384xf32>
    %cst_232 = arith.constant 5.000000e-01 : f32
    %543 = vector.broadcast %cst_232 : f32 to vector<8x384xf32>
    %544 = arith.mulf %543, %542 : vector<8x384xf32>
    %cst_233 = arith.constant 5.000000e-01 : f32
    %545 = vector.broadcast %cst_233 : f32 to vector<8x384xf32>
    %546 = arith.addf %544, %545 : vector<8x384xf32>
    %547 = vector.extract_strided_slice %538 {offsets = [0, 384], sizes = [8, 128], strides = [1, 1]} : vector<8x512xf32> to vector<8x128xf32>
    %548 = math.tanh %547 : vector<8x128xf32>
    %549 = vector.extract_strided_slice %546 {offsets = [0, 128], sizes = [8, 128], strides = [1, 1]} : vector<8x384xf32> to vector<8x128xf32>
    %550 = arith.mulf %549, %523 : vector<8x128xf32>
    %551 = vector.extract_strided_slice %546 {offsets = [0, 0], sizes = [8, 128], strides = [1, 1]} : vector<8x384xf32> to vector<8x128xf32>
    %552 = arith.mulf %551, %548 : vector<8x128xf32>
    %553 = arith.addf %550, %552 : vector<8x128xf32>
    %554 = vector.extract_strided_slice %546 {offsets = [0, 256], sizes = [8, 128], strides = [1, 1]} : vector<8x384xf32> to vector<8x128xf32>
    %555 = math.tanh %553 : vector<8x128xf32>
    %556 = arith.mulf %554, %555 : vector<8x128xf32>
    %557 = vector.extract_strided_slice %556 {offsets = [0, 0], sizes = [8, 64], strides = [1, 1]} : vector<8x128xf32> to vector<8x64xf32>
    %c4_234 = arith.constant 4 : index
    %c0_235 = arith.constant 0 : index
    %c0_236 = arith.constant 0 : index
    %558 = vector.load %arg13[%c4_234, %c0_235, %c0_236] : memref<8x8x128xf32, #tpu.memory_space<vmem>>, vector<1x8x64xf32>
    %559 = vector.shape_cast %558 : vector<1x8x64xf32> to vector<8x64xf32>
    %560 = vector.shape_cast %557 : vector<8x64xf32> to vector<1x8x64xf32>
    tpu.vector_store %arg13[%c4_234, %c0_235, %c0_236], %560 {strides = array<i32>} : memref<8x8x128xf32, #tpu.memory_space<vmem>>, vector<1x8x64xf32>,
    %561 = vector.extract_strided_slice %556 {offsets = [0, 64], sizes = [8, 64], strides = [1, 1]} : vector<8x128xf32> to vector<8x64xf32>
    %c3_237 = arith.constant 3 : index
    %c0_238 = arith.constant 0 : index
    %c64_239 = arith.constant 64 : index
    %562 = vector.load %arg13[%c3_237, %c0_238, %c64_239] : memref<8x8x128xf32, #tpu.memory_space<vmem>>, vector<1x8x64xf32>
    %563 = vector.shape_cast %562 : vector<1x8x64xf32> to vector<8x64xf32>
    %564 = vector.shape_cast %561 : vector<8x64xf32> to vector<1x8x64xf32>
    tpu.vector_store %arg13[%c3_237, %c0_238, %c64_239], %564 {strides = array<i32>} : memref<8x8x128xf32, #tpu.memory_space<vmem>>, vector<1x8x64xf32>,
    %cst_240 = arith.constant dense<0.000000e+00> : vector<8x512xf32>
    %565 = tpu.matmul %556, %412, %cst_240 {dimension_numbers = #tpu.dot_dimension_numbers<[1], [0], [0], [1], [0, 0, 1, 1], [], []>} : vector<8x128xf32>, vector<128x512xf32>, vector<8x512xf32> -> vector<8x512xf32>
    %c5_241 = arith.constant 5 : index
    %c0_242 = arith.constant 0 : index
    %c0_243 = arith.constant 0 : index
    %566 = vector.load %arg14[%c5_241, %c0_242, %c0_243] : memref<8x8x512xf32, #tpu.memory_space<vmem>>, vector<1x8x512xf32>
    %567 = vector.shape_cast %566 : vector<1x8x512xf32> to vector<8x512xf32>
    %568 = arith.addf %565, %567 : vector<8x512xf32>
    %569 = vector.extract_strided_slice %568 {offsets = [0, 0], sizes = [8, 384], strides = [1, 1]} : vector<8x512xf32> to vector<8x384xf32>
    %cst_244 = arith.constant 5.000000e-01 : f32
    %570 = vector.broadcast %cst_244 : f32 to vector<8x384xf32>
    %571 = arith.mulf %570, %569 : vector<8x384xf32>
    %572 = math.tanh %571 : vector<8x384xf32>
    %cst_245 = arith.constant 5.000000e-01 : f32
    %573 = vector.broadcast %cst_245 : f32 to vector<8x384xf32>
    %574 = arith.mulf %573, %572 : vector<8x384xf32>
    %cst_246 = arith.constant 5.000000e-01 : f32
    %575 = vector.broadcast %cst_246 : f32 to vector<8x384xf32>
    %576 = arith.addf %574, %575 : vector<8x384xf32>
    %577 = vector.extract_strided_slice %568 {offsets = [0, 384], sizes = [8, 128], strides = [1, 1]} : vector<8x512xf32> to vector<8x128xf32>
    %578 = math.tanh %577 : vector<8x128xf32>
    %579 = vector.extract_strided_slice %576 {offsets = [0, 128], sizes = [8, 128], strides = [1, 1]} : vector<8x384xf32> to vector<8x128xf32>
    %580 = arith.mulf %579, %553 : vector<8x128xf32>
    %581 = vector.extract_strided_slice %576 {offsets = [0, 0], sizes = [8, 128], strides = [1, 1]} : vector<8x384xf32> to vector<8x128xf32>
    %582 = arith.mulf %581, %578 : vector<8x128xf32>
    %583 = arith.addf %580, %582 : vector<8x128xf32>
    %584 = vector.extract_strided_slice %576 {offsets = [0, 256], sizes = [8, 128], strides = [1, 1]} : vector<8x384xf32> to vector<8x128xf32>
    %585 = math.tanh %583 : vector<8x128xf32>
    %586 = arith.mulf %584, %585 : vector<8x128xf32>
    %587 = vector.extract_strided_slice %586 {offsets = [0, 0], sizes = [8, 64], strides = [1, 1]} : vector<8x128xf32> to vector<8x64xf32>
    %c5_247 = arith.constant 5 : index
    %c0_248 = arith.constant 0 : index
    %c0_249 = arith.constant 0 : index
    %588 = vector.load %arg13[%c5_247, %c0_248, %c0_249] : memref<8x8x128xf32, #tpu.memory_space<vmem>>, vector<1x8x64xf32>
    %589 = vector.shape_cast %588 : vector<1x8x64xf32> to vector<8x64xf32>
    %590 = vector.shape_cast %587 : vector<8x64xf32> to vector<1x8x64xf32>
    tpu.vector_store %arg13[%c5_247, %c0_248, %c0_249], %590 {strides = array<i32>} : memref<8x8x128xf32, #tpu.memory_space<vmem>>, vector<1x8x64xf32>,
    %591 = vector.extract_strided_slice %586 {offsets = [0, 64], sizes = [8, 64], strides = [1, 1]} : vector<8x128xf32> to vector<8x64xf32>
    %c2_250 = arith.constant 2 : index
    %c0_251 = arith.constant 0 : index
    %c64_252 = arith.constant 64 : index
    %592 = vector.load %arg13[%c2_250, %c0_251, %c64_252] : memref<8x8x128xf32, #tpu.memory_space<vmem>>, vector<1x8x64xf32>
    %593 = vector.shape_cast %592 : vector<1x8x64xf32> to vector<8x64xf32>
    %594 = vector.shape_cast %591 : vector<8x64xf32> to vector<1x8x64xf32>
    tpu.vector_store %arg13[%c2_250, %c0_251, %c64_252], %594 {strides = array<i32>} : memref<8x8x128xf32, #tpu.memory_space<vmem>>, vector<1x8x64xf32>,
    %cst_253 = arith.constant dense<0.000000e+00> : vector<8x512xf32>
    %595 = tpu.matmul %586, %412, %cst_253 {dimension_numbers = #tpu.dot_dimension_numbers<[1], [0], [0], [1], [0, 0, 1, 1], [], []>} : vector<8x128xf32>, vector<128x512xf32>, vector<8x512xf32> -> vector<8x512xf32>
    %c6_254 = arith.constant 6 : index
    %c0_255 = arith.constant 0 : index
    %c0_256 = arith.constant 0 : index
    %596 = vector.load %arg14[%c6_254, %c0_255, %c0_256] : memref<8x8x512xf32, #tpu.memory_space<vmem>>, vector<1x8x512xf32>
    %597 = vector.shape_cast %596 : vector<1x8x512xf32> to vector<8x512xf32>
    %598 = arith.addf %595, %597 : vector<8x512xf32>
    %599 = vector.extract_strided_slice %598 {offsets = [0, 0], sizes = [8, 384], strides = [1, 1]} : vector<8x512xf32> to vector<8x384xf32>
    %cst_257 = arith.constant 5.000000e-01 : f32
    %600 = vector.broadcast %cst_257 : f32 to vector<8x384xf32>
    %601 = arith.mulf %600, %599 : vector<8x384xf32>
    %602 = math.tanh %601 : vector<8x384xf32>
    %cst_258 = arith.constant 5.000000e-01 : f32
    %603 = vector.broadcast %cst_258 : f32 to vector<8x384xf32>
    %604 = arith.mulf %603, %602 : vector<8x384xf32>
    %cst_259 = arith.constant 5.000000e-01 : f32
    %605 = vector.broadcast %cst_259 : f32 to vector<8x384xf32>
    %606 = arith.addf %604, %605 : vector<8x384xf32>
    %607 = vector.extract_strided_slice %598 {offsets = [0, 384], sizes = [8, 128], strides = [1, 1]} : vector<8x512xf32> to vector<8x128xf32>
    %608 = math.tanh %607 : vector<8x128xf32>
    %609 = vector.extract_strided_slice %606 {offsets = [0, 128], sizes = [8, 128], strides = [1, 1]} : vector<8x384xf32> to vector<8x128xf32>
    %610 = arith.mulf %609, %583 : vector<8x128xf32>
    %611 = vector.extract_strided_slice %606 {offsets = [0, 0], sizes = [8, 128], strides = [1, 1]} : vector<8x384xf32> to vector<8x128xf32>
    %612 = arith.mulf %611, %608 : vector<8x128xf32>
    %613 = arith.addf %610, %612 : vector<8x128xf32>
    %614 = vector.extract_strided_slice %606 {offsets = [0, 256], sizes = [8, 128], strides = [1, 1]} : vector<8x384xf32> to vector<8x128xf32>
    %615 = math.tanh %613 : vector<8x128xf32>
    %616 = arith.mulf %614, %615 : vector<8x128xf32>
    %617 = vector.extract_strided_slice %616 {offsets = [0, 0], sizes = [8, 64], strides = [1, 1]} : vector<8x128xf32> to vector<8x64xf32>
    %c6_260 = arith.constant 6 : index
    %c0_261 = arith.constant 0 : index
    %c0_262 = arith.constant 0 : index
    %618 = vector.load %arg13[%c6_260, %c0_261, %c0_262] : memref<8x8x128xf32, #tpu.memory_space<vmem>>, vector<1x8x64xf32>
    %619 = vector.shape_cast %618 : vector<1x8x64xf32> to vector<8x64xf32>
    %620 = vector.shape_cast %617 : vector<8x64xf32> to vector<1x8x64xf32>
    tpu.vector_store %arg13[%c6_260, %c0_261, %c0_262], %620 {strides = array<i32>} : memref<8x8x128xf32, #tpu.memory_space<vmem>>, vector<1x8x64xf32>,
    %621 = vector.extract_strided_slice %616 {offsets = [0, 64], sizes = [8, 64], strides = [1, 1]} : vector<8x128xf32> to vector<8x64xf32>
    %c1_263 = arith.constant 1 : index
    %c0_264 = arith.constant 0 : index
    %c64_265 = arith.constant 64 : index
    %622 = vector.load %arg13[%c1_263, %c0_264, %c64_265] : memref<8x8x128xf32, #tpu.memory_space<vmem>>, vector<1x8x64xf32>
    %623 = vector.shape_cast %622 : vector<1x8x64xf32> to vector<8x64xf32>
    %624 = vector.shape_cast %621 : vector<8x64xf32> to vector<1x8x64xf32>
    tpu.vector_store %arg13[%c1_263, %c0_264, %c64_265], %624 {strides = array<i32>} : memref<8x8x128xf32, #tpu.memory_space<vmem>>, vector<1x8x64xf32>,
    %cst_266 = arith.constant dense<0.000000e+00> : vector<8x512xf32>
    %625 = tpu.matmul %616, %412, %cst_266 {dimension_numbers = #tpu.dot_dimension_numbers<[1], [0], [0], [1], [0, 0, 1, 1], [], []>} : vector<8x128xf32>, vector<128x512xf32>, vector<8x512xf32> -> vector<8x512xf32>
    %c7_267 = arith.constant 7 : index
    %c0_268 = arith.constant 0 : index
    %c0_269 = arith.constant 0 : index
    %626 = vector.load %arg14[%c7_267, %c0_268, %c0_269] : memref<8x8x512xf32, #tpu.memory_space<vmem>>, vector<1x8x512xf32>
    %627 = vector.shape_cast %626 : vector<1x8x512xf32> to vector<8x512xf32>
    %628 = arith.addf %625, %627 : vector<8x512xf32>
    %629 = vector.extract_strided_slice %628 {offsets = [0, 0], sizes = [8, 384], strides = [1, 1]} : vector<8x512xf32> to vector<8x384xf32>
    %cst_270 = arith.constant 5.000000e-01 : f32
    %630 = vector.broadcast %cst_270 : f32 to vector<8x384xf32>
    %631 = arith.mulf %630, %629 : vector<8x384xf32>
    %632 = math.tanh %631 : vector<8x384xf32>
    %cst_271 = arith.constant 5.000000e-01 : f32
    %633 = vector.broadcast %cst_271 : f32 to vector<8x384xf32>
    %634 = arith.mulf %633, %632 : vector<8x384xf32>
    %cst_272 = arith.constant 5.000000e-01 : f32
    %635 = vector.broadcast %cst_272 : f32 to vector<8x384xf32>
    %636 = arith.addf %634, %635 : vector<8x384xf32>
    %637 = vector.extract_strided_slice %628 {offsets = [0, 384], sizes = [8, 128], strides = [1, 1]} : vector<8x512xf32> to vector<8x128xf32>
    %638 = math.tanh %637 : vector<8x128xf32>
    %639 = vector.extract_strided_slice %636 {offsets = [0, 128], sizes = [8, 128], strides = [1, 1]} : vector<8x384xf32> to vector<8x128xf32>
    %640 = arith.mulf %639, %613 : vector<8x128xf32>
    %641 = vector.extract_strided_slice %636 {offsets = [0, 0], sizes = [8, 128], strides = [1, 1]} : vector<8x384xf32> to vector<8x128xf32>
    %642 = arith.mulf %641, %638 : vector<8x128xf32>
    %643 = arith.addf %640, %642 : vector<8x128xf32>
    %644 = vector.extract_strided_slice %636 {offsets = [0, 256], sizes = [8, 128], strides = [1, 1]} : vector<8x384xf32> to vector<8x128xf32>
    %645 = math.tanh %643 : vector<8x128xf32>
    %646 = arith.mulf %644, %645 : vector<8x128xf32>
    %647 = vector.extract_strided_slice %646 {offsets = [0, 0], sizes = [8, 64], strides = [1, 1]} : vector<8x128xf32> to vector<8x64xf32>
    %c7_273 = arith.constant 7 : index
    %c0_274 = arith.constant 0 : index
    %c0_275 = arith.constant 0 : index
    %648 = vector.load %arg13[%c7_273, %c0_274, %c0_275] : memref<8x8x128xf32, #tpu.memory_space<vmem>>, vector<1x8x64xf32>
    %649 = vector.shape_cast %648 : vector<1x8x64xf32> to vector<8x64xf32>
    %650 = vector.shape_cast %647 : vector<8x64xf32> to vector<1x8x64xf32>
    tpu.vector_store %arg13[%c7_273, %c0_274, %c0_275], %650 {strides = array<i32>} : memref<8x8x128xf32, #tpu.memory_space<vmem>>, vector<1x8x64xf32>,
    %651 = vector.extract_strided_slice %646 {offsets = [0, 64], sizes = [8, 64], strides = [1, 1]} : vector<8x128xf32> to vector<8x64xf32>
    %c0_276 = arith.constant 0 : index
    %c0_277 = arith.constant 0 : index
    %c64_278 = arith.constant 64 : index
    %652 = vector.load %arg13[%c0_276, %c0_277, %c64_278] : memref<8x8x128xf32, #tpu.memory_space<vmem>>, vector<1x8x64xf32>
    %653 = vector.shape_cast %652 : vector<1x8x64xf32> to vector<8x64xf32>
    %654 = vector.shape_cast %651 : vector<8x64xf32> to vector<1x8x64xf32>
    tpu.vector_store %arg13[%c0_276, %c0_277, %c64_278], %654 {strides = array<i32>} : memref<8x8x128xf32, #tpu.memory_space<vmem>>, vector<1x8x64xf32>,
    %c0_279 = arith.constant 0 : index
    %c0_280 = arith.constant 0 : index
    %c0_281 = arith.constant 0 : index
    %655 = vector.load %arg13[%c0_279, %c0_280, %c0_281] : memref<8x8x128xf32, #tpu.memory_space<vmem>>, vector<8x8x128xf32>
    %656 = vector.shape_cast %655 : vector<8x8x128xf32> to vector<64x128xf32>
    %c2_282 = arith.constant 2 : index
    %c0_283 = arith.constant 0 : index
    %c0_284 = arith.constant 0 : index
    %657 = vector.load %arg2[%c2_282, %c0_283, %c0_284] : memref<3x128x512xf32, #tpu.memory_space<vmem>>, vector<1x128x512xf32>
    %658 = vector.shape_cast %657 : vector<1x128x512xf32> to vector<128x512xf32>
    %cst_285 = arith.constant dense<0.000000e+00> : vector<64x512xf32>
    %659 = tpu.matmul %656, %658, %cst_285 {dimension_numbers = #tpu.dot_dimension_numbers<[1], [0], [0], [1], [0, 0, 1, 1], [], []>} : vector<64x128xf32>, vector<128x512xf32>, vector<64x512xf32> -> vector<64x512xf32>
    %c2_286 = arith.constant 2 : index
    %c0_287 = arith.constant 0 : index
    %c0_288 = arith.constant 0 : index
    %660 = vector.load %arg4[%c2_286, %c0_287, %c0_288] : memref<3x1x512xf32, #tpu.memory_space<vmem>>, vector<1x1x512xf32>
    %661 = vector.shape_cast %660 : vector<1x1x512xf32> to vector<1x512xf32>
    %662 = vector.broadcast %661 : vector<1x512xf32> to vector<64x512xf32>
    %663 = arith.addf %659, %662 : vector<64x512xf32>
    %664 = vector.shape_cast %663 : vector<64x512xf32> to vector<8x8x512xf32>
    %665 = vector.extract_strided_slice %664 {offsets = [7, 0, 0], sizes = [1, 8, 512], strides = [1, 1, 1]} : vector<8x8x512xf32> to vector<1x8x512xf32>
    %666 = vector.shape_cast %665 : vector<1x8x512xf32> to vector<8x512xf32>
    %667 = vector.extract_strided_slice %664 {offsets = [0, 0, 0], sizes = [1, 8, 512], strides = [1, 1, 1]} : vector<8x8x512xf32> to vector<1x8x512xf32>
    %668 = vector.shape_cast %667 : vector<1x8x512xf32> to vector<8x512xf32>
    %669 = arith.select %18, %666, %668 : vector<8x512xi1>, vector<8x512xf32>
    %c0_289 = arith.constant 0 : index
    %c0_290 = arith.constant 0 : index
    %c0_291 = arith.constant 0 : index
    %670 = vector.load %arg14[%c0_289, %c0_290, %c0_291] : memref<8x8x512xf32, #tpu.memory_space<vmem>>, vector<1x8x512xf32>
    %671 = vector.shape_cast %670 : vector<1x8x512xf32> to vector<8x512xf32>
    %672 = vector.shape_cast %669 : vector<8x512xf32> to vector<1x8x512xf32>
    tpu.vector_store %arg14[%c0_289, %c0_290, %c0_291], %672 {strides = array<i32>} : memref<8x8x512xf32, #tpu.memory_space<vmem>>, vector<1x8x512xf32>,
    %673 = vector.extract_strided_slice %664 {offsets = [6, 0, 0], sizes = [1, 8, 512], strides = [1, 1, 1]} : vector<8x8x512xf32> to vector<1x8x512xf32>
    %674 = vector.shape_cast %673 : vector<1x8x512xf32> to vector<8x512xf32>
    %675 = vector.extract_strided_slice %664 {offsets = [1, 0, 0], sizes = [1, 8, 512], strides = [1, 1, 1]} : vector<8x8x512xf32> to vector<1x8x512xf32>
    %676 = vector.shape_cast %675 : vector<1x8x512xf32> to vector<8x512xf32>
    %677 = arith.select %18, %674, %676 : vector<8x512xi1>, vector<8x512xf32>
    %c1_292 = arith.constant 1 : index
    %c0_293 = arith.constant 0 : index
    %c0_294 = arith.constant 0 : index
    %678 = vector.load %arg14[%c1_292, %c0_293, %c0_294] : memref<8x8x512xf32, #tpu.memory_space<vmem>>, vector<1x8x512xf32>
    %679 = vector.shape_cast %678 : vector<1x8x512xf32> to vector<8x512xf32>
    %680 = vector.shape_cast %677 : vector<8x512xf32> to vector<1x8x512xf32>
    tpu.vector_store %arg14[%c1_292, %c0_293, %c0_294], %680 {strides = array<i32>} : memref<8x8x512xf32, #tpu.memory_space<vmem>>, vector<1x8x512xf32>,
    %681 = vector.extract_strided_slice %664 {offsets = [5, 0, 0], sizes = [1, 8, 512], strides = [1, 1, 1]} : vector<8x8x512xf32> to vector<1x8x512xf32>
    %682 = vector.shape_cast %681 : vector<1x8x512xf32> to vector<8x512xf32>
    %683 = vector.extract_strided_slice %664 {offsets = [2, 0, 0], sizes = [1, 8, 512], strides = [1, 1, 1]} : vector<8x8x512xf32> to vector<1x8x512xf32>
    %684 = vector.shape_cast %683 : vector<1x8x512xf32> to vector<8x512xf32>
    %685 = arith.select %18, %682, %684 : vector<8x512xi1>, vector<8x512xf32>
    %c2_295 = arith.constant 2 : index
    %c0_296 = arith.constant 0 : index
    %c0_297 = arith.constant 0 : index
    %686 = vector.load %arg14[%c2_295, %c0_296, %c0_297] : memref<8x8x512xf32, #tpu.memory_space<vmem>>, vector<1x8x512xf32>
    %687 = vector.shape_cast %686 : vector<1x8x512xf32> to vector<8x512xf32>
    %688 = vector.shape_cast %685 : vector<8x512xf32> to vector<1x8x512xf32>
    tpu.vector_store %arg14[%c2_295, %c0_296, %c0_297], %688 {strides = array<i32>} : memref<8x8x512xf32, #tpu.memory_space<vmem>>, vector<1x8x512xf32>,
    %689 = vector.extract_strided_slice %664 {offsets = [4, 0, 0], sizes = [1, 8, 512], strides = [1, 1, 1]} : vector<8x8x512xf32> to vector<1x8x512xf32>
    %690 = vector.shape_cast %689 : vector<1x8x512xf32> to vector<8x512xf32>
    %691 = vector.extract_strided_slice %664 {offsets = [3, 0, 0], sizes = [1, 8, 512], strides = [1, 1, 1]} : vector<8x8x512xf32> to vector<1x8x512xf32>
    %692 = vector.shape_cast %691 : vector<1x8x512xf32> to vector<8x512xf32>
    %693 = arith.select %18, %690, %692 : vector<8x512xi1>, vector<8x512xf32>
    %c3_298 = arith.constant 3 : index
    %c0_299 = arith.constant 0 : index
    %c0_300 = arith.constant 0 : index
    %694 = vector.load %arg14[%c3_298, %c0_299, %c0_300] : memref<8x8x512xf32, #tpu.memory_space<vmem>>, vector<1x8x512xf32>
    %695 = vector.shape_cast %694 : vector<1x8x512xf32> to vector<8x512xf32>
    %696 = vector.shape_cast %693 : vector<8x512xf32> to vector<1x8x512xf32>
    tpu.vector_store %arg14[%c3_298, %c0_299, %c0_300], %696 {strides = array<i32>} : memref<8x8x512xf32, #tpu.memory_space<vmem>>, vector<1x8x512xf32>,
    %697 = vector.extract_strided_slice %664 {offsets = [3, 0, 0], sizes = [1, 8, 512], strides = [1, 1, 1]} : vector<8x8x512xf32> to vector<1x8x512xf32>
    %698 = vector.shape_cast %697 : vector<1x8x512xf32> to vector<8x512xf32>
    %699 = vector.extract_strided_slice %664 {offsets = [4, 0, 0], sizes = [1, 8, 512], strides = [1, 1, 1]} : vector<8x8x512xf32> to vector<1x8x512xf32>
    %700 = vector.shape_cast %699 : vector<1x8x512xf32> to vector<8x512xf32>
    %701 = arith.select %18, %698, %700 : vector<8x512xi1>, vector<8x512xf32>
    %c4_301 = arith.constant 4 : index
    %c0_302 = arith.constant 0 : index
    %c0_303 = arith.constant 0 : index
    %702 = vector.load %arg14[%c4_301, %c0_302, %c0_303] : memref<8x8x512xf32, #tpu.memory_space<vmem>>, vector<1x8x512xf32>
    %703 = vector.shape_cast %702 : vector<1x8x512xf32> to vector<8x512xf32>
    %704 = vector.shape_cast %701 : vector<8x512xf32> to vector<1x8x512xf32>
    tpu.vector_store %arg14[%c4_301, %c0_302, %c0_303], %704 {strides = array<i32>} : memref<8x8x512xf32, #tpu.memory_space<vmem>>, vector<1x8x512xf32>,
    %705 = vector.extract_strided_slice %664 {offsets = [2, 0, 0], sizes = [1, 8, 512], strides = [1, 1, 1]} : vector<8x8x512xf32> to vector<1x8x512xf32>
    %706 = vector.shape_cast %705 : vector<1x8x512xf32> to vector<8x512xf32>
    %707 = vector.extract_strided_slice %664 {offsets = [5, 0, 0], sizes = [1, 8, 512], strides = [1, 1, 1]} : vector<8x8x512xf32> to vector<1x8x512xf32>
    %708 = vector.shape_cast %707 : vector<1x8x512xf32> to vector<8x512xf32>
    %709 = arith.select %18, %706, %708 : vector<8x512xi1>, vector<8x512xf32>
    %c5_304 = arith.constant 5 : index
    %c0_305 = arith.constant 0 : index
    %c0_306 = arith.constant 0 : index
    %710 = vector.load %arg14[%c5_304, %c0_305, %c0_306] : memref<8x8x512xf32, #tpu.memory_space<vmem>>, vector<1x8x512xf32>
    %711 = vector.shape_cast %710 : vector<1x8x512xf32> to vector<8x512xf32>
    %712 = vector.shape_cast %709 : vector<8x512xf32> to vector<1x8x512xf32>
    tpu.vector_store %arg14[%c5_304, %c0_305, %c0_306], %712 {strides = array<i32>} : memref<8x8x512xf32, #tpu.memory_space<vmem>>, vector<1x8x512xf32>,
    %713 = vector.extract_strided_slice %664 {offsets = [1, 0, 0], sizes = [1, 8, 512], strides = [1, 1, 1]} : vector<8x8x512xf32> to vector<1x8x512xf32>
    %714 = vector.shape_cast %713 : vector<1x8x512xf32> to vector<8x512xf32>
    %715 = vector.extract_strided_slice %664 {offsets = [6, 0, 0], sizes = [1, 8, 512], strides = [1, 1, 1]} : vector<8x8x512xf32> to vector<1x8x512xf32>
    %716 = vector.shape_cast %715 : vector<1x8x512xf32> to vector<8x512xf32>
    %717 = arith.select %18, %714, %716 : vector<8x512xi1>, vector<8x512xf32>
    %c6_307 = arith.constant 6 : index
    %c0_308 = arith.constant 0 : index
    %c0_309 = arith.constant 0 : index
    %718 = vector.load %arg14[%c6_307, %c0_308, %c0_309] : memref<8x8x512xf32, #tpu.memory_space<vmem>>, vector<1x8x512xf32>
    %719 = vector.shape_cast %718 : vector<1x8x512xf32> to vector<8x512xf32>
    %720 = vector.shape_cast %717 : vector<8x512xf32> to vector<1x8x512xf32>
    tpu.vector_store %arg14[%c6_307, %c0_308, %c0_309], %720 {strides = array<i32>} : memref<8x8x512xf32, #tpu.memory_space<vmem>>, vector<1x8x512xf32>,
    %721 = vector.extract_strided_slice %664 {offsets = [0, 0, 0], sizes = [1, 8, 512], strides = [1, 1, 1]} : vector<8x8x512xf32> to vector<1x8x512xf32>
    %722 = vector.shape_cast %721 : vector<1x8x512xf32> to vector<8x512xf32>
    %723 = vector.extract_strided_slice %664 {offsets = [7, 0, 0], sizes = [1, 8, 512], strides = [1, 1, 1]} : vector<8x8x512xf32> to vector<1x8x512xf32>
    %724 = vector.shape_cast %723 : vector<1x8x512xf32> to vector<8x512xf32>
    %725 = arith.select %18, %722, %724 : vector<8x512xi1>, vector<8x512xf32>
    %c7_310 = arith.constant 7 : index
    %c0_311 = arith.constant 0 : index
    %c0_312 = arith.constant 0 : index
    %726 = vector.load %arg14[%c7_310, %c0_311, %c0_312] : memref<8x8x512xf32, #tpu.memory_space<vmem>>, vector<1x8x512xf32>
    %727 = vector.shape_cast %726 : vector<1x8x512xf32> to vector<8x512xf32>
    %728 = vector.shape_cast %725 : vector<8x512xf32> to vector<1x8x512xf32>
    tpu.vector_store %arg14[%c7_310, %c0_311, %c0_312], %728 {strides = array<i32>} : memref<8x8x512xf32, #tpu.memory_space<vmem>>, vector<1x8x512xf32>,
    %c2_313 = arith.constant 2 : index
    %c0_314 = arith.constant 0 : index
    %c0_315 = arith.constant 0 : index
    %729 = vector.load %arg3[%c2_313, %c0_314, %c0_315] : memref<3x128x512xf32, #tpu.memory_space<vmem>>, vector<1x128x512xf32>
    %730 = vector.shape_cast %729 : vector<1x128x512xf32> to vector<128x512xf32>
    %cst_316 = arith.constant 0.000000e+00 : f32
    %731 = vector.broadcast %cst_316 : f32 to vector<8x128xf32>
    %cst_317 = arith.constant 0.000000e+00 : f32
    %732 = vector.broadcast %cst_317 : f32 to vector<8x128xf32>
    %cst_318 = arith.constant dense<0.000000e+00> : vector<8x512xf32>
    %733 = tpu.matmul %731, %730, %cst_318 {dimension_numbers = #tpu.dot_dimension_numbers<[1], [0], [0], [1], [0, 0, 1, 1], [], []>} : vector<8x128xf32>, vector<128x512xf32>, vector<8x512xf32> -> vector<8x512xf32>
    %c0_319 = arith.constant 0 : index
    %c0_320 = arith.constant 0 : index
    %c0_321 = arith.constant 0 : index
    %734 = vector.load %arg14[%c0_319, %c0_320, %c0_321] : memref<8x8x512xf32, #tpu.memory_space<vmem>>, vector<1x8x512xf32>
    %735 = vector.shape_cast %734 : vector<1x8x512xf32> to vector<8x512xf32>
    %736 = arith.addf %733, %735 : vector<8x512xf32>
    %737 = vector.extract_strided_slice %736 {offsets = [0, 0], sizes = [8, 384], strides = [1, 1]} : vector<8x512xf32> to vector<8x384xf32>
    %cst_322 = arith.constant 5.000000e-01 : f32
    %738 = vector.broadcast %cst_322 : f32 to vector<8x384xf32>
    %739 = arith.mulf %738, %737 : vector<8x384xf32>
    %740 = math.tanh %739 : vector<8x384xf32>
    %cst_323 = arith.constant 5.000000e-01 : f32
    %741 = vector.broadcast %cst_323 : f32 to vector<8x384xf32>
    %742 = arith.mulf %741, %740 : vector<8x384xf32>
    %cst_324 = arith.constant 5.000000e-01 : f32
    %743 = vector.broadcast %cst_324 : f32 to vector<8x384xf32>
    %744 = arith.addf %742, %743 : vector<8x384xf32>
    %745 = vector.extract_strided_slice %736 {offsets = [0, 384], sizes = [8, 128], strides = [1, 1]} : vector<8x512xf32> to vector<8x128xf32>
    %746 = math.tanh %745 : vector<8x128xf32>
    %747 = vector.extract_strided_slice %744 {offsets = [0, 128], sizes = [8, 128], strides = [1, 1]} : vector<8x384xf32> to vector<8x128xf32>
    %748 = arith.mulf %747, %732 : vector<8x128xf32>
    %749 = vector.extract_strided_slice %744 {offsets = [0, 0], sizes = [8, 128], strides = [1, 1]} : vector<8x384xf32> to vector<8x128xf32>
    %750 = arith.mulf %749, %746 : vector<8x128xf32>
    %751 = arith.addf %748, %750 : vector<8x128xf32>
    %752 = vector.extract_strided_slice %744 {offsets = [0, 256], sizes = [8, 128], strides = [1, 1]} : vector<8x384xf32> to vector<8x128xf32>
    %753 = math.tanh %751 : vector<8x128xf32>
    %754 = arith.mulf %752, %753 : vector<8x128xf32>
    %755 = vector.extract_strided_slice %754 {offsets = [0, 0], sizes = [8, 64], strides = [1, 1]} : vector<8x128xf32> to vector<8x64xf32>
    %c0_325 = arith.constant 0 : index
    %c0_326 = arith.constant 0 : index
    %c0_327 = arith.constant 0 : index
    %756 = vector.load %arg12[%c0_325, %c0_326, %c0_327] : memref<8x8x128xf32, #tpu.memory_space<vmem>>, vector<1x8x64xf32>
    %757 = vector.shape_cast %756 : vector<1x8x64xf32> to vector<8x64xf32>
    %758 = vector.shape_cast %755 : vector<8x64xf32> to vector<1x8x64xf32>
    tpu.vector_store %arg12[%c0_325, %c0_326, %c0_327], %758 {strides = array<i32>} : memref<8x8x128xf32, #tpu.memory_space<vmem>>, vector<1x8x64xf32>,
    %759 = vector.extract_strided_slice %754 {offsets = [0, 64], sizes = [8, 64], strides = [1, 1]} : vector<8x128xf32> to vector<8x64xf32>
    %c7_328 = arith.constant 7 : index
    %c0_329 = arith.constant 0 : index
    %c64_330 = arith.constant 64 : index
    %760 = vector.load %arg12[%c7_328, %c0_329, %c64_330] : memref<8x8x128xf32, #tpu.memory_space<vmem>>, vector<1x8x64xf32>
    %761 = vector.shape_cast %760 : vector<1x8x64xf32> to vector<8x64xf32>
    %762 = vector.shape_cast %759 : vector<8x64xf32> to vector<1x8x64xf32>
    tpu.vector_store %arg12[%c7_328, %c0_329, %c64_330], %762 {strides = array<i32>} : memref<8x8x128xf32, #tpu.memory_space<vmem>>, vector<1x8x64xf32>,
    %cst_331 = arith.constant dense<0.000000e+00> : vector<8x512xf32>
    %763 = tpu.matmul %754, %730, %cst_331 {dimension_numbers = #tpu.dot_dimension_numbers<[1], [0], [0], [1], [0, 0, 1, 1], [], []>} : vector<8x128xf32>, vector<128x512xf32>, vector<8x512xf32> -> vector<8x512xf32>
    %c1_332 = arith.constant 1 : index
    %c0_333 = arith.constant 0 : index
    %c0_334 = arith.constant 0 : index
    %764 = vector.load %arg14[%c1_332, %c0_333, %c0_334] : memref<8x8x512xf32, #tpu.memory_space<vmem>>, vector<1x8x512xf32>
    %765 = vector.shape_cast %764 : vector<1x8x512xf32> to vector<8x512xf32>
    %766 = arith.addf %763, %765 : vector<8x512xf32>
    %767 = vector.extract_strided_slice %766 {offsets = [0, 0], sizes = [8, 384], strides = [1, 1]} : vector<8x512xf32> to vector<8x384xf32>
    %cst_335 = arith.constant 5.000000e-01 : f32
    %768 = vector.broadcast %cst_335 : f32 to vector<8x384xf32>
    %769 = arith.mulf %768, %767 : vector<8x384xf32>
    %770 = math.tanh %769 : vector<8x384xf32>
    %cst_336 = arith.constant 5.000000e-01 : f32
    %771 = vector.broadcast %cst_336 : f32 to vector<8x384xf32>
    %772 = arith.mulf %771, %770 : vector<8x384xf32>
    %cst_337 = arith.constant 5.000000e-01 : f32
    %773 = vector.broadcast %cst_337 : f32 to vector<8x384xf32>
    %774 = arith.addf %772, %773 : vector<8x384xf32>
    %775 = vector.extract_strided_slice %766 {offsets = [0, 384], sizes = [8, 128], strides = [1, 1]} : vector<8x512xf32> to vector<8x128xf32>
    %776 = math.tanh %775 : vector<8x128xf32>
    %777 = vector.extract_strided_slice %774 {offsets = [0, 128], sizes = [8, 128], strides = [1, 1]} : vector<8x384xf32> to vector<8x128xf32>
    %778 = arith.mulf %777, %751 : vector<8x128xf32>
    %779 = vector.extract_strided_slice %774 {offsets = [0, 0], sizes = [8, 128], strides = [1, 1]} : vector<8x384xf32> to vector<8x128xf32>
    %780 = arith.mulf %779, %776 : vector<8x128xf32>
    %781 = arith.addf %778, %780 : vector<8x128xf32>
    %782 = vector.extract_strided_slice %774 {offsets = [0, 256], sizes = [8, 128], strides = [1, 1]} : vector<8x384xf32> to vector<8x128xf32>
    %783 = math.tanh %781 : vector<8x128xf32>
    %784 = arith.mulf %782, %783 : vector<8x128xf32>
    %785 = vector.extract_strided_slice %784 {offsets = [0, 0], sizes = [8, 64], strides = [1, 1]} : vector<8x128xf32> to vector<8x64xf32>
    %c1_338 = arith.constant 1 : index
    %c0_339 = arith.constant 0 : index
    %c0_340 = arith.constant 0 : index
    %786 = vector.load %arg12[%c1_338, %c0_339, %c0_340] : memref<8x8x128xf32, #tpu.memory_space<vmem>>, vector<1x8x64xf32>
    %787 = vector.shape_cast %786 : vector<1x8x64xf32> to vector<8x64xf32>
    %788 = vector.shape_cast %785 : vector<8x64xf32> to vector<1x8x64xf32>
    tpu.vector_store %arg12[%c1_338, %c0_339, %c0_340], %788 {strides = array<i32>} : memref<8x8x128xf32, #tpu.memory_space<vmem>>, vector<1x8x64xf32>,
    %789 = vector.extract_strided_slice %784 {offsets = [0, 64], sizes = [8, 64], strides = [1, 1]} : vector<8x128xf32> to vector<8x64xf32>
    %c6_341 = arith.constant 6 : index
    %c0_342 = arith.constant 0 : index
    %c64_343 = arith.constant 64 : index
    %790 = vector.load %arg12[%c6_341, %c0_342, %c64_343] : memref<8x8x128xf32, #tpu.memory_space<vmem>>, vector<1x8x64xf32>
    %791 = vector.shape_cast %790 : vector<1x8x64xf32> to vector<8x64xf32>
    %792 = vector.shape_cast %789 : vector<8x64xf32> to vector<1x8x64xf32>
    tpu.vector_store %arg12[%c6_341, %c0_342, %c64_343], %792 {strides = array<i32>} : memref<8x8x128xf32, #tpu.memory_space<vmem>>, vector<1x8x64xf32>,
    %cst_344 = arith.constant dense<0.000000e+00> : vector<8x512xf32>
    %793 = tpu.matmul %784, %730, %cst_344 {dimension_numbers = #tpu.dot_dimension_numbers<[1], [0], [0], [1], [0, 0, 1, 1], [], []>} : vector<8x128xf32>, vector<128x512xf32>, vector<8x512xf32> -> vector<8x512xf32>
    %c2_345 = arith.constant 2 : index
    %c0_346 = arith.constant 0 : index
    %c0_347 = arith.constant 0 : index
    %794 = vector.load %arg14[%c2_345, %c0_346, %c0_347] : memref<8x8x512xf32, #tpu.memory_space<vmem>>, vector<1x8x512xf32>
    %795 = vector.shape_cast %794 : vector<1x8x512xf32> to vector<8x512xf32>
    %796 = arith.addf %793, %795 : vector<8x512xf32>
    %797 = vector.extract_strided_slice %796 {offsets = [0, 0], sizes = [8, 384], strides = [1, 1]} : vector<8x512xf32> to vector<8x384xf32>
    %cst_348 = arith.constant 5.000000e-01 : f32
    %798 = vector.broadcast %cst_348 : f32 to vector<8x384xf32>
    %799 = arith.mulf %798, %797 : vector<8x384xf32>
    %800 = math.tanh %799 : vector<8x384xf32>
    %cst_349 = arith.constant 5.000000e-01 : f32
    %801 = vector.broadcast %cst_349 : f32 to vector<8x384xf32>
    %802 = arith.mulf %801, %800 : vector<8x384xf32>
    %cst_350 = arith.constant 5.000000e-01 : f32
    %803 = vector.broadcast %cst_350 : f32 to vector<8x384xf32>
    %804 = arith.addf %802, %803 : vector<8x384xf32>
    %805 = vector.extract_strided_slice %796 {offsets = [0, 384], sizes = [8, 128], strides = [1, 1]} : vector<8x512xf32> to vector<8x128xf32>
    %806 = math.tanh %805 : vector<8x128xf32>
    %807 = vector.extract_strided_slice %804 {offsets = [0, 128], sizes = [8, 128], strides = [1, 1]} : vector<8x384xf32> to vector<8x128xf32>
    %808 = arith.mulf %807, %781 : vector<8x128xf32>
    %809 = vector.extract_strided_slice %804 {offsets = [0, 0], sizes = [8, 128], strides = [1, 1]} : vector<8x384xf32> to vector<8x128xf32>
    %810 = arith.mulf %809, %806 : vector<8x128xf32>
    %811 = arith.addf %808, %810 : vector<8x128xf32>
    %812 = vector.extract_strided_slice %804 {offsets = [0, 256], sizes = [8, 128], strides = [1, 1]} : vector<8x384xf32> to vector<8x128xf32>
    %813 = math.tanh %811 : vector<8x128xf32>
    %814 = arith.mulf %812, %813 : vector<8x128xf32>
    %815 = vector.extract_strided_slice %814 {offsets = [0, 0], sizes = [8, 64], strides = [1, 1]} : vector<8x128xf32> to vector<8x64xf32>
    %c2_351 = arith.constant 2 : index
    %c0_352 = arith.constant 0 : index
    %c0_353 = arith.constant 0 : index
    %816 = vector.load %arg12[%c2_351, %c0_352, %c0_353] : memref<8x8x128xf32, #tpu.memory_space<vmem>>, vector<1x8x64xf32>
    %817 = vector.shape_cast %816 : vector<1x8x64xf32> to vector<8x64xf32>
    %818 = vector.shape_cast %815 : vector<8x64xf32> to vector<1x8x64xf32>
    tpu.vector_store %arg12[%c2_351, %c0_352, %c0_353], %818 {strides = array<i32>} : memref<8x8x128xf32, #tpu.memory_space<vmem>>, vector<1x8x64xf32>,
    %819 = vector.extract_strided_slice %814 {offsets = [0, 64], sizes = [8, 64], strides = [1, 1]} : vector<8x128xf32> to vector<8x64xf32>
    %c5_354 = arith.constant 5 : index
    %c0_355 = arith.constant 0 : index
    %c64_356 = arith.constant 64 : index
    %820 = vector.load %arg12[%c5_354, %c0_355, %c64_356] : memref<8x8x128xf32, #tpu.memory_space<vmem>>, vector<1x8x64xf32>
    %821 = vector.shape_cast %820 : vector<1x8x64xf32> to vector<8x64xf32>
    %822 = vector.shape_cast %819 : vector<8x64xf32> to vector<1x8x64xf32>
    tpu.vector_store %arg12[%c5_354, %c0_355, %c64_356], %822 {strides = array<i32>} : memref<8x8x128xf32, #tpu.memory_space<vmem>>, vector<1x8x64xf32>,
    %cst_357 = arith.constant dense<0.000000e+00> : vector<8x512xf32>
    %823 = tpu.matmul %814, %730, %cst_357 {dimension_numbers = #tpu.dot_dimension_numbers<[1], [0], [0], [1], [0, 0, 1, 1], [], []>} : vector<8x128xf32>, vector<128x512xf32>, vector<8x512xf32> -> vector<8x512xf32>
    %c3_358 = arith.constant 3 : index
    %c0_359 = arith.constant 0 : index
    %c0_360 = arith.constant 0 : index
    %824 = vector.load %arg14[%c3_358, %c0_359, %c0_360] : memref<8x8x512xf32, #tpu.memory_space<vmem>>, vector<1x8x512xf32>
    %825 = vector.shape_cast %824 : vector<1x8x512xf32> to vector<8x512xf32>
    %826 = arith.addf %823, %825 : vector<8x512xf32>
    %827 = vector.extract_strided_slice %826 {offsets = [0, 0], sizes = [8, 384], strides = [1, 1]} : vector<8x512xf32> to vector<8x384xf32>
    %cst_361 = arith.constant 5.000000e-01 : f32
    %828 = vector.broadcast %cst_361 : f32 to vector<8x384xf32>
    %829 = arith.mulf %828, %827 : vector<8x384xf32>
    %830 = math.tanh %829 : vector<8x384xf32>
    %cst_362 = arith.constant 5.000000e-01 : f32
    %831 = vector.broadcast %cst_362 : f32 to vector<8x384xf32>
    %832 = arith.mulf %831, %830 : vector<8x384xf32>
    %cst_363 = arith.constant 5.000000e-01 : f32
    %833 = vector.broadcast %cst_363 : f32 to vector<8x384xf32>
    %834 = arith.addf %832, %833 : vector<8x384xf32>
    %835 = vector.extract_strided_slice %826 {offsets = [0, 384], sizes = [8, 128], strides = [1, 1]} : vector<8x512xf32> to vector<8x128xf32>
    %836 = math.tanh %835 : vector<8x128xf32>
    %837 = vector.extract_strided_slice %834 {offsets = [0, 128], sizes = [8, 128], strides = [1, 1]} : vector<8x384xf32> to vector<8x128xf32>
    %838 = arith.mulf %837, %811 : vector<8x128xf32>
    %839 = vector.extract_strided_slice %834 {offsets = [0, 0], sizes = [8, 128], strides = [1, 1]} : vector<8x384xf32> to vector<8x128xf32>
    %840 = arith.mulf %839, %836 : vector<8x128xf32>
    %841 = arith.addf %838, %840 : vector<8x128xf32>
    %842 = vector.extract_strided_slice %834 {offsets = [0, 256], sizes = [8, 128], strides = [1, 1]} : vector<8x384xf32> to vector<8x128xf32>
    %843 = math.tanh %841 : vector<8x128xf32>
    %844 = arith.mulf %842, %843 : vector<8x128xf32>
    %845 = vector.extract_strided_slice %844 {offsets = [0, 0], sizes = [8, 64], strides = [1, 1]} : vector<8x128xf32> to vector<8x64xf32>
    %c3_364 = arith.constant 3 : index
    %c0_365 = arith.constant 0 : index
    %c0_366 = arith.constant 0 : index
    %846 = vector.load %arg12[%c3_364, %c0_365, %c0_366] : memref<8x8x128xf32, #tpu.memory_space<vmem>>, vector<1x8x64xf32>
    %847 = vector.shape_cast %846 : vector<1x8x64xf32> to vector<8x64xf32>
    %848 = vector.shape_cast %845 : vector<8x64xf32> to vector<1x8x64xf32>
    tpu.vector_store %arg12[%c3_364, %c0_365, %c0_366], %848 {strides = array<i32>} : memref<8x8x128xf32, #tpu.memory_space<vmem>>, vector<1x8x64xf32>,
    %849 = vector.extract_strided_slice %844 {offsets = [0, 64], sizes = [8, 64], strides = [1, 1]} : vector<8x128xf32> to vector<8x64xf32>
    %c4_367 = arith.constant 4 : index
    %c0_368 = arith.constant 0 : index
    %c64_369 = arith.constant 64 : index
    %850 = vector.load %arg12[%c4_367, %c0_368, %c64_369] : memref<8x8x128xf32, #tpu.memory_space<vmem>>, vector<1x8x64xf32>
    %851 = vector.shape_cast %850 : vector<1x8x64xf32> to vector<8x64xf32>
    %852 = vector.shape_cast %849 : vector<8x64xf32> to vector<1x8x64xf32>
    tpu.vector_store %arg12[%c4_367, %c0_368, %c64_369], %852 {strides = array<i32>} : memref<8x8x128xf32, #tpu.memory_space<vmem>>, vector<1x8x64xf32>,
    %cst_370 = arith.constant dense<0.000000e+00> : vector<8x512xf32>
    %853 = tpu.matmul %844, %730, %cst_370 {dimension_numbers = #tpu.dot_dimension_numbers<[1], [0], [0], [1], [0, 0, 1, 1], [], []>} : vector<8x128xf32>, vector<128x512xf32>, vector<8x512xf32> -> vector<8x512xf32>
    %c4_371 = arith.constant 4 : index
    %c0_372 = arith.constant 0 : index
    %c0_373 = arith.constant 0 : index
    %854 = vector.load %arg14[%c4_371, %c0_372, %c0_373] : memref<8x8x512xf32, #tpu.memory_space<vmem>>, vector<1x8x512xf32>
    %855 = vector.shape_cast %854 : vector<1x8x512xf32> to vector<8x512xf32>
    %856 = arith.addf %853, %855 : vector<8x512xf32>
    %857 = vector.extract_strided_slice %856 {offsets = [0, 0], sizes = [8, 384], strides = [1, 1]} : vector<8x512xf32> to vector<8x384xf32>
    %cst_374 = arith.constant 5.000000e-01 : f32
    %858 = vector.broadcast %cst_374 : f32 to vector<8x384xf32>
    %859 = arith.mulf %858, %857 : vector<8x384xf32>
    %860 = math.tanh %859 : vector<8x384xf32>
    %cst_375 = arith.constant 5.000000e-01 : f32
    %861 = vector.broadcast %cst_375 : f32 to vector<8x384xf32>
    %862 = arith.mulf %861, %860 : vector<8x384xf32>
    %cst_376 = arith.constant 5.000000e-01 : f32
    %863 = vector.broadcast %cst_376 : f32 to vector<8x384xf32>
    %864 = arith.addf %862, %863 : vector<8x384xf32>
    %865 = vector.extract_strided_slice %856 {offsets = [0, 384], sizes = [8, 128], strides = [1, 1]} : vector<8x512xf32> to vector<8x128xf32>
    %866 = math.tanh %865 : vector<8x128xf32>
    %867 = vector.extract_strided_slice %864 {offsets = [0, 128], sizes = [8, 128], strides = [1, 1]} : vector<8x384xf32> to vector<8x128xf32>
    %868 = arith.mulf %867, %841 : vector<8x128xf32>
    %869 = vector.extract_strided_slice %864 {offsets = [0, 0], sizes = [8, 128], strides = [1, 1]} : vector<8x384xf32> to vector<8x128xf32>
    %870 = arith.mulf %869, %866 : vector<8x128xf32>
    %871 = arith.addf %868, %870 : vector<8x128xf32>
    %872 = vector.extract_strided_slice %864 {offsets = [0, 256], sizes = [8, 128], strides = [1, 1]} : vector<8x384xf32> to vector<8x128xf32>
    %873 = math.tanh %871 : vector<8x128xf32>
    %874 = arith.mulf %872, %873 : vector<8x128xf32>
    %875 = vector.extract_strided_slice %874 {offsets = [0, 0], sizes = [8, 64], strides = [1, 1]} : vector<8x128xf32> to vector<8x64xf32>
    %c4_377 = arith.constant 4 : index
    %c0_378 = arith.constant 0 : index
    %c0_379 = arith.constant 0 : index
    %876 = vector.load %arg12[%c4_377, %c0_378, %c0_379] : memref<8x8x128xf32, #tpu.memory_space<vmem>>, vector<1x8x64xf32>
    %877 = vector.shape_cast %876 : vector<1x8x64xf32> to vector<8x64xf32>
    %878 = vector.shape_cast %875 : vector<8x64xf32> to vector<1x8x64xf32>
    tpu.vector_store %arg12[%c4_377, %c0_378, %c0_379], %878 {strides = array<i32>} : memref<8x8x128xf32, #tpu.memory_space<vmem>>, vector<1x8x64xf32>,
    %879 = vector.extract_strided_slice %874 {offsets = [0, 64], sizes = [8, 64], strides = [1, 1]} : vector<8x128xf32> to vector<8x64xf32>
    %c3_380 = arith.constant 3 : index
    %c0_381 = arith.constant 0 : index
    %c64_382 = arith.constant 64 : index
    %880 = vector.load %arg12[%c3_380, %c0_381, %c64_382] : memref<8x8x128xf32, #tpu.memory_space<vmem>>, vector<1x8x64xf32>
    %881 = vector.shape_cast %880 : vector<1x8x64xf32> to vector<8x64xf32>
    %882 = vector.shape_cast %879 : vector<8x64xf32> to vector<1x8x64xf32>
    tpu.vector_store %arg12[%c3_380, %c0_381, %c64_382], %882 {strides = array<i32>} : memref<8x8x128xf32, #tpu.memory_space<vmem>>, vector<1x8x64xf32>,
    %cst_383 = arith.constant dense<0.000000e+00> : vector<8x512xf32>
    %883 = tpu.matmul %874, %730, %cst_383 {dimension_numbers = #tpu.dot_dimension_numbers<[1], [0], [0], [1], [0, 0, 1, 1], [], []>} : vector<8x128xf32>, vector<128x512xf32>, vector<8x512xf32> -> vector<8x512xf32>
    %c5_384 = arith.constant 5 : index
    %c0_385 = arith.constant 0 : index
    %c0_386 = arith.constant 0 : index
    %884 = vector.load %arg14[%c5_384, %c0_385, %c0_386] : memref<8x8x512xf32, #tpu.memory_space<vmem>>, vector<1x8x512xf32>
    %885 = vector.shape_cast %884 : vector<1x8x512xf32> to vector<8x512xf32>
    %886 = arith.addf %883, %885 : vector<8x512xf32>
    %887 = vector.extract_strided_slice %886 {offsets = [0, 0], sizes = [8, 384], strides = [1, 1]} : vector<8x512xf32> to vector<8x384xf32>
    %cst_387 = arith.constant 5.000000e-01 : f32
    %888 = vector.broadcast %cst_387 : f32 to vector<8x384xf32>
    %889 = arith.mulf %888, %887 : vector<8x384xf32>
    %890 = math.tanh %889 : vector<8x384xf32>
    %cst_388 = arith.constant 5.000000e-01 : f32
    %891 = vector.broadcast %cst_388 : f32 to vector<8x384xf32>
    %892 = arith.mulf %891, %890 : vector<8x384xf32>
    %cst_389 = arith.constant 5.000000e-01 : f32
    %893 = vector.broadcast %cst_389 : f32 to vector<8x384xf32>
    %894 = arith.addf %892, %893 : vector<8x384xf32>
    %895 = vector.extract_strided_slice %886 {offsets = [0, 384], sizes = [8, 128], strides = [1, 1]} : vector<8x512xf32> to vector<8x128xf32>
    %896 = math.tanh %895 : vector<8x128xf32>
    %897 = vector.extract_strided_slice %894 {offsets = [0, 128], sizes = [8, 128], strides = [1, 1]} : vector<8x384xf32> to vector<8x128xf32>
    %898 = arith.mulf %897, %871 : vector<8x128xf32>
    %899 = vector.extract_strided_slice %894 {offsets = [0, 0], sizes = [8, 128], strides = [1, 1]} : vector<8x384xf32> to vector<8x128xf32>
    %900 = arith.mulf %899, %896 : vector<8x128xf32>
    %901 = arith.addf %898, %900 : vector<8x128xf32>
    %902 = vector.extract_strided_slice %894 {offsets = [0, 256], sizes = [8, 128], strides = [1, 1]} : vector<8x384xf32> to vector<8x128xf32>
    %903 = math.tanh %901 : vector<8x128xf32>
    %904 = arith.mulf %902, %903 : vector<8x128xf32>
    %905 = vector.extract_strided_slice %904 {offsets = [0, 0], sizes = [8, 64], strides = [1, 1]} : vector<8x128xf32> to vector<8x64xf32>
    %c5_390 = arith.constant 5 : index
    %c0_391 = arith.constant 0 : index
    %c0_392 = arith.constant 0 : index
    %906 = vector.load %arg12[%c5_390, %c0_391, %c0_392] : memref<8x8x128xf32, #tpu.memory_space<vmem>>, vector<1x8x64xf32>
    %907 = vector.shape_cast %906 : vector<1x8x64xf32> to vector<8x64xf32>
    %908 = vector.shape_cast %905 : vector<8x64xf32> to vector<1x8x64xf32>
    tpu.vector_store %arg12[%c5_390, %c0_391, %c0_392], %908 {strides = array<i32>} : memref<8x8x128xf32, #tpu.memory_space<vmem>>, vector<1x8x64xf32>,
    %909 = vector.extract_strided_slice %904 {offsets = [0, 64], sizes = [8, 64], strides = [1, 1]} : vector<8x128xf32> to vector<8x64xf32>
    %c2_393 = arith.constant 2 : index
    %c0_394 = arith.constant 0 : index
    %c64_395 = arith.constant 64 : index
    %910 = vector.load %arg12[%c2_393, %c0_394, %c64_395] : memref<8x8x128xf32, #tpu.memory_space<vmem>>, vector<1x8x64xf32>
    %911 = vector.shape_cast %910 : vector<1x8x64xf32> to vector<8x64xf32>
    %912 = vector.shape_cast %909 : vector<8x64xf32> to vector<1x8x64xf32>
    tpu.vector_store %arg12[%c2_393, %c0_394, %c64_395], %912 {strides = array<i32>} : memref<8x8x128xf32, #tpu.memory_space<vmem>>, vector<1x8x64xf32>,
    %cst_396 = arith.constant dense<0.000000e+00> : vector<8x512xf32>
    %913 = tpu.matmul %904, %730, %cst_396 {dimension_numbers = #tpu.dot_dimension_numbers<[1], [0], [0], [1], [0, 0, 1, 1], [], []>} : vector<8x128xf32>, vector<128x512xf32>, vector<8x512xf32> -> vector<8x512xf32>
    %c6_397 = arith.constant 6 : index
    %c0_398 = arith.constant 0 : index
    %c0_399 = arith.constant 0 : index
    %914 = vector.load %arg14[%c6_397, %c0_398, %c0_399] : memref<8x8x512xf32, #tpu.memory_space<vmem>>, vector<1x8x512xf32>
    %915 = vector.shape_cast %914 : vector<1x8x512xf32> to vector<8x512xf32>
    %916 = arith.addf %913, %915 : vector<8x512xf32>
    %917 = vector.extract_strided_slice %916 {offsets = [0, 0], sizes = [8, 384], strides = [1, 1]} : vector<8x512xf32> to vector<8x384xf32>
    %cst_400 = arith.constant 5.000000e-01 : f32
    %918 = vector.broadcast %cst_400 : f32 to vector<8x384xf32>
    %919 = arith.mulf %918, %917 : vector<8x384xf32>
    %920 = math.tanh %919 : vector<8x384xf32>
    %cst_401 = arith.constant 5.000000e-01 : f32
    %921 = vector.broadcast %cst_401 : f32 to vector<8x384xf32>
    %922 = arith.mulf %921, %920 : vector<8x384xf32>
    %cst_402 = arith.constant 5.000000e-01 : f32
    %923 = vector.broadcast %cst_402 : f32 to vector<8x384xf32>
    %924 = arith.addf %922, %923 : vector<8x384xf32>
    %925 = vector.extract_strided_slice %916 {offsets = [0, 384], sizes = [8, 128], strides = [1, 1]} : vector<8x512xf32> to vector<8x128xf32>
    %926 = math.tanh %925 : vector<8x128xf32>
    %927 = vector.extract_strided_slice %924 {offsets = [0, 128], sizes = [8, 128], strides = [1, 1]} : vector<8x384xf32> to vector<8x128xf32>
    %928 = arith.mulf %927, %901 : vector<8x128xf32>
    %929 = vector.extract_strided_slice %924 {offsets = [0, 0], sizes = [8, 128], strides = [1, 1]} : vector<8x384xf32> to vector<8x128xf32>
    %930 = arith.mulf %929, %926 : vector<8x128xf32>
    %931 = arith.addf %928, %930 : vector<8x128xf32>
    %932 = vector.extract_strided_slice %924 {offsets = [0, 256], sizes = [8, 128], strides = [1, 1]} : vector<8x384xf32> to vector<8x128xf32>
    %933 = math.tanh %931 : vector<8x128xf32>
    %934 = arith.mulf %932, %933 : vector<8x128xf32>
    %935 = vector.extract_strided_slice %934 {offsets = [0, 0], sizes = [8, 64], strides = [1, 1]} : vector<8x128xf32> to vector<8x64xf32>
    %c6_403 = arith.constant 6 : index
    %c0_404 = arith.constant 0 : index
    %c0_405 = arith.constant 0 : index
    %936 = vector.load %arg12[%c6_403, %c0_404, %c0_405] : memref<8x8x128xf32, #tpu.memory_space<vmem>>, vector<1x8x64xf32>
    %937 = vector.shape_cast %936 : vector<1x8x64xf32> to vector<8x64xf32>
    %938 = vector.shape_cast %935 : vector<8x64xf32> to vector<1x8x64xf32>
    tpu.vector_store %arg12[%c6_403, %c0_404, %c0_405], %938 {strides = array<i32>} : memref<8x8x128xf32, #tpu.memory_space<vmem>>, vector<1x8x64xf32>,
    %939 = vector.extract_strided_slice %934 {offsets = [0, 64], sizes = [8, 64], strides = [1, 1]} : vector<8x128xf32> to vector<8x64xf32>
    %c1_406 = arith.constant 1 : index
    %c0_407 = arith.constant 0 : index
    %c64_408 = arith.constant 64 : index
    %940 = vector.load %arg12[%c1_406, %c0_407, %c64_408] : memref<8x8x128xf32, #tpu.memory_space<vmem>>, vector<1x8x64xf32>
    %941 = vector.shape_cast %940 : vector<1x8x64xf32> to vector<8x64xf32>
    %942 = vector.shape_cast %939 : vector<8x64xf32> to vector<1x8x64xf32>
    tpu.vector_store %arg12[%c1_406, %c0_407, %c64_408], %942 {strides = array<i32>} : memref<8x8x128xf32, #tpu.memory_space<vmem>>, vector<1x8x64xf32>,
    %cst_409 = arith.constant dense<0.000000e+00> : vector<8x512xf32>
    %943 = tpu.matmul %934, %730, %cst_409 {dimension_numbers = #tpu.dot_dimension_numbers<[1], [0], [0], [1], [0, 0, 1, 1], [], []>} : vector<8x128xf32>, vector<128x512xf32>, vector<8x512xf32> -> vector<8x512xf32>
    %c7_410 = arith.constant 7 : index
    %c0_411 = arith.constant 0 : index
    %c0_412 = arith.constant 0 : index
    %944 = vector.load %arg14[%c7_410, %c0_411, %c0_412] : memref<8x8x512xf32, #tpu.memory_space<vmem>>, vector<1x8x512xf32>
    %945 = vector.shape_cast %944 : vector<1x8x512xf32> to vector<8x512xf32>
    %946 = arith.addf %943, %945 : vector<8x512xf32>
    %947 = vector.extract_strided_slice %946 {offsets = [0, 0], sizes = [8, 384], strides = [1, 1]} : vector<8x512xf32> to vector<8x384xf32>
    %cst_413 = arith.constant 5.000000e-01 : f32
    %948 = vector.broadcast %cst_413 : f32 to vector<8x384xf32>
    %949 = arith.mulf %948, %947 : vector<8x384xf32>
    %950 = math.tanh %949 : vector<8x384xf32>
    %cst_414 = arith.constant 5.000000e-01 : f32
    %951 = vector.broadcast %cst_414 : f32 to vector<8x384xf32>
    %952 = arith.mulf %951, %950 : vector<8x384xf32>
    %cst_415 = arith.constant 5.000000e-01 : f32
    %953 = vector.broadcast %cst_415 : f32 to vector<8x384xf32>
    %954 = arith.addf %952, %953 : vector<8x384xf32>
    %955 = vector.extract_strided_slice %946 {offsets = [0, 384], sizes = [8, 128], strides = [1, 1]} : vector<8x512xf32> to vector<8x128xf32>
    %956 = math.tanh %955 : vector<8x128xf32>
    %957 = vector.extract_strided_slice %954 {offsets = [0, 128], sizes = [8, 128], strides = [1, 1]} : vector<8x384xf32> to vector<8x128xf32>
    %958 = arith.mulf %957, %931 : vector<8x128xf32>
    %959 = vector.extract_strided_slice %954 {offsets = [0, 0], sizes = [8, 128], strides = [1, 1]} : vector<8x384xf32> to vector<8x128xf32>
    %960 = arith.mulf %959, %956 : vector<8x128xf32>
    %961 = arith.addf %958, %960 : vector<8x128xf32>
    %962 = vector.extract_strided_slice %954 {offsets = [0, 256], sizes = [8, 128], strides = [1, 1]} : vector<8x384xf32> to vector<8x128xf32>
    %963 = math.tanh %961 : vector<8x128xf32>
    %964 = arith.mulf %962, %963 : vector<8x128xf32>
    %965 = vector.extract_strided_slice %964 {offsets = [0, 0], sizes = [8, 64], strides = [1, 1]} : vector<8x128xf32> to vector<8x64xf32>
    %c7_416 = arith.constant 7 : index
    %c0_417 = arith.constant 0 : index
    %c0_418 = arith.constant 0 : index
    %966 = vector.load %arg12[%c7_416, %c0_417, %c0_418] : memref<8x8x128xf32, #tpu.memory_space<vmem>>, vector<1x8x64xf32>
    %967 = vector.shape_cast %966 : vector<1x8x64xf32> to vector<8x64xf32>
    %968 = vector.shape_cast %965 : vector<8x64xf32> to vector<1x8x64xf32>
    tpu.vector_store %arg12[%c7_416, %c0_417, %c0_418], %968 {strides = array<i32>} : memref<8x8x128xf32, #tpu.memory_space<vmem>>, vector<1x8x64xf32>,
    %969 = vector.extract_strided_slice %964 {offsets = [0, 64], sizes = [8, 64], strides = [1, 1]} : vector<8x128xf32> to vector<8x64xf32>
    %c0_419 = arith.constant 0 : index
    %c0_420 = arith.constant 0 : index
    %c64_421 = arith.constant 64 : index
    %970 = vector.load %arg12[%c0_419, %c0_420, %c64_421] : memref<8x8x128xf32, #tpu.memory_space<vmem>>, vector<1x8x64xf32>
    %971 = vector.shape_cast %970 : vector<1x8x64xf32> to vector<8x64xf32>
    %972 = vector.shape_cast %969 : vector<8x64xf32> to vector<1x8x64xf32>
    tpu.vector_store %arg12[%c0_419, %c0_420, %c64_421], %972 {strides = array<i32>} : memref<8x8x128xf32, #tpu.memory_space<vmem>>, vector<1x8x64xf32>,
    %c0_422 = arith.constant 0 : index
    %c0_423 = arith.constant 0 : index
    %c0_424 = arith.constant 0 : index
    %973 = vector.load %arg12[%c0_422, %c0_423, %c0_424] : memref<8x8x128xf32, #tpu.memory_space<vmem>>, vector<8x8x128xf32>
    %974 = vector.shape_cast %973 : vector<8x8x128xf32> to vector<64x128xf32>
    %c0_425 = arith.constant 0 : index
    %c0_426 = arith.constant 0 : index
    %975 = vector.load %arg5[%c0_425, %c0_426] : memref<128x1xf32, #tpu.memory_space<vmem>>, vector<128x1xf32>
    %cst_427 = arith.constant dense<0.000000e+00> : vector<64x1xf32>
    %976 = tpu.matmul %974, %975, %cst_427 {dimension_numbers = #tpu.dot_dimension_numbers<[1], [0], [0], [1], [0, 0, 1, 1], [], []>} : vector<64x128xf32>, vector<128x1xf32>, vector<64x1xf32> -> vector<64x1xf32>
    %c0_428 = arith.constant 0 : index
    %c0_429 = arith.constant 0 : index
    %977 = vector.load %arg6[%c0_428, %c0_429] : memref<1x1xf32, #tpu.memory_space<vmem>>, vector<1x1xf32>
    %978 = vector.broadcast %977 : vector<1x1xf32> to vector<64x1xf32>
    %979 = arith.addf %976, %978 : vector<64x1xf32>
    %980 = vector.shape_cast %979 : vector<64x1xf32> to vector<8x8x1xf32>
    %cst_430 = arith.constant dense<0xFF800000> : vector<8x1xf32>
    %981 = vector.multi_reduction <maximumf>, %980, %cst_430 [0] : vector<8x8x1xf32> to vector<8x1xf32>
    %982 = vector.shape_cast %981 : vector<8x1xf32> to vector<1x8x1xf32>
    %983 = vector.broadcast %982 : vector<1x8x1xf32> to vector<8x8x1xf32>
    %984 = arith.subf %980, %983 : vector<8x8x1xf32>
    %985 = math.exp %984 : vector<8x8x1xf32>
    %cst_431 = arith.constant dense<0.000000e+00> : vector<8x1xf32>
    %986 = vector.multi_reduction <add>, %985, %cst_431 [0] : vector<8x8x1xf32> to vector<8x1xf32>
    %987 = vector.shape_cast %986 : vector<8x1xf32> to vector<1x8x1xf32>
    %988 = vector.broadcast %987 : vector<1x8x1xf32> to vector<8x8x1xf32>
    %989 = arith.divf %985, %988 : vector<8x8x1xf32>
    %990 = vector.broadcast %989 : vector<8x8x1xf32> to vector<8x8x128xf32>
    %991 = arith.mulf %990, %973 : vector<8x8x128xf32>
    %cst_432 = arith.constant dense<0.000000e+00> : vector<8x128xf32>
    %992 = vector.multi_reduction <add>, %991, %cst_432 [0] : vector<8x8x128xf32> to vector<8x128xf32>
    %c0_433 = arith.constant 0 : index
    %c0_434 = arith.constant 0 : index
    %993 = vector.load %arg7[%c0_433, %c0_434] : memref<128x128xf32, #tpu.memory_space<vmem>>, vector<128x128xf32>
    %cst_435 = arith.constant dense<0.000000e+00> : vector<8x128xf32>
    %994 = tpu.matmul %992, %993, %cst_435 {dimension_numbers = #tpu.dot_dimension_numbers<[1], [0], [0], [1], [0, 0, 1, 1], [], []>} : vector<8x128xf32>, vector<128x128xf32>, vector<8x128xf32> -> vector<8x128xf32>
    %c0_436 = arith.constant 0 : index
    %c0_437 = arith.constant 0 : index
    %995 = vector.load %arg8[%c0_436, %c0_437] : memref<1x128xf32, #tpu.memory_space<vmem>>, vector<1x128xf32>
    %996 = vector.broadcast %995 : vector<1x128xf32> to vector<8x128xf32>
    %997 = arith.addf %994, %996 : vector<8x128xf32>
    %cst_438 = arith.constant 0.000000e+00 : f32
    %998 = vector.broadcast %cst_438 : f32 to vector<8x128xf32>
    %999 = arith.maximumf %997, %998 : vector<8x128xf32>
    %c0_439 = arith.constant 0 : index
    %c0_440 = arith.constant 0 : index
    %1000 = vector.load %arg9[%c0_439, %c0_440] : memref<128x1xf32, #tpu.memory_space<vmem>>, vector<128x1xf32>
    %cst_441 = arith.constant dense<0.000000e+00> : vector<8x1xf32>
    %1001 = tpu.matmul %999, %1000, %cst_441 {dimension_numbers = #tpu.dot_dimension_numbers<[1], [0], [0], [1], [0, 0, 1, 1], [], []>} : vector<8x128xf32>, vector<128x1xf32>, vector<8x1xf32> -> vector<8x1xf32>
    %c0_442 = arith.constant 0 : index
    %c0_443 = arith.constant 0 : index
    %1002 = vector.load %arg10[%c0_442, %c0_443] : memref<1x1xf32, #tpu.memory_space<vmem>>, vector<1x1xf32>
    %1003 = vector.broadcast %1002 : vector<1x1xf32> to vector<8x1xf32>
    %1004 = arith.addf %1001, %1003 : vector<8x1xf32>
    %cst_444 = arith.constant 5.000000e-01 : f32
    %1005 = vector.broadcast %cst_444 : f32 to vector<8x1xf32>
    %1006 = arith.mulf %1005, %1004 : vector<8x1xf32>
    %1007 = math.tanh %1006 : vector<8x1xf32>
    %cst_445 = arith.constant 5.000000e-01 : f32
    %1008 = vector.broadcast %cst_445 : f32 to vector<8x1xf32>
    %1009 = arith.mulf %1008, %1007 : vector<8x1xf32>
    %cst_446 = arith.constant 5.000000e-01 : f32
    %1010 = vector.broadcast %cst_446 : f32 to vector<8x1xf32>
    %1011 = arith.addf %1009, %1010 : vector<8x1xf32>
    %c0_447 = arith.constant 0 : index
    %c0_448 = arith.constant 0 : index
    %1012 = vector.load %arg11[%c0_447, %c0_448] : memref<8x1xf32, #tpu.memory_space<vmem>>, vector<8x1xf32>
    tpu.vector_store %arg11[%c0_447, %c0_448], %1011 {strides = array<i32>} : memref<8x1xf32, #tpu.memory_space<vmem>>, vector<8x1xf32>,
    return
  }
  func.func @transform_0(%arg0: i32) -> (i32, i32, i32) {
    %c0_i32 = arith.constant 0 : i32
    %c0_i32_0 = arith.constant 0 : i32
    %c0_i32_1 = arith.constant 0 : i32
    return %c0_i32, %arg0, %c0_i32_0 : i32, i32, i32
  }
  func.func @transform_1(%arg0: i32) -> (i32, i32, i32) {
    %c0_i32 = arith.constant 0 : i32
    %c0_i32_0 = arith.constant 0 : i32
    %c0_i32_1 = arith.constant 0 : i32
    %c0_i32_2 = arith.constant 0 : i32
    return %c0_i32, %c0_i32_0, %c0_i32_1 : i32, i32, i32
  }
  func.func @transform_2(%arg0: i32) -> (i32, i32, i32) {
    %c0_i32 = arith.constant 0 : i32
    %c0_i32_0 = arith.constant 0 : i32
    %c0_i32_1 = arith.constant 0 : i32
    %c0_i32_2 = arith.constant 0 : i32
    return %c0_i32, %c0_i32_0, %c0_i32_1 : i32, i32, i32
  }
  func.func @transform_3(%arg0: i32) -> (i32, i32, i32) {
    %c0_i32 = arith.constant 0 : i32
    %c0_i32_0 = arith.constant 0 : i32
    %c0_i32_1 = arith.constant 0 : i32
    %c0_i32_2 = arith.constant 0 : i32
    return %c0_i32, %c0_i32_0, %c0_i32_1 : i32, i32, i32
  }
  func.func @transform_4(%arg0: i32) -> (i32, i32) {
    %c0_i32 = arith.constant 0 : i32
    %c0_i32_0 = arith.constant 0 : i32
    %c0_i32_1 = arith.constant 0 : i32
    return %c0_i32, %c0_i32_0 : i32, i32
  }
  func.func @transform_5(%arg0: i32) -> (i32, i32) {
    %c0_i32 = arith.constant 0 : i32
    %c0_i32_0 = arith.constant 0 : i32
    %c0_i32_1 = arith.constant 0 : i32
    return %c0_i32, %c0_i32_0 : i32, i32
  }
  func.func @transform_6(%arg0: i32) -> (i32, i32) {
    %c0_i32 = arith.constant 0 : i32
    %c0_i32_0 = arith.constant 0 : i32
    %c0_i32_1 = arith.constant 0 : i32
    return %c0_i32, %c0_i32_0 : i32, i32
  }
  func.func @transform_7(%arg0: i32) -> (i32, i32) {
    %c0_i32 = arith.constant 0 : i32
    %c0_i32_0 = arith.constant 0 : i32
    %c0_i32_1 = arith.constant 0 : i32
    return %c0_i32, %c0_i32_0 : i32, i32
  }
  func.func @transform_8(%arg0: i32) -> (i32, i32) {
    %c0_i32 = arith.constant 0 : i32
    %c0_i32_0 = arith.constant 0 : i32
    %c0_i32_1 = arith.constant 0 : i32
    return %c0_i32, %c0_i32_0 : i32, i32
  }
  func.func @transform_9(%arg0: i32) -> (i32, i32) {
    %c0_i32 = arith.constant 0 : i32
    %c0_i32_0 = arith.constant 0 : i32
    %c0_i32_1 = arith.constant 0 : i32
    return %c0_i32, %c0_i32_0 : i32, i32
  }
  func.func @transform_10(%arg0: i32) -> (i32, i32) {
    %c0_i32 = arith.constant 0 : i32
    %c0_i32_0 = arith.constant 0 : i32
    return %arg0, %c0_i32 : i32, i32
  }
}

</mosaic_0001>

<llo_original>
// kernel: tpu_custom_call.1
$region0: #{tpu_custom_call.1}
  #allocation0 [shape = 'u32[]', space=smem, size = 0x4, offset = 0x4, fixed_abs, tag = 'smem constant byte address 0x4 - core index']
  #allocation1 [shape = 'u32[144,128]{1,0:T(1,128)}', space=vmem, size = 0x12000, scoped, tag = 'internal scratch']
  #allocation2 [shape = 'f32[8,8,128]{2,1,0:T(8,128)}', space=vmem, size = 0x8000, scoped, tag = 'scratch operand']
  #allocation3 [shape = 'f32[8,8,128]{2,1,0:T(8,128)}', space=vmem, size = 0x8000, scoped, tag = 'scratch operand']
  #allocation4 [shape = 'f32[8,8,512]{2,1,0:T(8,128)}', space=vmem, size = 0x20000, scoped, tag = 'scratch operand']
  #allocation5 [shape = 'f32[1,1]{1,0:T(1,128)S(1)}', space=vmem, size = 0x200, scoped, tag = 'scoped memory for tpu_custom_call.1']
  #allocation6 [shape = 'f32[1,1]{1,0:T(1,128)S(1)}', space=vmem, size = 0x200, scoped, tag = 'scoped memory for tpu_custom_call.1']
  %s0 = inlined_call_operand.vmem [shape: f32[8,8,128], index: 0, kind: input, shape index: {}]
  %s1 = inlined_call_operand.hbm [shape: f32[3,128,512], index: 1, kind: input, shape index: {}]
  %s2 = inlined_call_operand.hbm [shape: f32[3,128,512], index: 2, kind: input, shape index: {}]
  %s3 = inlined_call_operand.vmem [shape: f32[3,1,512], index: 3, kind: input, shape index: {}]
  %s4 = inlined_call_operand.vmem [shape: f32[128,1], index: 4, kind: input, shape index: {}]
  %s5 = inlined_call_operand.<no memory space> [shape: f32[1,1], index: 5, kind: input, shape index: {}]
  %s6 = inlined_call_operand.vmem [shape: f32[128,128], index: 6, kind: input, shape index: {}]
  %s7 = inlined_call_operand.vmem [shape: f32[1,128], index: 7, kind: input, shape index: {}]
  %s8 = inlined_call_operand.vmem [shape: f32[128,1], index: 8, kind: input, shape index: {}]
  %s9 = inlined_call_operand.<no memory space> [shape: f32[1,1], index: 9, kind: input, shape index: {}]
  %s10 = inlined_call_operand.vmem [shape: f32[8,1], index: 10, kind: output, shape index: {}]
  %s11 = sld [smem:[#allocation0]]
  $region58: #{tpu_custom_call.1} parent=0
    _
  %s13 = ssub.s32 1, %s11
  %s14 = scalar_select 0, %s13, %s11
  %v15 = vstv %s5
  %16 = vst [vmem:[#allocation5] sm:$0x1] %v15
  %v17 = vstv %s9
  %18 = vst [vmem:[#allocation6] sm:$0x1] %v17
  $region1: #{tpu_custom_call.1} parent=0
    #allocation7 [shape = 'u8[786432]{0}', space=vmem, size = 0xc0000, scoped, tag = 'input window, operand 1, single buffered']
    #allocation8 [shape = 's32[1]{0}', space=sflag, size = 0x4, scoped, tag = 'scoped memory for tpu_custom_call.1']
    #allocation9 [shape = 'u8[786432]{0}', space=vmem, size = 0xc0000, scoped, tag = 'input window, operand 2, single buffered']
    #allocation10 [shape = 's32[1]{0}', space=sflag, size = 0x4, scoped, tag = 'scoped memory for tpu_custom_call.1']
    %19 = vsyncpa [#allocation8], 0
    %20 = vsyncpa [#allocation10], 0
    // Predicated region
    $region2: #{tpu_custom_call.1} parent=1 // pred_check
      _
    $region3: #{tpu_custom_call.1} parent=1 // pred_check_branch
      %22 = sbr.rel (0) target = $region5
    $region4: #{tpu_custom_call.1} parent=1 // pred_region
      _
    $region5: #{tpu_custom_call.1} parent=1 // pred_fallthru
      _
    // Predicated region
    $region6: #{tpu_custom_call.1} parent=1 // pred_check
      _
    $region7: #{tpu_custom_call.1} parent=1 // pred_check_branch
      %24 = sbr.rel (0) target = $region9
    $region8: #{tpu_custom_call.1} parent=1 // pred_region
      %s26 = ssub.s32 24576, 24576
      %27 = vsyncadd [#allocation8], %s26
      %s28 = sshll.u32 [#allocation7], 4
      %s29 = int_to_ptr.vmem [resolvable:$true] %s28
      %34 = dma.hbm_to_vmem [thread:$0]  %s1, 24576, %s29, [#allocation8], 512, 512, 32
    $region9: #{tpu_custom_call.1} parent=1 // pred_fallthru
      _
    // Predicated region
    $region10: #{tpu_custom_call.1} parent=1 // pred_check
      _
    $region11: #{tpu_custom_call.1} parent=1 // pred_check_branch
      %36 = sbr.rel (0) target = $region13
    $region12: #{tpu_custom_call.1} parent=1 // pred_region
      %s38 = ssub.s32 24576, 24576
      %39 = vsyncadd [#allocation10], %s38
      %s40 = sshll.u32 [#allocation9], 4
      %s41 = int_to_ptr.vmem [resolvable:$true] %s40
      %46 = dma.hbm_to_vmem [thread:$0]  %s2, 24576, %s41, [#allocation10], 512, 512, 32
    $region13: #{tpu_custom_call.1} parent=1 // pred_fallthru
      _
    // Predicated region
    $region14: #{tpu_custom_call.1} parent=1 // pred_check
      _
    $region15: #{tpu_custom_call.1} parent=1 // pred_check_branch
      %48 = sbr.rel (0) target = $region17
    $region16: #{tpu_custom_call.1} parent=1 // pred_region
      _
    $region17: #{tpu_custom_call.1} parent=1 // pred_fallthru
      _
    // Predicated region
    $region18: #{tpu_custom_call.1} parent=1 // pred_check
      _
    $region19: #{tpu_custom_call.1} parent=1 // pred_check_branch
      %50 = sbr.rel (0) target = $region21
    $region20: #{tpu_custom_call.1} parent=1 // pred_region
      _
    $region21: #{tpu_custom_call.1} parent=1 // pred_fallthru
      _
    // Predicated region
    $region22: #{tpu_custom_call.1} parent=1 // pred_check
      _
    $region23: #{tpu_custom_call.1} parent=1 // pred_check_branch
      %52 = sbr.rel (0) target = $region25
    $region24: #{tpu_custom_call.1} parent=1 // pred_region
      _
    $region25: #{tpu_custom_call.1} parent=1 // pred_fallthru
      _
    // Predicated region
    $region26: #{tpu_custom_call.1} parent=1 // pred_check
      _
    $region27: #{tpu_custom_call.1} parent=1 // pred_check_branch
      %54 = sbr.rel (0) target = $region29
    $region28: #{tpu_custom_call.1} parent=1 // pred_region
      _
    $region29: #{tpu_custom_call.1} parent=1 // pred_fallthru
      _
    // Predicated region
    $region30: #{tpu_custom_call.1} parent=1 // pred_check
      _
    $region31: #{tpu_custom_call.1} parent=1 // pred_check_branch
      %56 = sbr.rel (0) target = $region33
    $region32: #{tpu_custom_call.1} parent=1 // pred_region
      _
    $region33: #{tpu_custom_call.1} parent=1 // pred_fallthru
      _
    // Predicated region
    $region34: #{tpu_custom_call.1} parent=1 // pred_check
      _
    $region35: #{tpu_custom_call.1} parent=1 // pred_check_branch
      %58 = sbr.rel (0) target = $region37
    $region36: #{tpu_custom_call.1} parent=1 // pred_region
      _
    $region37: #{tpu_custom_call.1} parent=1 // pred_fallthru
      _
    // Predicated region
    $region38: #{tpu_custom_call.1} parent=1 // pred_check
      _
    $region39: #{tpu_custom_call.1} parent=1 // pred_check_branch
      %60 = sbr.rel (0) target = $region41
    $region40: #{tpu_custom_call.1} parent=1 // pred_region
      _
    $region41: #{tpu_custom_call.1} parent=1 // pred_fallthru
      _
    // Predicated region
    $region42: #{tpu_custom_call.1} parent=1 // pred_check
      _
    $region43: #{tpu_custom_call.1} parent=1 // pred_check_branch
      %62 = sbr.rel (0) target = $region45
    $region44: #{tpu_custom_call.1} parent=1 // pred_region
      %63 = dma.done [#allocation8], 24576
    $region45: #{tpu_custom_call.1} parent=1 // pred_fallthru
      _
    // Predicated region
    $region46: #{tpu_custom_call.1} parent=1 // pred_check
      _
    $region47: #{tpu_custom_call.1} parent=1 // pred_check_branch
      %65 = sbr.rel (0) target = $region49
    $region48: #{tpu_custom_call.1} parent=1 // pred_region
      %66 = dma.done [#allocation10], 24576
    $region49: #{tpu_custom_call.1} parent=1 // pred_fallthru
      _
    %v67 = vlaneseq
    %v68 = vand.u32 %v67, 127
    %v69 = vadd.s32 %v68, 128
    %v70 = vadd.s32 %v68, 256
    %v71 = vadd.s32 %v68, 384
    %vm72 = vcmp.lt.s32.totalorder %v68, 0
    %v73 = vsub.s32 0, %v68
    %v74 = vsel %vm72, %v73, %v68
    %v75 = vshrl.u32 %v74, 7
    %v76 = vand.u32 %v74, 127
    %v77 = vsub.s32 0, %v76
    %v78 = vsel %vm72, %v77, %v76
    %vm79 = vcmp.lt.s32.totalorder %v69, 0
    %v80 = vsub.s32 0, %v69
    %v81 = vsel %vm79, %v80, %v69
    %v82 = vshrl.u32 %v81, 7
    %v83 = vand.u32 %v81, 127
    %v84 = vsub.s32 0, %v83
    %v85 = vsel %vm79, %v84, %v83
    %vm86 = vcmp.lt.s32.totalorder %v70, 0
    %v87 = vsub.s32 0, %v70
    %v88 = vsel %vm86, %v87, %v70
    %v89 = vshrl.u32 %v88, 7
    %v90 = vand.u32 %v88, 127
    %v91 = vsub.s32 0, %v90
    %v92 = vsel %vm86, %v91, %v90
    %vm93 = vcmp.lt.s32.totalorder %v71, 0
    %v94 = vsub.s32 0, %v71
    %v95 = vsel %vm93, %v94, %v71
    %v96 = vshrl.u32 %v95, 7
    %v97 = vand.u32 %v95, 127
    %v98 = vsub.s32 0, %v97
    %v99 = vsel %vm93, %v98, %v97
    %vm100 = vcmp.ne.s32.totalorder %v78, 0
    %vm101 = vcmp.ne.s32.totalorder %v85, 0
    %vm102 = vcmp.ne.s32.totalorder %v92, 0
    %vm103 = vcmp.ne.s32.totalorder %v99, 0
    %vm104 = vcmp.lt.s32.totalorder %v78, 0
    %vm105 = vcmp.lt.s32.totalorder %v85, 0
    %vm106 = vcmp.lt.s32.totalorder %v92, 0
    %vm107 = vcmp.lt.s32.totalorder %v99, 0
    %vm108 = vmand %vm104, %vm100
    %vm109 = vmand %vm105, %vm101
    %vm110 = vmand %vm106, %vm102
    %vm111 = vmand %vm107, %vm103
    %v112 = vadd.s32 %v78, 128
    %v113 = vadd.s32 %v85, 128
    %v114 = vadd.s32 %v92, 128
    %v115 = vadd.s32 %v99, 128
    %v116 = vsel %vm108, %v112, %v78
    %v117 = vsel %vm109, %v113, %v85
    %v118 = vsel %vm110, %v114, %v92
    %v119 = vsel %vm111, %v115, %v99
    %vm120 = vcmp.ge.s32.totalorder %v116, 64
    %vm121 = vcmp.ge.s32.totalorder %v117, 64
    %vm122 = vcmp.ge.s32.totalorder %v118, 64
    %vm123 = vcmp.ge.s32.totalorder %v119, 64
    %v124 = vld [vmem:[%s0] sm:$0xff]
    %v125 = vld [vmem:[%s0 + $0x8] sm:$0xff]
    %v126 = vld [vmem:[%s0 + $0x10] sm:$0xff]
    %v127 = vld [vmem:[%s0 + $0x18] sm:$0xff]
    %v128 = vld [vmem:[%s0 + $0x20] sm:$0xff]
    %v129 = vld [vmem:[%s0 + $0x28] sm:$0xff]
    %v130 = vld [vmem:[%s0 + $0x30] sm:$0xff]
    %v131 = vld [vmem:[%s0 + $0x38] sm:$0xff]
    %v132 = vld [vmem:[#allocation7] sm:$0xff]
    %v133 = vld [vmem:[#allocation7 + $0x8] sm:$0xff]
    %v134 = vld [vmem:[#allocation7 + $0x10] sm:$0xff]
    %v135 = vld [vmem:[#allocation7 + $0x18] sm:$0xff]
    %v136 = vld [vmem:[#allocation7 + $0x20] sm:$0xff]
    %v137 = vld [vmem:[#allocation7 + $0x28] sm:$0xff]
    %v138 = vld [vmem:[#allocation7 + $0x30] sm:$0xff]
    %v139 = vld [vmem:[#allocation7 + $0x38] sm:$0xff]
    %v140 = vld [vmem:[#allocation7 + $0x40] sm:$0xff]
    %v141 = vld [vmem:[#allocation7 + $0x48] sm:$0xff]
    %v142 = vld [vmem:[#allocation7 + $0x50] sm:$0xff]
    %v143 = vld [vmem:[#allocation7 + $0x58] sm:$0xff]
    %v144 = vld [vmem:[#allocation7 + $0x60] sm:$0xff]
    %v145 = vld [vmem:[#allocation7 + $0x68] sm:$0xff]
    %v146 = vld [vmem:[#allocation7 + $0x70] sm:$0xff]
    %v147 = vld [vmem:[#allocation7 + $0x78] sm:$0xff]
    %v148 = vld [vmem:[#allocation7 + $0x80] sm:$0xff]
    %v149 = vld [vmem:[#allocation7 + $0x88] sm:$0xff]
    %v150 = vld [vmem:[#allocation7 + $0x90] sm:$0xff]
    %v151 = vld [vmem:[#allocation7 + $0x98] sm:$0xff]
    %v152 = vld [vmem:[#allocation7 + $0xa0] sm:$0xff]
    %v153 = vld [vmem:[#allocation7 + $0xa8] sm:$0xff]
    %v154 = vld [vmem:[#allocation7 + $0xb0] sm:$0xff]
    %v155 = vld [vmem:[#allocation7 + $0xb8] sm:$0xff]
    %v156 = vld [vmem:[#allocation7 + $0xc0] sm:$0xff]
    %v157 = vld [vmem:[#allocation7 + $0xc8] sm:$0xff]
    %v158 = vld [vmem:[#allocation7 + $0xd0] sm:$0xff]
    %v159 = vld [vmem:[#allocation7 + $0xd8] sm:$0xff]
    %v160 = vld [vmem:[#allocation7 + $0xe0] sm:$0xff]
    %v161 = vld [vmem:[#allocation7 + $0xe8] sm:$0xff]
    %v162 = vld [vmem:[#allocation7 + $0xf0] sm:$0xff]
    %v163 = vld [vmem:[#allocation7 + $0xf8] sm:$0xff]
    %v164 = vld [vmem:[#allocation7 + $0x100] sm:$0xff]
    %v165 = vld [vmem:[#allocation7 + $0x108] sm:$0xff]
    %v166 = vld [vmem:[#allocation7 + $0x110] sm:$0xff]
    %v167 = vld [vmem:[#allocation7 + $0x118] sm:$0xff]
    %v168 = vld [vmem:[#allocation7 + $0x120] sm:$0xff]
    %v169 = vld [vmem:[#allocation7 + $0x128] sm:$0xff]
    %v170 = vld [vmem:[#allocation7 + $0x130] sm:$0xff]
    %v171 = vld [vmem:[#allocation7 + $0x138] sm:$0xff]
    %v172 = vld [vmem:[#allocation7 + $0x140] sm:$0xff]
    %v173 = vld [vmem:[#allocation7 + $0x148] sm:$0xff]
    %v174 = vld [vmem:[#allocation7 + $0x150] sm:$0xff]
    %v175 = vld [vmem:[#allocation7 + $0x158] sm:$0xff]
    %v176 = vld [vmem:[#allocation7 + $0x160] sm:$0xff]
    %v177 = vld [vmem:[#allocation7 + $0x168] sm:$0xff]
    %v178 = vld [vmem:[#allocation7 + $0x170] sm:$0xff]
    %v179 = vld [vmem:[#allocation7 + $0x178] sm:$0xff]
    %v180 = vld [vmem:[#allocation7 + $0x180] sm:$0xff]
    %v181 = vld [vmem:[#allocation7 + $0x188] sm:$0xff]
    %v182 = vld [vmem:[#allocation7 + $0x190] sm:$0xff]
    %v183 = vld [vmem:[#allocation7 + $0x198] sm:$0xff]
    %v184 = vld [vmem:[#allocation7 + $0x1a0] sm:$0xff]
    %v185 = vld [vmem:[#allocation7 + $0x1a8] sm:$0xff]
    %v186 = vld [vmem:[#allocation7 + $0x1b0] sm:$0xff]
    %v187 = vld [vmem:[#allocation7 + $0x1b8] sm:$0xff]
    %v188 = vld [vmem:[#allocation7 + $0x1c0] sm:$0xff]
    %v189 = vld [vmem:[#allocation7 + $0x1c8] sm:$0xff]
    %v190 = vld [vmem:[#allocation7 + $0x1d0] sm:$0xff]
    %v191 = vld [vmem:[#allocation7 + $0x1d8] sm:$0xff]
    %v192 = vld [vmem:[#allocation7 + $0x1e0] sm:$0xff]
    %v193 = vld [vmem:[#allocation7 + $0x1e8] sm:$0xff]
    %v194 = vld [vmem:[#allocation7 + $0x1f0] sm:$0xff]
    %v195 = vld [vmem:[#allocation7 + $0x1f8] sm:$0xff]
    %v196 = vld [vmem:[%s3] sm:$0xf]
    %v198 = vlaneseq
    %v199 = vshrl.u32 %v198, 7
    %v200 = vsub.s32 0, %v199
    %v201 = vrot.slane %v196, %v200
    %v202 = vlaneseq
    %v203 = vshrl.u32 %v202, 7
    %v204 = vsub.s32 1, %v203
    %v205 = vrot.slane %v196, %v204
    %v206 = vlaneseq
    %v207 = vshrl.u32 %v206, 7
    %v208 = vsub.s32 2, %v207
    %v209 = vrot.slane %v196, %v208
    %v210 = vlaneseq
    %v211 = vshrl.u32 %v210, 7
    %v212 = vsub.s32 3, %v211
    %v213 = vrot.slane %v196, %v212
    %218 = vmatprep.subr.mxu0 %v133
    %219 = vmatpush1.msra.mxu0 %v132
    %220 = vmatprep.subr.mxu0 %v137
    %221 = vmatpush1.msra.mxu0 %v136
    %222 = vmatprep.subr.mxu0 %v141
    %223 = vmatpush1.msra.mxu0 %v140
    %224 = vmatprep.subr.mxu0 %v145
    %225 = vmatpush1.msra.mxu0 %v144
    %226 = vmatprep.subr.mxu0 %v149
    %227 = vmatpush1.msra.mxu0 %v148
    %228 = vmatprep.subr.mxu0 %v153
    %229 = vmatpush1.msra.mxu0 %v152
    %230 = vmatprep.subr.mxu0 %v157
    %231 = vmatpush1.msra.mxu0 %v156
    %232 = vmatprep.subr.mxu0 %v161
    %233 = vmatpush1.msra.mxu0 %v160
    %234 = vmatprep.subr.mxu0 %v165
    %235 = vmatpush1.msra.mxu0 %v164
    %236 = vmatprep.subr.mxu0 %v169
    %237 = vmatpush1.msra.mxu0 %v168
    %238 = vmatprep.subr.mxu0 %v173
    %239 = vmatpush1.msra.mxu0 %v172
    %240 = vmatprep.subr.mxu0 %v177
    %241 = vmatpush1.msra.mxu0 %v176
    %242 = vmatprep.subr.mxu0 %v181
    %243 = vmatpush1.msra.mxu0 %v180
    %244 = vmatprep.subr.mxu0 %v185
    %245 = vmatpush1.msra.mxu0 %v184
    %246 = vmatprep.subr.mxu0 %v189
    %247 = vmatpush1.msra.mxu0 %v188
    %248 = vmatprep.subr.mxu0 %v193
    %249 = vmatpush1.msra.mxu0 %v192
    %250 = vmatprep.subr.mxu0 0.0
    %251 = vmatpush1.msra.mxu0 0.0
    %252 = vmatprep.subr.mxu0 0.0
    %253 = vmatpush1.msra.mxu0 0.0
    %254 = vmatprep.subr.mxu0 0.0
    %255 = vmatpush1.msra.mxu0 0.0
    %256 = vmatprep.subr.mxu0 0.0
    %257 = vmatpush1.msra.mxu0 0.0
    %258 = vmatprep.subr.mxu0 0.0
    %259 = vmatpush1.msra.mxu0 0.0
    %260 = vmatprep.subr.mxu0 0.0
    %261 = vmatpush1.msra.mxu0 0.0
    %262 = vmatprep.subr.mxu0 0.0
    %263 = vmatpush1.msra.mxu0 0.0
    %264 = vmatprep.subr.mxu0 0.0
    %265 = vmatpush1.msra.mxu0 0.0
    %266 = vmatprep.subr.mxu0 0.0
    %267 = vmatpush1.msra.mxu0 0.0
    %268 = vmatprep.subr.mxu0 0.0
    %269 = vmatpush1.msra.mxu0 0.0
    %270 = vmatprep.subr.mxu0 0.0
    %271 = vmatpush1.msra.mxu0 0.0
    %272 = vmatprep.subr.mxu0 0.0
    %273 = vmatpush1.msra.mxu0 0.0
    %274 = vmatprep.subr.mxu0 0.0
    %275 = vmatpush1.msra.mxu0 0.0
    %276 = vmatprep.subr.mxu0 0.0
    %277 = vmatpush1.msra.mxu0 0.0
    %278 = vmatprep.subr.mxu0 0.0
    %279 = vmatpush1.msra.mxu0 0.0
    %280 = vmatprep.subr.mxu0 0.0
    %281 = vmatpush1.msra.mxu0 0.0
    %282 = vmatprep.mubr.f32.mxu0 0.0
    %283 = vmatmul.mubr.f32.gmra.mrb[0].mxu0 %v124
    %v284 = vpop.f32.mrb[0].mxu0
    %v285 = vadd.f32 %v201, %v284
    %v286 = vpop.f32.mrb[0].mxu0
    %v287 = vadd.f32 %v205, %v286
    %288 = vmatprep.mubr.f32.mxu0 0.0
    %289 = vmatmul.mubr.f32.gmra.mrb[0].mxu0 %v125
    %v290 = vpop.f32.mrb[0].mxu0
    %v291 = vadd.f32 %v201, %v290
    %v292 = vpop.f32.mrb[0].mxu0
    %v293 = vadd.f32 %v205, %v292
    %294 = vmatprep.mubr.f32.mxu0 0.0
    %295 = vmatmul.mubr.f32.gmra.mrb[0].mxu0 %v126
    %v296 = vpop.f32.mrb[0].mxu0
    %v297 = vadd.f32 %v201, %v296
    %v298 = vpop.f32.mrb[0].mxu0
    %v299 = vadd.f32 %v205, %v298
    %300 = vmatprep.mubr.f32.mxu0 0.0
    %301 = vmatmul.mubr.f32.gmra.mrb[0].mxu0 %v127
    %v302 = vpop.f32.mrb[0].mxu0
    %v303 = vadd.f32 %v201, %v302
    %v304 = vpop.f32.mrb[0].mxu0
    %v305 = vadd.f32 %v205, %v304
    %306 = vmatprep.mubr.f32.mxu0 0.0
    %307 = vmatmul.mubr.f32.gmra.mrb[0].mxu0 %v128
    %v308 = vpop.f32.mrb[0].mxu0
    %v309 = vadd.f32 %v201, %v308
    %v310 = vpop.f32.mrb[0].mxu0
    %v311 = vadd.f32 %v205, %v310
    %312 = vmatprep.mubr.f32.mxu0 0.0
    %313 = vmatmul.mubr.f32.gmra.mrb[0].mxu0 %v129
    %v314 = vpop.f32.mrb[0].mxu0
    %v315 = vadd.f32 %v201, %v314
    %v316 = vpop.f32.mrb[0].mxu0
    %v317 = vadd.f32 %v205, %v316
    %318 = vmatprep.mubr.f32.mxu0 0.0
    %319 = vmatmul.mubr.f32.gmra.mrb[0].mxu0 %v130
    %v320 = vpop.f32.mrb[0].mxu0
    %v321 = vadd.f32 %v201, %v320
    %v322 = vpop.f32.mrb[0].mxu0
    %v323 = vadd.f32 %v205, %v322
    %324 = vmatprep.mubr.f32.mxu0 0.0
    %325 = vmatmul.mubr.f32.gmra.mrb[0].mxu0 %v131
    %v326 = vpop.f32.mrb[0].mxu0
    %v327 = vadd.f32 %v201, %v326
    %v328 = vpop.f32.mrb[0].mxu0
    %v329 = vadd.f32 %v205, %v328
    %330 = vdwg.mxu0
    %331 = vmatprep.subr.mxu0 %v135
    %332 = vmatpush1.msra.mxu0 %v134
    %333 = vmatprep.subr.mxu0 %v139
    %334 = vmatpush1.msra.mxu0 %v138
    %335 = vmatprep.subr.mxu0 %v143
    %336 = vmatpush1.msra.mxu0 %v142
    %337 = vmatprep.subr.mxu0 %v147
    %338 = vmatpush1.msra.mxu0 %v146
    %339 = vmatprep.subr.mxu0 %v151
    %340 = vmatpush1.msra.mxu0 %v150
    %341 = vmatprep.subr.mxu0 %v155
    %342 = vmatpush1.msra.mxu0 %v154
    %343 = vmatprep.subr.mxu0 %v159
    %344 = vmatpush1.msra.mxu0 %v158
    %345 = vmatprep.subr.mxu0 %v163
    %346 = vmatpush1.msra.mxu0 %v162
    %347 = vmatprep.subr.mxu0 %v167
    %348 = vmatpush1.msra.mxu0 %v166
    %349 = vmatprep.subr.mxu0 %v171
    %350 = vmatpush1.msra.mxu0 %v170
    %351 = vmatprep.subr.mxu0 %v175
    %352 = vmatpush1.msra.mxu0 %v174
    %353 = vmatprep.subr.mxu0 %v179
    %354 = vmatpush1.msra.mxu0 %v178
    %355 = vmatprep.subr.mxu0 %v183
    %356 = vmatpush1.msra.mxu0 %v182
    %357 = vmatprep.subr.mxu0 %v187
    %358 = vmatpush1.msra.mxu0 %v186
    %359 = vmatprep.subr.mxu0 %v191
    %360 = vmatpush1.msra.mxu0 %v190
    %361 = vmatprep.subr.mxu0 %v195
    %362 = vmatpush1.msra.mxu0 %v194
    %363 = vmatprep.subr.mxu0 0.0
    %364 = vmatpush1.msra.mxu0 0.0
    %365 = vmatprep.subr.mxu0 0.0
    %366 = vmatpush1.msra.mxu0 0.0
    %367 = vmatprep.subr.mxu0 0.0
    %368 = vmatpush1.msra.mxu0 0.0
    %369 = vmatprep.subr.mxu0 0.0
    %370 = vmatpush1.msra.mxu0 0.0
    %371 = vmatprep.subr.mxu0 0.0
    %372 = vmatpush1.msra.mxu0 0.0
    %373 = vmatprep.subr.mxu0 0.0
    %374 = vmatpush1.msra.mxu0 0.0
    %375 = vmatprep.subr.mxu0 0.0
    %376 = vmatpush1.msra.mxu0 0.0
    %377 = vmatprep.subr.mxu0 0.0
    %378 = vmatpush1.msra.mxu0 0.0
    %379 = vmatprep.subr.mxu0 0.0
    %380 = vmatpush1.msra.mxu0 0.0
    %381 = vmatprep.subr.mxu0 0.0
    %382 = vmatpush1.msra.mxu0 0.0
    %383 = vmatprep.subr.mxu0 0.0
    %384 = vmatpush1.msra.mxu0 0.0
    %385 = vmatprep.subr.mxu0 0.0
    %386 = vmatpush1.msra.mxu0 0.0
    %387 = vmatprep.subr.mxu0 0.0
    %388 = vmatpush1.msra.mxu0 0.0
    %389 = vmatprep.subr.mxu0 0.0
    %390 = vmatpush1.msra.mxu0 0.0
    %391 = vmatprep.subr.mxu0 0.0
    %392 = vmatpush1.msra.mxu0 0.0
    %393 = vmatprep.subr.mxu0 0.0
    %394 = vmatpush1.msra.mxu0 0.0
    %395 = vmatprep.mubr.f32.mxu0 0.0
    %396 = vmatmul.mubr.f32.gmra.mrb[0].mxu0 %v124
    %v397 = vpop.f32.mrb[0].mxu0
    %v398 = vadd.f32 %v209, %v397
    %v399 = vpop.f32.mrb[0].mxu0
    %v400 = vadd.f32 %v213, %v399
    %401 = vmatprep.mubr.f32.mxu0 0.0
    %402 = vmatmul.mubr.f32.gmra.mrb[0].mxu0 %v125
    %v403 = vpop.f32.mrb[0].mxu0
    %v404 = vadd.f32 %v209, %v403
    %v405 = vpop.f32.mrb[0].mxu0
    %v406 = vadd.f32 %v213, %v405
    %407 = vmatprep.mubr.f32.mxu0 0.0
    %408 = vmatmul.mubr.f32.gmra.mrb[0].mxu0 %v126
    %v409 = vpop.f32.mrb[0].mxu0
    %v410 = vadd.f32 %v209, %v409
    %v411 = vpop.f32.mrb[0].mxu0
    %v412 = vadd.f32 %v213, %v411
    %413 = vmatprep.mubr.f32.mxu0 0.0
    %414 = vmatmul.mubr.f32.gmra.mrb[0].mxu0 %v127
    %v415 = vpop.f32.mrb[0].mxu0
    %v416 = vadd.f32 %v209, %v415
    %v417 = vpop.f32.mrb[0].mxu0
    %v418 = vadd.f32 %v213, %v417
    %419 = vmatprep.mubr.f32.mxu0 0.0
    %420 = vmatmul.mubr.f32.gmra.mrb[0].mxu0 %v128
    %v421 = vpop.f32.mrb[0].mxu0
    %v422 = vadd.f32 %v209, %v421
    %v423 = vpop.f32.mrb[0].mxu0
    %v424 = vadd.f32 %v213, %v423
    %425 = vmatprep.mubr.f32.mxu0 0.0
    %426 = vmatmul.mubr.f32.gmra.mrb[0].mxu0 %v129
    %v427 = vpop.f32.mrb[0].mxu0
    %v428 = vadd.f32 %v209, %v427
    %v429 = vpop.f32.mrb[0].mxu0
    %v430 = vadd.f32 %v213, %v429
    %431 = vmatprep.mubr.f32.mxu0 0.0
    %432 = vmatmul.mubr.f32.gmra.mrb[0].mxu0 %v130
    %v433 = vpop.f32.mrb[0].mxu0
    %v434 = vadd.f32 %v209, %v433
    %v435 = vpop.f32.mrb[0].mxu0
    %v436 = vadd.f32 %v213, %v435
    %437 = vmatprep.mubr.f32.mxu0 0.0
    %438 = vmatmul.mubr.f32.gmra.mrb[0].mxu0 %v131
    %v439 = vpop.f32.mrb[0].mxu0
    %v440 = vadd.f32 %v209, %v439
    %v441 = vpop.f32.mrb[0].mxu0
    %v442 = vadd.f32 %v213, %v441
    %443 = vdwg.mxu0
    %v444 = vsel %vm120, %v327, %v285
    %v445 = vsel %vm121, %v329, %v287
    %v446 = vsel %vm122, %v440, %v398
    %v447 = vsel %vm123, %v442, %v400
    %448 = vst [vmem:[#allocation4] sm:$0xff] %v444
    %449 = vst [vmem:[#allocation4 + $0x8] sm:$0xff] %v445
    %450 = vst [vmem:[#allocation4 + $0x10] sm:$0xff] %v446
    %451 = vst [vmem:[#allocation4 + $0x18] sm:$0xff] %v447
    %v452 = vsel %vm120, %v321, %v291
    %v453 = vsel %vm121, %v323, %v293
    %v454 = vsel %vm122, %v434, %v404
    %v455 = vsel %vm123, %v436, %v406
    %s456 = scalar_lea.vmem [#allocation4], 32
    %457 = vst [vmem:[%s456] sm:$0xff] %v452
    %458 = vst [vmem:[%s456 + $0x8] sm:$0xff] %v453
    %459 = vst [vmem:[%s456 + $0x10] sm:$0xff] %v454
    %460 = vst [vmem:[%s456 + $0x18] sm:$0xff] %v455
    %v461 = vsel %vm120, %v315, %v297
    %v462 = vsel %vm121, %v317, %v299
    %v463 = vsel %vm122, %v428, %v410
    %v464 = vsel %vm123, %v430, %v412
    %s465 = scalar_lea.vmem [#allocation4], 64
    %466 = vst [vmem:[%s465] sm:$0xff] %v461
    %467 = vst [vmem:[%s465 + $0x8] sm:$0xff] %v462
    %468 = vst [vmem:[%s465 + $0x10] sm:$0xff] %v463
    %469 = vst [vmem:[%s465 + $0x18] sm:$0xff] %v464
    %v470 = vsel %vm120, %v309, %v303
    %v471 = vsel %vm121, %v311, %v305
    %v472 = vsel %vm122, %v422, %v416
    %v473 = vsel %vm123, %v424, %v418
    %s474 = scalar_lea.vmem [#allocation4], 96
    %475 = vst [vmem:[%s474] sm:$0xff] %v470
    %476 = vst [vmem:[%s474 + $0x8] sm:$0xff] %v471
    %477 = vst [vmem:[%s474 + $0x10] sm:$0xff] %v472
    %478 = vst [vmem:[%s474 + $0x18] sm:$0xff] %v473
    %v479 = vsel %vm120, %v303, %v309
    %v480 = vsel %vm121, %v305, %v311
    %v481 = vsel %vm122, %v416, %v422
    %v482 = vsel %vm123, %v418, %v424
    %s483 = scalar_lea.vmem [#allocation4], 128
    %484 = vst [vmem:[%s483] sm:$0xff] %v479
    %485 = vst [vmem:[%s483 + $0x8] sm:$0xff] %v480
    %486 = vst [vmem:[%s483 + $0x10] sm:$0xff] %v481
    %487 = vst [vmem:[%s483 + $0x18] sm:$0xff] %v482
    %v488 = vsel %vm120, %v297, %v315
    %v489 = vsel %vm121, %v299, %v317
    %v490 = vsel %vm122, %v410, %v428
    %v491 = vsel %vm123, %v412, %v430
    %s492 = scalar_lea.vmem [#allocation4], 160
    %493 = vst [vmem:[%s492] sm:$0xff] %v488
    %494 = vst [vmem:[%s492 + $0x8] sm:$0xff] %v489
    %495 = vst [vmem:[%s492 + $0x10] sm:$0xff] %v490
    %496 = vst [vmem:[%s492 + $0x18] sm:$0xff] %v491
    %v497 = vsel %vm120, %v291, %v321
    %v498 = vsel %vm121, %v293, %v323
    %v499 = vsel %vm122, %v404, %v434
    %v500 = vsel %vm123, %v406, %v436
    %s501 = scalar_lea.vmem [#allocation4], 192
    %502 = vst [vmem:[%s501] sm:$0xff] %v497
    %503 = vst [vmem:[%s501 + $0x8] sm:$0xff] %v498
    %504 = vst [vmem:[%s501 + $0x10] sm:$0xff] %v499
    %505 = vst [vmem:[%s501 + $0x18] sm:$0xff] %v500
    %v506 = vsel %vm120, %v285, %v327
    %v507 = vsel %vm121, %v287, %v329
    %v508 = vsel %vm122, %v398, %v440
    %v509 = vsel %vm123, %v400, %v442
    %s510 = scalar_lea.vmem [#allocation4], 224
    %511 = vst [vmem:[%s510] sm:$0xff] %v506
    %512 = vst [vmem:[%s510 + $0x8] sm:$0xff] %v507
    %513 = vst [vmem:[%s510 + $0x10] sm:$0xff] %v508
    %514 = vst [vmem:[%s510 + $0x18] sm:$0xff] %v509
    %v515 = vld [vmem:[#allocation9] sm:$0xff]
    %v516 = vld [vmem:[#allocation9 + $0x8] sm:$0xff]
    %v517 = vld [vmem:[#allocation9 + $0x10] sm:$0xff]
    %v518 = vld [vmem:[#allocation9 + $0x18] sm:$0xff]
    %v519 = vld [vmem:[#allocation9 + $0x20] sm:$0xff]
    %v520 = vld [vmem:[#allocation9 + $0x28] sm:$0xff]
    %v521 = vld [vmem:[#allocation9 + $0x30] sm:$0xff]
    %v522 = vld [vmem:[#allocation9 + $0x38] sm:$0xff]
    %v523 = vld [vmem:[#allocation9 + $0x40] sm:$0xff]
    %v524 = vld [vmem:[#allocation9 + $0x48] sm:$0xff]
    %v525 = vld [vmem:[#allocation9 + $0x50] sm:$0xff]
    %v526 = vld [vmem:[#allocation9 + $0x58] sm:$0xff]
    %v527 = vld [vmem:[#allocation9 + $0x60] sm:$0xff]
    %v528 = vld [vmem:[#allocation9 + $0x68] sm:$0xff]
    %v529 = vld [vmem:[#allocation9 + $0x70] sm:$0xff]
    %v530 = vld [vmem:[#allocation9 + $0x78] sm:$0xff]
    %v531 = vld [vmem:[#allocation9 + $0x80] sm:$0xff]
    %v532 = vld [vmem:[#allocation9 + $0x88] sm:$0xff]
    %v533 = vld [vmem:[#allocation9 + $0x90] sm:$0xff]
    %v534 = vld [vmem:[#allocation9 + $0x98] sm:$0xff]
    %v535 = vld [vmem:[#allocation9 + $0xa0] sm:$0xff]
    %v536 = vld [vmem:[#allocation9 + $0xa8] sm:$0xff]
    %v537 = vld [vmem:[#allocation9 + $0xb0] sm:$0xff]
    %v538 = vld [vmem:[#allocation9 + $0xb8] sm:$0xff]
    %v539 = vld [vmem:[#allocation9 + $0xc0] sm:$0xff]
    %v540 = vld [vmem:[#allocation9 + $0xc8] sm:$0xff]
    %v541 = vld [vmem:[#allocation9 + $0xd0] sm:$0xff]
    %v542 = vld [vmem:[#allocation9 + $0xd8] sm:$0xff]
    %v543 = vld [vmem:[#allocation9 + $0xe0] sm:$0xff]
    %v544 = vld [vmem:[#allocation9 + $0xe8] sm:$0xff]
    %v545 = vld [vmem:[#allocation9 + $0xf0] sm:$0xff]
    %v546 = vld [vmem:[#allocation9 + $0xf8] sm:$0xff]
    %v547 = vld [vmem:[#allocation9 + $0x100] sm:$0xff]
    %v548 = vld [vmem:[#allocation9 + $0x108] sm:$0xff]
    %v549 = vld [vmem:[#allocation9 + $0x110] sm:$0xff]
    %v550 = vld [vmem:[#allocation9 + $0x118] sm:$0xff]
    %v551 = vld [vmem:[#allocation9 + $0x120] sm:$0xff]
    %v552 = vld [vmem:[#allocation9 + $0x128] sm:$0xff]
    %v553 = vld [vmem:[#allocation9 + $0x130] sm:$0xff]
    %v554 = vld [vmem:[#allocation9 + $0x138] sm:$0xff]
    %v555 = vld [vmem:[#allocation9 + $0x140] sm:$0xff]
    %v556 = vld [vmem:[#allocation9 + $0x148] sm:$0xff]
    %v557 = vld [vmem:[#allocation9 + $0x150] sm:$0xff]
    %v558 = vld [vmem:[#allocation9 + $0x158] sm:$0xff]
    %v559 = vld [vmem:[#allocation9 + $0x160] sm:$0xff]
    %v560 = vld [vmem:[#allocation9 + $0x168] sm:$0xff]
    %v561 = vld [vmem:[#allocation9 + $0x170] sm:$0xff]
    %v562 = vld [vmem:[#allocation9 + $0x178] sm:$0xff]
    %v563 = vld [vmem:[#allocation9 + $0x180] sm:$0xff]
    %v564 = vld [vmem:[#allocation9 + $0x188] sm:$0xff]
    %v565 = vld [vmem:[#allocation9 + $0x190] sm:$0xff]
    %v566 = vld [vmem:[#allocation9 + $0x198] sm:$0xff]
    %v567 = vld [vmem:[#allocation9 + $0x1a0] sm:$0xff]
    %v568 = vld [vmem:[#allocation9 + $0x1a8] sm:$0xff]
    %v569 = vld [vmem:[#allocation9 + $0x1b0] sm:$0xff]
    %v570 = vld [vmem:[#allocation9 + $0x1b8] sm:$0xff]
    %v571 = vld [vmem:[#allocation9 + $0x1c0] sm:$0xff]
    %v572 = vld [vmem:[#allocation9 + $0x1c8] sm:$0xff]
    %v573 = vld [vmem:[#allocation9 + $0x1d0] sm:$0xff]
    %v574 = vld [vmem:[#allocation9 + $0x1d8] sm:$0xff]
    %v575 = vld [vmem:[#allocation9 + $0x1e0] sm:$0xff]
    %v576 = vld [vmem:[#allocation9 + $0x1e8] sm:$0xff]
    %v577 = vld [vmem:[#allocation9 + $0x1f0] sm:$0xff]
    %v578 = vld [vmem:[#allocation9 + $0x1f8] sm:$0xff]
    %v579 = vld [vmem:[#allocation4] sm:$0xff]
    %v580 = vld [vmem:[#allocation4 + $0x8] sm:$0xff]
    %v581 = vld [vmem:[#allocation4 + $0x10] sm:$0xff]
    %v582 = vld [vmem:[#allocation4 + $0x18] sm:$0xff]
    %583 = vmatprep.subr.mxu0 %v516
    %584 = vmatpush1.msra.mxu0 %v515
    %585 = vmatprep.subr.mxu0 %v520
    %586 = vmatpush1.msra.mxu0 %v519
    %587 = vmatprep.subr.mxu0 %v524
    %588 = vmatpush1.msra.mxu0 %v523
    %589 = vmatprep.subr.mxu0 %v528
    %590 = vmatpush1.msra.mxu0 %v527
    %591 = vmatprep.subr.mxu0 %v532
    %592 = vmatpush1.msra.mxu0 %v531
    %593 = vmatprep.subr.mxu0 %v536
    %594 = vmatpush1.msra.mxu0 %v535
    %595 = vmatprep.subr.mxu0 %v540
    %596 = vmatpush1.msra.mxu0 %v539
    %597 = vmatprep.subr.mxu0 %v544
    %598 = vmatpush1.msra.mxu0 %v543
    %599 = vmatprep.subr.mxu0 %v548
    %600 = vmatpush1.msra.mxu0 %v547
    %601 = vmatprep.subr.mxu0 %v552
    %602 = vmatpush1.msra.mxu0 %v551
    %603 = vmatprep.subr.mxu0 %v556
    %604 = vmatpush1.msra.mxu0 %v555
    %605 = vmatprep.subr.mxu0 %v560
    %606 = vmatpush1.msra.mxu0 %v559
    %607 = vmatprep.subr.mxu0 %v564
    %608 = vmatpush1.msra.mxu0 %v563
    %609 = vmatprep.subr.mxu0 %v568
    %610 = vmatpush1.msra.mxu0 %v567
    %611 = vmatprep.subr.mxu0 %v572
    %612 = vmatpush1.msra.mxu0 %v571
    %613 = vmatprep.subr.mxu0 %v576
    %614 = vmatpush1.msra.mxu0 %v575
    %615 = vmatprep.subr.mxu0 0.0
    %616 = vmatpush1.msra.mxu0 0.0
    %617 = vmatprep.subr.mxu0 0.0
    %618 = vmatpush1.msra.mxu0 0.0
    %619 = vmatprep.subr.mxu0 0.0
    %620 = vmatpush1.msra.mxu0 0.0
    %621 = vmatprep.subr.mxu0 0.0
    %622 = vmatpush1.msra.mxu0 0.0
    %623 = vmatprep.subr.mxu0 0.0
    %624 = vmatpush1.msra.mxu0 0.0
    %625 = vmatprep.subr.mxu0 0.0
    %626 = vmatpush1.msra.mxu0 0.0
    %627 = vmatprep.subr.mxu0 0.0
    %628 = vmatpush1.msra.mxu0 0.0
    %629 = vmatprep.subr.mxu0 0.0
    %630 = vmatpush1.msra.mxu0 0.0
    %631 = vmatprep.subr.mxu0 0.0
    %632 = vmatpush1.msra.mxu0 0.0
    %633 = vmatprep.subr.mxu0 0.0
    %634 = vmatpush1.msra.mxu0 0.0
    %635 = vmatprep.subr.mxu0 0.0
    %636 = vmatpush1.msra.mxu0 0.0
    %637 = vmatprep.subr.mxu0 0.0
    %638 = vmatpush1.msra.mxu0 0.0
    %639 = vmatprep.subr.mxu0 0.0
    %640 = vmatpush1.msra.mxu0 0.0
    %641 = vmatprep.subr.mxu0 0.0
    %642 = vmatpush1.msra.mxu0 0.0
    %643 = vmatprep.subr.mxu0 0.0
    %644 = vmatpush1.msra.mxu0 0.0
    %645 = vmatprep.subr.mxu0 0.0
    %646 = vmatpush1.msra.mxu0 0.0
    %647 = vmatprep.mubr.f32.mxu0 0.0
    %648 = vmatmul.mubr.f32.gmra.mrb[0].mxu0 0.0
    %v649 = vpop.f32.mrb[0].mxu0
    %v650 = vadd.f32 %v579, %v649
    %v651 = vpop.f32.mrb[0].mxu0
    %v652 = vadd.f32 %v580, %v651
    %653 = vdwg.mxu0
    %654 = vmatprep.subr.mxu0 %v518
    %655 = vmatpush1.msra.mxu0 %v517
    %656 = vmatprep.subr.mxu0 %v522
    %657 = vmatpush1.msra.mxu0 %v521
    %658 = vmatprep.subr.mxu0 %v526
    %659 = vmatpush1.msra.mxu0 %v525
    %660 = vmatprep.subr.mxu0 %v530
    %661 = vmatpush1.msra.mxu0 %v529
    %662 = vmatprep.subr.mxu0 %v534
    %663 = vmatpush1.msra.mxu0 %v533
    %664 = vmatprep.subr.mxu0 %v538
    %665 = vmatpush1.msra.mxu0 %v537
    %666 = vmatprep.subr.mxu0 %v542
    %667 = vmatpush1.msra.mxu0 %v541
    %668 = vmatprep.subr.mxu0 %v546
    %669 = vmatpush1.msra.mxu0 %v545
    %670 = vmatprep.subr.mxu0 %v550
    %671 = vmatpush1.msra.mxu0 %v549
    %672 = vmatprep.subr.mxu0 %v554
    %673 = vmatpush1.msra.mxu0 %v553
    %674 = vmatprep.subr.mxu0 %v558
    %675 = vmatpush1.msra.mxu0 %v557
    %676 = vmatprep.subr.mxu0 %v562
    %677 = vmatpush1.msra.mxu0 %v561
    %678 = vmatprep.subr.mxu0 %v566
    %679 = vmatpush1.msra.mxu0 %v565
    %680 = vmatprep.subr.mxu0 %v570
    %681 = vmatpush1.msra.mxu0 %v569
    %682 = vmatprep.subr.mxu0 %v574
    %683 = vmatpush1.msra.mxu0 %v573
    %684 = vmatprep.subr.mxu0 %v578
    %685 = vmatpush1.msra.mxu0 %v577
    %686 = vmatprep.subr.mxu0 0.0
    %687 = vmatpush1.msra.mxu0 0.0
    %688 = vmatprep.subr.mxu0 0.0
    %689 = vmatpush1.msra.mxu0 0.0
    %690 = vmatprep.subr.mxu0 0.0
    %691 = vmatpush1.msra.mxu0 0.0
    %692 = vmatprep.subr.mxu0 0.0
    %693 = vmatpush1.msra.mxu0 0.0
    %694 = vmatprep.subr.mxu0 0.0
    %695 = vmatpush1.msra.mxu0 0.0
    %696 = vmatprep.subr.mxu0 0.0
    %697 = vmatpush1.msra.mxu0 0.0
    %698 = vmatprep.subr.mxu0 0.0
    %699 = vmatpush1.msra.mxu0 0.0
    %700 = vmatprep.subr.mxu0 0.0
    %701 = vmatpush1.msra.mxu0 0.0
    %702 = vmatprep.subr.mxu0 0.0
    %703 = vmatpush1.msra.mxu0 0.0
    %704 = vmatprep.subr.mxu0 0.0
    %705 = vmatpush1.msra.mxu0 0.0
    %706 = vmatprep.subr.mxu0 0.0
    %707 = vmatpush1.msra.mxu0 0.0
    %708 = vmatprep.subr.mxu0 0.0
    %709 = vmatpush1.msra.mxu0 0.0
    %710 = vmatprep.subr.mxu0 0.0
    %711 = vmatpush1.msra.mxu0 0.0
    %712 = vmatprep.subr.mxu0 0.0
    %713 = vmatpush1.msra.mxu0 0.0
    %714 = vmatprep.subr.mxu0 0.0
    %715 = vmatpush1.msra.mxu0 0.0
    %716 = vmatprep.subr.mxu0 0.0
    %717 = vmatpush1.msra.mxu0 0.0
    %718 = vmatprep.mubr.f32.mxu0 0.0
    %719 = vmatmul.mubr.f32.gmra.mrb[0].mxu0 0.0
    %v720 = vpop.f32.mrb[0].mxu0
    %v721 = vadd.f32 %v581, %v720
    %v722 = vpop.f32.mrb[0].mxu0
    %v723 = vadd.f32 %v582, %v722
    %724 = vdwg.mxu0
    %v725 = vmul.f32 %v650, 0.5
    %v726 = vmul.f32 %v652, 0.5
    %v727 = vmul.f32 %v721, 0.5
    %v728 = vtanh.pop %v725
    %v729 = vtanh.pop %v726
    %v730 = vtanh.pop %v727
    %v731 = vmul.f32 %v728, 0.5
    %v732 = vmul.f32 %v729, 0.5
    %v733 = vmul.f32 %v730, 0.5
    %v734 = vadd.f32 %v731, 0.5
    %v735 = vadd.f32 %v732, 0.5
    %v736 = vadd.f32 %v733, 0.5
    %v737 = vtanh.pop %v723
    %v738 = vmul.f32 %v735, 0.0
    %v739 = vmul.f32 %v734, %v737
    %v740 = vadd.f32 %v738, %v739
    %v741 = vtanh.pop %v740
    %v742 = vmul.f32 %v736, %v741
    %vm743 = vcmask 523264
    %744 = vst.msk [vmem:[#allocation2] sm:$0xff] %vm743, %v742
    %s745 = scalar_lea.vmem [#allocation2], 56
    %vm746 = vcmask 1048064
    %747 = vst.msk [vmem:[%s745] sm:$0xff] %vm746, %v742
    %v748 = vld [vmem:[%s456] sm:$0xff]
    %v749 = vld [vmem:[%s456 + $0x8] sm:$0xff]
    %v750 = vld [vmem:[%s456 + $0x10] sm:$0xff]
    %v751 = vld [vmem:[%s456 + $0x18] sm:$0xff]
    %752 = vmatprep.subr.mxu0 %v516
    %753 = vmatpush1.msra.mxu0 %v515
    %754 = vmatprep.subr.mxu0 %v520
    %755 = vmatpush1.msra.mxu0 %v519
    %756 = vmatprep.subr.mxu0 %v524
    %757 = vmatpush1.msra.mxu0 %v523
    %758 = vmatprep.subr.mxu0 %v528
    %759 = vmatpush1.msra.mxu0 %v527
    %760 = vmatprep.subr.mxu0 %v532
    %761 = vmatpush1.msra.mxu0 %v531
    %762 = vmatprep.subr.mxu0 %v536
    %763 = vmatpush1.msra.mxu0 %v535
    %764 = vmatprep.subr.mxu0 %v540
    %765 = vmatpush1.msra.mxu0 %v539
    %766 = vmatprep.subr.mxu0 %v544
    %767 = vmatpush1.msra.mxu0 %v543
    %768 = vmatprep.subr.mxu0 %v548
    %769 = vmatpush1.msra.mxu0 %v547
    %770 = vmatprep.subr.mxu0 %v552
    %771 = vmatpush1.msra.mxu0 %v551
    %772 = vmatprep.subr.mxu0 %v556
    %773 = vmatpush1.msra.mxu0 %v555
    %774 = vmatprep.subr.mxu0 %v560
    %775 = vmatpush1.msra.mxu0 %v559
    %776 = vmatprep.subr.mxu0 %v564
    %777 = vmatpush1.msra.mxu0 %v563
    %778 = vmatprep.subr.mxu0 %v568
    %779 = vmatpush1.msra.mxu0 %v567
    %780 = vmatprep.subr.mxu0 %v572
    %781 = vmatpush1.msra.mxu0 %v571
    %782 = vmatprep.subr.mxu0 %v576
    %783 = vmatpush1.msra.mxu0 %v575
    %784 = vmatprep.subr.mxu0 0.0
    %785 = vmatpush1.msra.mxu0 0.0
    %786 = vmatprep.subr.mxu0 0.0
    %787 = vmatpush1.msra.mxu0 0.0
    %788 = vmatprep.subr.mxu0 0.0
    %789 = vmatpush1.msra.mxu0 0.0
    %790 = vmatprep.subr.mxu0 0.0
    %791 = vmatpush1.msra.mxu0 0.0
    %792 = vmatprep.subr.mxu0 0.0
    %793 = vmatpush1.msra.mxu0 0.0
    %794 = vmatprep.subr.mxu0 0.0
    %795 = vmatpush1.msra.mxu0 0.0
    %796 = vmatprep.subr.mxu0 0.0
    %797 = vmatpush1.msra.mxu0 0.0
    %798 = vmatprep.subr.mxu0 0.0
    %799 = vmatpush1.msra.mxu0 0.0
    %800 = vmatprep.subr.mxu0 0.0
    %801 = vmatpush1.msra.mxu0 0.0
    %802 = vmatprep.subr.mxu0 0.0
    %803 = vmatpush1.msra.mxu0 0.0
    %804 = vmatprep.subr.mxu0 0.0
    %805 = vmatpush1.msra.mxu0 0.0
    %806 = vmatprep.subr.mxu0 0.0
    %807 = vmatpush1.msra.mxu0 0.0
    %808 = vmatprep.subr.mxu0 0.0
    %809 = vmatpush1.msra.mxu0 0.0
    %810 = vmatprep.subr.mxu0 0.0
    %811 = vmatpush1.msra.mxu0 0.0
    %812 = vmatprep.subr.mxu0 0.0
    %813 = vmatpush1.msra.mxu0 0.0
    %814 = vmatprep.subr.mxu0 0.0
    %815 = vmatpush1.msra.mxu0 0.0
    %816 = vmatprep.mubr.f32.mxu0 0.0
    %817 = vmatmul.mubr.f32.gmra.mrb[0].mxu0 %v742
    %v818 = vpop.f32.mrb[0].mxu0
    %v819 = vadd.f32 %v748, %v818
    %v820 = vpop.f32.mrb[0].mxu0
    %v821 = vadd.f32 %v749, %v820
    %822 = vdwg.mxu0
    %823 = vmatprep.subr.mxu0 %v518
    %824 = vmatpush1.msra.mxu0 %v517
    %825 = vmatprep.subr.mxu0 %v522
    %826 = vmatpush1.msra.mxu0 %v521
    %827 = vmatprep.subr.mxu0 %v526
    %828 = vmatpush1.msra.mxu0 %v525
    %829 = vmatprep.subr.mxu0 %v530
    %830 = vmatpush1.msra.mxu0 %v529
    %831 = vmatprep.subr.mxu0 %v534
    %832 = vmatpush1.msra.mxu0 %v533
    %833 = vmatprep.subr.mxu0 %v538
    %834 = vmatpush1.msra.mxu0 %v537
    %835 = vmatprep.subr.mxu0 %v542
    %836 = vmatpush1.msra.mxu0 %v541
    %837 = vmatprep.subr.mxu0 %v546
    %838 = vmatpush1.msra.mxu0 %v545
    %839 = vmatprep.subr.mxu0 %v550
    %840 = vmatpush1.msra.mxu0 %v549
    %841 = vmatprep.subr.mxu0 %v554
    %842 = vmatpush1.msra.mxu0 %v553
    %843 = vmatprep.subr.mxu0 %v558
    %844 = vmatpush1.msra.mxu0 %v557
    %845 = vmatprep.subr.mxu0 %v562
    %846 = vmatpush1.msra.mxu0 %v561
    %847 = vmatprep.subr.mxu0 %v566
    %848 = vmatpush1.msra.mxu0 %v565
    %849 = vmatprep.subr.mxu0 %v570
    %850 = vmatpush1.msra.mxu0 %v569
    %851 = vmatprep.subr.mxu0 %v574
    %852 = vmatpush1.msra.mxu0 %v573
    %853 = vmatprep.subr.mxu0 %v578
    %854 = vmatpush1.msra.mxu0 %v577
    %855 = vmatprep.subr.mxu0 0.0
    %856 = vmatpush1.msra.mxu0 0.0
    %857 = vmatprep.subr.mxu0 0.0
    %858 = vmatpush1.msra.mxu0 0.0
    %859 = vmatprep.subr.mxu0 0.0
    %860 = vmatpush1.msra.mxu0 0.0
    %861 = vmatprep.subr.mxu0 0.0
    %862 = vmatpush1.msra.mxu0 0.0
    %863 = vmatprep.subr.mxu0 0.0
    %864 = vmatpush1.msra.mxu0 0.0
    %865 = vmatprep.subr.mxu0 0.0
    %866 = vmatpush1.msra.mxu0 0.0
    %867 = vmatprep.subr.mxu0 0.0
    %868 = vmatpush1.msra.mxu0 0.0
    %869 = vmatprep.subr.mxu0 0.0
    %870 = vmatpush1.msra.mxu0 0.0
    %871 = vmatprep.subr.mxu0 0.0
    %872 = vmatpush1.msra.mxu0 0.0
    %873 = vmatprep.subr.mxu0 0.0
    %874 = vmatpush1.msra.mxu0 0.0
    %875 = vmatprep.subr.mxu0 0.0
    %876 = vmatpush1.msra.mxu0 0.0
    %877 = vmatprep.subr.mxu0 0.0
    %878 = vmatpush1.msra.mxu0 0.0
    %879 = vmatprep.subr.mxu0 0.0
    %880 = vmatpush1.msra.mxu0 0.0
    %881 = vmatprep.subr.mxu0 0.0
    %882 = vmatpush1.msra.mxu0 0.0
    %883 = vmatprep.subr.mxu0 0.0
    %884 = vmatpush1.msra.mxu0 0.0
    %885 = vmatprep.subr.mxu0 0.0
    %886 = vmatpush1.msra.mxu0 0.0
    %887 = vmatprep.mubr.f32.mxu0 0.0
    %888 = vmatmul.mubr.f32.gmra.mrb[0].mxu0 %v742
    %v889 = vpop.f32.mrb[0].mxu0
    %v890 = vadd.f32 %v750, %v889
    %v891 = vpop.f32.mrb[0].mxu0
    %v892 = vadd.f32 %v751, %v891
    %893 = vdwg.mxu0
    %v894 = vmul.f32 %v819, 0.5
    %v895 = vmul.f32 %v821, 0.5
    %v896 = vmul.f32 %v890, 0.5
    %v897 = vtanh.pop %v894
    %v898 = vtanh.pop %v895
    %v899 = vtanh.pop %v896
    %v900 = vmul.f32 %v897, 0.5
    %v901 = vmul.f32 %v898, 0.5
    %v902 = vmul.f32 %v899, 0.5
    %v903 = vadd.f32 %v900, 0.5
    %v904 = vadd.f32 %v901, 0.5
    %v905 = vadd.f32 %v902, 0.5
    %v906 = vtanh.pop %v892
    %v907 = vmul.f32 %v904, %v740
    %v908 = vmul.f32 %v903, %v906
    %v909 = vadd.f32 %v907, %v908
    %v910 = vtanh.pop %v909
    %v911 = vmul.f32 %v905, %v910
    %s912 = scalar_lea.vmem [#allocation2], 8
    %913 = vst.msk [vmem:[%s912] sm:$0xff] %vm743, %v911
    %s914 = scalar_lea.vmem [#allocation2], 48
    %915 = vst.msk [vmem:[%s914] sm:$0xff] %vm746, %v911
    %v916 = vld [vmem:[%s465] sm:$0xff]
    %v917 = vld [vmem:[%s465 + $0x8] sm:$0xff]
    %v918 = vld [vmem:[%s465 + $0x10] sm:$0xff]
    %v919 = vld [vmem:[%s465 + $0x18] sm:$0xff]
    %920 = vmatprep.subr.mxu0 %v516
    %921 = vmatpush1.msra.mxu0 %v515
    %922 = vmatprep.subr.mxu0 %v520
    %923 = vmatpush1.msra.mxu0 %v519
    %924 = vmatprep.subr.mxu0 %v524
    %925 = vmatpush1.msra.mxu0 %v523
    %926 = vmatprep.subr.mxu0 %v528
    %927 = vmatpush1.msra.mxu0 %v527
    %928 = vmatprep.subr.mxu0 %v532
    %929 = vmatpush1.msra.mxu0 %v531
    %930 = vmatprep.subr.mxu0 %v536
    %931 = vmatpush1.msra.mxu0 %v535
    %932 = vmatprep.subr.mxu0 %v540
    %933 = vmatpush1.msra.mxu0 %v539
    %934 = vmatprep.subr.mxu0 %v544
    %935 = vmatpush1.msra.mxu0 %v543
    %936 = vmatprep.subr.mxu0 %v548
    %937 = vmatpush1.msra.mxu0 %v547
    %938 = vmatprep.subr.mxu0 %v552
    %939 = vmatpush1.msra.mxu0 %v551
    %940 = vmatprep.subr.mxu0 %v556
    %941 = vmatpush1.msra.mxu0 %v555
    %942 = vmatprep.subr.mxu0 %v560
    %943 = vmatpush1.msra.mxu0 %v559
    %944 = vmatprep.subr.mxu0 %v564
    %945 = vmatpush1.msra.mxu0 %v563
    %946 = vmatprep.subr.mxu0 %v568
    %947 = vmatpush1.msra.mxu0 %v567
    %948 = vmatprep.subr.mxu0 %v572
    %949 = vmatpush1.msra.mxu0 %v571
    %950 = vmatprep.subr.mxu0 %v576
    %951 = vmatpush1.msra.mxu0 %v575
    %952 = vmatprep.subr.mxu0 0.0
    %953 = vmatpush1.msra.mxu0 0.0
    %954 = vmatprep.subr.mxu0 0.0
    %955 = vmatpush1.msra.mxu0 0.0
    %956 = vmatprep.subr.mxu0 0.0
    %957 = vmatpush1.msra.mxu0 0.0
    %958 = vmatprep.subr.mxu0 0.0
    %959 = vmatpush1.msra.mxu0 0.0
    %960 = vmatprep.subr.mxu0 0.0
    %961 = vmatpush1.msra.mxu0 0.0
    %962 = vmatprep.subr.mxu0 0.0
    %963 = vmatpush1.msra.mxu0 0.0
    %964 = vmatprep.subr.mxu0 0.0
    %965 = vmatpush1.msra.mxu0 0.0
    %966 = vmatprep.subr.mxu0 0.0
    %967 = vmatpush1.msra.mxu0 0.0
    %968 = vmatprep.subr.mxu0 0.0
    %969 = vmatpush1.msra.mxu0 0.0
    %970 = vmatprep.subr.mxu0 0.0
    %971 = vmatpush1.msra.mxu0 0.0
    %972 = vmatprep.subr.mxu0 0.0
    %973 = vmatpush1.msra.mxu0 0.0
    %974 = vmatprep.subr.mxu0 0.0
    %975 = vmatpush1.msra.mxu0 0.0
    %976 = vmatprep.subr.mxu0 0.0
    %977 = vmatpush1.msra.mxu0 0.0
    %978 = vmatprep.subr.mxu0 0.0
    %979 = vmatpush1.msra.mxu0 0.0
    %980 = vmatprep.subr.mxu0 0.0
    %981 = vmatpush1.msra.mxu0 0.0
    %982 = vmatprep.subr.mxu0 0.0
    %983 = vmatpush1.msra.mxu0 0.0
    %984 = vmatprep.mubr.f32.mxu0 0.0
    %985 = vmatmul.mubr.f32.gmra.mrb[0].mxu0 %v911
    %v986 = vpop.f32.mrb[0].mxu0
    %v987 = vadd.f32 %v916, %v986
    %v988 = vpop.f32.mrb[0].mxu0
    %v989 = vadd.f32 %v917, %v988
    %990 = vdwg.mxu0
    %991 = vmatprep.subr.mxu0 %v518
    %992 = vmatpush1.msra.mxu0 %v517
    %993 = vmatprep.subr.mxu0 %v522
    %994 = vmatpush1.msra.mxu0 %v521
    %995 = vmatprep.subr.mxu0 %v526
    %996 = vmatpush1.msra.mxu0 %v525
    %997 = vmatprep.subr.mxu0 %v530
    %998 = vmatpush1.msra.mxu0 %v529
    %999 = vmatprep.subr.mxu0 %v534
    %1000 = vmatpush1.msra.mxu0 %v533
    %1001 = vmatprep.subr.mxu0 %v538
    %1002 = vmatpush1.msra.mxu0 %v537
    %1003 = vmatprep.subr.mxu0 %v542
    %1004 = vmatpush1.msra.mxu0 %v541
    %1005 = vmatprep.subr.mxu0 %v546
    %1006 = vmatpush1.msra.mxu0 %v545
    %1007 = vmatprep.subr.mxu0 %v550
    %1008 = vmatpush1.msra.mxu0 %v549
    %1009 = vmatprep.subr.mxu0 %v554
    %1010 = vmatpush1.msra.mxu0 %v553
    %1011 = vmatprep.subr.mxu0 %v558
    %1012 = vmatpush1.msra.mxu0 %v557
    %1013 = vmatprep.subr.mxu0 %v562
    %1014 = vmatpush1.msra.mxu0 %v561
    %1015 = vmatprep.subr.mxu0 %v566
    %1016 = vmatpush1.msra.mxu0 %v565
    %1017 = vmatprep.subr.mxu0 %v570
    %1018 = vmatpush1.msra.mxu0 %v569
    %1019 = vmatprep.subr.mxu0 %v574
    %1020 = vmatpush1.msra.mxu0 %v573
    %1021 = vmatprep.subr.mxu0 %v578
    %1022 = vmatpush1.msra.mxu0 %v577
    %1023 = vmatprep.subr.mxu0 0.0
    %1024 = vmatpush1.msra.mxu0 0.0
    %1025 = vmatprep.subr.mxu0 0.0
    %1026 = vmatpush1.msra.mxu0 0.0
    %1027 = vmatprep.subr.mxu0 0.0
    %1028 = vmatpush1.msra.mxu0 0.0
    %1029 = vmatprep.subr.mxu0 0.0
    %1030 = vmatpush1.msra.mxu0 0.0
    %1031 = vmatprep.subr.mxu0 0.0
    %1032 = vmatpush1.msra.mxu0 0.0
    %1033 = vmatprep.subr.mxu0 0.0
    %1034 = vmatpush1.msra.mxu0 0.0
    %1035 = vmatprep.subr.mxu0 0.0
    %1036 = vmatpush1.msra.mxu0 0.0
    %1037 = vmatprep.subr.mxu0 0.0
    %1038 = vmatpush1.msra.mxu0 0.0
    %1039 = vmatprep.subr.mxu0 0.0
    %1040 = vmatpush1.msra.mxu0 0.0
    %1041 = vmatprep.subr.mxu0 0.0
    %1042 = vmatpush1.msra.mxu0 0.0
    %1043 = vmatprep.subr.mxu0 0.0
    %1044 = vmatpush1.msra.mxu0 0.0
    %1045 = vmatprep.subr.mxu0 0.0
    %1046 = vmatpush1.msra.mxu0 0.0
    %1047 = vmatprep.subr.mxu0 0.0
    %1048 = vmatpush1.msra.mxu0 0.0
    %1049 = vmatprep.subr.mxu0 0.0
    %1050 = vmatpush1.msra.mxu0 0.0
    %1051 = vmatprep.subr.mxu0 0.0
    %1052 = vmatpush1.msra.mxu0 0.0
    %1053 = vmatprep.subr.mxu0 0.0
    %1054 = vmatpush1.msra.mxu0 0.0
    %1055 = vmatprep.mubr.f32.mxu0 0.0
    %1056 = vmatmul.mubr.f32.gmra.mrb[0].mxu0 %v911
    %v1057 = vpop.f32.mrb[0].mxu0
    %v1058 = vadd.f32 %v918, %v1057
    %v1059 = vpop.f32.mrb[0].mxu0
    %v1060 = vadd.f32 %v919, %v1059
    %1061 = vdwg.mxu0
    %v1062 = vmul.f32 %v987, 0.5
    %v1063 = vmul.f32 %v989, 0.5
    %v1064 = vmul.f32 %v1058, 0.5
    %v1065 = vtanh.pop %v1062
    %v1066 = vtanh.pop %v1063
    %v1067 = vtanh.pop %v1064
    %v1068 = vmul.f32 %v1065, 0.5
    %v1069 = vmul.f32 %v1066, 0.5
    %v1070 = vmul.f32 %v1067, 0.5
    %v1071 = vadd.f32 %v1068, 0.5
    %v1072 = vadd.f32 %v1069, 0.5
    %v1073 = vadd.f32 %v1070, 0.5
    %v1074 = vtanh.pop %v1060
    %v1075 = vmul.f32 %v1072, %v909
    %v1076 = vmul.f32 %v1071, %v1074
    %v1077 = vadd.f32 %v1075, %v1076
    %v1078 = vtanh.pop %v1077
    %v1079 = vmul.f32 %v1073, %v1078
    %s1080 = scalar_lea.vmem [#allocation2], 16
    %1081 = vst.msk [vmem:[%s1080] sm:$0xff] %vm743, %v1079
    %s1082 = scalar_lea.vmem [#allocation2], 40
    %1083 = vst.msk [vmem:[%s1082] sm:$0xff] %vm746, %v1079
    %v1084 = vld [vmem:[%s474] sm:$0xff]
    %v1085 = vld [vmem:[%s474 + $0x8] sm:$0xff]
    %v1086 = vld [vmem:[%s474 + $0x10] sm:$0xff]
    %v1087 = vld [vmem:[%s474 + $0x18] sm:$0xff]
    %1088 = vmatprep.subr.mxu0 %v516
    %1089 = vmatpush1.msra.mxu0 %v515
    %1090 = vmatprep.subr.mxu0 %v520
    %1091 = vmatpush1.msra.mxu0 %v519
    %1092 = vmatprep.subr.mxu0 %v524
    %1093 = vmatpush1.msra.mxu0 %v523
    %1094 = vmatprep.subr.mxu0 %v528
    %1095 = vmatpush1.msra.mxu0 %v527
    %1096 = vmatprep.subr.mxu0 %v532
    %1097 = vmatpush1.msra.mxu0 %v531
    %1098 = vmatprep.subr.mxu0 %v536
    %1099 = vmatpush1.msra.mxu0 %v535
    %1100 = vmatprep.subr.mxu0 %v540
    %1101 = vmatpush1.msra.mxu0 %v539
    %1102 = vmatprep.subr.mxu0 %v544
    %1103 = vmatpush1.msra.mxu0 %v543
    %1104 = vmatprep.subr.mxu0 %v548
    %1105 = vmatpush1.msra.mxu0 %v547
    %1106 = vmatprep.subr.mxu0 %v552
    %1107 = vmatpush1.msra.mxu0 %v551
    %1108 = vmatprep.subr.mxu0 %v556
    %1109 = vmatpush1.msra.mxu0 %v555
    %1110 = vmatprep.subr.mxu0 %v560
    %1111 = vmatpush1.msra.mxu0 %v559
    %1112 = vmatprep.subr.mxu0 %v564
    %1113 = vmatpush1.msra.mxu0 %v563
    %1114 = vmatprep.subr.mxu0 %v568
    %1115 = vmatpush1.msra.mxu0 %v567
    %1116 = vmatprep.subr.mxu0 %v572
    %1117 = vmatpush1.msra.mxu0 %v571
    %1118 = vmatprep.subr.mxu0 %v576
    %1119 = vmatpush1.msra.mxu0 %v575
    %1120 = vmatprep.subr.mxu0 0.0
    %1121 = vmatpush1.msra.mxu0 0.0
    %1122 = vmatprep.subr.mxu0 0.0
    %1123 = vmatpush1.msra.mxu0 0.0
    %1124 = vmatprep.subr.mxu0 0.0
    %1125 = vmatpush1.msra.mxu0 0.0
    %1126 = vmatprep.subr.mxu0 0.0
    %1127 = vmatpush1.msra.mxu0 0.0
    %1128 = vmatprep.subr.mxu0 0.0
    %1129 = vmatpush1.msra.mxu0 0.0
    %1130 = vmatprep.subr.mxu0 0.0
    %1131 = vmatpush1.msra.mxu0 0.0
    %1132 = vmatprep.subr.mxu0 0.0
    %1133 = vmatpush1.msra.mxu0 0.0
    %1134 = vmatprep.subr.mxu0 0.0
    %1135 = vmatpush1.msra.mxu0 0.0
    %1136 = vmatprep.subr.mxu0 0.0
    %1137 = vmatpush1.msra.mxu0 0.0
    %1138 = vmatprep.subr.mxu0 0.0
    %1139 = vmatpush1.msra.mxu0 0.0
    %1140 = vmatprep.subr.mxu0 0.0
    %1141 = vmatpush1.msra.mxu0 0.0
    %1142 = vmatprep.subr.mxu0 0.0
    %1143 = vmatpush1.msra.mxu0 0.0
    %1144 = vmatprep.subr.mxu0 0.0
    %1145 = vmatpush1.msra.mxu0 0.0
    %1146 = vmatprep.subr.mxu0 0.0
    %1147 = vmatpush1.msra.mxu0 0.0
    %1148 = vmatprep.subr.mxu0 0.0
    %1149 = vmatpush1.msra.mxu0 0.0
    %1150 = vmatprep.subr.mxu0 0.0
    %1151 = vmatpush1.msra.mxu0 0.0
    %1152 = vmatprep.mubr.f32.mxu0 0.0
    %1153 = vmatmul.mubr.f32.gmra.mrb[0].mxu0 %v1079
    %v1154 = vpop.f32.mrb[0].mxu0
    %v1155 = vadd.f32 %v1084, %v1154
    %v1156 = vpop.f32.mrb[0].mxu0
    %v1157 = vadd.f32 %v1085, %v1156
    %1158 = vdwg.mxu0
    %1159 = vmatprep.subr.mxu0 %v518
    %1160 = vmatpush1.msra.mxu0 %v517
    %1161 = vmatprep.subr.mxu0 %v522
    %1162 = vmatpush1.msra.mxu0 %v521
    %1163 = vmatprep.subr.mxu0 %v526
    %1164 = vmatpush1.msra.mxu0 %v525
    %1165 = vmatprep.subr.mxu0 %v530
    %1166 = vmatpush1.msra.mxu0 %v529
    %1167 = vmatprep.subr.mxu0 %v534
    %1168 = vmatpush1.msra.mxu0 %v533
    %1169 = vmatprep.subr.mxu0 %v538
    %1170 = vmatpush1.msra.mxu0 %v537
    %1171 = vmatprep.subr.mxu0 %v542
    %1172 = vmatpush1.msra.mxu0 %v541
    %1173 = vmatprep.subr.mxu0 %v546
    %1174 = vmatpush1.msra.mxu0 %v545
    %1175 = vmatprep.subr.mxu0 %v550
    %1176 = vmatpush1.msra.mxu0 %v549
    %1177 = vmatprep.subr.mxu0 %v554
    %1178 = vmatpush1.msra.mxu0 %v553
    %1179 = vmatprep.subr.mxu0 %v558
    %1180 = vmatpush1.msra.mxu0 %v557
    %1181 = vmatprep.subr.mxu0 %v562
    %1182 = vmatpush1.msra.mxu0 %v561
    %1183 = vmatprep.subr.mxu0 %v566
    %1184 = vmatpush1.msra.mxu0 %v565
    %1185 = vmatprep.subr.mxu0 %v570
    %1186 = vmatpush1.msra.mxu0 %v569
    %1187 = vmatprep.subr.mxu0 %v574
    %1188 = vmatpush1.msra.mxu0 %v573
    %1189 = vmatprep.subr.mxu0 %v578
    %1190 = vmatpush1.msra.mxu0 %v577
    %1191 = vmatprep.subr.mxu0 0.0
    %1192 = vmatpush1.msra.mxu0 0.0
    %1193 = vmatprep.subr.mxu0 0.0
    %1194 = vmatpush1.msra.mxu0 0.0
    %1195 = vmatprep.subr.mxu0 0.0
    %1196 = vmatpush1.msra.mxu0 0.0
    %1197 = vmatprep.subr.mxu0 0.0
    %1198 = vmatpush1.msra.mxu0 0.0
    %1199 = vmatprep.subr.mxu0 0.0
    %1200 = vmatpush1.msra.mxu0 0.0
    %1201 = vmatprep.subr.mxu0 0.0
    %1202 = vmatpush1.msra.mxu0 0.0
    %1203 = vmatprep.subr.mxu0 0.0
    %1204 = vmatpush1.msra.mxu0 0.0
    %1205 = vmatprep.subr.mxu0 0.0
    %1206 = vmatpush1.msra.mxu0 0.0
    %1207 = vmatprep.subr.mxu0 0.0
    %1208 = vmatpush1.msra.mxu0 0.0
    %1209 = vmatprep.subr.mxu0 0.0
    %1210 = vmatpush1.msra.mxu0 0.0
    %1211 = vmatprep.subr.mxu0 0.0
    %1212 = vmatpush1.msra.mxu0 0.0
    %1213 = vmatprep.subr.mxu0 0.0
    %1214 = vmatpush1.msra.mxu0 0.0
    %1215 = vmatprep.subr.mxu0 0.0
    %1216 = vmatpush1.msra.mxu0 0.0
    %1217 = vmatprep.subr.mxu0 0.0
    %1218 = vmatpush1.msra.mxu0 0.0
    %1219 = vmatprep.subr.mxu0 0.0
    %1220 = vmatpush1.msra.mxu0 0.0
    %1221 = vmatprep.subr.mxu0 0.0
    %1222 = vmatpush1.msra.mxu0 0.0
    %1223 = vmatprep.mubr.f32.mxu0 0.0
    %1224 = vmatmul.mubr.f32.gmra.mrb[0].mxu0 %v1079
    %v1225 = vpop.f32.mrb[0].mxu0
    %v1226 = vadd.f32 %v1086, %v1225
    %v1227 = vpop.f32.mrb[0].mxu0
    %v1228 = vadd.f32 %v1087, %v1227
    %1229 = vdwg.mxu0
    %v1230 = vmul.f32 %v1155, 0.5
    %v1231 = vmul.f32 %v1157, 0.5
    %v1232 = vmul.f32 %v1226, 0.5
    %v1233 = vtanh.pop %v1230
    %v1234 = vtanh.pop %v1231
    %v1235 = vtanh.pop %v1232
    %v1236 = vmul.f32 %v1233, 0.5
    %v1237 = vmul.f32 %v1234, 0.5
    %v1238 = vmul.f32 %v1235, 0.5
    %v1239 = vadd.f32 %v1236, 0.5
    %v1240 = vadd.f32 %v1237, 0.5
    %v1241 = vadd.f32 %v1238, 0.5
    %v1242 = vtanh.pop %v1228
    %v1243 = vmul.f32 %v1240, %v1077
    %v1244 = vmul.f32 %v1239, %v1242
    %v1245 = vadd.f32 %v1243, %v1244
    %v1246 = vtanh.pop %v1245
    %v1247 = vmul.f32 %v1241, %v1246
    %s1248 = scalar_lea.vmem [#allocation2], 24
    %1249 = vst.msk [vmem:[%s1248] sm:$0xff] %vm743, %v1247
    %s1250 = scalar_lea.vmem [#allocation2], 32
    %1251 = vst.msk [vmem:[%s1250] sm:$0xff] %vm746, %v1247
    %v1252 = vld [vmem:[%s483] sm:$0xff]
    %v1253 = vld [vmem:[%s483 + $0x8] sm:$0xff]
    %v1254 = vld [vmem:[%s483 + $0x10] sm:$0xff]
    %v1255 = vld [vmem:[%s483 + $0x18] sm:$0xff]
    %1256 = vmatprep.subr.mxu0 %v516
    %1257 = vmatpush1.msra.mxu0 %v515
    %1258 = vmatprep.subr.mxu0 %v520
    %1259 = vmatpush1.msra.mxu0 %v519
    %1260 = vmatprep.subr.mxu0 %v524
    %1261 = vmatpush1.msra.mxu0 %v523
    %1262 = vmatprep.subr.mxu0 %v528
    %1263 = vmatpush1.msra.mxu0 %v527
    %1264 = vmatprep.subr.mxu0 %v532
    %1265 = vmatpush1.msra.mxu0 %v531
    %1266 = vmatprep.subr.mxu0 %v536
    %1267 = vmatpush1.msra.mxu0 %v535
    %1268 = vmatprep.subr.mxu0 %v540
    %1269 = vmatpush1.msra.mxu0 %v539
    %1270 = vmatprep.subr.mxu0 %v544
    %1271 = vmatpush1.msra.mxu0 %v543
    %1272 = vmatprep.subr.mxu0 %v548
    %1273 = vmatpush1.msra.mxu0 %v547
    %1274 = vmatprep.subr.mxu0 %v552
    %1275 = vmatpush1.msra.mxu0 %v551
    %1276 = vmatprep.subr.mxu0 %v556
    %1277 = vmatpush1.msra.mxu0 %v555
    %1278 = vmatprep.subr.mxu0 %v560
    %1279 = vmatpush1.msra.mxu0 %v559
    %1280 = vmatprep.subr.mxu0 %v564
    %1281 = vmatpush1.msra.mxu0 %v563
    %1282 = vmatprep.subr.mxu0 %v568
    %1283 = vmatpush1.msra.mxu0 %v567
    %1284 = vmatprep.subr.mxu0 %v572
    %1285 = vmatpush1.msra.mxu0 %v571
    %1286 = vmatprep.subr.mxu0 %v576
    %1287 = vmatpush1.msra.mxu0 %v575
    %1288 = vmatprep.subr.mxu0 0.0
    %1289 = vmatpush1.msra.mxu0 0.0
    %1290 = vmatprep.subr.mxu0 0.0
    %1291 = vmatpush1.msra.mxu0 0.0
    %1292 = vmatprep.subr.mxu0 0.0
    %1293 = vmatpush1.msra.mxu0 0.0
    %1294 = vmatprep.subr.mxu0 0.0
    %1295 = vmatpush1.msra.mxu0 0.0
    %1296 = vmatprep.subr.mxu0 0.0
    %1297 = vmatpush1.msra.mxu0 0.0
    %1298 = vmatprep.subr.mxu0 0.0
    %1299 = vmatpush1.msra.mxu0 0.0
    %1300 = vmatprep.subr.mxu0 0.0
    %1301 = vmatpush1.msra.mxu0 0.0
    %1302 = vmatprep.subr.mxu0 0.0
    %1303 = vmatpush1.msra.mxu0 0.0
    %1304 = vmatprep.subr.mxu0 0.0
    %1305 = vmatpush1.msra.mxu0 0.0
    %1306 = vmatprep.subr.mxu0 0.0
    %1307 = vmatpush1.msra.mxu0 0.0
    %1308 = vmatprep.subr.mxu0 0.0
    %1309 = vmatpush1.msra.mxu0 0.0
    %1310 = vmatprep.subr.mxu0 0.0
    %1311 = vmatpush1.msra.mxu0 0.0
    %1312 = vmatprep.subr.mxu0 0.0
    %1313 = vmatpush1.msra.mxu0 0.0
    %1314 = vmatprep.subr.mxu0 0.0
    %1315 = vmatpush1.msra.mxu0 0.0
    %1316 = vmatprep.subr.mxu0 0.0
    %1317 = vmatpush1.msra.mxu0 0.0
    %1318 = vmatprep.subr.mxu0 0.0
    %1319 = vmatpush1.msra.mxu0 0.0
    %1320 = vmatprep.mubr.f32.mxu0 0.0
    %1321 = vmatmul.mubr.f32.gmra.mrb[0].mxu0 %v1247
    %v1322 = vpop.f32.mrb[0].mxu0
    %v1323 = vadd.f32 %v1252, %v1322
    %v1324 = vpop.f32.mrb[0].mxu0
    %v1325 = vadd.f32 %v1253, %v1324
    %1326 = vdwg.mxu0
    %1327 = vmatprep.subr.mxu0 %v518
    %1328 = vmatpush1.msra.mxu0 %v517
    %1329 = vmatprep.subr.mxu0 %v522
    %1330 = vmatpush1.msra.mxu0 %v521
    %1331 = vmatprep.subr.mxu0 %v526
    %1332 = vmatpush1.msra.mxu0 %v525
    %1333 = vmatprep.subr.mxu0 %v530
    %1334 = vmatpush1.msra.mxu0 %v529
    %1335 = vmatprep.subr.mxu0 %v534
    %1336 = vmatpush1.msra.mxu0 %v533
    %1337 = vmatprep.subr.mxu0 %v538
    %1338 = vmatpush1.msra.mxu0 %v537
    %1339 = vmatprep.subr.mxu0 %v542
    %1340 = vmatpush1.msra.mxu0 %v541
    %1341 = vmatprep.subr.mxu0 %v546
    %1342 = vmatpush1.msra.mxu0 %v545
    %1343 = vmatprep.subr.mxu0 %v550
    %1344 = vmatpush1.msra.mxu0 %v549
    %1345 = vmatprep.subr.mxu0 %v554
    %1346 = vmatpush1.msra.mxu0 %v553
    %1347 = vmatprep.subr.mxu0 %v558
    %1348 = vmatpush1.msra.mxu0 %v557
    %1349 = vmatprep.subr.mxu0 %v562
    %1350 = vmatpush1.msra.mxu0 %v561
    %1351 = vmatprep.subr.mxu0 %v566
    %1352 = vmatpush1.msra.mxu0 %v565
    %1353 = vmatprep.subr.mxu0 %v570
    %1354 = vmatpush1.msra.mxu0 %v569
    %1355 = vmatprep.subr.mxu0 %v574
    %1356 = vmatpush1.msra.mxu0 %v573
    %1357 = vmatprep.subr.mxu0 %v578
    %1358 = vmatpush1.msra.mxu0 %v577
    %1359 = vmatprep.subr.mxu0 0.0
    %1360 = vmatpush1.msra.mxu0 0.0
    %1361 = vmatprep.subr.mxu0 0.0
    %1362 = vmatpush1.msra.mxu0 0.0
    %1363 = vmatprep.subr.mxu0 0.0
    %1364 = vmatpush1.msra.mxu0 0.0
    %1365 = vmatprep.subr.mxu0 0.0
    %1366 = vmatpush1.msra.mxu0 0.0
    %1367 = vmatprep.subr.mxu0 0.0
    %1368 = vmatpush1.msra.mxu0 0.0
    %1369 = vmatprep.subr.mxu0 0.0
    %1370 = vmatpush1.msra.mxu0 0.0
    %1371 = vmatprep.subr.mxu0 0.0
    %1372 = vmatpush1.msra.mxu0 0.0
    %1373 = vmatprep.subr.mxu0 0.0
    %1374 = vmatpush1.msra.mxu0 0.0
    %1375 = vmatprep.subr.mxu0 0.0
    %1376 = vmatpush1.msra.mxu0 0.0
    %1377 = vmatprep.subr.mxu0 0.0
    %1378 = vmatpush1.msra.mxu0 0.0
    %1379 = vmatprep.subr.mxu0 0.0
    %1380 = vmatpush1.msra.mxu0 0.0
    %1381 = vmatprep.subr.mxu0 0.0
    %1382 = vmatpush1.msra.mxu0 0.0
    %1383 = vmatprep.subr.mxu0 0.0
    %1384 = vmatpush1.msra.mxu0 0.0
    %1385 = vmatprep.subr.mxu0 0.0
    %1386 = vmatpush1.msra.mxu0 0.0
    %1387 = vmatprep.subr.mxu0 0.0
    %1388 = vmatpush1.msra.mxu0 0.0
    %1389 = vmatprep.subr.mxu0 0.0
    %1390 = vmatpush1.msra.mxu0 0.0
    %1391 = vmatprep.mubr.f32.mxu0 0.0
    %1392 = vmatmul.mubr.f32.gmra.mrb[0].mxu0 %v1247
    %v1393 = vpop.f32.mrb[0].mxu0
    %v1394 = vadd.f32 %v1254, %v1393
    %v1395 = vpop.f32.mrb[0].mxu0
    %v1396 = vadd.f32 %v1255, %v1395
    %1397 = vdwg.mxu0
    %v1398 = vmul.f32 %v1323, 0.5
    %v1399 = vmul.f32 %v1325, 0.5
    %v1400 = vmul.f32 %v1394, 0.5
    %v1401 = vtanh.pop %v1398
    %v1402 = vtanh.pop %v1399
    %v1403 = vtanh.pop %v1400
    %v1404 = vmul.f32 %v1401, 0.5
    %v1405 = vmul.f32 %v1402, 0.5
    %v1406 = vmul.f32 %v1403, 0.5
    %v1407 = vadd.f32 %v1404, 0.5
    %v1408 = vadd.f32 %v1405, 0.5
    %v1409 = vadd.f32 %v1406, 0.5
    %v1410 = vtanh.pop %v1396
    %v1411 = vmul.f32 %v1408, %v1245
    %v1412 = vmul.f32 %v1407, %v1410
    %v1413 = vadd.f32 %v1411, %v1412
    %v1414 = vtanh.pop %v1413
    %v1415 = vmul.f32 %v1409, %v1414
    %1416 = vst.msk [vmem:[%s1250] sm:$0xff] %vm743, %v1415
    %1417 = vst.msk [vmem:[%s1248] sm:$0xff] %vm746, %v1415
    %v1418 = vld [vmem:[%s492] sm:$0xff]
    %v1419 = vld [vmem:[%s492 + $0x8] sm:$0xff]
    %v1420 = vld [vmem:[%s492 + $0x10] sm:$0xff]
    %v1421 = vld [vmem:[%s492 + $0x18] sm:$0xff]
    %1422 = vmatprep.subr.mxu0 %v516
    %1423 = vmatpush1.msra.mxu0 %v515
    %1424 = vmatprep.subr.mxu0 %v520
    %1425 = vmatpush1.msra.mxu0 %v519
    %1426 = vmatprep.subr.mxu0 %v524
    %1427 = vmatpush1.msra.mxu0 %v523
    %1428 = vmatprep.subr.mxu0 %v528
    %1429 = vmatpush1.msra.mxu0 %v527
    %1430 = vmatprep.subr.mxu0 %v532
    %1431 = vmatpush1.msra.mxu0 %v531
    %1432 = vmatprep.subr.mxu0 %v536
    %1433 = vmatpush1.msra.mxu0 %v535
    %1434 = vmatprep.subr.mxu0 %v540
    %1435 = vmatpush1.msra.mxu0 %v539
    %1436 = vmatprep.subr.mxu0 %v544
    %1437 = vmatpush1.msra.mxu0 %v543
    %1438 = vmatprep.subr.mxu0 %v548
    %1439 = vmatpush1.msra.mxu0 %v547
    %1440 = vmatprep.subr.mxu0 %v552
    %1441 = vmatpush1.msra.mxu0 %v551
    %1442 = vmatprep.subr.mxu0 %v556
    %1443 = vmatpush1.msra.mxu0 %v555
    %1444 = vmatprep.subr.mxu0 %v560
    %1445 = vmatpush1.msra.mxu0 %v559
    %1446 = vmatprep.subr.mxu0 %v564
    %1447 = vmatpush1.msra.mxu0 %v563
    %1448 = vmatprep.subr.mxu0 %v568
    %1449 = vmatpush1.msra.mxu0 %v567
    %1450 = vmatprep.subr.mxu0 %v572
    %1451 = vmatpush1.msra.mxu0 %v571
    %1452 = vmatprep.subr.mxu0 %v576
    %1453 = vmatpush1.msra.mxu0 %v575
    %1454 = vmatprep.subr.mxu0 0.0
    %1455 = vmatpush1.msra.mxu0 0.0
    %1456 = vmatprep.subr.mxu0 0.0
    %1457 = vmatpush1.msra.mxu0 0.0
    %1458 = vmatprep.subr.mxu0 0.0
    %1459 = vmatpush1.msra.mxu0 0.0
    %1460 = vmatprep.subr.mxu0 0.0
    %1461 = vmatpush1.msra.mxu0 0.0
    %1462 = vmatprep.subr.mxu0 0.0
    %1463 = vmatpush1.msra.mxu0 0.0
    %1464 = vmatprep.subr.mxu0 0.0
    %1465 = vmatpush1.msra.mxu0 0.0
    %1466 = vmatprep.subr.mxu0 0.0
    %1467 = vmatpush1.msra.mxu0 0.0
    %1468 = vmatprep.subr.mxu0 0.0
    %1469 = vmatpush1.msra.mxu0 0.0
    %1470 = vmatprep.subr.mxu0 0.0
    %1471 = vmatpush1.msra.mxu0 0.0
    %1472 = vmatprep.subr.mxu0 0.0
    %1473 = vmatpush1.msra.mxu0 0.0
    %1474 = vmatprep.subr.mxu0 0.0
    %1475 = vmatpush1.msra.mxu0 0.0
    %1476 = vmatprep.subr.mxu0 0.0
    %1477 = vmatpush1.msra.mxu0 0.0
    %1478 = vmatprep.subr.mxu0 0.0
    %1479 = vmatpush1.msra.mxu0 0.0
    %1480 = vmatprep.subr.mxu0 0.0
    %1481 = vmatpush1.msra.mxu0 0.0
    %1482 = vmatprep.subr.mxu0 0.0
    %1483 = vmatpush1.msra.mxu0 0.0
    %1484 = vmatprep.subr.mxu0 0.0
    %1485 = vmatpush1.msra.mxu0 0.0
    %1486 = vmatprep.mubr.f32.mxu0 0.0
    %1487 = vmatmul.mubr.f32.gmra.mrb[0].mxu0 %v1415
    %v1488 = vpop.f32.mrb[0].mxu0
    %v1489 = vadd.f32 %v1418, %v1488
    %v1490 = vpop.f32.mrb[0].mxu0
    %v1491 = vadd.f32 %v1419, %v1490
    %1492 = vdwg.mxu0
    %1493 = vmatprep.subr.mxu0 %v518
    %1494 = vmatpush1.msra.mxu0 %v517
    %1495 = vmatprep.subr.mxu0 %v522
    %1496 = vmatpush1.msra.mxu0 %v521
    %1497 = vmatprep.subr.mxu0 %v526
    %1498 = vmatpush1.msra.mxu0 %v525
    %1499 = vmatprep.subr.mxu0 %v530
    %1500 = vmatpush1.msra.mxu0 %v529
    %1501 = vmatprep.subr.mxu0 %v534
    %1502 = vmatpush1.msra.mxu0 %v533
    %1503 = vmatprep.subr.mxu0 %v538
    %1504 = vmatpush1.msra.mxu0 %v537
    %1505 = vmatprep.subr.mxu0 %v542
    %1506 = vmatpush1.msra.mxu0 %v541
    %1507 = vmatprep.subr.mxu0 %v546
    %1508 = vmatpush1.msra.mxu0 %v545
    %1509 = vmatprep.subr.mxu0 %v550
    %1510 = vmatpush1.msra.mxu0 %v549
    %1511 = vmatprep.subr.mxu0 %v554
    %1512 = vmatpush1.msra.mxu0 %v553
    %1513 = vmatprep.subr.mxu0 %v558
    %1514 = vmatpush1.msra.mxu0 %v557
    %1515 = vmatprep.subr.mxu0 %v562
    %1516 = vmatpush1.msra.mxu0 %v561
    %1517 = vmatprep.subr.mxu0 %v566
    %1518 = vmatpush1.msra.mxu0 %v565
    %1519 = vmatprep.subr.mxu0 %v570
    %1520 = vmatpush1.msra.mxu0 %v569
    %1521 = vmatprep.subr.mxu0 %v574
    %1522 = vmatpush1.msra.mxu0 %v573
    %1523 = vmatprep.subr.mxu0 %v578
    %1524 = vmatpush1.msra.mxu0 %v577
    %1525 = vmatprep.subr.mxu0 0.0
    %1526 = vmatpush1.msra.mxu0 0.0
    %1527 = vmatprep.subr.mxu0 0.0
    %1528 = vmatpush1.msra.mxu0 0.0
    %1529 = vmatprep.subr.mxu0 0.0
    %1530 = vmatpush1.msra.mxu0 0.0
    %1531 = vmatprep.subr.mxu0 0.0
    %1532 = vmatpush1.msra.mxu0 0.0
    %1533 = vmatprep.subr.mxu0 0.0
    %1534 = vmatpush1.msra.mxu0 0.0
    %1535 = vmatprep.subr.mxu0 0.0
    %1536 = vmatpush1.msra.mxu0 0.0
    %1537 = vmatprep.subr.mxu0 0.0
    %1538 = vmatpush1.msra.mxu0 0.0
    %1539 = vmatprep.subr.mxu0 0.0
    %1540 = vmatpush1.msra.mxu0 0.0
    %1541 = vmatprep.subr.mxu0 0.0
    %1542 = vmatpush1.msra.mxu0 0.0
    %1543 = vmatprep.subr.mxu0 0.0
    %1544 = vmatpush1.msra.mxu0 0.0
    %1545 = vmatprep.subr.mxu0 0.0
    %1546 = vmatpush1.msra.mxu0 0.0
    %1547 = vmatprep.subr.mxu0 0.0
    %1548 = vmatpush1.msra.mxu0 0.0
    %1549 = vmatprep.subr.mxu0 0.0
    %1550 = vmatpush1.msra.mxu0 0.0
    %1551 = vmatprep.subr.mxu0 0.0
    %1552 = vmatpush1.msra.mxu0 0.0
    %1553 = vmatprep.subr.mxu0 0.0
    %1554 = vmatpush1.msra.mxu0 0.0
    %1555 = vmatprep.subr.mxu0 0.0
    %1556 = vmatpush1.msra.mxu0 0.0
    %1557 = vmatprep.mubr.f32.mxu0 0.0
    %1558 = vmatmul.mubr.f32.gmra.mrb[0].mxu0 %v1415
    %v1559 = vpop.f32.mrb[0].mxu0
    %v1560 = vadd.f32 %v1420, %v1559
    %v1561 = vpop.f32.mrb[0].mxu0
    %v1562 = vadd.f32 %v1421, %v1561
    %1563 = vdwg.mxu0
    %v1564 = vmul.f32 %v1489, 0.5
    %v1565 = vmul.f32 %v1491, 0.5
    %v1566 = vmul.f32 %v1560, 0.5
    %v1567 = vtanh.pop %v1564
    %v1568 = vtanh.pop %v1565
    %v1569 = vtanh.pop %v1566
    %v1570 = vmul.f32 %v1567, 0.5
    %v1571 = vmul.f32 %v1568, 0.5
    %v1572 = vmul.f32 %v1569, 0.5
    %v1573 = vadd.f32 %v1570, 0.5
    %v1574 = vadd.f32 %v1571, 0.5
    %v1575 = vadd.f32 %v1572, 0.5
    %v1576 = vtanh.pop %v1562
    %v1577 = vmul.f32 %v1574, %v1413
    %v1578 = vmul.f32 %v1573, %v1576
    %v1579 = vadd.f32 %v1577, %v1578
    %v1580 = vtanh.pop %v1579
    %v1581 = vmul.f32 %v1575, %v1580
    %1582 = vst.msk [vmem:[%s1082] sm:$0xff] %vm743, %v1581
    %1583 = vst.msk [vmem:[%s1080] sm:$0xff] %vm746, %v1581
    %v1584 = vld [vmem:[%s501] sm:$0xff]
    %v1585 = vld [vmem:[%s501 + $0x8] sm:$0xff]
    %v1586 = vld [vmem:[%s501 + $0x10] sm:$0xff]
    %v1587 = vld [vmem:[%s501 + $0x18] sm:$0xff]
    %1588 = vmatprep.subr.mxu0 %v516
    %1589 = vmatpush1.msra.mxu0 %v515
    %1590 = vmatprep.subr.mxu0 %v520
    %1591 = vmatpush1.msra.mxu0 %v519
    %1592 = vmatprep.subr.mxu0 %v524
    %1593 = vmatpush1.msra.mxu0 %v523
    %1594 = vmatprep.subr.mxu0 %v528
    %1595 = vmatpush1.msra.mxu0 %v527
    %1596 = vmatprep.subr.mxu0 %v532
    %1597 = vmatpush1.msra.mxu0 %v531
    %1598 = vmatprep.subr.mxu0 %v536
    %1599 = vmatpush1.msra.mxu0 %v535
    %1600 = vmatprep.subr.mxu0 %v540
    %1601 = vmatpush1.msra.mxu0 %v539
    %1602 = vmatprep.subr.mxu0 %v544
    %1603 = vmatpush1.msra.mxu0 %v543
    %1604 = vmatprep.subr.mxu0 %v548
    %1605 = vmatpush1.msra.mxu0 %v547
    %1606 = vmatprep.subr.mxu0 %v552
    %1607 = vmatpush1.msra.mxu0 %v551
    %1608 = vmatprep.subr.mxu0 %v556
    %1609 = vmatpush1.msra.mxu0 %v555
    %1610 = vmatprep.subr.mxu0 %v560
    %1611 = vmatpush1.msra.mxu0 %v559
    %1612 = vmatprep.subr.mxu0 %v564
    %1613 = vmatpush1.msra.mxu0 %v563
    %1614 = vmatprep.subr.mxu0 %v568
    %1615 = vmatpush1.msra.mxu0 %v567
    %1616 = vmatprep.subr.mxu0 %v572
    %1617 = vmatpush1.msra.mxu0 %v571
    %1618 = vmatprep.subr.mxu0 %v576
    %1619 = vmatpush1.msra.mxu0 %v575
    %1620 = vmatprep.subr.mxu0 0.0
    %1621 = vmatpush1.msra.mxu0 0.0
    %1622 = vmatprep.subr.mxu0 0.0
    %1623 = vmatpush1.msra.mxu0 0.0
    %1624 = vmatprep.subr.mxu0 0.0
    %1625 = vmatpush1.msra.mxu0 0.0
    %1626 = vmatprep.subr.mxu0 0.0
    %1627 = vmatpush1.msra.mxu0 0.0
    %1628 = vmatprep.subr.mxu0 0.0
    %1629 = vmatpush1.msra.mxu0 0.0
    %1630 = vmatprep.subr.mxu0 0.0
    %1631 = vmatpush1.msra.mxu0 0.0
    %1632 = vmatprep.subr.mxu0 0.0
    %1633 = vmatpush1.msra.mxu0 0.0
    %1634 = vmatprep.subr.mxu0 0.0
    %1635 = vmatpush1.msra.mxu0 0.0
    %1636 = vmatprep.subr.mxu0 0.0
    %1637 = vmatpush1.msra.mxu0 0.0
    %1638 = vmatprep.subr.mxu0 0.0
    %1639 = vmatpush1.msra.mxu0 0.0
    %1640 = vmatprep.subr.mxu0 0.0
    %1641 = vmatpush1.msra.mxu0 0.0
    %1642 = vmatprep.subr.mxu0 0.0
    %1643 = vmatpush1.msra.mxu0 0.0
    %1644 = vmatprep.subr.mxu0 0.0
    %1645 = vmatpush1.msra.mxu0 0.0
    %1646 = vmatprep.subr.mxu0 0.0
    %1647 = vmatpush1.msra.mxu0 0.0
    %1648 = vmatprep.subr.mxu0 0.0
    %1649 = vmatpush1.msra.mxu0 0.0
    %1650 = vmatprep.subr.mxu0 0.0
    %1651 = vmatpush1.msra.mxu0 0.0
    %1652 = vmatprep.mubr.f32.mxu0 0.0
    %1653 = vmatmul.mubr.f32.gmra.mrb[0].mxu0 %v1581
    %v1654 = vpop.f32.mrb[0].mxu0
    %v1655 = vadd.f32 %v1584, %v1654
    %v1656 = vpop.f32.mrb[0].mxu0
    %v1657 = vadd.f32 %v1585, %v1656
    %1658 = vdwg.mxu0
    %1659 = vmatprep.subr.mxu0 %v518
    %1660 = vmatpush1.msra.mxu0 %v517
    %1661 = vmatprep.subr.mxu0 %v522
    %1662 = vmatpush1.msra.mxu0 %v521
    %1663 = vmatprep.subr.mxu0 %v526
    %1664 = vmatpush1.msra.mxu0 %v525
    %1665 = vmatprep.subr.mxu0 %v530
    %1666 = vmatpush1.msra.mxu0 %v529
    %1667 = vmatprep.subr.mxu0 %v534
    %1668 = vmatpush1.msra.mxu0 %v533
    %1669 = vmatprep.subr.mxu0 %v538
    %1670 = vmatpush1.msra.mxu0 %v537
    %1671 = vmatprep.subr.mxu0 %v542
    %1672 = vmatpush1.msra.mxu0 %v541
    %1673 = vmatprep.subr.mxu0 %v546
    %1674 = vmatpush1.msra.mxu0 %v545
    %1675 = vmatprep.subr.mxu0 %v550
    %1676 = vmatpush1.msra.mxu0 %v549
    %1677 = vmatprep.subr.mxu0 %v554
    %1678 = vmatpush1.msra.mxu0 %v553
    %1679 = vmatprep.subr.mxu0 %v558
    %1680 = vmatpush1.msra.mxu0 %v557
    %1681 = vmatprep.subr.mxu0 %v562
    %1682 = vmatpush1.msra.mxu0 %v561
    %1683 = vmatprep.subr.mxu0 %v566
    %1684 = vmatpush1.msra.mxu0 %v565
    %1685 = vmatprep.subr.mxu0 %v570
    %1686 = vmatpush1.msra.mxu0 %v569
    %1687 = vmatprep.subr.mxu0 %v574
    %1688 = vmatpush1.msra.mxu0 %v573
    %1689 = vmatprep.subr.mxu0 %v578
    %1690 = vmatpush1.msra.mxu0 %v577
    %1691 = vmatprep.subr.mxu0 0.0
    %1692 = vmatpush1.msra.mxu0 0.0
    %1693 = vmatprep.subr.mxu0 0.0
    %1694 = vmatpush1.msra.mxu0 0.0
    %1695 = vmatprep.subr.mxu0 0.0
    %1696 = vmatpush1.msra.mxu0 0.0
    %1697 = vmatprep.subr.mxu0 0.0
    %1698 = vmatpush1.msra.mxu0 0.0
    %1699 = vmatprep.subr.mxu0 0.0
    %1700 = vmatpush1.msra.mxu0 0.0
    %1701 = vmatprep.subr.mxu0 0.0
    %1702 = vmatpush1.msra.mxu0 0.0
    %1703 = vmatprep.subr.mxu0 0.0
    %1704 = vmatpush1.msra.mxu0 0.0
    %1705 = vmatprep.subr.mxu0 0.0
    %1706 = vmatpush1.msra.mxu0 0.0
    %1707 = vmatprep.subr.mxu0 0.0
    %1708 = vmatpush1.msra.mxu0 0.0
    %1709 = vmatprep.subr.mxu0 0.0
    %1710 = vmatpush1.msra.mxu0 0.0
    %1711 = vmatprep.subr.mxu0 0.0
    %1712 = vmatpush1.msra.mxu0 0.0
    %1713 = vmatprep.subr.mxu0 0.0
    %1714 = vmatpush1.msra.mxu0 0.0
    %1715 = vmatprep.subr.mxu0 0.0
    %1716 = vmatpush1.msra.mxu0 0.0
    %1717 = vmatprep.subr.mxu0 0.0
    %1718 = vmatpush1.msra.mxu0 0.0
    %1719 = vmatprep.subr.mxu0 0.0
    %1720 = vmatpush1.msra.mxu0 0.0
    %1721 = vmatprep.subr.mxu0 0.0
    %1722 = vmatpush1.msra.mxu0 0.0
    %1723 = vmatprep.mubr.f32.mxu0 0.0
    %1724 = vmatmul.mubr.f32.gmra.mrb[0].mxu0 %v1581
    %v1725 = vpop.f32.mrb[0].mxu0
    %v1726 = vadd.f32 %v1586, %v1725
    %v1727 = vpop.f32.mrb[0].mxu0
    %v1728 = vadd.f32 %v1587, %v1727
    %1729 = vdwg.mxu0
    %v1730 = vmul.f32 %v1655, 0.5
    %v1731 = vmul.f32 %v1657, 0.5
    %v1732 = vmul.f32 %v1726, 0.5
    %v1733 = vtanh.pop %v1730
    %v1734 = vtanh.pop %v1731
    %v1735 = vtanh.pop %v1732
    %v1736 = vmul.f32 %v1733, 0.5
    %v1737 = vmul.f32 %v1734, 0.5
    %v1738 = vmul.f32 %v1735, 0.5
    %v1739 = vadd.f32 %v1736, 0.5
    %v1740 = vadd.f32 %v1737, 0.5
    %v1741 = vadd.f32 %v1738, 0.5
    %v1742 = vtanh.pop %v1728
    %v1743 = vmul.f32 %v1740, %v1579
    %v1744 = vmul.f32 %v1739, %v1742
    %v1745 = vadd.f32 %v1743, %v1744
    %v1746 = vtanh.pop %v1745
    %v1747 = vmul.f32 %v1741, %v1746
    %1748 = vst.msk [vmem:[%s914] sm:$0xff] %vm743, %v1747
    %1749 = vst.msk [vmem:[%s912] sm:$0xff] %vm746, %v1747
    %v1750 = vld [vmem:[%s510] sm:$0xff]
    %v1751 = vld [vmem:[%s510 + $0x8] sm:$0xff]
    %v1752 = vld [vmem:[%s510 + $0x10] sm:$0xff]
    %v1753 = vld [vmem:[%s510 + $0x18] sm:$0xff]
    %1754 = vmatprep.subr.mxu0 %v516
    %1755 = vmatpush1.msra.mxu0 %v515
    %1756 = vmatprep.subr.mxu0 %v520
    %1757 = vmatpush1.msra.mxu0 %v519
    %1758 = vmatprep.subr.mxu0 %v524
    %1759 = vmatpush1.msra.mxu0 %v523
    %1760 = vmatprep.subr.mxu0 %v528
    %1761 = vmatpush1.msra.mxu0 %v527
    %1762 = vmatprep.subr.mxu0 %v532
    %1763 = vmatpush1.msra.mxu0 %v531
    %1764 = vmatprep.subr.mxu0 %v536
    %1765 = vmatpush1.msra.mxu0 %v535
    %1766 = vmatprep.subr.mxu0 %v540
    %1767 = vmatpush1.msra.mxu0 %v539
    %1768 = vmatprep.subr.mxu0 %v544
    %1769 = vmatpush1.msra.mxu0 %v543
    %1770 = vmatprep.subr.mxu0 %v548
    %1771 = vmatpush1.msra.mxu0 %v547
    %1772 = vmatprep.subr.mxu0 %v552
    %1773 = vmatpush1.msra.mxu0 %v551
    %1774 = vmatprep.subr.mxu0 %v556
    %1775 = vmatpush1.msra.mxu0 %v555
    %1776 = vmatprep.subr.mxu0 %v560
    %1777 = vmatpush1.msra.mxu0 %v559
    %1778 = vmatprep.subr.mxu0 %v564
    %1779 = vmatpush1.msra.mxu0 %v563
    %1780 = vmatprep.subr.mxu0 %v568
    %1781 = vmatpush1.msra.mxu0 %v567
    %1782 = vmatprep.subr.mxu0 %v572
    %1783 = vmatpush1.msra.mxu0 %v571
    %1784 = vmatprep.subr.mxu0 %v576
    %1785 = vmatpush1.msra.mxu0 %v575
    %1786 = vmatprep.subr.mxu0 0.0
    %1787 = vmatpush1.msra.mxu0 0.0
    %1788 = vmatprep.subr.mxu0 0.0
    %1789 = vmatpush1.msra.mxu0 0.0
    %1790 = vmatprep.subr.mxu0 0.0
    %1791 = vmatpush1.msra.mxu0 0.0
    %1792 = vmatprep.subr.mxu0 0.0
    %1793 = vmatpush1.msra.mxu0 0.0
    %1794 = vmatprep.subr.mxu0 0.0
    %1795 = vmatpush1.msra.mxu0 0.0
    %1796 = vmatprep.subr.mxu0 0.0
    %1797 = vmatpush1.msra.mxu0 0.0
    %1798 = vmatprep.subr.mxu0 0.0
    %1799 = vmatpush1.msra.mxu0 0.0
    %1800 = vmatprep.subr.mxu0 0.0
    %1801 = vmatpush1.msra.mxu0 0.0
    %1802 = vmatprep.subr.mxu0 0.0
    %1803 = vmatpush1.msra.mxu0 0.0
    %1804 = vmatprep.subr.mxu0 0.0
    %1805 = vmatpush1.msra.mxu0 0.0
    %1806 = vmatprep.subr.mxu0 0.0
    %1807 = vmatpush1.msra.mxu0 0.0
    %1808 = vmatprep.subr.mxu0 0.0
    %1809 = vmatpush1.msra.mxu0 0.0
    %1810 = vmatprep.subr.mxu0 0.0
    %1811 = vmatpush1.msra.mxu0 0.0
    %1812 = vmatprep.subr.mxu0 0.0
    %1813 = vmatpush1.msra.mxu0 0.0
    %1814 = vmatprep.subr.mxu0 0.0
    %1815 = vmatpush1.msra.mxu0 0.0
    %1816 = vmatprep.subr.mxu0 0.0
    %1817 = vmatpush1.msra.mxu0 0.0
    %1818 = vmatprep.mubr.f32.mxu0 0.0
    %1819 = vmatmul.mubr.f32.gmra.mrb[0].mxu0 %v1747
    %v1820 = vpop.f32.mrb[0].mxu0
    %v1821 = vadd.f32 %v1750, %v1820
    %v1822 = vpop.f32.mrb[0].mxu0
    %v1823 = vadd.f32 %v1751, %v1822
    %1824 = vdwg.mxu0
    %1825 = vmatprep.subr.mxu0 %v518
    %1826 = vmatpush1.msra.mxu0 %v517
    %1827 = vmatprep.subr.mxu0 %v522
    %1828 = vmatpush1.msra.mxu0 %v521
    %1829 = vmatprep.subr.mxu0 %v526
    %1830 = vmatpush1.msra.mxu0 %v525
    %1831 = vmatprep.subr.mxu0 %v530
    %1832 = vmatpush1.msra.mxu0 %v529
    %1833 = vmatprep.subr.mxu0 %v534
    %1834 = vmatpush1.msra.mxu0 %v533
    %1835 = vmatprep.subr.mxu0 %v538
    %1836 = vmatpush1.msra.mxu0 %v537
    %1837 = vmatprep.subr.mxu0 %v542
    %1838 = vmatpush1.msra.mxu0 %v541
    %1839 = vmatprep.subr.mxu0 %v546
    %1840 = vmatpush1.msra.mxu0 %v545
    %1841 = vmatprep.subr.mxu0 %v550
    %1842 = vmatpush1.msra.mxu0 %v549
    %1843 = vmatprep.subr.mxu0 %v554
    %1844 = vmatpush1.msra.mxu0 %v553
    %1845 = vmatprep.subr.mxu0 %v558
    %1846 = vmatpush1.msra.mxu0 %v557
    %1847 = vmatprep.subr.mxu0 %v562
    %1848 = vmatpush1.msra.mxu0 %v561
    %1849 = vmatprep.subr.mxu0 %v566
    %1850 = vmatpush1.msra.mxu0 %v565
    %1851 = vmatprep.subr.mxu0 %v570
    %1852 = vmatpush1.msra.mxu0 %v569
    %1853 = vmatprep.subr.mxu0 %v574
    %1854 = vmatpush1.msra.mxu0 %v573
    %1855 = vmatprep.subr.mxu0 %v578
    %1856 = vmatpush1.msra.mxu0 %v577
    %1857 = vmatprep.subr.mxu0 0.0
    %1858 = vmatpush1.msra.mxu0 0.0
    %1859 = vmatprep.subr.mxu0 0.0
    %1860 = vmatpush1.msra.mxu0 0.0
    %1861 = vmatprep.subr.mxu0 0.0
    %1862 = vmatpush1.msra.mxu0 0.0
    %1863 = vmatprep.subr.mxu0 0.0
    %1864 = vmatpush1.msra.mxu0 0.0
    %1865 = vmatprep.subr.mxu0 0.0
    %1866 = vmatpush1.msra.mxu0 0.0
    %1867 = vmatprep.subr.mxu0 0.0
    %1868 = vmatpush1.msra.mxu0 0.0
    %1869 = vmatprep.subr.mxu0 0.0
    %1870 = vmatpush1.msra.mxu0 0.0
    %1871 = vmatprep.subr.mxu0 0.0
    %1872 = vmatpush1.msra.mxu0 0.0
    %1873 = vmatprep.subr.mxu0 0.0
    %1874 = vmatpush1.msra.mxu0 0.0
    %1875 = vmatprep.subr.mxu0 0.0
    %1876 = vmatpush1.msra.mxu0 0.0
    %1877 = vmatprep.subr.mxu0 0.0
    %1878 = vmatpush1.msra.mxu0 0.0
    %1879 = vmatprep.subr.mxu0 0.0
    %1880 = vmatpush1.msra.mxu0 0.0
    %1881 = vmatprep.subr.mxu0 0.0
    %1882 = vmatpush1.msra.mxu0 0.0
    %1883 = vmatprep.subr.mxu0 0.0
    %1884 = vmatpush1.msra.mxu0 0.0
    %1885 = vmatprep.subr.mxu0 0.0
    %1886 = vmatpush1.msra.mxu0 0.0
    %1887 = vmatprep.subr.mxu0 0.0
    %1888 = vmatpush1.msra.mxu0 0.0
    %1889 = vmatprep.mubr.f32.mxu0 0.0
    %1890 = vmatmul.mubr.f32.gmra.mrb[0].mxu0 %v1747
    %v1891 = vpop.f32.mrb[0].mxu0
    %v1892 = vadd.f32 %v1752, %v1891
    %v1893 = vpop.f32.mrb[0].mxu0
    %v1894 = vadd.f32 %v1753, %v1893
    %1895 = vdwg.mxu0
    %v1896 = vmul.f32 %v1821, 0.5
    %v1897 = vmul.f32 %v1823, 0.5
    %v1898 = vmul.f32 %v1892, 0.5
    %v1899 = vtanh.pop %v1896
    %v1900 = vtanh.pop %v1897
    %v1901 = vtanh.pop %v1898
    %v1902 = vmul.f32 %v1899, 0.5
    %v1903 = vmul.f32 %v1900, 0.5
    %v1904 = vmul.f32 %v1901, 0.5
    %v1905 = vadd.f32 %v1902, 0.5
    %v1906 = vadd.f32 %v1903, 0.5
    %v1907 = vadd.f32 %v1904, 0.5
    %v1908 = vtanh.pop %v1894
    %v1909 = vmul.f32 %v1906, %v1745
    %v1910 = vmul.f32 %v1905, %v1908
    %v1911 = vadd.f32 %v1909, %v1910
    %v1912 = vtanh.pop %v1911
    %v1913 = vmul.f32 %v1907, %v1912
    %1914 = vst.msk [vmem:[%s745] sm:$0xff] %vm743, %v1913
    %1915 = vst.msk [vmem:[#allocation2] sm:$0xff] %vm746, %v1913
    %v1916 = vld [vmem:[#allocation2] sm:$0xff]
    %v1917 = vld [vmem:[#allocation2 + $0x8] sm:$0xff]
    %v1918 = vld [vmem:[#allocation2 + $0x10] sm:$0xff]
    %v1919 = vld [vmem:[#allocation2 + $0x18] sm:$0xff]
    %v1920 = vld [vmem:[#allocation2 + $0x20] sm:$0xff]
    %v1921 = vld [vmem:[#allocation2 + $0x28] sm:$0xff]
    %v1922 = vld [vmem:[#allocation2 + $0x30] sm:$0xff]
    %v1923 = vld [vmem:[#allocation2 + $0x38] sm:$0xff]
    %s1924 = scalar_lea.vmem [#allocation7], 512
    %v1925 = vld [vmem:[%s1924] sm:$0xff]
    %v1926 = vld [vmem:[%s1924 + $0x8] sm:$0xff]
    %v1927 = vld [vmem:[%s1924 + $0x10] sm:$0xff]
    %v1928 = vld [vmem:[%s1924 + $0x18] sm:$0xff]
    %v1929 = vld [vmem:[%s1924 + $0x20] sm:$0xff]
    %v1930 = vld [vmem:[%s1924 + $0x28] sm:$0xff]
    %v1931 = vld [vmem:[%s1924 + $0x30] sm:$0xff]
    %v1932 = vld [vmem:[%s1924 + $0x38] sm:$0xff]
    %v1933 = vld [vmem:[%s1924 + $0x40] sm:$0xff]
    %v1934 = vld [vmem:[%s1924 + $0x48] sm:$0xff]
    %v1935 = vld [vmem:[%s1924 + $0x50] sm:$0xff]
    %v1936 = vld [vmem:[%s1924 + $0x58] sm:$0xff]
    %v1937 = vld [vmem:[%s1924 + $0x60] sm:$0xff]
    %v1938 = vld [vmem:[%s1924 + $0x68] sm:$0xff]
    %v1939 = vld [vmem:[%s1924 + $0x70] sm:$0xff]
    %v1940 = vld [vmem:[%s1924 + $0x78] sm:$0xff]
    %v1941 = vld [vmem:[%s1924 + $0x80] sm:$0xff]
    %v1942 = vld [vmem:[%s1924 + $0x88] sm:$0xff]
    %v1943 = vld [vmem:[%s1924 + $0x90] sm:$0xff]
    %v1944 = vld [vmem:[%s1924 + $0x98] sm:$0xff]
    %v1945 = vld [vmem:[%s1924 + $0xa0] sm:$0xff]
    %v1946 = vld [vmem:[%s1924 + $0xa8] sm:$0xff]
    %v1947 = vld [vmem:[%s1924 + $0xb0] sm:$0xff]
    %v1948 = vld [vmem:[%s1924 + $0xb8] sm:$0xff]
    %v1949 = vld [vmem:[%s1924 + $0xc0] sm:$0xff]
    %v1950 = vld [vmem:[%s1924 + $0xc8] sm:$0xff]
    %v1951 = vld [vmem:[%s1924 + $0xd0] sm:$0xff]
    %v1952 = vld [vmem:[%s1924 + $0xd8] sm:$0xff]
    %v1953 = vld [vmem:[%s1924 + $0xe0] sm:$0xff]
    %v1954 = vld [vmem:[%s1924 + $0xe8] sm:$0xff]
    %v1955 = vld [vmem:[%s1924 + $0xf0] sm:$0xff]
    %v1956 = vld [vmem:[%s1924 + $0xf8] sm:$0xff]
    %v1957 = vld [vmem:[%s1924 + $0x100] sm:$0xff]
    %v1958 = vld [vmem:[%s1924 + $0x108] sm:$0xff]
    %v1959 = vld [vmem:[%s1924 + $0x110] sm:$0xff]
    %v1960 = vld [vmem:[%s1924 + $0x118] sm:$0xff]
    %v1961 = vld [vmem:[%s1924 + $0x120] sm:$0xff]
    %v1962 = vld [vmem:[%s1924 + $0x128] sm:$0xff]
    %v1963 = vld [vmem:[%s1924 + $0x130] sm:$0xff]
    %v1964 = vld [vmem:[%s1924 + $0x138] sm:$0xff]
    %v1965 = vld [vmem:[%s1924 + $0x140] sm:$0xff]
    %v1966 = vld [vmem:[%s1924 + $0x148] sm:$0xff]
    %v1967 = vld [vmem:[%s1924 + $0x150] sm:$0xff]
    %v1968 = vld [vmem:[%s1924 + $0x158] sm:$0xff]
    %v1969 = vld [vmem:[%s1924 + $0x160] sm:$0xff]
    %v1970 = vld [vmem:[%s1924 + $0x168] sm:$0xff]
    %v1971 = vld [vmem:[%s1924 + $0x170] sm:$0xff]
    %v1972 = vld [vmem:[%s1924 + $0x178] sm:$0xff]
    %v1973 = vld [vmem:[%s1924 + $0x180] sm:$0xff]
    %v1974 = vld [vmem:[%s1924 + $0x188] sm:$0xff]
    %v1975 = vld [vmem:[%s1924 + $0x190] sm:$0xff]
    %v1976 = vld [vmem:[%s1924 + $0x198] sm:$0xff]
    %v1977 = vld [vmem:[%s1924 + $0x1a0] sm:$0xff]
    %v1978 = vld [vmem:[%s1924 + $0x1a8] sm:$0xff]
    %v1979 = vld [vmem:[%s1924 + $0x1b0] sm:$0xff]
    %v1980 = vld [vmem:[%s1924 + $0x1b8] sm:$0xff]
    %v1981 = vld [vmem:[%s1924 + $0x1c0] sm:$0xff]
    %v1982 = vld [vmem:[%s1924 + $0x1c8] sm:$0xff]
    %v1983 = vld [vmem:[%s1924 + $0x1d0] sm:$0xff]
    %v1984 = vld [vmem:[%s1924 + $0x1d8] sm:$0xff]
    %v1985 = vld [vmem:[%s1924 + $0x1e0] sm:$0xff]
    %v1986 = vld [vmem:[%s1924 + $0x1e8] sm:$0xff]
    %v1987 = vld [vmem:[%s1924 + $0x1f0] sm:$0xff]
    %v1988 = vld [vmem:[%s1924 + $0x1f8] sm:$0xff]
    %s1989 = scalar_lea.vmem %s3, 4
    %v1990 = vld [vmem:[%s1989] sm:$0xf]
    %v1992 = vlaneseq
    %v1993 = vshrl.u32 %v1992, 7
    %v1994 = vsub.s32 0, %v1993
    %v1995 = vrot.slane %v1990, %v1994
    %v1996 = vlaneseq
    %v1997 = vshrl.u32 %v1996, 7
    %v1998 = vsub.s32 1, %v1997
    %v1999 = vrot.slane %v1990, %v1998
    %v2000 = vlaneseq
    %v2001 = vshrl.u32 %v2000, 7
    %v2002 = vsub.s32 2, %v2001
    %v2003 = vrot.slane %v1990, %v2002
    %v2004 = vlaneseq
    %v2005 = vshrl.u32 %v2004, 7
    %v2006 = vsub.s32 3, %v2005
    %v2007 = vrot.slane %v1990, %v2006
    %2012 = vmatprep.subr.mxu0 %v1926
    %2013 = vmatpush1.msra.mxu0 %v1925
    %2014 = vmatprep.subr.mxu0 %v1930
    %2015 = vmatpush1.msra.mxu0 %v1929
    %2016 = vmatprep.subr.mxu0 %v1934
    %2017 = vmatpush1.msra.mxu0 %v1933
    %2018 = vmatprep.subr.mxu0 %v1938
    %2019 = vmatpush1.msra.mxu0 %v1937
    %2020 = vmatprep.subr.mxu0 %v1942
    %2021 = vmatpush1.msra.mxu0 %v1941
    %2022 = vmatprep.subr.mxu0 %v1946
    %2023 = vmatpush1.msra.mxu0 %v1945
    %2024 = vmatprep.subr.mxu0 %v1950
    %2025 = vmatpush1.msra.mxu0 %v1949
    %2026 = vmatprep.subr.mxu0 %v1954
    %2027 = vmatpush1.msra.mxu0 %v1953
    %2028 = vmatprep.subr.mxu0 %v1958
    %2029 = vmatpush1.msra.mxu0 %v1957
    %2030 = vmatprep.subr.mxu0 %v1962
    %2031 = vmatpush1.msra.mxu0 %v1961
    %2032 = vmatprep.subr.mxu0 %v1966
    %2033 = vmatpush1.msra.mxu0 %v1965
    %2034 = vmatprep.subr.mxu0 %v1970
    %2035 = vmatpush1.msra.mxu0 %v1969
    %2036 = vmatprep.subr.mxu0 %v1974
    %2037 = vmatpush1.msra.mxu0 %v1973
    %2038 = vmatprep.subr.mxu0 %v1978
    %2039 = vmatpush1.msra.mxu0 %v1977
    %2040 = vmatprep.subr.mxu0 %v1982
    %2041 = vmatpush1.msra.mxu0 %v1981
    %2042 = vmatprep.subr.mxu0 %v1986
    %2043 = vmatpush1.msra.mxu0 %v1985
    %2044 = vmatprep.subr.mxu0 0.0
    %2045 = vmatpush1.msra.mxu0 0.0
    %2046 = vmatprep.subr.mxu0 0.0
    %2047 = vmatpush1.msra.mxu0 0.0
    %2048 = vmatprep.subr.mxu0 0.0
    %2049 = vmatpush1.msra.mxu0 0.0
    %2050 = vmatprep.subr.mxu0 0.0
    %2051 = vmatpush1.msra.mxu0 0.0
    %2052 = vmatprep.subr.mxu0 0.0
    %2053 = vmatpush1.msra.mxu0 0.0
    %2054 = vmatprep.subr.mxu0 0.0
    %2055 = vmatpush1.msra.mxu0 0.0
    %2056 = vmatprep.subr.mxu0 0.0
    %2057 = vmatpush1.msra.mxu0 0.0
    %2058 = vmatprep.subr.mxu0 0.0
    %2059 = vmatpush1.msra.mxu0 0.0
    %2060 = vmatprep.subr.mxu0 0.0
    %2061 = vmatpush1.msra.mxu0 0.0
    %2062 = vmatprep.subr.mxu0 0.0
    %2063 = vmatpush1.msra.mxu0 0.0
    %2064 = vmatprep.subr.mxu0 0.0
    %2065 = vmatpush1.msra.mxu0 0.0
    %2066 = vmatprep.subr.mxu0 0.0
    %2067 = vmatpush1.msra.mxu0 0.0
    %2068 = vmatprep.subr.mxu0 0.0
    %2069 = vmatpush1.msra.mxu0 0.0
    %2070 = vmatprep.subr.mxu0 0.0
    %2071 = vmatpush1.msra.mxu0 0.0
    %2072 = vmatprep.subr.mxu0 0.0
    %2073 = vmatpush1.msra.mxu0 0.0
    %2074 = vmatprep.subr.mxu0 0.0
    %2075 = vmatpush1.msra.mxu0 0.0
    %2076 = vmatprep.mubr.f32.mxu0 0.0
    %2077 = vmatmul.mubr.f32.gmra.mrb[0].mxu0 %v1916
    %v2078 = vpop.f32.mrb[0].mxu0
    %v2079 = vadd.f32 %v1995, %v2078
    %v2080 = vpop.f32.mrb[0].mxu0
    %v2081 = vadd.f32 %v1999, %v2080
    %2082 = vmatprep.mubr.f32.mxu0 0.0
    %2083 = vmatmul.mubr.f32.gmra.mrb[0].mxu0 %v1917
    %v2084 = vpop.f32.mrb[0].mxu0
    %v2085 = vadd.f32 %v1995, %v2084
    %v2086 = vpop.f32.mrb[0].mxu0
    %v2087 = vadd.f32 %v1999, %v2086
    %2088 = vmatprep.mubr.f32.mxu0 0.0
    %2089 = vmatmul.mubr.f32.gmra.mrb[0].mxu0 %v1918
    %v2090 = vpop.f32.mrb[0].mxu0
    %v2091 = vadd.f32 %v1995, %v2090
    %v2092 = vpop.f32.mrb[0].mxu0
    %v2093 = vadd.f32 %v1999, %v2092
    %2094 = vmatprep.mubr.f32.mxu0 0.0
    %2095 = vmatmul.mubr.f32.gmra.mrb[0].mxu0 %v1919
    %v2096 = vpop.f32.mrb[0].mxu0
    %v2097 = vadd.f32 %v1995, %v2096
    %v2098 = vpop.f32.mrb[0].mxu0
    %v2099 = vadd.f32 %v1999, %v2098
    %2100 = vmatprep.mubr.f32.mxu0 0.0
    %2101 = vmatmul.mubr.f32.gmra.mrb[0].mxu0 %v1920
    %v2102 = vpop.f32.mrb[0].mxu0
    %v2103 = vadd.f32 %v1995, %v2102
    %v2104 = vpop.f32.mrb[0].mxu0
    %v2105 = vadd.f32 %v1999, %v2104
    %2106 = vmatprep.mubr.f32.mxu0 0.0
    %2107 = vmatmul.mubr.f32.gmra.mrb[0].mxu0 %v1921
    %v2108 = vpop.f32.mrb[0].mxu0
    %v2109 = vadd.f32 %v1995, %v2108
    %v2110 = vpop.f32.mrb[0].mxu0
    %v2111 = vadd.f32 %v1999, %v2110
    %2112 = vmatprep.mubr.f32.mxu0 0.0
    %2113 = vmatmul.mubr.f32.gmra.mrb[0].mxu0 %v1922
    %v2114 = vpop.f32.mrb[0].mxu0
    %v2115 = vadd.f32 %v1995, %v2114
    %v2116 = vpop.f32.mrb[0].mxu0
    %v2117 = vadd.f32 %v1999, %v2116
    %2118 = vmatprep.mubr.f32.mxu0 0.0
    %2119 = vmatmul.mubr.f32.gmra.mrb[0].mxu0 %v1923
    %v2120 = vpop.f32.mrb[0].mxu0
    %v2121 = vadd.f32 %v1995, %v2120
    %v2122 = vpop.f32.mrb[0].mxu0
    %v2123 = vadd.f32 %v1999, %v2122
    %2124 = vdwg.mxu0
    %2125 = vmatprep.subr.mxu0 %v1928
    %2126 = vmatpush1.msra.mxu0 %v1927
    %2127 = vmatprep.subr.mxu0 %v1932
    %2128 = vmatpush1.msra.mxu0 %v1931
    %2129 = vmatprep.subr.mxu0 %v1936
    %2130 = vmatpush1.msra.mxu0 %v1935
    %2131 = vmatprep.subr.mxu0 %v1940
    %2132 = vmatpush1.msra.mxu0 %v1939
    %2133 = vmatprep.subr.mxu0 %v1944
    %2134 = vmatpush1.msra.mxu0 %v1943
    %2135 = vmatprep.subr.mxu0 %v1948
    %2136 = vmatpush1.msra.mxu0 %v1947
    %2137 = vmatprep.subr.mxu0 %v1952
    %2138 = vmatpush1.msra.mxu0 %v1951
    %2139 = vmatprep.subr.mxu0 %v1956
    %2140 = vmatpush1.msra.mxu0 %v1955
    %2141 = vmatprep.subr.mxu0 %v1960
    %2142 = vmatpush1.msra.mxu0 %v1959
    %2143 = vmatprep.subr.mxu0 %v1964
    %2144 = vmatpush1.msra.mxu0 %v1963
    %2145 = vmatprep.subr.mxu0 %v1968
    %2146 = vmatpush1.msra.mxu0 %v1967
    %2147 = vmatprep.subr.mxu0 %v1972
    %2148 = vmatpush1.msra.mxu0 %v1971
    %2149 = vmatprep.subr.mxu0 %v1976
    %2150 = vmatpush1.msra.mxu0 %v1975
    %2151 = vmatprep.subr.mxu0 %v1980
    %2152 = vmatpush1.msra.mxu0 %v1979
    %2153 = vmatprep.subr.mxu0 %v1984
    %2154 = vmatpush1.msra.mxu0 %v1983
    %2155 = vmatprep.subr.mxu0 %v1988
    %2156 = vmatpush1.msra.mxu0 %v1987
    %2157 = vmatprep.subr.mxu0 0.0
    %2158 = vmatpush1.msra.mxu0 0.0
    %2159 = vmatprep.subr.mxu0 0.0
    %2160 = vmatpush1.msra.mxu0 0.0
    %2161 = vmatprep.subr.mxu0 0.0
    %2162 = vmatpush1.msra.mxu0 0.0
    %2163 = vmatprep.subr.mxu0 0.0
    %2164 = vmatpush1.msra.mxu0 0.0
    %2165 = vmatprep.subr.mxu0 0.0
    %2166 = vmatpush1.msra.mxu0 0.0
    %2167 = vmatprep.subr.mxu0 0.0
    %2168 = vmatpush1.msra.mxu0 0.0
    %2169 = vmatprep.subr.mxu0 0.0
    %2170 = vmatpush1.msra.mxu0 0.0
    %2171 = vmatprep.subr.mxu0 0.0
    %2172 = vmatpush1.msra.mxu0 0.0
    %2173 = vmatprep.subr.mxu0 0.0
    %2174 = vmatpush1.msra.mxu0 0.0
    %2175 = vmatprep.subr.mxu0 0.0
    %2176 = vmatpush1.msra.mxu0 0.0
    %2177 = vmatprep.subr.mxu0 0.0
    %2178 = vmatpush1.msra.mxu0 0.0
    %2179 = vmatprep.subr.mxu0 0.0
    %2180 = vmatpush1.msra.mxu0 0.0
    %2181 = vmatprep.subr.mxu0 0.0
    %2182 = vmatpush1.msra.mxu0 0.0
    %2183 = vmatprep.subr.mxu0 0.0
    %2184 = vmatpush1.msra.mxu0 0.0
    %2185 = vmatprep.subr.mxu0 0.0
    %2186 = vmatpush1.msra.mxu0 0.0
    %2187 = vmatprep.subr.mxu0 0.0
    %2188 = vmatpush1.msra.mxu0 0.0
    %2189 = vmatprep.mubr.f32.mxu0 0.0
    %2190 = vmatmul.mubr.f32.gmra.mrb[0].mxu0 %v1916
    %v2191 = vpop.f32.mrb[0].mxu0
    %v2192 = vadd.f32 %v2003, %v2191
    %v2193 = vpop.f32.mrb[0].mxu0
    %v2194 = vadd.f32 %v2007, %v2193
    %2195 = vmatprep.mubr.f32.mxu0 0.0
    %2196 = vmatmul.mubr.f32.gmra.mrb[0].mxu0 %v1917
    %v2197 = vpop.f32.mrb[0].mxu0
    %v2198 = vadd.f32 %v2003, %v2197
    %v2199 = vpop.f32.mrb[0].mxu0
    %v2200 = vadd.f32 %v2007, %v2199
    %2201 = vmatprep.mubr.f32.mxu0 0.0
    %2202 = vmatmul.mubr.f32.gmra.mrb[0].mxu0 %v1918
    %v2203 = vpop.f32.mrb[0].mxu0
    %v2204 = vadd.f32 %v2003, %v2203
    %v2205 = vpop.f32.mrb[0].mxu0
    %v2206 = vadd.f32 %v2007, %v2205
    %2207 = vmatprep.mubr.f32.mxu0 0.0
    %2208 = vmatmul.mubr.f32.gmra.mrb[0].mxu0 %v1919
    %v2209 = vpop.f32.mrb[0].mxu0
    %v2210 = vadd.f32 %v2003, %v2209
    %v2211 = vpop.f32.mrb[0].mxu0
    %v2212 = vadd.f32 %v2007, %v2211
    %2213 = vmatprep.mubr.f32.mxu0 0.0
    %2214 = vmatmul.mubr.f32.gmra.mrb[0].mxu0 %v1920
    %v2215 = vpop.f32.mrb[0].mxu0
    %v2216 = vadd.f32 %v2003, %v2215
    %v2217 = vpop.f32.mrb[0].mxu0
    %v2218 = vadd.f32 %v2007, %v2217
    %2219 = vmatprep.mubr.f32.mxu0 0.0
    %2220 = vmatmul.mubr.f32.gmra.mrb[0].mxu0 %v1921
    %v2221 = vpop.f32.mrb[0].mxu0
    %v2222 = vadd.f32 %v2003, %v2221
    %v2223 = vpop.f32.mrb[0].mxu0
    %v2224 = vadd.f32 %v2007, %v2223
    %2225 = vmatprep.mubr.f32.mxu0 0.0
    %2226 = vmatmul.mubr.f32.gmra.mrb[0].mxu0 %v1922
    %v2227 = vpop.f32.mrb[0].mxu0
    %v2228 = vadd.f32 %v2003, %v2227
    %v2229 = vpop.f32.mrb[0].mxu0
    %v2230 = vadd.f32 %v2007, %v2229
    %2231 = vmatprep.mubr.f32.mxu0 0.0
    %2232 = vmatmul.mubr.f32.gmra.mrb[0].mxu0 %v1923
    %v2233 = vpop.f32.mrb[0].mxu0
    %v2234 = vadd.f32 %v2003, %v2233
    %v2235 = vpop.f32.mrb[0].mxu0
    %v2236 = vadd.f32 %v2007, %v2235
    %2237 = vdwg.mxu0
    %v2238 = vsel %vm120, %v2121, %v2079
    %v2239 = vsel %vm121, %v2123, %v2081
    %v2240 = vsel %vm122, %v2234, %v2192
    %v2241 = vsel %vm123, %v2236, %v2194
    %2242 = vst [vmem:[#allocation4] sm:$0xff] %v2238
    %2243 = vst [vmem:[#allocation4 + $0x8] sm:$0xff] %v2239
    %2244 = vst [vmem:[#allocation4 + $0x10] sm:$0xff] %v2240
    %2245 = vst [vmem:[#allocation4 + $0x18] sm:$0xff] %v2241
    %v2246 = vsel %vm120, %v2115, %v2085
    %v2247 = vsel %vm121, %v2117, %v2087
    %v2248 = vsel %vm122, %v2228, %v2198
    %v2249 = vsel %vm123, %v2230, %v2200
    %2250 = vst [vmem:[%s456] sm:$0xff] %v2246
    %2251 = vst [vmem:[%s456 + $0x8] sm:$0xff] %v2247
    %2252 = vst [vmem:[%s456 + $0x10] sm:$0xff] %v2248
    %2253 = vst [vmem:[%s456 + $0x18] sm:$0xff] %v2249
    %v2254 = vsel %vm120, %v2109, %v2091
    %v2255 = vsel %vm121, %v2111, %v2093
    %v2256 = vsel %vm122, %v2222, %v2204
    %v2257 = vsel %vm123, %v2224, %v2206
    %2258 = vst [vmem:[%s465] sm:$0xff] %v2254
    %2259 = vst [vmem:[%s465 + $0x8] sm:$0xff] %v2255
    %2260 = vst [vmem:[%s465 + $0x10] sm:$0xff] %v2256
    %2261 = vst [vmem:[%s465 + $0x18] sm:$0xff] %v2257
    %v2262 = vsel %vm120, %v2103, %v2097
    %v2263 = vsel %vm121, %v2105, %v2099
    %v2264 = vsel %vm122, %v2216, %v2210
    %v2265 = vsel %vm123, %v2218, %v2212
    %2266 = vst [vmem:[%s474] sm:$0xff] %v2262
    %2267 = vst [vmem:[%s474 + $0x8] sm:$0xff] %v2263
    %2268 = vst [vmem:[%s474 + $0x10] sm:$0xff] %v2264
    %2269 = vst [vmem:[%s474 + $0x18] sm:$0xff] %v2265
    %v2270 = vsel %vm120, %v2097, %v2103
    %v2271 = vsel %vm121, %v2099, %v2105
    %v2272 = vsel %vm122, %v2210, %v2216
    %v2273 = vsel %vm123, %v2212, %v2218
    %2274 = vst [vmem:[%s483] sm:$0xff] %v2270
    %2275 = vst [vmem:[%s483 + $0x8] sm:$0xff] %v2271
    %2276 = vst [vmem:[%s483 + $0x10] sm:$0xff] %v2272
    %2277 = vst [vmem:[%s483 + $0x18] sm:$0xff] %v2273
    %v2278 = vsel %vm120, %v2091, %v2109
    %v2279 = vsel %vm121, %v2093, %v2111
    %v2280 = vsel %vm122, %v2204, %v2222
    %v2281 = vsel %vm123, %v2206, %v2224
    %2282 = vst [vmem:[%s492] sm:$0xff] %v2278
    %2283 = vst [vmem:[%s492 + $0x8] sm:$0xff] %v2279
    %2284 = vst [vmem:[%s492 + $0x10] sm:$0xff] %v2280
    %2285 = vst [vmem:[%s492 + $0x18] sm:$0xff] %v2281
    %v2286 = vsel %vm120, %v2085, %v2115
    %v2287 = vsel %vm121, %v2087, %v2117
    %v2288 = vsel %vm122, %v2198, %v2228
    %v2289 = vsel %vm123, %v2200, %v2230
    %2290 = vst [vmem:[%s501] sm:$0xff] %v2286
    %2291 = vst [vmem:[%s501 + $0x8] sm:$0xff] %v2287
    %2292 = vst [vmem:[%s501 + $0x10] sm:$0xff] %v2288
    %2293 = vst [vmem:[%s501 + $0x18] sm:$0xff] %v2289
    %v2294 = vsel %vm120, %v2079, %v2121
    %v2295 = vsel %vm121, %v2081, %v2123
    %v2296 = vsel %vm122, %v2192, %v2234
    %v2297 = vsel %vm123, %v2194, %v2236
    %2298 = vst [vmem:[%s510] sm:$0xff] %v2294
    %2299 = vst [vmem:[%s510 + $0x8] sm:$0xff] %v2295
    %2300 = vst [vmem:[%s510 + $0x10] sm:$0xff] %v2296
    %2301 = vst [vmem:[%s510 + $0x18] sm:$0xff] %v2297
    %s2302 = scalar_lea.vmem [#allocation9], 512
    %v2303 = vld [vmem:[%s2302] sm:$0xff]
    %v2304 = vld [vmem:[%s2302 + $0x8] sm:$0xff]
    %v2305 = vld [vmem:[%s2302 + $0x10] sm:$0xff]
    %v2306 = vld [vmem:[%s2302 + $0x18] sm:$0xff]
    %v2307 = vld [vmem:[%s2302 + $0x20] sm:$0xff]
    %v2308 = vld [vmem:[%s2302 + $0x28] sm:$0xff]
    %v2309 = vld [vmem:[%s2302 + $0x30] sm:$0xff]
    %v2310 = vld [vmem:[%s2302 + $0x38] sm:$0xff]
    %v2311 = vld [vmem:[%s2302 + $0x40] sm:$0xff]
    %v2312 = vld [vmem:[%s2302 + $0x48] sm:$0xff]
    %v2313 = vld [vmem:[%s2302 + $0x50] sm:$0xff]
    %v2314 = vld [vmem:[%s2302 + $0x58] sm:$0xff]
    %v2315 = vld [vmem:[%s2302 + $0x60] sm:$0xff]
    %v2316 = vld [vmem:[%s2302 + $0x68] sm:$0xff]
    %v2317 = vld [vmem:[%s2302 + $0x70] sm:$0xff]
    %v2318 = vld [vmem:[%s2302 + $0x78] sm:$0xff]
    %v2319 = vld [vmem:[%s2302 + $0x80] sm:$0xff]
    %v2320 = vld [vmem:[%s2302 + $0x88] sm:$0xff]
    %v2321 = vld [vmem:[%s2302 + $0x90] sm:$0xff]
    %v2322 = vld [vmem:[%s2302 + $0x98] sm:$0xff]
    %v2323 = vld [vmem:[%s2302 + $0xa0] sm:$0xff]
    %v2324 = vld [vmem:[%s2302 + $0xa8] sm:$0xff]
    %v2325 = vld [vmem:[%s2302 + $0xb0] sm:$0xff]
    %v2326 = vld [vmem:[%s2302 + $0xb8] sm:$0xff]
    %v2327 = vld [vmem:[%s2302 + $0xc0] sm:$0xff]
    %v2328 = vld [vmem:[%s2302 + $0xc8] sm:$0xff]
    %v2329 = vld [vmem:[%s2302 + $0xd0] sm:$0xff]
    %v2330 = vld [vmem:[%s2302 + $0xd8] sm:$0xff]
    %v2331 = vld [vmem:[%s2302 + $0xe0] sm:$0xff]
    %v2332 = vld [vmem:[%s2302 + $0xe8] sm:$0xff]
    %v2333 = vld [vmem:[%s2302 + $0xf0] sm:$0xff]
    %v2334 = vld [vmem:[%s2302 + $0xf8] sm:$0xff]
    %v2335 = vld [vmem:[%s2302 + $0x100] sm:$0xff]
    %v2336 = vld [vmem:[%s2302 + $0x108] sm:$0xff]
    %v2337 = vld [vmem:[%s2302 + $0x110] sm:$0xff]
    %v2338 = vld [vmem:[%s2302 + $0x118] sm:$0xff]
    %v2339 = vld [vmem:[%s2302 + $0x120] sm:$0xff]
    %v2340 = vld [vmem:[%s2302 + $0x128] sm:$0xff]
    %v2341 = vld [vmem:[%s2302 + $0x130] sm:$0xff]
    %v2342 = vld [vmem:[%s2302 + $0x138] sm:$0xff]
    %v2343 = vld [vmem:[%s2302 + $0x140] sm:$0xff]
    %v2344 = vld [vmem:[%s2302 + $0x148] sm:$0xff]
    %v2345 = vld [vmem:[%s2302 + $0x150] sm:$0xff]
    %v2346 = vld [vmem:[%s2302 + $0x158] sm:$0xff]
    %v2347 = vld [vmem:[%s2302 + $0x160] sm:$0xff]
    %v2348 = vld [vmem:[%s2302 + $0x168] sm:$0xff]
    %v2349 = vld [vmem:[%s2302 + $0x170] sm:$0xff]
    %v2350 = vld [vmem:[%s2302 + $0x178] sm:$0xff]
    %v2351 = vld [vmem:[%s2302 + $0x180] sm:$0xff]
    %v2352 = vld [vmem:[%s2302 + $0x188] sm:$0xff]
    %v2353 = vld [vmem:[%s2302 + $0x190] sm:$0xff]
    %v2354 = vld [vmem:[%s2302 + $0x198] sm:$0xff]
    %v2355 = vld [vmem:[%s2302 + $0x1a0] sm:$0xff]
    %v2356 = vld [vmem:[%s2302 + $0x1a8] sm:$0xff]
    %v2357 = vld [vmem:[%s2302 + $0x1b0] sm:$0xff]
    %v2358 = vld [vmem:[%s2302 + $0x1b8] sm:$0xff]
    %v2359 = vld [vmem:[%s2302 + $0x1c0] sm:$0xff]
    %v2360 = vld [vmem:[%s2302 + $0x1c8] sm:$0xff]
    %v2361 = vld [vmem:[%s2302 + $0x1d0] sm:$0xff]
    %v2362 = vld [vmem:[%s2302 + $0x1d8] sm:$0xff]
    %v2363 = vld [vmem:[%s2302 + $0x1e0] sm:$0xff]
    %v2364 = vld [vmem:[%s2302 + $0x1e8] sm:$0xff]
    %v2365 = vld [vmem:[%s2302 + $0x1f0] sm:$0xff]
    %v2366 = vld [vmem:[%s2302 + $0x1f8] sm:$0xff]
    %v2367 = vld [vmem:[#allocation4] sm:$0xff]
    %v2368 = vld [vmem:[#allocation4 + $0x8] sm:$0xff]
    %v2369 = vld [vmem:[#allocation4 + $0x10] sm:$0xff]
    %v2370 = vld [vmem:[#allocation4 + $0x18] sm:$0xff]
    %2371 = vmatprep.subr.mxu0 %v2304
    %2372 = vmatpush1.msra.mxu0 %v2303
    %2373 = vmatprep.subr.mxu0 %v2308
    %2374 = vmatpush1.msra.mxu0 %v2307
    %2375 = vmatprep.subr.mxu0 %v2312
    %2376 = vmatpush1.msra.mxu0 %v2311
    %2377 = vmatprep.subr.mxu0 %v2316
    %2378 = vmatpush1.msra.mxu0 %v2315
    %2379 = vmatprep.subr.mxu0 %v2320
    %2380 = vmatpush1.msra.mxu0 %v2319
    %2381 = vmatprep.subr.mxu0 %v2324
    %2382 = vmatpush1.msra.mxu0 %v2323
    %2383 = vmatprep.subr.mxu0 %v2328
    %2384 = vmatpush1.msra.mxu0 %v2327
    %2385 = vmatprep.subr.mxu0 %v2332
    %2386 = vmatpush1.msra.mxu0 %v2331
    %2387 = vmatprep.subr.mxu0 %v2336
    %2388 = vmatpush1.msra.mxu0 %v2335
    %2389 = vmatprep.subr.mxu0 %v2340
    %2390 = vmatpush1.msra.mxu0 %v2339
    %2391 = vmatprep.subr.mxu0 %v2344
    %2392 = vmatpush1.msra.mxu0 %v2343
    %2393 = vmatprep.subr.mxu0 %v2348
    %2394 = vmatpush1.msra.mxu0 %v2347
    %2395 = vmatprep.subr.mxu0 %v2352
    %2396 = vmatpush1.msra.mxu0 %v2351
    %2397 = vmatprep.subr.mxu0 %v2356
    %2398 = vmatpush1.msra.mxu0 %v2355
    %2399 = vmatprep.subr.mxu0 %v2360
    %2400 = vmatpush1.msra.mxu0 %v2359
    %2401 = vmatprep.subr.mxu0 %v2364
    %2402 = vmatpush1.msra.mxu0 %v2363
    %2403 = vmatprep.subr.mxu0 0.0
    %2404 = vmatpush1.msra.mxu0 0.0
    %2405 = vmatprep.subr.mxu0 0.0
    %2406 = vmatpush1.msra.mxu0 0.0
    %2407 = vmatprep.subr.mxu0 0.0
    %2408 = vmatpush1.msra.mxu0 0.0
    %2409 = vmatprep.subr.mxu0 0.0
    %2410 = vmatpush1.msra.mxu0 0.0
    %2411 = vmatprep.subr.mxu0 0.0
    %2412 = vmatpush1.msra.mxu0 0.0
    %2413 = vmatprep.subr.mxu0 0.0
    %2414 = vmatpush1.msra.mxu0 0.0
    %2415 = vmatprep.subr.mxu0 0.0
    %2416 = vmatpush1.msra.mxu0 0.0
    %2417 = vmatprep.subr.mxu0 0.0
    %2418 = vmatpush1.msra.mxu0 0.0
    %2419 = vmatprep.subr.mxu0 0.0
    %2420 = vmatpush1.msra.mxu0 0.0
    %2421 = vmatprep.subr.mxu0 0.0
    %2422 = vmatpush1.msra.mxu0 0.0
    %2423 = vmatprep.subr.mxu0 0.0
    %2424 = vmatpush1.msra.mxu0 0.0
    %2425 = vmatprep.subr.mxu0 0.0
    %2426 = vmatpush1.msra.mxu0 0.0
    %2427 = vmatprep.subr.mxu0 0.0
    %2428 = vmatpush1.msra.mxu0 0.0
    %2429 = vmatprep.subr.mxu0 0.0
    %2430 = vmatpush1.msra.mxu0 0.0
    %2431 = vmatprep.subr.mxu0 0.0
    %2432 = vmatpush1.msra.mxu0 0.0
    %2433 = vmatprep.subr.mxu0 0.0
    %2434 = vmatpush1.msra.mxu0 0.0
    %2435 = vmatprep.mubr.f32.mxu0 0.0
    %2436 = vmatmul.mubr.f32.gmra.mrb[0].mxu0 0.0
    %v2437 = vpop.f32.mrb[0].mxu0
    %v2438 = vadd.f32 %v2367, %v2437
    %v2439 = vpop.f32.mrb[0].mxu0
    %v2440 = vadd.f32 %v2368, %v2439
    %2441 = vdwg.mxu0
    %2442 = vmatprep.subr.mxu0 %v2306
    %2443 = vmatpush1.msra.mxu0 %v2305
    %2444 = vmatprep.subr.mxu0 %v2310
    %2445 = vmatpush1.msra.mxu0 %v2309
    %2446 = vmatprep.subr.mxu0 %v2314
    %2447 = vmatpush1.msra.mxu0 %v2313
    %2448 = vmatprep.subr.mxu0 %v2318
    %2449 = vmatpush1.msra.mxu0 %v2317
    %2450 = vmatprep.subr.mxu0 %v2322
    %2451 = vmatpush1.msra.mxu0 %v2321
    %2452 = vmatprep.subr.mxu0 %v2326
    %2453 = vmatpush1.msra.mxu0 %v2325
    %2454 = vmatprep.subr.mxu0 %v2330
    %2455 = vmatpush1.msra.mxu0 %v2329
    %2456 = vmatprep.subr.mxu0 %v2334
    %2457 = vmatpush1.msra.mxu0 %v2333
    %2458 = vmatprep.subr.mxu0 %v2338
    %2459 = vmatpush1.msra.mxu0 %v2337
    %2460 = vmatprep.subr.mxu0 %v2342
    %2461 = vmatpush1.msra.mxu0 %v2341
    %2462 = vmatprep.subr.mxu0 %v2346
    %2463 = vmatpush1.msra.mxu0 %v2345
    %2464 = vmatprep.subr.mxu0 %v2350
    %2465 = vmatpush1.msra.mxu0 %v2349
    %2466 = vmatprep.subr.mxu0 %v2354
    %2467 = vmatpush1.msra.mxu0 %v2353
    %2468 = vmatprep.subr.mxu0 %v2358
    %2469 = vmatpush1.msra.mxu0 %v2357
    %2470 = vmatprep.subr.mxu0 %v2362
    %2471 = vmatpush1.msra.mxu0 %v2361
    %2472 = vmatprep.subr.mxu0 %v2366
    %2473 = vmatpush1.msra.mxu0 %v2365
    %2474 = vmatprep.subr.mxu0 0.0
    %2475 = vmatpush1.msra.mxu0 0.0
    %2476 = vmatprep.subr.mxu0 0.0
    %2477 = vmatpush1.msra.mxu0 0.0
    %2478 = vmatprep.subr.mxu0 0.0
    %2479 = vmatpush1.msra.mxu0 0.0
    %2480 = vmatprep.subr.mxu0 0.0
    %2481 = vmatpush1.msra.mxu0 0.0
    %2482 = vmatprep.subr.mxu0 0.0
    %2483 = vmatpush1.msra.mxu0 0.0
    %2484 = vmatprep.subr.mxu0 0.0
    %2485 = vmatpush1.msra.mxu0 0.0
    %2486 = vmatprep.subr.mxu0 0.0
    %2487 = vmatpush1.msra.mxu0 0.0
    %2488 = vmatprep.subr.mxu0 0.0
    %2489 = vmatpush1.msra.mxu0 0.0
    %2490 = vmatprep.subr.mxu0 0.0
    %2491 = vmatpush1.msra.mxu0 0.0
    %2492 = vmatprep.subr.mxu0 0.0
    %2493 = vmatpush1.msra.mxu0 0.0
    %2494 = vmatprep.subr.mxu0 0.0
    %2495 = vmatpush1.msra.mxu0 0.0
    %2496 = vmatprep.subr.mxu0 0.0
    %2497 = vmatpush1.msra.mxu0 0.0
    %2498 = vmatprep.subr.mxu0 0.0
    %2499 = vmatpush1.msra.mxu0 0.0
    %2500 = vmatprep.subr.mxu0 0.0
    %2501 = vmatpush1.msra.mxu0 0.0
    %2502 = vmatprep.subr.mxu0 0.0
    %2503 = vmatpush1.msra.mxu0 0.0
    %2504 = vmatprep.subr.mxu0 0.0
    %2505 = vmatpush1.msra.mxu0 0.0
    %2506 = vmatprep.mubr.f32.mxu0 0.0
    %2507 = vmatmul.mubr.f32.gmra.mrb[0].mxu0 0.0
    %v2508 = vpop.f32.mrb[0].mxu0
    %v2509 = vadd.f32 %v2369, %v2508
    %v2510 = vpop.f32.mrb[0].mxu0
    %v2511 = vadd.f32 %v2370, %v2510
    %2512 = vdwg.mxu0
    %v2513 = vmul.f32 %v2438, 0.5
    %v2514 = vmul.f32 %v2440, 0.5
    %v2515 = vmul.f32 %v2509, 0.5
    %v2516 = vtanh.pop %v2513
    %v2517 = vtanh.pop %v2514
    %v2518 = vtanh.pop %v2515
    %v2519 = vmul.f32 %v2516, 0.5
    %v2520 = vmul.f32 %v2517, 0.5
    %v2521 = vmul.f32 %v2518, 0.5
    %v2522 = vadd.f32 %v2519, 0.5
    %v2523 = vadd.f32 %v2520, 0.5
    %v2524 = vadd.f32 %v2521, 0.5
    %v2525 = vtanh.pop %v2511
    %v2526 = vmul.f32 %v2523, 0.0
    %v2527 = vmul.f32 %v2522, %v2525
    %v2528 = vadd.f32 %v2526, %v2527
    %v2529 = vtanh.pop %v2528
    %v2530 = vmul.f32 %v2524, %v2529
    %2531 = vst.msk [vmem:[#allocation3] sm:$0xff] %vm743, %v2530
    %s2532 = scalar_lea.vmem [#allocation3], 56
    %2533 = vst.msk [vmem:[%s2532] sm:$0xff] %vm746, %v2530
    %v2534 = vld [vmem:[%s456] sm:$0xff]
    %v2535 = vld [vmem:[%s456 + $0x8] sm:$0xff]
    %v2536 = vld [vmem:[%s456 + $0x10] sm:$0xff]
    %v2537 = vld [vmem:[%s456 + $0x18] sm:$0xff]
    %2538 = vmatprep.subr.mxu0 %v2304
    %2539 = vmatpush1.msra.mxu0 %v2303
    %2540 = vmatprep.subr.mxu0 %v2308
    %2541 = vmatpush1.msra.mxu0 %v2307
    %2542 = vmatprep.subr.mxu0 %v2312
    %2543 = vmatpush1.msra.mxu0 %v2311
    %2544 = vmatprep.subr.mxu0 %v2316
    %2545 = vmatpush1.msra.mxu0 %v2315
    %2546 = vmatprep.subr.mxu0 %v2320
    %2547 = vmatpush1.msra.mxu0 %v2319
    %2548 = vmatprep.subr.mxu0 %v2324
    %2549 = vmatpush1.msra.mxu0 %v2323
    %2550 = vmatprep.subr.mxu0 %v2328
    %2551 = vmatpush1.msra.mxu0 %v2327
    %2552 = vmatprep.subr.mxu0 %v2332
    %2553 = vmatpush1.msra.mxu0 %v2331
    %2554 = vmatprep.subr.mxu0 %v2336
    %2555 = vmatpush1.msra.mxu0 %v2335
    %2556 = vmatprep.subr.mxu0 %v2340
    %2557 = vmatpush1.msra.mxu0 %v2339
    %2558 = vmatprep.subr.mxu0 %v2344
    %2559 = vmatpush1.msra.mxu0 %v2343
    %2560 = vmatprep.subr.mxu0 %v2348
    %2561 = vmatpush1.msra.mxu0 %v2347
    %2562 = vmatprep.subr.mxu0 %v2352
    %2563 = vmatpush1.msra.mxu0 %v2351
    %2564 = vmatprep.subr.mxu0 %v2356
    %2565 = vmatpush1.msra.mxu0 %v2355
    %2566 = vmatprep.subr.mxu0 %v2360
    %2567 = vmatpush1.msra.mxu0 %v2359
    %2568 = vmatprep.subr.mxu0 %v2364
    %2569 = vmatpush1.msra.mxu0 %v2363
    %2570 = vmatprep.subr.mxu0 0.0
    %2571 = vmatpush1.msra.mxu0 0.0
    %2572 = vmatprep.subr.mxu0 0.0
    %2573 = vmatpush1.msra.mxu0 0.0
    %2574 = vmatprep.subr.mxu0 0.0
    %2575 = vmatpush1.msra.mxu0 0.0
    %2576 = vmatprep.subr.mxu0 0.0
    %2577 = vmatpush1.msra.mxu0 0.0
    %2578 = vmatprep.subr.mxu0 0.0
    %2579 = vmatpush1.msra.mxu0 0.0
    %2580 = vmatprep.subr.mxu0 0.0
    %2581 = vmatpush1.msra.mxu0 0.0
    %2582 = vmatprep.subr.mxu0 0.0
    %2583 = vmatpush1.msra.mxu0 0.0
    %2584 = vmatprep.subr.mxu0 0.0
    %2585 = vmatpush1.msra.mxu0 0.0
    %2586 = vmatprep.subr.mxu0 0.0
    %2587 = vmatpush1.msra.mxu0 0.0
    %2588 = vmatprep.subr.mxu0 0.0
    %2589 = vmatpush1.msra.mxu0 0.0
    %2590 = vmatprep.subr.mxu0 0.0
    %2591 = vmatpush1.msra.mxu0 0.0
    %2592 = vmatprep.subr.mxu0 0.0
    %2593 = vmatpush1.msra.mxu0 0.0
    %2594 = vmatprep.subr.mxu0 0.0
    %2595 = vmatpush1.msra.mxu0 0.0
    %2596 = vmatprep.subr.mxu0 0.0
    %2597 = vmatpush1.msra.mxu0 0.0
    %2598 = vmatprep.subr.mxu0 0.0
    %2599 = vmatpush1.msra.mxu0 0.0
    %2600 = vmatprep.subr.mxu0 0.0
    %2601 = vmatpush1.msra.mxu0 0.0
    %2602 = vmatprep.mubr.f32.mxu0 0.0
    %2603 = vmatmul.mubr.f32.gmra.mrb[0].mxu0 %v2530
    %v2604 = vpop.f32.mrb[0].mxu0
    %v2605 = vadd.f32 %v2534, %v2604
    %v2606 = vpop.f32.mrb[0].mxu0
    %v2607 = vadd.f32 %v2535, %v2606
    %2608 = vdwg.mxu0
    %2609 = vmatprep.subr.mxu0 %v2306
    %2610 = vmatpush1.msra.mxu0 %v2305
    %2611 = vmatprep.subr.mxu0 %v2310
    %2612 = vmatpush1.msra.mxu0 %v2309
    %2613 = vmatprep.subr.mxu0 %v2314
    %2614 = vmatpush1.msra.mxu0 %v2313
    %2615 = vmatprep.subr.mxu0 %v2318
    %2616 = vmatpush1.msra.mxu0 %v2317
    %2617 = vmatprep.subr.mxu0 %v2322
    %2618 = vmatpush1.msra.mxu0 %v2321
    %2619 = vmatprep.subr.mxu0 %v2326
    %2620 = vmatpush1.msra.mxu0 %v2325
    %2621 = vmatprep.subr.mxu0 %v2330
    %2622 = vmatpush1.msra.mxu0 %v2329
    %2623 = vmatprep.subr.mxu0 %v2334
    %2624 = vmatpush1.msra.mxu0 %v2333
    %2625 = vmatprep.subr.mxu0 %v2338
    %2626 = vmatpush1.msra.mxu0 %v2337
    %2627 = vmatprep.subr.mxu0 %v2342
    %2628 = vmatpush1.msra.mxu0 %v2341
    %2629 = vmatprep.subr.mxu0 %v2346
    %2630 = vmatpush1.msra.mxu0 %v2345
    %2631 = vmatprep.subr.mxu0 %v2350
    %2632 = vmatpush1.msra.mxu0 %v2349
    %2633 = vmatprep.subr.mxu0 %v2354
    %2634 = vmatpush1.msra.mxu0 %v2353
    %2635 = vmatprep.subr.mxu0 %v2358
    %2636 = vmatpush1.msra.mxu0 %v2357
    %2637 = vmatprep.subr.mxu0 %v2362
    %2638 = vmatpush1.msra.mxu0 %v2361
    %2639 = vmatprep.subr.mxu0 %v2366
    %2640 = vmatpush1.msra.mxu0 %v2365
    %2641 = vmatprep.subr.mxu0 0.0
    %2642 = vmatpush1.msra.mxu0 0.0
    %2643 = vmatprep.subr.mxu0 0.0
    %2644 = vmatpush1.msra.mxu0 0.0
    %2645 = vmatprep.subr.mxu0 0.0
    %2646 = vmatpush1.msra.mxu0 0.0
    %2647 = vmatprep.subr.mxu0 0.0
    %2648 = vmatpush1.msra.mxu0 0.0
    %2649 = vmatprep.subr.mxu0 0.0
    %2650 = vmatpush1.msra.mxu0 0.0
    %2651 = vmatprep.subr.mxu0 0.0
    %2652 = vmatpush1.msra.mxu0 0.0
    %2653 = vmatprep.subr.mxu0 0.0
    %2654 = vmatpush1.msra.mxu0 0.0
    %2655 = vmatprep.subr.mxu0 0.0
    %2656 = vmatpush1.msra.mxu0 0.0
    %2657 = vmatprep.subr.mxu0 0.0
    %2658 = vmatpush1.msra.mxu0 0.0
    %2659 = vmatprep.subr.mxu0 0.0
    %2660 = vmatpush1.msra.mxu0 0.0
    %2661 = vmatprep.subr.mxu0 0.0
    %2662 = vmatpush1.msra.mxu0 0.0
    %2663 = vmatprep.subr.mxu0 0.0
    %2664 = vmatpush1.msra.mxu0 0.0
    %2665 = vmatprep.subr.mxu0 0.0
    %2666 = vmatpush1.msra.mxu0 0.0
    %2667 = vmatprep.subr.mxu0 0.0
    %2668 = vmatpush1.msra.mxu0 0.0
    %2669 = vmatprep.subr.mxu0 0.0
    %2670 = vmatpush1.msra.mxu0 0.0
    %2671 = vmatprep.subr.mxu0 0.0
    %2672 = vmatpush1.msra.mxu0 0.0
    %2673 = vmatprep.mubr.f32.mxu0 0.0
    %2674 = vmatmul.mubr.f32.gmra.mrb[0].mxu0 %v2530
    %v2675 = vpop.f32.mrb[0].mxu0
    %v2676 = vadd.f32 %v2536, %v2675
    %v2677 = vpop.f32.mrb[0].mxu0
    %v2678 = vadd.f32 %v2537, %v2677
    %2679 = vdwg.mxu0
    %v2680 = vmul.f32 %v2605, 0.5
    %v2681 = vmul.f32 %v2607, 0.5
    %v2682 = vmul.f32 %v2676, 0.5
    %v2683 = vtanh.pop %v2680
    %v2684 = vtanh.pop %v2681
    %v2685 = vtanh.pop %v2682
    %v2686 = vmul.f32 %v2683, 0.5
    %v2687 = vmul.f32 %v2684, 0.5
    %v2688 = vmul.f32 %v2685, 0.5
    %v2689 = vadd.f32 %v2686, 0.5
    %v2690 = vadd.f32 %v2687, 0.5
    %v2691 = vadd.f32 %v2688, 0.5
    %v2692 = vtanh.pop %v2678
    %v2693 = vmul.f32 %v2690, %v2528
    %v2694 = vmul.f32 %v2689, %v2692
    %v2695 = vadd.f32 %v2693, %v2694
    %v2696 = vtanh.pop %v2695
    %v2697 = vmul.f32 %v2691, %v2696
    %s2698 = scalar_lea.vmem [#allocation3], 8
    %2699 = vst.msk [vmem:[%s2698] sm:$0xff] %vm743, %v2697
    %s2700 = scalar_lea.vmem [#allocation3], 48
    %2701 = vst.msk [vmem:[%s2700] sm:$0xff] %vm746, %v2697
    %v2702 = vld [vmem:[%s465] sm:$0xff]
    %v2703 = vld [vmem:[%s465 + $0x8] sm:$0xff]
    %v2704 = vld [vmem:[%s465 + $0x10] sm:$0xff]
    %v2705 = vld [vmem:[%s465 + $0x18] sm:$0xff]
    %2706 = vmatprep.subr.mxu0 %v2304
    %2707 = vmatpush1.msra.mxu0 %v2303
    %2708 = vmatprep.subr.mxu0 %v2308
    %2709 = vmatpush1.msra.mxu0 %v2307
    %2710 = vmatprep.subr.mxu0 %v2312
    %2711 = vmatpush1.msra.mxu0 %v2311
    %2712 = vmatprep.subr.mxu0 %v2316
    %2713 = vmatpush1.msra.mxu0 %v2315
    %2714 = vmatprep.subr.mxu0 %v2320
    %2715 = vmatpush1.msra.mxu0 %v2319
    %2716 = vmatprep.subr.mxu0 %v2324
    %2717 = vmatpush1.msra.mxu0 %v2323
    %2718 = vmatprep.subr.mxu0 %v2328
    %2719 = vmatpush1.msra.mxu0 %v2327
    %2720 = vmatprep.subr.mxu0 %v2332
    %2721 = vmatpush1.msra.mxu0 %v2331
    %2722 = vmatprep.subr.mxu0 %v2336
    %2723 = vmatpush1.msra.mxu0 %v2335
    %2724 = vmatprep.subr.mxu0 %v2340
    %2725 = vmatpush1.msra.mxu0 %v2339
    %2726 = vmatprep.subr.mxu0 %v2344
    %2727 = vmatpush1.msra.mxu0 %v2343
    %2728 = vmatprep.subr.mxu0 %v2348
    %2729 = vmatpush1.msra.mxu0 %v2347
    %2730 = vmatprep.subr.mxu0 %v2352
    %2731 = vmatpush1.msra.mxu0 %v2351
    %2732 = vmatprep.subr.mxu0 %v2356
    %2733 = vmatpush1.msra.mxu0 %v2355
    %2734 = vmatprep.subr.mxu0 %v2360
    %2735 = vmatpush1.msra.mxu0 %v2359
    %2736 = vmatprep.subr.mxu0 %v2364
    %2737 = vmatpush1.msra.mxu0 %v2363
    %2738 = vmatprep.subr.mxu0 0.0
    %2739 = vmatpush1.msra.mxu0 0.0
    %2740 = vmatprep.subr.mxu0 0.0
    %2741 = vmatpush1.msra.mxu0 0.0
    %2742 = vmatprep.subr.mxu0 0.0
    %2743 = vmatpush1.msra.mxu0 0.0
    %2744 = vmatprep.subr.mxu0 0.0
    %2745 = vmatpush1.msra.mxu0 0.0
    %2746 = vmatprep.subr.mxu0 0.0
    %2747 = vmatpush1.msra.mxu0 0.0
    %2748 = vmatprep.subr.mxu0 0.0
    %2749 = vmatpush1.msra.mxu0 0.0
    %2750 = vmatprep.subr.mxu0 0.0
    %2751 = vmatpush1.msra.mxu0 0.0
    %2752 = vmatprep.subr.mxu0 0.0
    %2753 = vmatpush1.msra.mxu0 0.0
    %2754 = vmatprep.subr.mxu0 0.0
    %2755 = vmatpush1.msra.mxu0 0.0
    %2756 = vmatprep.subr.mxu0 0.0
    %2757 = vmatpush1.msra.mxu0 0.0
    %2758 = vmatprep.subr.mxu0 0.0
    %2759 = vmatpush1.msra.mxu0 0.0
    %2760 = vmatprep.subr.mxu0 0.0
    %2761 = vmatpush1.msra.mxu0 0.0
    %2762 = vmatprep.subr.mxu0 0.0
    %2763 = vmatpush1.msra.mxu0 0.0
    %2764 = vmatprep.subr.mxu0 0.0
    %2765 = vmatpush1.msra.mxu0 0.0
    %2766 = vmatprep.subr.mxu0 0.0
    %2767 = vmatpush1.msra.mxu0 0.0
    %2768 = vmatprep.subr.mxu0 0.0
    %2769 = vmatpush1.msra.mxu0 0.0
    %2770 = vmatprep.mubr.f32.mxu0 0.0
    %2771 = vmatmul.mubr.f32.gmra.mrb[0].mxu0 %v2697
    %v2772 = vpop.f32.mrb[0].mxu0
    %v2773 = vadd.f32 %v2702, %v2772
    %v2774 = vpop.f32.mrb[0].mxu0
    %v2775 = vadd.f32 %v2703, %v2774
    %2776 = vdwg.mxu0
    %2777 = vmatprep.subr.mxu0 %v2306
    %2778 = vmatpush1.msra.mxu0 %v2305
    %2779 = vmatprep.subr.mxu0 %v2310
    %2780 = vmatpush1.msra.mxu0 %v2309
    %2781 = vmatprep.subr.mxu0 %v2314
    %2782 = vmatpush1.msra.mxu0 %v2313
    %2783 = vmatprep.subr.mxu0 %v2318
    %2784 = vmatpush1.msra.mxu0 %v2317
    %2785 = vmatprep.subr.mxu0 %v2322
    %2786 = vmatpush1.msra.mxu0 %v2321
    %2787 = vmatprep.subr.mxu0 %v2326
    %2788 = vmatpush1.msra.mxu0 %v2325
    %2789 = vmatprep.subr.mxu0 %v2330
    %2790 = vmatpush1.msra.mxu0 %v2329
    %2791 = vmatprep.subr.mxu0 %v2334
    %2792 = vmatpush1.msra.mxu0 %v2333
    %2793 = vmatprep.subr.mxu0 %v2338
    %2794 = vmatpush1.msra.mxu0 %v2337
    %2795 = vmatprep.subr.mxu0 %v2342
    %2796 = vmatpush1.msra.mxu0 %v2341
    %2797 = vmatprep.subr.mxu0 %v2346
    %2798 = vmatpush1.msra.mxu0 %v2345
    %2799 = vmatprep.subr.mxu0 %v2350
    %2800 = vmatpush1.msra.mxu0 %v2349
    %2801 = vmatprep.subr.mxu0 %v2354
    %2802 = vmatpush1.msra.mxu0 %v2353
    %2803 = vmatprep.subr.mxu0 %v2358
    %2804 = vmatpush1.msra.mxu0 %v2357
    %2805 = vmatprep.subr.mxu0 %v2362
    %2806 = vmatpush1.msra.mxu0 %v2361
    %2807 = vmatprep.subr.mxu0 %v2366
    %2808 = vmatpush1.msra.mxu0 %v2365
    %2809 = vmatprep.subr.mxu0 0.0
    %2810 = vmatpush1.msra.mxu0 0.0
    %2811 = vmatprep.subr.mxu0 0.0
    %2812 = vmatpush1.msra.mxu0 0.0
    %2813 = vmatprep.subr.mxu0 0.0
    %2814 = vmatpush1.msra.mxu0 0.0
    %2815 = vmatprep.subr.mxu0 0.0
    %2816 = vmatpush1.msra.mxu0 0.0
    %2817 = vmatprep.subr.mxu0 0.0
    %2818 = vmatpush1.msra.mxu0 0.0
    %2819 = vmatprep.subr.mxu0 0.0
    %2820 = vmatpush1.msra.mxu0 0.0
    %2821 = vmatprep.subr.mxu0 0.0
    %2822 = vmatpush1.msra.mxu0 0.0
    %2823 = vmatprep.subr.mxu0 0.0
    %2824 = vmatpush1.msra.mxu0 0.0
    %2825 = vmatprep.subr.mxu0 0.0
    %2826 = vmatpush1.msra.mxu0 0.0
    %2827 = vmatprep.subr.mxu0 0.0
    %2828 = vmatpush1.msra.mxu0 0.0
    %2829 = vmatprep.subr.mxu0 0.0
    %2830 = vmatpush1.msra.mxu0 0.0
    %2831 = vmatprep.subr.mxu0 0.0
    %2832 = vmatpush1.msra.mxu0 0.0
    %2833 = vmatprep.subr.mxu0 0.0
    %2834 = vmatpush1.msra.mxu0 0.0
    %2835 = vmatprep.subr.mxu0 0.0
    %2836 = vmatpush1.msra.mxu0 0.0
    %2837 = vmatprep.subr.mxu0 0.0
    %2838 = vmatpush1.msra.mxu0 0.0
    %2839 = vmatprep.subr.mxu0 0.0
    %2840 = vmatpush1.msra.mxu0 0.0
    %2841 = vmatprep.mubr.f32.mxu0 0.0
    %2842 = vmatmul.mubr.f32.gmra.mrb[0].mxu0 %v2697
    %v2843 = vpop.f32.mrb[0].mxu0
    %v2844 = vadd.f32 %v2704, %v2843
    %v2845 = vpop.f32.mrb[0].mxu0
    %v2846 = vadd.f32 %v2705, %v2845
    %2847 = vdwg.mxu0
    %v2848 = vmul.f32 %v2773, 0.5
    %v2849 = vmul.f32 %v2775, 0.5
    %v2850 = vmul.f32 %v2844, 0.5
    %v2851 = vtanh.pop %v2848
    %v2852 = vtanh.pop %v2849
    %v2853 = vtanh.pop %v2850
    %v2854 = vmul.f32 %v2851, 0.5
    %v2855 = vmul.f32 %v2852, 0.5
    %v2856 = vmul.f32 %v2853, 0.5
    %v2857 = vadd.f32 %v2854, 0.5
    %v2858 = vadd.f32 %v2855, 0.5
    %v2859 = vadd.f32 %v2856, 0.5
    %v2860 = vtanh.pop %v2846
    %v2861 = vmul.f32 %v2858, %v2695
    %v2862 = vmul.f32 %v2857, %v2860
    %v2863 = vadd.f32 %v2861, %v2862
    %v2864 = vtanh.pop %v2863
    %v2865 = vmul.f32 %v2859, %v2864
    %s2866 = scalar_lea.vmem [#allocation3], 16
    %2867 = vst.msk [vmem:[%s2866] sm:$0xff] %vm743, %v2865
    %s2868 = scalar_lea.vmem [#allocation3], 40
    %2869 = vst.msk [vmem:[%s2868] sm:$0xff] %vm746, %v2865
    %v2870 = vld [vmem:[%s474] sm:$0xff]
    %v2871 = vld [vmem:[%s474 + $0x8] sm:$0xff]
    %v2872 = vld [vmem:[%s474 + $0x10] sm:$0xff]
    %v2873 = vld [vmem:[%s474 + $0x18] sm:$0xff]
    %2874 = vmatprep.subr.mxu0 %v2304
    %2875 = vmatpush1.msra.mxu0 %v2303
    %2876 = vmatprep.subr.mxu0 %v2308
    %2877 = vmatpush1.msra.mxu0 %v2307
    %2878 = vmatprep.subr.mxu0 %v2312
    %2879 = vmatpush1.msra.mxu0 %v2311
    %2880 = vmatprep.subr.mxu0 %v2316
    %2881 = vmatpush1.msra.mxu0 %v2315
    %2882 = vmatprep.subr.mxu0 %v2320
    %2883 = vmatpush1.msra.mxu0 %v2319
    %2884 = vmatprep.subr.mxu0 %v2324
    %2885 = vmatpush1.msra.mxu0 %v2323
    %2886 = vmatprep.subr.mxu0 %v2328
    %2887 = vmatpush1.msra.mxu0 %v2327
    %2888 = vmatprep.subr.mxu0 %v2332
    %2889 = vmatpush1.msra.mxu0 %v2331
    %2890 = vmatprep.subr.mxu0 %v2336
    %2891 = vmatpush1.msra.mxu0 %v2335
    %2892 = vmatprep.subr.mxu0 %v2340
    %2893 = vmatpush1.msra.mxu0 %v2339
    %2894 = vmatprep.subr.mxu0 %v2344
    %2895 = vmatpush1.msra.mxu0 %v2343
    %2896 = vmatprep.subr.mxu0 %v2348
    %2897 = vmatpush1.msra.mxu0 %v2347
    %2898 = vmatprep.subr.mxu0 %v2352
    %2899 = vmatpush1.msra.mxu0 %v2351
    %2900 = vmatprep.subr.mxu0 %v2356
    %2901 = vmatpush1.msra.mxu0 %v2355
    %2902 = vmatprep.subr.mxu0 %v2360
    %2903 = vmatpush1.msra.mxu0 %v2359
    %2904 = vmatprep.subr.mxu0 %v2364
    %2905 = vmatpush1.msra.mxu0 %v2363
    %2906 = vmatprep.subr.mxu0 0.0
    %2907 = vmatpush1.msra.mxu0 0.0
    %2908 = vmatprep.subr.mxu0 0.0
    %2909 = vmatpush1.msra.mxu0 0.0
    %2910 = vmatprep.subr.mxu0 0.0
    %2911 = vmatpush1.msra.mxu0 0.0
    %2912 = vmatprep.subr.mxu0 0.0
    %2913 = vmatpush1.msra.mxu0 0.0
    %2914 = vmatprep.subr.mxu0 0.0
    %2915 = vmatpush1.msra.mxu0 0.0
    %2916 = vmatprep.subr.mxu0 0.0
    %2917 = vmatpush1.msra.mxu0 0.0
    %2918 = vmatprep.subr.mxu0 0.0
    %2919 = vmatpush1.msra.mxu0 0.0
    %2920 = vmatprep.subr.mxu0 0.0
    %2921 = vmatpush1.msra.mxu0 0.0
    %2922 = vmatprep.subr.mxu0 0.0
    %2923 = vmatpush1.msra.mxu0 0.0
    %2924 = vmatprep.subr.mxu0 0.0
    %2925 = vmatpush1.msra.mxu0 0.0
    %2926 = vmatprep.subr.mxu0 0.0
    %2927 = vmatpush1.msra.mxu0 0.0
    %2928 = vmatprep.subr.mxu0 0.0
    %2929 = vmatpush1.msra.mxu0 0.0
    %2930 = vmatprep.subr.mxu0 0.0
    %2931 = vmatpush1.msra.mxu0 0.0
    %2932 = vmatprep.subr.mxu0 0.0
    %2933 = vmatpush1.msra.mxu0 0.0
    %2934 = vmatprep.subr.mxu0 0.0
    %2935 = vmatpush1.msra.mxu0 0.0
    %2936 = vmatprep.subr.mxu0 0.0
    %2937 = vmatpush1.msra.mxu0 0.0
    %2938 = vmatprep.mubr.f32.mxu0 0.0
    %2939 = vmatmul.mubr.f32.gmra.mrb[0].mxu0 %v2865
    %v2940 = vpop.f32.mrb[0].mxu0
    %v2941 = vadd.f32 %v2870, %v2940
    %v2942 = vpop.f32.mrb[0].mxu0
    %v2943 = vadd.f32 %v2871, %v2942
    %2944 = vdwg.mxu0
    %2945 = vmatprep.subr.mxu0 %v2306
    %2946 = vmatpush1.msra.mxu0 %v2305
    %2947 = vmatprep.subr.mxu0 %v2310
    %2948 = vmatpush1.msra.mxu0 %v2309
    %2949 = vmatprep.subr.mxu0 %v2314
    %2950 = vmatpush1.msra.mxu0 %v2313
    %2951 = vmatprep.subr.mxu0 %v2318
    %2952 = vmatpush1.msra.mxu0 %v2317
    %2953 = vmatprep.subr.mxu0 %v2322
    %2954 = vmatpush1.msra.mxu0 %v2321
    %2955 = vmatprep.subr.mxu0 %v2326
    %2956 = vmatpush1.msra.mxu0 %v2325
    %2957 = vmatprep.subr.mxu0 %v2330
    %2958 = vmatpush1.msra.mxu0 %v2329
    %2959 = vmatprep.subr.mxu0 %v2334
    %2960 = vmatpush1.msra.mxu0 %v2333
    %2961 = vmatprep.subr.mxu0 %v2338
    %2962 = vmatpush1.msra.mxu0 %v2337
    %2963 = vmatprep.subr.mxu0 %v2342
    %2964 = vmatpush1.msra.mxu0 %v2341
    %2965 = vmatprep.subr.mxu0 %v2346
    %2966 = vmatpush1.msra.mxu0 %v2345
    %2967 = vmatprep.subr.mxu0 %v2350
    %2968 = vmatpush1.msra.mxu0 %v2349
    %2969 = vmatprep.subr.mxu0 %v2354
    %2970 = vmatpush1.msra.mxu0 %v2353
    %2971 = vmatprep.subr.mxu0 %v2358
    %2972 = vmatpush1.msra.mxu0 %v2357
    %2973 = vmatprep.subr.mxu0 %v2362
    %2974 = vmatpush1.msra.mxu0 %v2361
    %2975 = vmatprep.subr.mxu0 %v2366
    %2976 = vmatpush1.msra.mxu0 %v2365
    %2977 = vmatprep.subr.mxu0 0.0
    %2978 = vmatpush1.msra.mxu0 0.0
    %2979 = vmatprep.subr.mxu0 0.0
    %2980 = vmatpush1.msra.mxu0 0.0
    %2981 = vmatprep.subr.mxu0 0.0
    %2982 = vmatpush1.msra.mxu0 0.0
    %2983 = vmatprep.subr.mxu0 0.0
    %2984 = vmatpush1.msra.mxu0 0.0
    %2985 = vmatprep.subr.mxu0 0.0
    %2986 = vmatpush1.msra.mxu0 0.0
    %2987 = vmatprep.subr.mxu0 0.0
    %2988 = vmatpush1.msra.mxu0 0.0
    %2989 = vmatprep.subr.mxu0 0.0
    %2990 = vmatpush1.msra.mxu0 0.0
    %2991 = vmatprep.subr.mxu0 0.0
    %2992 = vmatpush1.msra.mxu0 0.0
    %2993 = vmatprep.subr.mxu0 0.0
    %2994 = vmatpush1.msra.mxu0 0.0
    %2995 = vmatprep.subr.mxu0 0.0
    %2996 = vmatpush1.msra.mxu0 0.0
    %2997 = vmatprep.subr.mxu0 0.0
    %2998 = vmatpush1.msra.mxu0 0.0
    %2999 = vmatprep.subr.mxu0 0.0
    %3000 = vmatpush1.msra.mxu0 0.0
    %3001 = vmatprep.subr.mxu0 0.0
    %3002 = vmatpush1.msra.mxu0 0.0
    %3003 = vmatprep.subr.mxu0 0.0
    %3004 = vmatpush1.msra.mxu0 0.0
    %3005 = vmatprep.subr.mxu0 0.0
    %3006 = vmatpush1.msra.mxu0 0.0
    %3007 = vmatprep.subr.mxu0 0.0
    %3008 = vmatpush1.msra.mxu0 0.0
    %3009 = vmatprep.mubr.f32.mxu0 0.0
    %3010 = vmatmul.mubr.f32.gmra.mrb[0].mxu0 %v2865
    %v3011 = vpop.f32.mrb[0].mxu0
    %v3012 = vadd.f32 %v2872, %v3011
    %v3013 = vpop.f32.mrb[0].mxu0
    %v3014 = vadd.f32 %v2873, %v3013
    %3015 = vdwg.mxu0
    %v3016 = vmul.f32 %v2941, 0.5
    %v3017 = vmul.f32 %v2943, 0.5
    %v3018 = vmul.f32 %v3012, 0.5
    %v3019 = vtanh.pop %v3016
    %v3020 = vtanh.pop %v3017
    %v3021 = vtanh.pop %v3018
    %v3022 = vmul.f32 %v3019, 0.5
    %v3023 = vmul.f32 %v3020, 0.5
    %v3024 = vmul.f32 %v3021, 0.5
    %v3025 = vadd.f32 %v3022, 0.5
    %v3026 = vadd.f32 %v3023, 0.5
    %v3027 = vadd.f32 %v3024, 0.5
    %v3028 = vtanh.pop %v3014
    %v3029 = vmul.f32 %v3026, %v2863
    %v3030 = vmul.f32 %v3025, %v3028
    %v3031 = vadd.f32 %v3029, %v3030
    %v3032 = vtanh.pop %v3031
    %v3033 = vmul.f32 %v3027, %v3032
    %s3034 = scalar_lea.vmem [#allocation3], 24
    %3035 = vst.msk [vmem:[%s3034] sm:$0xff] %vm743, %v3033
    %s3036 = scalar_lea.vmem [#allocation3], 32
    %3037 = vst.msk [vmem:[%s3036] sm:$0xff] %vm746, %v3033
    %v3038 = vld [vmem:[%s483] sm:$0xff]
    %v3039 = vld [vmem:[%s483 + $0x8] sm:$0xff]
    %v3040 = vld [vmem:[%s483 + $0x10] sm:$0xff]
    %v3041 = vld [vmem:[%s483 + $0x18] sm:$0xff]
    %3042 = vmatprep.subr.mxu0 %v2304
    %3043 = vmatpush1.msra.mxu0 %v2303
    %3044 = vmatprep.subr.mxu0 %v2308
    %3045 = vmatpush1.msra.mxu0 %v2307
    %3046 = vmatprep.subr.mxu0 %v2312
    %3047 = vmatpush1.msra.mxu0 %v2311
    %3048 = vmatprep.subr.mxu0 %v2316
    %3049 = vmatpush1.msra.mxu0 %v2315
    %3050 = vmatprep.subr.mxu0 %v2320
    %3051 = vmatpush1.msra.mxu0 %v2319
    %3052 = vmatprep.subr.mxu0 %v2324
    %3053 = vmatpush1.msra.mxu0 %v2323
    %3054 = vmatprep.subr.mxu0 %v2328
    %3055 = vmatpush1.msra.mxu0 %v2327
    %3056 = vmatprep.subr.mxu0 %v2332
    %3057 = vmatpush1.msra.mxu0 %v2331
    %3058 = vmatprep.subr.mxu0 %v2336
    %3059 = vmatpush1.msra.mxu0 %v2335
    %3060 = vmatprep.subr.mxu0 %v2340
    %3061 = vmatpush1.msra.mxu0 %v2339
    %3062 = vmatprep.subr.mxu0 %v2344
    %3063 = vmatpush1.msra.mxu0 %v2343
    %3064 = vmatprep.subr.mxu0 %v2348
    %3065 = vmatpush1.msra.mxu0 %v2347
    %3066 = vmatprep.subr.mxu0 %v2352
    %3067 = vmatpush1.msra.mxu0 %v2351
    %3068 = vmatprep.subr.mxu0 %v2356
    %3069 = vmatpush1.msra.mxu0 %v2355
    %3070 = vmatprep.subr.mxu0 %v2360
    %3071 = vmatpush1.msra.mxu0 %v2359
    %3072 = vmatprep.subr.mxu0 %v2364
    %3073 = vmatpush1.msra.mxu0 %v2363
    %3074 = vmatprep.subr.mxu0 0.0
    %3075 = vmatpush1.msra.mxu0 0.0
    %3076 = vmatprep.subr.mxu0 0.0
    %3077 = vmatpush1.msra.mxu0 0.0
    %3078 = vmatprep.subr.mxu0 0.0
    %3079 = vmatpush1.msra.mxu0 0.0
    %3080 = vmatprep.subr.mxu0 0.0
    %3081 = vmatpush1.msra.mxu0 0.0
    %3082 = vmatprep.subr.mxu0 0.0
    %3083 = vmatpush1.msra.mxu0 0.0
    %3084 = vmatprep.subr.mxu0 0.0
    %3085 = vmatpush1.msra.mxu0 0.0
    %3086 = vmatprep.subr.mxu0 0.0
    %3087 = vmatpush1.msra.mxu0 0.0
    %3088 = vmatprep.subr.mxu0 0.0
    %3089 = vmatpush1.msra.mxu0 0.0
    %3090 = vmatprep.subr.mxu0 0.0
    %3091 = vmatpush1.msra.mxu0 0.0
    %3092 = vmatprep.subr.mxu0 0.0
    %3093 = vmatpush1.msra.mxu0 0.0
    %3094 = vmatprep.subr.mxu0 0.0
    %3095 = vmatpush1.msra.mxu0 0.0
    %3096 = vmatprep.subr.mxu0 0.0
    %3097 = vmatpush1.msra.mxu0 0.0
    %3098 = vmatprep.subr.mxu0 0.0
    %3099 = vmatpush1.msra.mxu0 0.0
    %3100 = vmatprep.subr.mxu0 0.0
    %3101 = vmatpush1.msra.mxu0 0.0
    %3102 = vmatprep.subr.mxu0 0.0
    %3103 = vmatpush1.msra.mxu0 0.0
    %3104 = vmatprep.subr.mxu0 0.0
    %3105 = vmatpush1.msra.mxu0 0.0
    %3106 = vmatprep.mubr.f32.mxu0 0.0
    %3107 = vmatmul.mubr.f32.gmra.mrb[0].mxu0 %v3033
    %v3108 = vpop.f32.mrb[0].mxu0
    %v3109 = vadd.f32 %v3038, %v3108
    %v3110 = vpop.f32.mrb[0].mxu0
    %v3111 = vadd.f32 %v3039, %v3110
    %3112 = vdwg.mxu0
    %3113 = vmatprep.subr.mxu0 %v2306
    %3114 = vmatpush1.msra.mxu0 %v2305
    %3115 = vmatprep.subr.mxu0 %v2310
    %3116 = vmatpush1.msra.mxu0 %v2309
    %3117 = vmatprep.subr.mxu0 %v2314
    %3118 = vmatpush1.msra.mxu0 %v2313
    %3119 = vmatprep.subr.mxu0 %v2318
    %3120 = vmatpush1.msra.mxu0 %v2317
    %3121 = vmatprep.subr.mxu0 %v2322
    %3122 = vmatpush1.msra.mxu0 %v2321
    %3123 = vmatprep.subr.mxu0 %v2326
    %3124 = vmatpush1.msra.mxu0 %v2325
    %3125 = vmatprep.subr.mxu0 %v2330
    %3126 = vmatpush1.msra.mxu0 %v2329
    %3127 = vmatprep.subr.mxu0 %v2334
    %3128 = vmatpush1.msra.mxu0 %v2333
    %3129 = vmatprep.subr.mxu0 %v2338
    %3130 = vmatpush1.msra.mxu0 %v2337
    %3131 = vmatprep.subr.mxu0 %v2342
    %3132 = vmatpush1.msra.mxu0 %v2341
    %3133 = vmatprep.subr.mxu0 %v2346
    %3134 = vmatpush1.msra.mxu0 %v2345
    %3135 = vmatprep.subr.mxu0 %v2350
    %3136 = vmatpush1.msra.mxu0 %v2349
    %3137 = vmatprep.subr.mxu0 %v2354
    %3138 = vmatpush1.msra.mxu0 %v2353
    %3139 = vmatprep.subr.mxu0 %v2358
    %3140 = vmatpush1.msra.mxu0 %v2357
    %3141 = vmatprep.subr.mxu0 %v2362
    %3142 = vmatpush1.msra.mxu0 %v2361
    %3143 = vmatprep.subr.mxu0 %v2366
    %3144 = vmatpush1.msra.mxu0 %v2365
    %3145 = vmatprep.subr.mxu0 0.0
    %3146 = vmatpush1.msra.mxu0 0.0
    %3147 = vmatprep.subr.mxu0 0.0
    %3148 = vmatpush1.msra.mxu0 0.0
    %3149 = vmatprep.subr.mxu0 0.0
    %3150 = vmatpush1.msra.mxu0 0.0
    %3151 = vmatprep.subr.mxu0 0.0
    %3152 = vmatpush1.msra.mxu0 0.0
    %3153 = vmatprep.subr.mxu0 0.0
    %3154 = vmatpush1.msra.mxu0 0.0
    %3155 = vmatprep.subr.mxu0 0.0
    %3156 = vmatpush1.msra.mxu0 0.0
    %3157 = vmatprep.subr.mxu0 0.0
    %3158 = vmatpush1.msra.mxu0 0.0
    %3159 = vmatprep.subr.mxu0 0.0
    %3160 = vmatpush1.msra.mxu0 0.0
    %3161 = vmatprep.subr.mxu0 0.0
    %3162 = vmatpush1.msra.mxu0 0.0
    %3163 = vmatprep.subr.mxu0 0.0
    %3164 = vmatpush1.msra.mxu0 0.0
    %3165 = vmatprep.subr.mxu0 0.0
    %3166 = vmatpush1.msra.mxu0 0.0
    %3167 = vmatprep.subr.mxu0 0.0
    %3168 = vmatpush1.msra.mxu0 0.0
    %3169 = vmatprep.subr.mxu0 0.0
    %3170 = vmatpush1.msra.mxu0 0.0
    %3171 = vmatprep.subr.mxu0 0.0
    %3172 = vmatpush1.msra.mxu0 0.0
    %3173 = vmatprep.subr.mxu0 0.0
    %3174 = vmatpush1.msra.mxu0 0.0
    %3175 = vmatprep.subr.mxu0 0.0
    %3176 = vmatpush1.msra.mxu0 0.0
    %3177 = vmatprep.mubr.f32.mxu0 0.0
    %3178 = vmatmul.mubr.f32.gmra.mrb[0].mxu0 %v3033
    %v3179 = vpop.f32.mrb[0].mxu0
    %v3180 = vadd.f32 %v3040, %v3179
    %v3181 = vpop.f32.mrb[0].mxu0
    %v3182 = vadd.f32 %v3041, %v3181
    %3183 = vdwg.mxu0
    %v3184 = vmul.f32 %v3109, 0.5
    %v3185 = vmul.f32 %v3111, 0.5
    %v3186 = vmul.f32 %v3180, 0.5
    %v3187 = vtanh.pop %v3184
    %v3188 = vtanh.pop %v3185
    %v3189 = vtanh.pop %v3186
    %v3190 = vmul.f32 %v3187, 0.5
    %v3191 = vmul.f32 %v3188, 0.5
    %v3192 = vmul.f32 %v3189, 0.5
    %v3193 = vadd.f32 %v3190, 0.5
    %v3194 = vadd.f32 %v3191, 0.5
    %v3195 = vadd.f32 %v3192, 0.5
    %v3196 = vtanh.pop %v3182
    %v3197 = vmul.f32 %v3194, %v3031
    %v3198 = vmul.f32 %v3193, %v3196
    %v3199 = vadd.f32 %v3197, %v3198
    %v3200 = vtanh.pop %v3199
    %v3201 = vmul.f32 %v3195, %v3200
    %3202 = vst.msk [vmem:[%s3036] sm:$0xff] %vm743, %v3201
    %3203 = vst.msk [vmem:[%s3034] sm:$0xff] %vm746, %v3201
    %v3204 = vld [vmem:[%s492] sm:$0xff]
    %v3205 = vld [vmem:[%s492 + $0x8] sm:$0xff]
    %v3206 = vld [vmem:[%s492 + $0x10] sm:$0xff]
    %v3207 = vld [vmem:[%s492 + $0x18] sm:$0xff]
    %3208 = vmatprep.subr.mxu0 %v2304
    %3209 = vmatpush1.msra.mxu0 %v2303
    %3210 = vmatprep.subr.mxu0 %v2308
    %3211 = vmatpush1.msra.mxu0 %v2307
    %3212 = vmatprep.subr.mxu0 %v2312
    %3213 = vmatpush1.msra.mxu0 %v2311
    %3214 = vmatprep.subr.mxu0 %v2316
    %3215 = vmatpush1.msra.mxu0 %v2315
    %3216 = vmatprep.subr.mxu0 %v2320
    %3217 = vmatpush1.msra.mxu0 %v2319
    %3218 = vmatprep.subr.mxu0 %v2324
    %3219 = vmatpush1.msra.mxu0 %v2323
    %3220 = vmatprep.subr.mxu0 %v2328
    %3221 = vmatpush1.msra.mxu0 %v2327
    %3222 = vmatprep.subr.mxu0 %v2332
    %3223 = vmatpush1.msra.mxu0 %v2331
    %3224 = vmatprep.subr.mxu0 %v2336
    %3225 = vmatpush1.msra.mxu0 %v2335
    %3226 = vmatprep.subr.mxu0 %v2340
    %3227 = vmatpush1.msra.mxu0 %v2339
    %3228 = vmatprep.subr.mxu0 %v2344
    %3229 = vmatpush1.msra.mxu0 %v2343
    %3230 = vmatprep.subr.mxu0 %v2348
    %3231 = vmatpush1.msra.mxu0 %v2347
    %3232 = vmatprep.subr.mxu0 %v2352
    %3233 = vmatpush1.msra.mxu0 %v2351
    %3234 = vmatprep.subr.mxu0 %v2356
    %3235 = vmatpush1.msra.mxu0 %v2355
    %3236 = vmatprep.subr.mxu0 %v2360
    %3237 = vmatpush1.msra.mxu0 %v2359
    %3238 = vmatprep.subr.mxu0 %v2364
    %3239 = vmatpush1.msra.mxu0 %v2363
    %3240 = vmatprep.subr.mxu0 0.0
    %3241 = vmatpush1.msra.mxu0 0.0
    %3242 = vmatprep.subr.mxu0 0.0
    %3243 = vmatpush1.msra.mxu0 0.0
    %3244 = vmatprep.subr.mxu0 0.0
    %3245 = vmatpush1.msra.mxu0 0.0
    %3246 = vmatprep.subr.mxu0 0.0
    %3247 = vmatpush1.msra.mxu0 0.0
    %3248 = vmatprep.subr.mxu0 0.0
    %3249 = vmatpush1.msra.mxu0 0.0
    %3250 = vmatprep.subr.mxu0 0.0
    %3251 = vmatpush1.msra.mxu0 0.0
    %3252 = vmatprep.subr.mxu0 0.0
    %3253 = vmatpush1.msra.mxu0 0.0
    %3254 = vmatprep.subr.mxu0 0.0
    %3255 = vmatpush1.msra.mxu0 0.0
    %3256 = vmatprep.subr.mxu0 0.0
    %3257 = vmatpush1.msra.mxu0 0.0
    %3258 = vmatprep.subr.mxu0 0.0
    %3259 = vmatpush1.msra.mxu0 0.0
    %3260 = vmatprep.subr.mxu0 0.0
    %3261 = vmatpush1.msra.mxu0 0.0
    %3262 = vmatprep.subr.mxu0 0.0
    %3263 = vmatpush1.msra.mxu0 0.0
    %3264 = vmatprep.subr.mxu0 0.0
    %3265 = vmatpush1.msra.mxu0 0.0
    %3266 = vmatprep.subr.mxu0 0.0
    %3267 = vmatpush1.msra.mxu0 0.0
    %3268 = vmatprep.subr.mxu0 0.0
    %3269 = vmatpush1.msra.mxu0 0.0
    %3270 = vmatprep.subr.mxu0 0.0
    %3271 = vmatpush1.msra.mxu0 0.0
    %3272 = vmatprep.mubr.f32.mxu0 0.0
    %3273 = vmatmul.mubr.f32.gmra.mrb[0].mxu0 %v3201
    %v3274 = vpop.f32.mrb[0].mxu0
    %v3275 = vadd.f32 %v3204, %v3274
    %v3276 = vpop.f32.mrb[0].mxu0
    %v3277 = vadd.f32 %v3205, %v3276
    %3278 = vdwg.mxu0
    %3279 = vmatprep.subr.mxu0 %v2306
    %3280 = vmatpush1.msra.mxu0 %v2305
    %3281 = vmatprep.subr.mxu0 %v2310
    %3282 = vmatpush1.msra.mxu0 %v2309
    %3283 = vmatprep.subr.mxu0 %v2314
    %3284 = vmatpush1.msra.mxu0 %v2313
    %3285 = vmatprep.subr.mxu0 %v2318
    %3286 = vmatpush1.msra.mxu0 %v2317
    %3287 = vmatprep.subr.mxu0 %v2322
    %3288 = vmatpush1.msra.mxu0 %v2321
    %3289 = vmatprep.subr.mxu0 %v2326
    %3290 = vmatpush1.msra.mxu0 %v2325
    %3291 = vmatprep.subr.mxu0 %v2330
    %3292 = vmatpush1.msra.mxu0 %v2329
    %3293 = vmatprep.subr.mxu0 %v2334
    %3294 = vmatpush1.msra.mxu0 %v2333
    %3295 = vmatprep.subr.mxu0 %v2338
    %3296 = vmatpush1.msra.mxu0 %v2337
    %3297 = vmatprep.subr.mxu0 %v2342
    %3298 = vmatpush1.msra.mxu0 %v2341
    %3299 = vmatprep.subr.mxu0 %v2346
    %3300 = vmatpush1.msra.mxu0 %v2345
    %3301 = vmatprep.subr.mxu0 %v2350
    %3302 = vmatpush1.msra.mxu0 %v2349
    %3303 = vmatprep.subr.mxu0 %v2354
    %3304 = vmatpush1.msra.mxu0 %v2353
    %3305 = vmatprep.subr.mxu0 %v2358
    %3306 = vmatpush1.msra.mxu0 %v2357
    %3307 = vmatprep.subr.mxu0 %v2362
    %3308 = vmatpush1.msra.mxu0 %v2361
    %3309 = vmatprep.subr.mxu0 %v2366
    %3310 = vmatpush1.msra.mxu0 %v2365
    %3311 = vmatprep.subr.mxu0 0.0
    %3312 = vmatpush1.msra.mxu0 0.0
    %3313 = vmatprep.subr.mxu0 0.0
    %3314 = vmatpush1.msra.mxu0 0.0
    %3315 = vmatprep.subr.mxu0 0.0
    %3316 = vmatpush1.msra.mxu0 0.0
    %3317 = vmatprep.subr.mxu0 0.0
    %3318 = vmatpush1.msra.mxu0 0.0
    %3319 = vmatprep.subr.mxu0 0.0
    %3320 = vmatpush1.msra.mxu0 0.0
    %3321 = vmatprep.subr.mxu0 0.0
    %3322 = vmatpush1.msra.mxu0 0.0
    %3323 = vmatprep.subr.mxu0 0.0
    %3324 = vmatpush1.msra.mxu0 0.0
    %3325 = vmatprep.subr.mxu0 0.0
    %3326 = vmatpush1.msra.mxu0 0.0
    %3327 = vmatprep.subr.mxu0 0.0
    %3328 = vmatpush1.msra.mxu0 0.0
    %3329 = vmatprep.subr.mxu0 0.0
    %3330 = vmatpush1.msra.mxu0 0.0
    %3331 = vmatprep.subr.mxu0 0.0
    %3332 = vmatpush1.msra.mxu0 0.0
    %3333 = vmatprep.subr.mxu0 0.0
    %3334 = vmatpush1.msra.mxu0 0.0
    %3335 = vmatprep.subr.mxu0 0.0
    %3336 = vmatpush1.msra.mxu0 0.0
    %3337 = vmatprep.subr.mxu0 0.0
    %3338 = vmatpush1.msra.mxu0 0.0
    %3339 = vmatprep.subr.mxu0 0.0
    %3340 = vmatpush1.msra.mxu0 0.0
    %3341 = vmatprep.subr.mxu0 0.0
    %3342 = vmatpush1.msra.mxu0 0.0
    %3343 = vmatprep.mubr.f32.mxu0 0.0
    %3344 = vmatmul.mubr.f32.gmra.mrb[0].mxu0 %v3201
    %v3345 = vpop.f32.mrb[0].mxu0
    %v3346 = vadd.f32 %v3206, %v3345
    %v3347 = vpop.f32.mrb[0].mxu0
    %v3348 = vadd.f32 %v3207, %v3347
    %3349 = vdwg.mxu0
    %v3350 = vmul.f32 %v3275, 0.5
    %v3351 = vmul.f32 %v3277, 0.5
    %v3352 = vmul.f32 %v3346, 0.5
    %v3353 = vtanh.pop %v3350
    %v3354 = vtanh.pop %v3351
    %v3355 = vtanh.pop %v3352
    %v3356 = vmul.f32 %v3353, 0.5
    %v3357 = vmul.f32 %v3354, 0.5
    %v3358 = vmul.f32 %v3355, 0.5
    %v3359 = vadd.f32 %v3356, 0.5
    %v3360 = vadd.f32 %v3357, 0.5
    %v3361 = vadd.f32 %v3358, 0.5
    %v3362 = vtanh.pop %v3348
    %v3363 = vmul.f32 %v3360, %v3199
    %v3364 = vmul.f32 %v3359, %v3362
    %v3365 = vadd.f32 %v3363, %v3364
    %v3366 = vtanh.pop %v3365
    %v3367 = vmul.f32 %v3361, %v3366
    %3368 = vst.msk [vmem:[%s2868] sm:$0xff] %vm743, %v3367
    %3369 = vst.msk [vmem:[%s2866] sm:$0xff] %vm746, %v3367
    %v3370 = vld [vmem:[%s501] sm:$0xff]
    %v3371 = vld [vmem:[%s501 + $0x8] sm:$0xff]
    %v3372 = vld [vmem:[%s501 + $0x10] sm:$0xff]
    %v3373 = vld [vmem:[%s501 + $0x18] sm:$0xff]
    %3374 = vmatprep.subr.mxu0 %v2304
    %3375 = vmatpush1.msra.mxu0 %v2303
    %3376 = vmatprep.subr.mxu0 %v2308
    %3377 = vmatpush1.msra.mxu0 %v2307
    %3378 = vmatprep.subr.mxu0 %v2312
    %3379 = vmatpush1.msra.mxu0 %v2311
    %3380 = vmatprep.subr.mxu0 %v2316
    %3381 = vmatpush1.msra.mxu0 %v2315
    %3382 = vmatprep.subr.mxu0 %v2320
    %3383 = vmatpush1.msra.mxu0 %v2319
    %3384 = vmatprep.subr.mxu0 %v2324
    %3385 = vmatpush1.msra.mxu0 %v2323
    %3386 = vmatprep.subr.mxu0 %v2328
    %3387 = vmatpush1.msra.mxu0 %v2327
    %3388 = vmatprep.subr.mxu0 %v2332
    %3389 = vmatpush1.msra.mxu0 %v2331
    %3390 = vmatprep.subr.mxu0 %v2336
    %3391 = vmatpush1.msra.mxu0 %v2335
    %3392 = vmatprep.subr.mxu0 %v2340
    %3393 = vmatpush1.msra.mxu0 %v2339
    %3394 = vmatprep.subr.mxu0 %v2344
    %3395 = vmatpush1.msra.mxu0 %v2343
    %3396 = vmatprep.subr.mxu0 %v2348
    %3397 = vmatpush1.msra.mxu0 %v2347
    %3398 = vmatprep.subr.mxu0 %v2352
    %3399 = vmatpush1.msra.mxu0 %v2351
    %3400 = vmatprep.subr.mxu0 %v2356
    %3401 = vmatpush1.msra.mxu0 %v2355
    %3402 = vmatprep.subr.mxu0 %v2360
    %3403 = vmatpush1.msra.mxu0 %v2359
    %3404 = vmatprep.subr.mxu0 %v2364
    %3405 = vmatpush1.msra.mxu0 %v2363
    %3406 = vmatprep.subr.mxu0 0.0
    %3407 = vmatpush1.msra.mxu0 0.0
    %3408 = vmatprep.subr.mxu0 0.0
    %3409 = vmatpush1.msra.mxu0 0.0
    %3410 = vmatprep.subr.mxu0 0.0
    %3411 = vmatpush1.msra.mxu0 0.0
    %3412 = vmatprep.subr.mxu0 0.0
    %3413 = vmatpush1.msra.mxu0 0.0
    %3414 = vmatprep.subr.mxu0 0.0
    %3415 = vmatpush1.msra.mxu0 0.0
    %3416 = vmatprep.subr.mxu0 0.0
    %3417 = vmatpush1.msra.mxu0 0.0
    %3418 = vmatprep.subr.mxu0 0.0
    %3419 = vmatpush1.msra.mxu0 0.0
    %3420 = vmatprep.subr.mxu0 0.0
    %3421 = vmatpush1.msra.mxu0 0.0
    %3422 = vmatprep.subr.mxu0 0.0
    %3423 = vmatpush1.msra.mxu0 0.0
    %3424 = vmatprep.subr.mxu0 0.0
    %3425 = vmatpush1.msra.mxu0 0.0
    %3426 = vmatprep.subr.mxu0 0.0
    %3427 = vmatpush1.msra.mxu0 0.0
    %3428 = vmatprep.subr.mxu0 0.0
    %3429 = vmatpush1.msra.mxu0 0.0
    %3430 = vmatprep.subr.mxu0 0.0
    %3431 = vmatpush1.msra.mxu0 0.0
    %3432 = vmatprep.subr.mxu0 0.0
    %3433 = vmatpush1.msra.mxu0 0.0
    %3434 = vmatprep.subr.mxu0 0.0
    %3435 = vmatpush1.msra.mxu0 0.0
    %3436 = vmatprep.subr.mxu0 0.0
    %3437 = vmatpush1.msra.mxu0 0.0
    %3438 = vmatprep.mubr.f32.mxu0 0.0
    %3439 = vmatmul.mubr.f32.gmra.mrb[0].mxu0 %v3367
    %v3440 = vpop.f32.mrb[0].mxu0
    %v3441 = vadd.f32 %v3370, %v3440
    %v3442 = vpop.f32.mrb[0].mxu0
    %v3443 = vadd.f32 %v3371, %v3442
    %3444 = vdwg.mxu0
    %3445 = vmatprep.subr.mxu0 %v2306
    %3446 = vmatpush1.msra.mxu0 %v2305
    %3447 = vmatprep.subr.mxu0 %v2310
    %3448 = vmatpush1.msra.mxu0 %v2309
    %3449 = vmatprep.subr.mxu0 %v2314
    %3450 = vmatpush1.msra.mxu0 %v2313
    %3451 = vmatprep.subr.mxu0 %v2318
    %3452 = vmatpush1.msra.mxu0 %v2317
    %3453 = vmatprep.subr.mxu0 %v2322
    %3454 = vmatpush1.msra.mxu0 %v2321
    %3455 = vmatprep.subr.mxu0 %v2326
    %3456 = vmatpush1.msra.mxu0 %v2325
    %3457 = vmatprep.subr.mxu0 %v2330
    %3458 = vmatpush1.msra.mxu0 %v2329
    %3459 = vmatprep.subr.mxu0 %v2334
    %3460 = vmatpush1.msra.mxu0 %v2333
    %3461 = vmatprep.subr.mxu0 %v2338
    %3462 = vmatpush1.msra.mxu0 %v2337
    %3463 = vmatprep.subr.mxu0 %v2342
    %3464 = vmatpush1.msra.mxu0 %v2341
    %3465 = vmatprep.subr.mxu0 %v2346
    %3466 = vmatpush1.msra.mxu0 %v2345
    %3467 = vmatprep.subr.mxu0 %v2350
    %3468 = vmatpush1.msra.mxu0 %v2349
    %3469 = vmatprep.subr.mxu0 %v2354
    %3470 = vmatpush1.msra.mxu0 %v2353
    %3471 = vmatprep.subr.mxu0 %v2358
    %3472 = vmatpush1.msra.mxu0 %v2357
    %3473 = vmatprep.subr.mxu0 %v2362
    %3474 = vmatpush1.msra.mxu0 %v2361
    %3475 = vmatprep.subr.mxu0 %v2366
    %3476 = vmatpush1.msra.mxu0 %v2365
    %3477 = vmatprep.subr.mxu0 0.0
    %3478 = vmatpush1.msra.mxu0 0.0
    %3479 = vmatprep.subr.mxu0 0.0
    %3480 = vmatpush1.msra.mxu0 0.0
    %3481 = vmatprep.subr.mxu0 0.0
    %3482 = vmatpush1.msra.mxu0 0.0
    %3483 = vmatprep.subr.mxu0 0.0
    %3484 = vmatpush1.msra.mxu0 0.0
    %3485 = vmatprep.subr.mxu0 0.0
    %3486 = vmatpush1.msra.mxu0 0.0
    %3487 = vmatprep.subr.mxu0 0.0
    %3488 = vmatpush1.msra.mxu0 0.0
    %3489 = vmatprep.subr.mxu0 0.0
    %3490 = vmatpush1.msra.mxu0 0.0
    %3491 = vmatprep.subr.mxu0 0.0
    %3492 = vmatpush1.msra.mxu0 0.0
    %3493 = vmatprep.subr.mxu0 0.0
    %3494 = vmatpush1.msra.mxu0 0.0
    %3495 = vmatprep.subr.mxu0 0.0
    %3496 = vmatpush1.msra.mxu0 0.0
    %3497 = vmatprep.subr.mxu0 0.0
    %3498 = vmatpush1.msra.mxu0 0.0
    %3499 = vmatprep.subr.mxu0 0.0
    %3500 = vmatpush1.msra.mxu0 0.0
    %3501 = vmatprep.subr.mxu0 0.0
    %3502 = vmatpush1.msra.mxu0 0.0
    %3503 = vmatprep.subr.mxu0 0.0
    %3504 = vmatpush1.msra.mxu0 0.0
    %3505 = vmatprep.subr.mxu0 0.0
    %3506 = vmatpush1.msra.mxu0 0.0
    %3507 = vmatprep.subr.mxu0 0.0
    %3508 = vmatpush1.msra.mxu0 0.0
    %3509 = vmatprep.mubr.f32.mxu0 0.0
    %3510 = vmatmul.mubr.f32.gmra.mrb[0].mxu0 %v3367
    %v3511 = vpop.f32.mrb[0].mxu0
    %v3512 = vadd.f32 %v3372, %v3511
    %v3513 = vpop.f32.mrb[0].mxu0
    %v3514 = vadd.f32 %v3373, %v3513
    %3515 = vdwg.mxu0
    %v3516 = vmul.f32 %v3441, 0.5
    %v3517 = vmul.f32 %v3443, 0.5
    %v3518 = vmul.f32 %v3512, 0.5
    %v3519 = vtanh.pop %v3516
    %v3520 = vtanh.pop %v3517
    %v3521 = vtanh.pop %v3518
    %v3522 = vmul.f32 %v3519, 0.5
    %v3523 = vmul.f32 %v3520, 0.5
    %v3524 = vmul.f32 %v3521, 0.5
    %v3525 = vadd.f32 %v3522, 0.5
    %v3526 = vadd.f32 %v3523, 0.5
    %v3527 = vadd.f32 %v3524, 0.5
    %v3528 = vtanh.pop %v3514
    %v3529 = vmul.f32 %v3526, %v3365
    %v3530 = vmul.f32 %v3525, %v3528
    %v3531 = vadd.f32 %v3529, %v3530
    %v3532 = vtanh.pop %v3531
    %v3533 = vmul.f32 %v3527, %v3532
    %3534 = vst.msk [vmem:[%s2700] sm:$0xff] %vm743, %v3533
    %3535 = vst.msk [vmem:[%s2698] sm:$0xff] %vm746, %v3533
    %v3536 = vld [vmem:[%s510] sm:$0xff]
    %v3537 = vld [vmem:[%s510 + $0x8] sm:$0xff]
    %v3538 = vld [vmem:[%s510 + $0x10] sm:$0xff]
    %v3539 = vld [vmem:[%s510 + $0x18] sm:$0xff]
    %3540 = vmatprep.subr.mxu0 %v2304
    %3541 = vmatpush1.msra.mxu0 %v2303
    %3542 = vmatprep.subr.mxu0 %v2308
    %3543 = vmatpush1.msra.mxu0 %v2307
    %3544 = vmatprep.subr.mxu0 %v2312
    %3545 = vmatpush1.msra.mxu0 %v2311
    %3546 = vmatprep.subr.mxu0 %v2316
    %3547 = vmatpush1.msra.mxu0 %v2315
    %3548 = vmatprep.subr.mxu0 %v2320
    %3549 = vmatpush1.msra.mxu0 %v2319
    %3550 = vmatprep.subr.mxu0 %v2324
    %3551 = vmatpush1.msra.mxu0 %v2323
    %3552 = vmatprep.subr.mxu0 %v2328
    %3553 = vmatpush1.msra.mxu0 %v2327
    %3554 = vmatprep.subr.mxu0 %v2332
    %3555 = vmatpush1.msra.mxu0 %v2331
    %3556 = vmatprep.subr.mxu0 %v2336
    %3557 = vmatpush1.msra.mxu0 %v2335
    %3558 = vmatprep.subr.mxu0 %v2340
    %3559 = vmatpush1.msra.mxu0 %v2339
    %3560 = vmatprep.subr.mxu0 %v2344
    %3561 = vmatpush1.msra.mxu0 %v2343
    %3562 = vmatprep.subr.mxu0 %v2348
    %3563 = vmatpush1.msra.mxu0 %v2347
    %3564 = vmatprep.subr.mxu0 %v2352
    %3565 = vmatpush1.msra.mxu0 %v2351
    %3566 = vmatprep.subr.mxu0 %v2356
    %3567 = vmatpush1.msra.mxu0 %v2355
    %3568 = vmatprep.subr.mxu0 %v2360
    %3569 = vmatpush1.msra.mxu0 %v2359
    %3570 = vmatprep.subr.mxu0 %v2364
    %3571 = vmatpush1.msra.mxu0 %v2363
    %3572 = vmatprep.subr.mxu0 0.0
    %3573 = vmatpush1.msra.mxu0 0.0
    %3574 = vmatprep.subr.mxu0 0.0
    %3575 = vmatpush1.msra.mxu0 0.0
    %3576 = vmatprep.subr.mxu0 0.0
    %3577 = vmatpush1.msra.mxu0 0.0
    %3578 = vmatprep.subr.mxu0 0.0
    %3579 = vmatpush1.msra.mxu0 0.0
    %3580 = vmatprep.subr.mxu0 0.0
    %3581 = vmatpush1.msra.mxu0 0.0
    %3582 = vmatprep.subr.mxu0 0.0
    %3583 = vmatpush1.msra.mxu0 0.0
    %3584 = vmatprep.subr.mxu0 0.0
    %3585 = vmatpush1.msra.mxu0 0.0
    %3586 = vmatprep.subr.mxu0 0.0
    %3587 = vmatpush1.msra.mxu0 0.0
    %3588 = vmatprep.subr.mxu0 0.0
    %3589 = vmatpush1.msra.mxu0 0.0
    %3590 = vmatprep.subr.mxu0 0.0
    %3591 = vmatpush1.msra.mxu0 0.0
    %3592 = vmatprep.subr.mxu0 0.0
    %3593 = vmatpush1.msra.mxu0 0.0
    %3594 = vmatprep.subr.mxu0 0.0
    %3595 = vmatpush1.msra.mxu0 0.0
    %3596 = vmatprep.subr.mxu0 0.0
    %3597 = vmatpush1.msra.mxu0 0.0
    %3598 = vmatprep.subr.mxu0 0.0
    %3599 = vmatpush1.msra.mxu0 0.0
    %3600 = vmatprep.subr.mxu0 0.0
    %3601 = vmatpush1.msra.mxu0 0.0
    %3602 = vmatprep.subr.mxu0 0.0
    %3603 = vmatpush1.msra.mxu0 0.0
    %3604 = vmatprep.mubr.f32.mxu0 0.0
    %3605 = vmatmul.mubr.f32.gmra.mrb[0].mxu0 %v3533
    %v3606 = vpop.f32.mrb[0].mxu0
    %v3607 = vadd.f32 %v3536, %v3606
    %v3608 = vpop.f32.mrb[0].mxu0
    %v3609 = vadd.f32 %v3537, %v3608
    %3610 = vdwg.mxu0
    %3611 = vmatprep.subr.mxu0 %v2306
    %3612 = vmatpush1.msra.mxu0 %v2305
    %3613 = vmatprep.subr.mxu0 %v2310
    %3614 = vmatpush1.msra.mxu0 %v2309
    %3615 = vmatprep.subr.mxu0 %v2314
    %3616 = vmatpush1.msra.mxu0 %v2313
    %3617 = vmatprep.subr.mxu0 %v2318
    %3618 = vmatpush1.msra.mxu0 %v2317
    %3619 = vmatprep.subr.mxu0 %v2322
    %3620 = vmatpush1.msra.mxu0 %v2321
    %3621 = vmatprep.subr.mxu0 %v2326
    %3622 = vmatpush1.msra.mxu0 %v2325
    %3623 = vmatprep.subr.mxu0 %v2330
    %3624 = vmatpush1.msra.mxu0 %v2329
    %3625 = vmatprep.subr.mxu0 %v2334
    %3626 = vmatpush1.msra.mxu0 %v2333
    %3627 = vmatprep.subr.mxu0 %v2338
    %3628 = vmatpush1.msra.mxu0 %v2337
    %3629 = vmatprep.subr.mxu0 %v2342
    %3630 = vmatpush1.msra.mxu0 %v2341
    %3631 = vmatprep.subr.mxu0 %v2346
    %3632 = vmatpush1.msra.mxu0 %v2345
    %3633 = vmatprep.subr.mxu0 %v2350
    %3634 = vmatpush1.msra.mxu0 %v2349
    %3635 = vmatprep.subr.mxu0 %v2354
    %3636 = vmatpush1.msra.mxu0 %v2353
    %3637 = vmatprep.subr.mxu0 %v2358
    %3638 = vmatpush1.msra.mxu0 %v2357
    %3639 = vmatprep.subr.mxu0 %v2362
    %3640 = vmatpush1.msra.mxu0 %v2361
    %3641 = vmatprep.subr.mxu0 %v2366
    %3642 = vmatpush1.msra.mxu0 %v2365
    %3643 = vmatprep.subr.mxu0 0.0
    %3644 = vmatpush1.msra.mxu0 0.0
    %3645 = vmatprep.subr.mxu0 0.0
    %3646 = vmatpush1.msra.mxu0 0.0
    %3647 = vmatprep.subr.mxu0 0.0
    %3648 = vmatpush1.msra.mxu0 0.0
    %3649 = vmatprep.subr.mxu0 0.0
    %3650 = vmatpush1.msra.mxu0 0.0
    %3651 = vmatprep.subr.mxu0 0.0
    %3652 = vmatpush1.msra.mxu0 0.0
    %3653 = vmatprep.subr.mxu0 0.0
    %3654 = vmatpush1.msra.mxu0 0.0
    %3655 = vmatprep.subr.mxu0 0.0
    %3656 = vmatpush1.msra.mxu0 0.0
    %3657 = vmatprep.subr.mxu0 0.0
    %3658 = vmatpush1.msra.mxu0 0.0
    %3659 = vmatprep.subr.mxu0 0.0
    %3660 = vmatpush1.msra.mxu0 0.0
    %3661 = vmatprep.subr.mxu0 0.0
    %3662 = vmatpush1.msra.mxu0 0.0
    %3663 = vmatprep.subr.mxu0 0.0
    %3664 = vmatpush1.msra.mxu0 0.0
    %3665 = vmatprep.subr.mxu0 0.0
    %3666 = vmatpush1.msra.mxu0 0.0
    %3667 = vmatprep.subr.mxu0 0.0
    %3668 = vmatpush1.msra.mxu0 0.0
    %3669 = vmatprep.subr.mxu0 0.0
    %3670 = vmatpush1.msra.mxu0 0.0
    %3671 = vmatprep.subr.mxu0 0.0
    %3672 = vmatpush1.msra.mxu0 0.0
    %3673 = vmatprep.subr.mxu0 0.0
    %3674 = vmatpush1.msra.mxu0 0.0
    %3675 = vmatprep.mubr.f32.mxu0 0.0
    %3676 = vmatmul.mubr.f32.gmra.mrb[0].mxu0 %v3533
    %v3677 = vpop.f32.mrb[0].mxu0
    %v3678 = vadd.f32 %v3538, %v3677
    %v3679 = vpop.f32.mrb[0].mxu0
    %v3680 = vadd.f32 %v3539, %v3679
    %3681 = vdwg.mxu0
    %v3682 = vmul.f32 %v3607, 0.5
    %v3683 = vmul.f32 %v3609, 0.5
    %v3684 = vmul.f32 %v3678, 0.5
    %v3685 = vtanh.pop %v3682
    %v3686 = vtanh.pop %v3683
    %v3687 = vtanh.pop %v3684
    %v3688 = vmul.f32 %v3685, 0.5
    %v3689 = vmul.f32 %v3686, 0.5
    %v3690 = vmul.f32 %v3687, 0.5
    %v3691 = vadd.f32 %v3688, 0.5
    %v3692 = vadd.f32 %v3689, 0.5
    %v3693 = vadd.f32 %v3690, 0.5
    %v3694 = vtanh.pop %v3680
    %v3695 = vmul.f32 %v3692, %v3531
    %v3696 = vmul.f32 %v3691, %v3694
    %v3697 = vadd.f32 %v3695, %v3696
    %v3698 = vtanh.pop %v3697
    %v3699 = vmul.f32 %v3693, %v3698
    %3700 = vst.msk [vmem:[%s2532] sm:$0xff] %vm743, %v3699
    %3701 = vst.msk [vmem:[#allocation3] sm:$0xff] %vm746, %v3699
    %v3702 = vld [vmem:[#allocation3] sm:$0xff]
    %v3703 = vld [vmem:[#allocation3 + $0x8] sm:$0xff]
    %v3704 = vld [vmem:[#allocation3 + $0x10] sm:$0xff]
    %v3705 = vld [vmem:[#allocation3 + $0x18] sm:$0xff]
    %v3706 = vld [vmem:[#allocation3 + $0x20] sm:$0xff]
    %v3707 = vld [vmem:[#allocation3 + $0x28] sm:$0xff]
    %v3708 = vld [vmem:[#allocation3 + $0x30] sm:$0xff]
    %v3709 = vld [vmem:[#allocation3 + $0x38] sm:$0xff]
    %s3710 = scalar_lea.vmem [#allocation7], 1024
    %v3711 = vld [vmem:[%s3710] sm:$0xff]
    %v3712 = vld [vmem:[%s3710 + $0x8] sm:$0xff]
    %v3713 = vld [vmem:[%s3710 + $0x10] sm:$0xff]
    %v3714 = vld [vmem:[%s3710 + $0x18] sm:$0xff]
    %v3715 = vld [vmem:[%s3710 + $0x20] sm:$0xff]
    %v3716 = vld [vmem:[%s3710 + $0x28] sm:$0xff]
    %v3717 = vld [vmem:[%s3710 + $0x30] sm:$0xff]
    %v3718 = vld [vmem:[%s3710 + $0x38] sm:$0xff]
    %v3719 = vld [vmem:[%s3710 + $0x40] sm:$0xff]
    %v3720 = vld [vmem:[%s3710 + $0x48] sm:$0xff]
    %v3721 = vld [vmem:[%s3710 + $0x50] sm:$0xff]
    %v3722 = vld [vmem:[%s3710 + $0x58] sm:$0xff]
    %v3723 = vld [vmem:[%s3710 + $0x60] sm:$0xff]
    %v3724 = vld [vmem:[%s3710 + $0x68] sm:$0xff]
    %v3725 = vld [vmem:[%s3710 + $0x70] sm:$0xff]
    %v3726 = vld [vmem:[%s3710 + $0x78] sm:$0xff]
    %v3727 = vld [vmem:[%s3710 + $0x80] sm:$0xff]
    %v3728 = vld [vmem:[%s3710 + $0x88] sm:$0xff]
    %v3729 = vld [vmem:[%s3710 + $0x90] sm:$0xff]
    %v3730 = vld [vmem:[%s3710 + $0x98] sm:$0xff]
    %v3731 = vld [vmem:[%s3710 + $0xa0] sm:$0xff]
    %v3732 = vld [vmem:[%s3710 + $0xa8] sm:$0xff]
    %v3733 = vld [vmem:[%s3710 + $0xb0] sm:$0xff]
    %v3734 = vld [vmem:[%s3710 + $0xb8] sm:$0xff]
    %v3735 = vld [vmem:[%s3710 + $0xc0] sm:$0xff]
    %v3736 = vld [vmem:[%s3710 + $0xc8] sm:$0xff]
    %v3737 = vld [vmem:[%s3710 + $0xd0] sm:$0xff]
    %v3738 = vld [vmem:[%s3710 + $0xd8] sm:$0xff]
    %v3739 = vld [vmem:[%s3710 + $0xe0] sm:$0xff]
    %v3740 = vld [vmem:[%s3710 + $0xe8] sm:$0xff]
    %v3741 = vld [vmem:[%s3710 + $0xf0] sm:$0xff]
    %v3742 = vld [vmem:[%s3710 + $0xf8] sm:$0xff]
    %v3743 = vld [vmem:[%s3710 + $0x100] sm:$0xff]
    %v3744 = vld [vmem:[%s3710 + $0x108] sm:$0xff]
    %v3745 = vld [vmem:[%s3710 + $0x110] sm:$0xff]
    %v3746 = vld [vmem:[%s3710 + $0x118] sm:$0xff]
    %v3747 = vld [vmem:[%s3710 + $0x120] sm:$0xff]
    %v3748 = vld [vmem:[%s3710 + $0x128] sm:$0xff]
    %v3749 = vld [vmem:[%s3710 + $0x130] sm:$0xff]
    %v3750 = vld [vmem:[%s3710 + $0x138] sm:$0xff]
    %v3751 = vld [vmem:[%s3710 + $0x140] sm:$0xff]
    %v3752 = vld [vmem:[%s3710 + $0x148] sm:$0xff]
    %v3753 = vld [vmem:[%s3710 + $0x150] sm:$0xff]
    %v3754 = vld [vmem:[%s3710 + $0x158] sm:$0xff]
    %v3755 = vld [vmem:[%s3710 + $0x160] sm:$0xff]
    %v3756 = vld [vmem:[%s3710 + $0x168] sm:$0xff]
    %v3757 = vld [vmem:[%s3710 + $0x170] sm:$0xff]
    %v3758 = vld [vmem:[%s3710 + $0x178] sm:$0xff]
    %v3759 = vld [vmem:[%s3710 + $0x180] sm:$0xff]
    %v3760 = vld [vmem:[%s3710 + $0x188] sm:$0xff]
    %v3761 = vld [vmem:[%s3710 + $0x190] sm:$0xff]
    %v3762 = vld [vmem:[%s3710 + $0x198] sm:$0xff]
    %v3763 = vld [vmem:[%s3710 + $0x1a0] sm:$0xff]
    %v3764 = vld [vmem:[%s3710 + $0x1a8] sm:$0xff]
    %v3765 = vld [vmem:[%s3710 + $0x1b0] sm:$0xff]
    %v3766 = vld [vmem:[%s3710 + $0x1b8] sm:$0xff]
    %v3767 = vld [vmem:[%s3710 + $0x1c0] sm:$0xff]
    %v3768 = vld [vmem:[%s3710 + $0x1c8] sm:$0xff]
    %v3769 = vld [vmem:[%s3710 + $0x1d0] sm:$0xff]
    %v3770 = vld [vmem:[%s3710 + $0x1d8] sm:$0xff]
    %v3771 = vld [vmem:[%s3710 + $0x1e0] sm:$0xff]
    %v3772 = vld [vmem:[%s3710 + $0x1e8] sm:$0xff]
    %v3773 = vld [vmem:[%s3710 + $0x1f0] sm:$0xff]
    %v3774 = vld [vmem:[%s3710 + $0x1f8] sm:$0xff]
    %s3775 = scalar_lea.vmem %s3, 8
    %v3776 = vld [vmem:[%s3775] sm:$0xf]
    %v3778 = vlaneseq
    %v3779 = vshrl.u32 %v3778, 7
    %v3780 = vsub.s32 0, %v3779
    %v3781 = vrot.slane %v3776, %v3780
    %v3782 = vlaneseq
    %v3783 = vshrl.u32 %v3782, 7
    %v3784 = vsub.s32 1, %v3783
    %v3785 = vrot.slane %v3776, %v3784
    %v3786 = vlaneseq
    %v3787 = vshrl.u32 %v3786, 7
    %v3788 = vsub.s32 2, %v3787
    %v3789 = vrot.slane %v3776, %v3788
    %v3790 = vlaneseq
    %v3791 = vshrl.u32 %v3790, 7
    %v3792 = vsub.s32 3, %v3791
    %v3793 = vrot.slane %v3776, %v3792
    %3798 = vmatprep.subr.mxu0 %v3712
    %3799 = vmatpush1.msra.mxu0 %v3711
    %3800 = vmatprep.subr.mxu0 %v3716
    %3801 = vmatpush1.msra.mxu0 %v3715
    %3802 = vmatprep.subr.mxu0 %v3720
    %3803 = vmatpush1.msra.mxu0 %v3719
    %3804 = vmatprep.subr.mxu0 %v3724
    %3805 = vmatpush1.msra.mxu0 %v3723
    %3806 = vmatprep.subr.mxu0 %v3728
    %3807 = vmatpush1.msra.mxu0 %v3727
    %3808 = vmatprep.subr.mxu0 %v3732
    %3809 = vmatpush1.msra.mxu0 %v3731
    %3810 = vmatprep.subr.mxu0 %v3736
    %3811 = vmatpush1.msra.mxu0 %v3735
    %3812 = vmatprep.subr.mxu0 %v3740
    %3813 = vmatpush1.msra.mxu0 %v3739
    %3814 = vmatprep.subr.mxu0 %v3744
    %3815 = vmatpush1.msra.mxu0 %v3743
    %3816 = vmatprep.subr.mxu0 %v3748
    %3817 = vmatpush1.msra.mxu0 %v3747
    %3818 = vmatprep.subr.mxu0 %v3752
    %3819 = vmatpush1.msra.mxu0 %v3751
    %3820 = vmatprep.subr.mxu0 %v3756
    %3821 = vmatpush1.msra.mxu0 %v3755
    %3822 = vmatprep.subr.mxu0 %v3760
    %3823 = vmatpush1.msra.mxu0 %v3759
    %3824 = vmatprep.subr.mxu0 %v3764
    %3825 = vmatpush1.msra.mxu0 %v3763
    %3826 = vmatprep.subr.mxu0 %v3768
    %3827 = vmatpush1.msra.mxu0 %v3767
    %3828 = vmatprep.subr.mxu0 %v3772
    %3829 = vmatpush1.msra.mxu0 %v3771
    %3830 = vmatprep.subr.mxu0 0.0
    %3831 = vmatpush1.msra.mxu0 0.0
    %3832 = vmatprep.subr.mxu0 0.0
    %3833 = vmatpush1.msra.mxu0 0.0
    %3834 = vmatprep.subr.mxu0 0.0
    %3835 = vmatpush1.msra.mxu0 0.0
    %3836 = vmatprep.subr.mxu0 0.0
    %3837 = vmatpush1.msra.mxu0 0.0
    %3838 = vmatprep.subr.mxu0 0.0
    %3839 = vmatpush1.msra.mxu0 0.0
    %3840 = vmatprep.subr.mxu0 0.0
    %3841 = vmatpush1.msra.mxu0 0.0
    %3842 = vmatprep.subr.mxu0 0.0
    %3843 = vmatpush1.msra.mxu0 0.0
    %3844 = vmatprep.subr.mxu0 0.0
    %3845 = vmatpush1.msra.mxu0 0.0
    %3846 = vmatprep.subr.mxu0 0.0
    %3847 = vmatpush1.msra.mxu0 0.0
    %3848 = vmatprep.subr.mxu0 0.0
    %3849 = vmatpush1.msra.mxu0 0.0
    %3850 = vmatprep.subr.mxu0 0.0
    %3851 = vmatpush1.msra.mxu0 0.0
    %3852 = vmatprep.subr.mxu0 0.0
    %3853 = vmatpush1.msra.mxu0 0.0
    %3854 = vmatprep.subr.mxu0 0.0
    %3855 = vmatpush1.msra.mxu0 0.0
    %3856 = vmatprep.subr.mxu0 0.0
    %3857 = vmatpush1.msra.mxu0 0.0
    %3858 = vmatprep.subr.mxu0 0.0
    %3859 = vmatpush1.msra.mxu0 0.0
    %3860 = vmatprep.subr.mxu0 0.0
    %3861 = vmatpush1.msra.mxu0 0.0
    %3862 = vmatprep.mubr.f32.mxu0 0.0
    %3863 = vmatmul.mubr.f32.gmra.mrb[0].mxu0 %v3702
    %v3864 = vpop.f32.mrb[0].mxu0
    %v3865 = vadd.f32 %v3781, %v3864
    %v3866 = vpop.f32.mrb[0].mxu0
    %v3867 = vadd.f32 %v3785, %v3866
    %3868 = vmatprep.mubr.f32.mxu0 0.0
    %3869 = vmatmul.mubr.f32.gmra.mrb[0].mxu0 %v3703
    %v3870 = vpop.f32.mrb[0].mxu0
    %v3871 = vadd.f32 %v3781, %v3870
    %v3872 = vpop.f32.mrb[0].mxu0
    %v3873 = vadd.f32 %v3785, %v3872
    %3874 = vmatprep.mubr.f32.mxu0 0.0
    %3875 = vmatmul.mubr.f32.gmra.mrb[0].mxu0 %v3704
    %v3876 = vpop.f32.mrb[0].mxu0
    %v3877 = vadd.f32 %v3781, %v3876
    %v3878 = vpop.f32.mrb[0].mxu0
    %v3879 = vadd.f32 %v3785, %v3878
    %3880 = vmatprep.mubr.f32.mxu0 0.0
    %3881 = vmatmul.mubr.f32.gmra.mrb[0].mxu0 %v3705
    %v3882 = vpop.f32.mrb[0].mxu0
    %v3883 = vadd.f32 %v3781, %v3882
    %v3884 = vpop.f32.mrb[0].mxu0
    %v3885 = vadd.f32 %v3785, %v3884
    %3886 = vmatprep.mubr.f32.mxu0 0.0
    %3887 = vmatmul.mubr.f32.gmra.mrb[0].mxu0 %v3706
    %v3888 = vpop.f32.mrb[0].mxu0
    %v3889 = vadd.f32 %v3781, %v3888
    %v3890 = vpop.f32.mrb[0].mxu0
    %v3891 = vadd.f32 %v3785, %v3890
    %3892 = vmatprep.mubr.f32.mxu0 0.0
    %3893 = vmatmul.mubr.f32.gmra.mrb[0].mxu0 %v3707
    %v3894 = vpop.f32.mrb[0].mxu0
    %v3895 = vadd.f32 %v3781, %v3894
    %v3896 = vpop.f32.mrb[0].mxu0
    %v3897 = vadd.f32 %v3785, %v3896
    %3898 = vmatprep.mubr.f32.mxu0 0.0
    %3899 = vmatmul.mubr.f32.gmra.mrb[0].mxu0 %v3708
    %v3900 = vpop.f32.mrb[0].mxu0
    %v3901 = vadd.f32 %v3781, %v3900
    %v3902 = vpop.f32.mrb[0].mxu0
    %v3903 = vadd.f32 %v3785, %v3902
    %3904 = vmatprep.mubr.f32.mxu0 0.0
    %3905 = vmatmul.mubr.f32.gmra.mrb[0].mxu0 %v3709
    %v3906 = vpop.f32.mrb[0].mxu0
    %v3907 = vadd.f32 %v3781, %v3906
    %v3908 = vpop.f32.mrb[0].mxu0
    %v3909 = vadd.f32 %v3785, %v3908
    %3910 = vdwg.mxu0
    %3911 = vmatprep.subr.mxu0 %v3714
    %3912 = vmatpush1.msra.mxu0 %v3713
    %3913 = vmatprep.subr.mxu0 %v3718
    %3914 = vmatpush1.msra.mxu0 %v3717
    %3915 = vmatprep.subr.mxu0 %v3722
    %3916 = vmatpush1.msra.mxu0 %v3721
    %3917 = vmatprep.subr.mxu0 %v3726
    %3918 = vmatpush1.msra.mxu0 %v3725
    %3919 = vmatprep.subr.mxu0 %v3730
    %3920 = vmatpush1.msra.mxu0 %v3729
    %3921 = vmatprep.subr.mxu0 %v3734
    %3922 = vmatpush1.msra.mxu0 %v3733
    %3923 = vmatprep.subr.mxu0 %v3738
    %3924 = vmatpush1.msra.mxu0 %v3737
    %3925 = vmatprep.subr.mxu0 %v3742
    %3926 = vmatpush1.msra.mxu0 %v3741
    %3927 = vmatprep.subr.mxu0 %v3746
    %3928 = vmatpush1.msra.mxu0 %v3745
    %3929 = vmatprep.subr.mxu0 %v3750
    %3930 = vmatpush1.msra.mxu0 %v3749
    %3931 = vmatprep.subr.mxu0 %v3754
    %3932 = vmatpush1.msra.mxu0 %v3753
    %3933 = vmatprep.subr.mxu0 %v3758
    %3934 = vmatpush1.msra.mxu0 %v3757
    %3935 = vmatprep.subr.mxu0 %v3762
    %3936 = vmatpush1.msra.mxu0 %v3761
    %3937 = vmatprep.subr.mxu0 %v3766
    %3938 = vmatpush1.msra.mxu0 %v3765
    %3939 = vmatprep.subr.mxu0 %v3770
    %3940 = vmatpush1.msra.mxu0 %v3769
    %3941 = vmatprep.subr.mxu0 %v3774
    %3942 = vmatpush1.msra.mxu0 %v3773
    %3943 = vmatprep.subr.mxu0 0.0
    %3944 = vmatpush1.msra.mxu0 0.0
    %3945 = vmatprep.subr.mxu0 0.0
    %3946 = vmatpush1.msra.mxu0 0.0
    %3947 = vmatprep.subr.mxu0 0.0
    %3948 = vmatpush1.msra.mxu0 0.0
    %3949 = vmatprep.subr.mxu0 0.0
    %3950 = vmatpush1.msra.mxu0 0.0
    %3951 = vmatprep.subr.mxu0 0.0
    %3952 = vmatpush1.msra.mxu0 0.0
    %3953 = vmatprep.subr.mxu0 0.0
    %3954 = vmatpush1.msra.mxu0 0.0
    %3955 = vmatprep.subr.mxu0 0.0
    %3956 = vmatpush1.msra.mxu0 0.0
    %3957 = vmatprep.subr.mxu0 0.0
    %3958 = vmatpush1.msra.mxu0 0.0
    %3959 = vmatprep.subr.mxu0 0.0
    %3960 = vmatpush1.msra.mxu0 0.0
    %3961 = vmatprep.subr.mxu0 0.0
    %3962 = vmatpush1.msra.mxu0 0.0
    %3963 = vmatprep.subr.mxu0 0.0
    %3964 = vmatpush1.msra.mxu0 0.0
    %3965 = vmatprep.subr.mxu0 0.0
    %3966 = vmatpush1.msra.mxu0 0.0
    %3967 = vmatprep.subr.mxu0 0.0
    %3968 = vmatpush1.msra.mxu0 0.0
    %3969 = vmatprep.subr.mxu0 0.0
    %3970 = vmatpush1.msra.mxu0 0.0
    %3971 = vmatprep.subr.mxu0 0.0
    %3972 = vmatpush1.msra.mxu0 0.0
    %3973 = vmatprep.subr.mxu0 0.0
    %3974 = vmatpush1.msra.mxu0 0.0
    %3975 = vmatprep.mubr.f32.mxu0 0.0
    %3976 = vmatmul.mubr.f32.gmra.mrb[0].mxu0 %v3702
    %v3977 = vpop.f32.mrb[0].mxu0
    %v3978 = vadd.f32 %v3789, %v3977
    %v3979 = vpop.f32.mrb[0].mxu0
    %v3980 = vadd.f32 %v3793, %v3979
    %3981 = vmatprep.mubr.f32.mxu0 0.0
    %3982 = vmatmul.mubr.f32.gmra.mrb[0].mxu0 %v3703
    %v3983 = vpop.f32.mrb[0].mxu0
    %v3984 = vadd.f32 %v3789, %v3983
    %v3985 = vpop.f32.mrb[0].mxu0
    %v3986 = vadd.f32 %v3793, %v3985
    %3987 = vmatprep.mubr.f32.mxu0 0.0
    %3988 = vmatmul.mubr.f32.gmra.mrb[0].mxu0 %v3704
    %v3989 = vpop.f32.mrb[0].mxu0
    %v3990 = vadd.f32 %v3789, %v3989
    %v3991 = vpop.f32.mrb[0].mxu0
    %v3992 = vadd.f32 %v3793, %v3991
    %3993 = vmatprep.mubr.f32.mxu0 0.0
    %3994 = vmatmul.mubr.f32.gmra.mrb[0].mxu0 %v3705
    %v3995 = vpop.f32.mrb[0].mxu0
    %v3996 = vadd.f32 %v3789, %v3995
    %v3997 = vpop.f32.mrb[0].mxu0
    %v3998 = vadd.f32 %v3793, %v3997
    %3999 = vmatprep.mubr.f32.mxu0 0.0
    %4000 = vmatmul.mubr.f32.gmra.mrb[0].mxu0 %v3706
    %v4001 = vpop.f32.mrb[0].mxu0
    %v4002 = vadd.f32 %v3789, %v4001
    %v4003 = vpop.f32.mrb[0].mxu0
    %v4004 = vadd.f32 %v3793, %v4003
    %4005 = vmatprep.mubr.f32.mxu0 0.0
    %4006 = vmatmul.mubr.f32.gmra.mrb[0].mxu0 %v3707
    %v4007 = vpop.f32.mrb[0].mxu0
    %v4008 = vadd.f32 %v3789, %v4007
    %v4009 = vpop.f32.mrb[0].mxu0
    %v4010 = vadd.f32 %v3793, %v4009
    %4011 = vmatprep.mubr.f32.mxu0 0.0
    %4012 = vmatmul.mubr.f32.gmra.mrb[0].mxu0 %v3708
    %v4013 = vpop.f32.mrb[0].mxu0
    %v4014 = vadd.f32 %v3789, %v4013
    %v4015 = vpop.f32.mrb[0].mxu0
    %v4016 = vadd.f32 %v3793, %v4015
    %4017 = vmatprep.mubr.f32.mxu0 0.0
    %4018 = vmatmul.mubr.f32.gmra.mrb[0].mxu0 %v3709
    %v4019 = vpop.f32.mrb[0].mxu0
    %v4020 = vadd.f32 %v3789, %v4019
    %v4021 = vpop.f32.mrb[0].mxu0
    %v4022 = vadd.f32 %v3793, %v4021
    %4023 = vdwg.mxu0
    %v4024 = vsel %vm120, %v3907, %v3865
    %v4025 = vsel %vm121, %v3909, %v3867
    %v4026 = vsel %vm122, %v4020, %v3978
    %v4027 = vsel %vm123, %v4022, %v3980
    %4028 = vst [vmem:[#allocation4] sm:$0xff] %v4024
    %4029 = vst [vmem:[#allocation4 + $0x8] sm:$0xff] %v4025
    %4030 = vst [vmem:[#allocation4 + $0x10] sm:$0xff] %v4026
    %4031 = vst [vmem:[#allocation4 + $0x18] sm:$0xff] %v4027
    %v4032 = vsel %vm120, %v3901, %v3871
    %v4033 = vsel %vm121, %v3903, %v3873
    %v4034 = vsel %vm122, %v4014, %v3984
    %v4035 = vsel %vm123, %v4016, %v3986
    %4036 = vst [vmem:[%s456] sm:$0xff] %v4032
    %4037 = vst [vmem:[%s456 + $0x8] sm:$0xff] %v4033
    %4038 = vst [vmem:[%s456 + $0x10] sm:$0xff] %v4034
    %4039 = vst [vmem:[%s456 + $0x18] sm:$0xff] %v4035
    %v4040 = vsel %vm120, %v3895, %v3877
    %v4041 = vsel %vm121, %v3897, %v3879
    %v4042 = vsel %vm122, %v4008, %v3990
    %v4043 = vsel %vm123, %v4010, %v3992
    %4044 = vst [vmem:[%s465] sm:$0xff] %v4040
    %4045 = vst [vmem:[%s465 + $0x8] sm:$0xff] %v4041
    %4046 = vst [vmem:[%s465 + $0x10] sm:$0xff] %v4042
    %4047 = vst [vmem:[%s465 + $0x18] sm:$0xff] %v4043
    %v4048 = vsel %vm120, %v3889, %v3883
    %v4049 = vsel %vm121, %v3891, %v3885
    %v4050 = vsel %vm122, %v4002, %v3996
    %v4051 = vsel %vm123, %v4004, %v3998
    %4052 = vst [vmem:[%s474] sm:$0xff] %v4048
    %4053 = vst [vmem:[%s474 + $0x8] sm:$0xff] %v4049
    %4054 = vst [vmem:[%s474 + $0x10] sm:$0xff] %v4050
    %4055 = vst [vmem:[%s474 + $0x18] sm:$0xff] %v4051
    %v4056 = vsel %vm120, %v3883, %v3889
    %v4057 = vsel %vm121, %v3885, %v3891
    %v4058 = vsel %vm122, %v3996, %v4002
    %v4059 = vsel %vm123, %v3998, %v4004
    %4060 = vst [vmem:[%s483] sm:$0xff] %v4056
    %4061 = vst [vmem:[%s483 + $0x8] sm:$0xff] %v4057
    %4062 = vst [vmem:[%s483 + $0x10] sm:$0xff] %v4058
    %4063 = vst [vmem:[%s483 + $0x18] sm:$0xff] %v4059
    %v4064 = vsel %vm120, %v3877, %v3895
    %v4065 = vsel %vm121, %v3879, %v3897
    %v4066 = vsel %vm122, %v3990, %v4008
    %v4067 = vsel %vm123, %v3992, %v4010
    %4068 = vst [vmem:[%s492] sm:$0xff] %v4064
    %4069 = vst [vmem:[%s492 + $0x8] sm:$0xff] %v4065
    %4070 = vst [vmem:[%s492 + $0x10] sm:$0xff] %v4066
    %4071 = vst [vmem:[%s492 + $0x18] sm:$0xff] %v4067
    %v4072 = vsel %vm120, %v3871, %v3901
    %v4073 = vsel %vm121, %v3873, %v3903
    %v4074 = vsel %vm122, %v3984, %v4014
    %v4075 = vsel %vm123, %v3986, %v4016
    %4076 = vst [vmem:[%s501] sm:$0xff] %v4072
    %4077 = vst [vmem:[%s501 + $0x8] sm:$0xff] %v4073
    %4078 = vst [vmem:[%s501 + $0x10] sm:$0xff] %v4074
    %4079 = vst [vmem:[%s501 + $0x18] sm:$0xff] %v4075
    %v4080 = vsel %vm120, %v3865, %v3907
    %v4081 = vsel %vm121, %v3867, %v3909
    %v4082 = vsel %vm122, %v3978, %v4020
    %v4083 = vsel %vm123, %v3980, %v4022
    %4084 = vst [vmem:[%s510] sm:$0xff] %v4080
    %4085 = vst [vmem:[%s510 + $0x8] sm:$0xff] %v4081
    %4086 = vst [vmem:[%s510 + $0x10] sm:$0xff] %v4082
    %4087 = vst [vmem:[%s510 + $0x18] sm:$0xff] %v4083
    %s4088 = scalar_lea.vmem [#allocation9], 1024
    %v4089 = vld [vmem:[%s4088] sm:$0xff]
    %v4090 = vld [vmem:[%s4088 + $0x8] sm:$0xff]
    %v4091 = vld [vmem:[%s4088 + $0x10] sm:$0xff]
    %v4092 = vld [vmem:[%s4088 + $0x18] sm:$0xff]
    %v4093 = vld [vmem:[%s4088 + $0x20] sm:$0xff]
    %v4094 = vld [vmem:[%s4088 + $0x28] sm:$0xff]
    %v4095 = vld [vmem:[%s4088 + $0x30] sm:$0xff]
    %v4096 = vld [vmem:[%s4088 + $0x38] sm:$0xff]
    %v4097 = vld [vmem:[%s4088 + $0x40] sm:$0xff]
    %v4098 = vld [vmem:[%s4088 + $0x48] sm:$0xff]
    %v4099 = vld [vmem:[%s4088 + $0x50] sm:$0xff]
    %v4100 = vld [vmem:[%s4088 + $0x58] sm:$0xff]
    %v4101 = vld [vmem:[%s4088 + $0x60] sm:$0xff]
    %v4102 = vld [vmem:[%s4088 + $0x68] sm:$0xff]
    %v4103 = vld [vmem:[%s4088 + $0x70] sm:$0xff]
    %v4104 = vld [vmem:[%s4088 + $0x78] sm:$0xff]
    %v4105 = vld [vmem:[%s4088 + $0x80] sm:$0xff]
    %v4106 = vld [vmem:[%s4088 + $0x88] sm:$0xff]
    %v4107 = vld [vmem:[%s4088 + $0x90] sm:$0xff]
    %v4108 = vld [vmem:[%s4088 + $0x98] sm:$0xff]
    %v4109 = vld [vmem:[%s4088 + $0xa0] sm:$0xff]
    %v4110 = vld [vmem:[%s4088 + $0xa8] sm:$0xff]
    %v4111 = vld [vmem:[%s4088 + $0xb0] sm:$0xff]
    %v4112 = vld [vmem:[%s4088 + $0xb8] sm:$0xff]
    %v4113 = vld [vmem:[%s4088 + $0xc0] sm:$0xff]
    %v4114 = vld [vmem:[%s4088 + $0xc8] sm:$0xff]
    %v4115 = vld [vmem:[%s4088 + $0xd0] sm:$0xff]
    %v4116 = vld [vmem:[%s4088 + $0xd8] sm:$0xff]
    %v4117 = vld [vmem:[%s4088 + $0xe0] sm:$0xff]
    %v4118 = vld [vmem:[%s4088 + $0xe8] sm:$0xff]
    %v4119 = vld [vmem:[%s4088 + $0xf0] sm:$0xff]
    %v4120 = vld [vmem:[%s4088 + $0xf8] sm:$0xff]
    %v4121 = vld [vmem:[%s4088 + $0x100] sm:$0xff]
    %v4122 = vld [vmem:[%s4088 + $0x108] sm:$0xff]
    %v4123 = vld [vmem:[%s4088 + $0x110] sm:$0xff]
    %v4124 = vld [vmem:[%s4088 + $0x118] sm:$0xff]
    %v4125 = vld [vmem:[%s4088 + $0x120] sm:$0xff]
    %v4126 = vld [vmem:[%s4088 + $0x128] sm:$0xff]
    %v4127 = vld [vmem:[%s4088 + $0x130] sm:$0xff]
    %v4128 = vld [vmem:[%s4088 + $0x138] sm:$0xff]
    %v4129 = vld [vmem:[%s4088 + $0x140] sm:$0xff]
    %v4130 = vld [vmem:[%s4088 + $0x148] sm:$0xff]
    %v4131 = vld [vmem:[%s4088 + $0x150] sm:$0xff]
    %v4132 = vld [vmem:[%s4088 + $0x158] sm:$0xff]
    %v4133 = vld [vmem:[%s4088 + $0x160] sm:$0xff]
    %v4134 = vld [vmem:[%s4088 + $0x168] sm:$0xff]
    %v4135 = vld [vmem:[%s4088 + $0x170] sm:$0xff]
    %v4136 = vld [vmem:[%s4088 + $0x178] sm:$0xff]
    %v4137 = vld [vmem:[%s4088 + $0x180] sm:$0xff]
    %v4138 = vld [vmem:[%s4088 + $0x188] sm:$0xff]
    %v4139 = vld [vmem:[%s4088 + $0x190] sm:$0xff]
    %v4140 = vld [vmem:[%s4088 + $0x198] sm:$0xff]
    %v4141 = vld [vmem:[%s4088 + $0x1a0] sm:$0xff]
    %v4142 = vld [vmem:[%s4088 + $0x1a8] sm:$0xff]
    %v4143 = vld [vmem:[%s4088 + $0x1b0] sm:$0xff]
    %v4144 = vld [vmem:[%s4088 + $0x1b8] sm:$0xff]
    %v4145 = vld [vmem:[%s4088 + $0x1c0] sm:$0xff]
    %v4146 = vld [vmem:[%s4088 + $0x1c8] sm:$0xff]
    %v4147 = vld [vmem:[%s4088 + $0x1d0] sm:$0xff]
    %v4148 = vld [vmem:[%s4088 + $0x1d8] sm:$0xff]
    %v4149 = vld [vmem:[%s4088 + $0x1e0] sm:$0xff]
    %v4150 = vld [vmem:[%s4088 + $0x1e8] sm:$0xff]
    %v4151 = vld [vmem:[%s4088 + $0x1f0] sm:$0xff]
    %v4152 = vld [vmem:[%s4088 + $0x1f8] sm:$0xff]
    %v4153 = vld [vmem:[#allocation4] sm:$0xff]
    %v4154 = vld [vmem:[#allocation4 + $0x8] sm:$0xff]
    %v4155 = vld [vmem:[#allocation4 + $0x10] sm:$0xff]
    %v4156 = vld [vmem:[#allocation4 + $0x18] sm:$0xff]
    %4157 = vmatprep.subr.mxu0 %v4090
    %4158 = vmatpush1.msra.mxu0 %v4089
    %4159 = vmatprep.subr.mxu0 %v4094
    %4160 = vmatpush1.msra.mxu0 %v4093
    %4161 = vmatprep.subr.mxu0 %v4098
    %4162 = vmatpush1.msra.mxu0 %v4097
    %4163 = vmatprep.subr.mxu0 %v4102
    %4164 = vmatpush1.msra.mxu0 %v4101
    %4165 = vmatprep.subr.mxu0 %v4106
    %4166 = vmatpush1.msra.mxu0 %v4105
    %4167 = vmatprep.subr.mxu0 %v4110
    %4168 = vmatpush1.msra.mxu0 %v4109
    %4169 = vmatprep.subr.mxu0 %v4114
    %4170 = vmatpush1.msra.mxu0 %v4113
    %4171 = vmatprep.subr.mxu0 %v4118
    %4172 = vmatpush1.msra.mxu0 %v4117
    %4173 = vmatprep.subr.mxu0 %v4122
    %4174 = vmatpush1.msra.mxu0 %v4121
    %4175 = vmatprep.subr.mxu0 %v4126
    %4176 = vmatpush1.msra.mxu0 %v4125
    %4177 = vmatprep.subr.mxu0 %v4130
    %4178 = vmatpush1.msra.mxu0 %v4129
    %4179 = vmatprep.subr.mxu0 %v4134
    %4180 = vmatpush1.msra.mxu0 %v4133
    %4181 = vmatprep.subr.mxu0 %v4138
    %4182 = vmatpush1.msra.mxu0 %v4137
    %4183 = vmatprep.subr.mxu0 %v4142
    %4184 = vmatpush1.msra.mxu0 %v4141
    %4185 = vmatprep.subr.mxu0 %v4146
    %4186 = vmatpush1.msra.mxu0 %v4145
    %4187 = vmatprep.subr.mxu0 %v4150
    %4188 = vmatpush1.msra.mxu0 %v4149
    %4189 = vmatprep.subr.mxu0 0.0
    %4190 = vmatpush1.msra.mxu0 0.0
    %4191 = vmatprep.subr.mxu0 0.0
    %4192 = vmatpush1.msra.mxu0 0.0
    %4193 = vmatprep.subr.mxu0 0.0
    %4194 = vmatpush1.msra.mxu0 0.0
    %4195 = vmatprep.subr.mxu0 0.0
    %4196 = vmatpush1.msra.mxu0 0.0
    %4197 = vmatprep.subr.mxu0 0.0
    %4198 = vmatpush1.msra.mxu0 0.0
    %4199 = vmatprep.subr.mxu0 0.0
    %4200 = vmatpush1.msra.mxu0 0.0
    %4201 = vmatprep.subr.mxu0 0.0
    %4202 = vmatpush1.msra.mxu0 0.0
    %4203 = vmatprep.subr.mxu0 0.0
    %4204 = vmatpush1.msra.mxu0 0.0
    %4205 = vmatprep.subr.mxu0 0.0
    %4206 = vmatpush1.msra.mxu0 0.0
    %4207 = vmatprep.subr.mxu0 0.0
    %4208 = vmatpush1.msra.mxu0 0.0
    %4209 = vmatprep.subr.mxu0 0.0
    %4210 = vmatpush1.msra.mxu0 0.0
    %4211 = vmatprep.subr.mxu0 0.0
    %4212 = vmatpush1.msra.mxu0 0.0
    %4213 = vmatprep.subr.mxu0 0.0
    %4214 = vmatpush1.msra.mxu0 0.0
    %4215 = vmatprep.subr.mxu0 0.0
    %4216 = vmatpush1.msra.mxu0 0.0
    %4217 = vmatprep.subr.mxu0 0.0
    %4218 = vmatpush1.msra.mxu0 0.0
    %4219 = vmatprep.subr.mxu0 0.0
    %4220 = vmatpush1.msra.mxu0 0.0
    %4221 = vmatprep.mubr.f32.mxu0 0.0
    %4222 = vmatmul.mubr.f32.gmra.mrb[0].mxu0 0.0
    %v4223 = vpop.f32.mrb[0].mxu0
    %v4224 = vadd.f32 %v4153, %v4223
    %v4225 = vpop.f32.mrb[0].mxu0
    %v4226 = vadd.f32 %v4154, %v4225
    %4227 = vdwg.mxu0
    %4228 = vmatprep.subr.mxu0 %v4092
    %4229 = vmatpush1.msra.mxu0 %v4091
    %4230 = vmatprep.subr.mxu0 %v4096
    %4231 = vmatpush1.msra.mxu0 %v4095
    %4232 = vmatprep.subr.mxu0 %v4100
    %4233 = vmatpush1.msra.mxu0 %v4099
    %4234 = vmatprep.subr.mxu0 %v4104
    %4235 = vmatpush1.msra.mxu0 %v4103
    %4236 = vmatprep.subr.mxu0 %v4108
    %4237 = vmatpush1.msra.mxu0 %v4107
    %4238 = vmatprep.subr.mxu0 %v4112
    %4239 = vmatpush1.msra.mxu0 %v4111
    %4240 = vmatprep.subr.mxu0 %v4116
    %4241 = vmatpush1.msra.mxu0 %v4115
    %4242 = vmatprep.subr.mxu0 %v4120
    %4243 = vmatpush1.msra.mxu0 %v4119
    %4244 = vmatprep.subr.mxu0 %v4124
    %4245 = vmatpush1.msra.mxu0 %v4123
    %4246 = vmatprep.subr.mxu0 %v4128
    %4247 = vmatpush1.msra.mxu0 %v4127
    %4248 = vmatprep.subr.mxu0 %v4132
    %4249 = vmatpush1.msra.mxu0 %v4131
    %4250 = vmatprep.subr.mxu0 %v4136
    %4251 = vmatpush1.msra.mxu0 %v4135
    %4252 = vmatprep.subr.mxu0 %v4140
    %4253 = vmatpush1.msra.mxu0 %v4139
    %4254 = vmatprep.subr.mxu0 %v4144
    %4255 = vmatpush1.msra.mxu0 %v4143
    %4256 = vmatprep.subr.mxu0 %v4148
    %4257 = vmatpush1.msra.mxu0 %v4147
    %4258 = vmatprep.subr.mxu0 %v4152
    %4259 = vmatpush1.msra.mxu0 %v4151
    %4260 = vmatprep.subr.mxu0 0.0
    %4261 = vmatpush1.msra.mxu0 0.0
    %4262 = vmatprep.subr.mxu0 0.0
    %4263 = vmatpush1.msra.mxu0 0.0
    %4264 = vmatprep.subr.mxu0 0.0
    %4265 = vmatpush1.msra.mxu0 0.0
    %4266 = vmatprep.subr.mxu0 0.0
    %4267 = vmatpush1.msra.mxu0 0.0
    %4268 = vmatprep.subr.mxu0 0.0
    %4269 = vmatpush1.msra.mxu0 0.0
    %4270 = vmatprep.subr.mxu0 0.0
    %4271 = vmatpush1.msra.mxu0 0.0
    %4272 = vmatprep.subr.mxu0 0.0
    %4273 = vmatpush1.msra.mxu0 0.0
    %4274 = vmatprep.subr.mxu0 0.0
    %4275 = vmatpush1.msra.mxu0 0.0
    %4276 = vmatprep.subr.mxu0 0.0
    %4277 = vmatpush1.msra.mxu0 0.0
    %4278 = vmatprep.subr.mxu0 0.0
    %4279 = vmatpush1.msra.mxu0 0.0
    %4280 = vmatprep.subr.mxu0 0.0
    %4281 = vmatpush1.msra.mxu0 0.0
    %4282 = vmatprep.subr.mxu0 0.0
    %4283 = vmatpush1.msra.mxu0 0.0
    %4284 = vmatprep.subr.mxu0 0.0
    %4285 = vmatpush1.msra.mxu0 0.0
    %4286 = vmatprep.subr.mxu0 0.0
    %4287 = vmatpush1.msra.mxu0 0.0
    %4288 = vmatprep.subr.mxu0 0.0
    %4289 = vmatpush1.msra.mxu0 0.0
    %4290 = vmatprep.subr.mxu0 0.0
    %4291 = vmatpush1.msra.mxu0 0.0
    %4292 = vmatprep.mubr.f32.mxu0 0.0
    %4293 = vmatmul.mubr.f32.gmra.mrb[0].mxu0 0.0
    %v4294 = vpop.f32.mrb[0].mxu0
    %v4295 = vadd.f32 %v4155, %v4294
    %v4296 = vpop.f32.mrb[0].mxu0
    %v4297 = vadd.f32 %v4156, %v4296
    %4298 = vdwg.mxu0
    %v4299 = vmul.f32 %v4224, 0.5
    %v4300 = vmul.f32 %v4226, 0.5
    %v4301 = vmul.f32 %v4295, 0.5
    %v4302 = vtanh.pop %v4299
    %v4303 = vtanh.pop %v4300
    %v4304 = vtanh.pop %v4301
    %v4305 = vmul.f32 %v4302, 0.5
    %v4306 = vmul.f32 %v4303, 0.5
    %v4307 = vmul.f32 %v4304, 0.5
    %v4308 = vadd.f32 %v4305, 0.5
    %v4309 = vadd.f32 %v4306, 0.5
    %v4310 = vadd.f32 %v4307, 0.5
    %v4311 = vtanh.pop %v4297
    %v4312 = vmul.f32 %v4309, 0.0
    %v4313 = vmul.f32 %v4308, %v4311
    %v4314 = vadd.f32 %v4312, %v4313
    %v4315 = vtanh.pop %v4314
    %v4316 = vmul.f32 %v4310, %v4315
    %4317 = vst.msk [vmem:[#allocation2] sm:$0xff] %vm743, %v4316
    %4318 = vst.msk [vmem:[%s745] sm:$0xff] %vm746, %v4316
    %v4319 = vld [vmem:[%s456] sm:$0xff]
    %v4320 = vld [vmem:[%s456 + $0x8] sm:$0xff]
    %v4321 = vld [vmem:[%s456 + $0x10] sm:$0xff]
    %v4322 = vld [vmem:[%s456 + $0x18] sm:$0xff]
    %4323 = vmatprep.subr.mxu0 %v4090
    %4324 = vmatpush1.msra.mxu0 %v4089
    %4325 = vmatprep.subr.mxu0 %v4094
    %4326 = vmatpush1.msra.mxu0 %v4093
    %4327 = vmatprep.subr.mxu0 %v4098
    %4328 = vmatpush1.msra.mxu0 %v4097
    %4329 = vmatprep.subr.mxu0 %v4102
    %4330 = vmatpush1.msra.mxu0 %v4101
    %4331 = vmatprep.subr.mxu0 %v4106
    %4332 = vmatpush1.msra.mxu0 %v4105
    %4333 = vmatprep.subr.mxu0 %v4110
    %4334 = vmatpush1.msra.mxu0 %v4109
    %4335 = vmatprep.subr.mxu0 %v4114
    %4336 = vmatpush1.msra.mxu0 %v4113
    %4337 = vmatprep.subr.mxu0 %v4118
    %4338 = vmatpush1.msra.mxu0 %v4117
    %4339 = vmatprep.subr.mxu0 %v4122
    %4340 = vmatpush1.msra.mxu0 %v4121
    %4341 = vmatprep.subr.mxu0 %v4126
    %4342 = vmatpush1.msra.mxu0 %v4125
    %4343 = vmatprep.subr.mxu0 %v4130
    %4344 = vmatpush1.msra.mxu0 %v4129
    %4345 = vmatprep.subr.mxu0 %v4134
    %4346 = vmatpush1.msra.mxu0 %v4133
    %4347 = vmatprep.subr.mxu0 %v4138
    %4348 = vmatpush1.msra.mxu0 %v4137
    %4349 = vmatprep.subr.mxu0 %v4142
    %4350 = vmatpush1.msra.mxu0 %v4141
    %4351 = vmatprep.subr.mxu0 %v4146
    %4352 = vmatpush1.msra.mxu0 %v4145
    %4353 = vmatprep.subr.mxu0 %v4150
    %4354 = vmatpush1.msra.mxu0 %v4149
    %4355 = vmatprep.subr.mxu0 0.0
    %4356 = vmatpush1.msra.mxu0 0.0
    %4357 = vmatprep.subr.mxu0 0.0
    %4358 = vmatpush1.msra.mxu0 0.0
    %4359 = vmatprep.subr.mxu0 0.0
    %4360 = vmatpush1.msra.mxu0 0.0
    %4361 = vmatprep.subr.mxu0 0.0
    %4362 = vmatpush1.msra.mxu0 0.0
    %4363 = vmatprep.subr.mxu0 0.0
    %4364 = vmatpush1.msra.mxu0 0.0
    %4365 = vmatprep.subr.mxu0 0.0
    %4366 = vmatpush1.msra.mxu0 0.0
    %4367 = vmatprep.subr.mxu0 0.0
    %4368 = vmatpush1.msra.mxu0 0.0
    %4369 = vmatprep.subr.mxu0 0.0
    %4370 = vmatpush1.msra.mxu0 0.0
    %4371 = vmatprep.subr.mxu0 0.0
    %4372 = vmatpush1.msra.mxu0 0.0
    %4373 = vmatprep.subr.mxu0 0.0
    %4374 = vmatpush1.msra.mxu0 0.0
    %4375 = vmatprep.subr.mxu0 0.0
    %4376 = vmatpush1.msra.mxu0 0.0
    %4377 = vmatprep.subr.mxu0 0.0
    %4378 = vmatpush1.msra.mxu0 0.0
    %4379 = vmatprep.subr.mxu0 0.0
    %4380 = vmatpush1.msra.mxu0 0.0
    %4381 = vmatprep.subr.mxu0 0.0
    %4382 = vmatpush1.msra.mxu0 0.0
    %4383 = vmatprep.subr.mxu0 0.0
    %4384 = vmatpush1.msra.mxu0 0.0
    %4385 = vmatprep.subr.mxu0 0.0
    %4386 = vmatpush1.msra.mxu0 0.0
    %4387 = vmatprep.mubr.f32.mxu0 0.0
    %4388 = vmatmul.mubr.f32.gmra.mrb[0].mxu0 %v4316
    %v4389 = vpop.f32.mrb[0].mxu0
    %v4390 = vadd.f32 %v4319, %v4389
    %v4391 = vpop.f32.mrb[0].mxu0
    %v4392 = vadd.f32 %v4320, %v4391
    %4393 = vdwg.mxu0
    %4394 = vmatprep.subr.mxu0 %v4092
    %4395 = vmatpush1.msra.mxu0 %v4091
    %4396 = vmatprep.subr.mxu0 %v4096
    %4397 = vmatpush1.msra.mxu0 %v4095
    %4398 = vmatprep.subr.mxu0 %v4100
    %4399 = vmatpush1.msra.mxu0 %v4099
    %4400 = vmatprep.subr.mxu0 %v4104
    %4401 = vmatpush1.msra.mxu0 %v4103
    %4402 = vmatprep.subr.mxu0 %v4108
    %4403 = vmatpush1.msra.mxu0 %v4107
    %4404 = vmatprep.subr.mxu0 %v4112
    %4405 = vmatpush1.msra.mxu0 %v4111
    %4406 = vmatprep.subr.mxu0 %v4116
    %4407 = vmatpush1.msra.mxu0 %v4115
    %4408 = vmatprep.subr.mxu0 %v4120
    %4409 = vmatpush1.msra.mxu0 %v4119
    %4410 = vmatprep.subr.mxu0 %v4124
    %4411 = vmatpush1.msra.mxu0 %v4123
    %4412 = vmatprep.subr.mxu0 %v4128
    %4413 = vmatpush1.msra.mxu0 %v4127
    %4414 = vmatprep.subr.mxu0 %v4132
    %4415 = vmatpush1.msra.mxu0 %v4131
    %4416 = vmatprep.subr.mxu0 %v4136
    %4417 = vmatpush1.msra.mxu0 %v4135
    %4418 = vmatprep.subr.mxu0 %v4140
    %4419 = vmatpush1.msra.mxu0 %v4139
    %4420 = vmatprep.subr.mxu0 %v4144
    %4421 = vmatpush1.msra.mxu0 %v4143
    %4422 = vmatprep.subr.mxu0 %v4148
    %4423 = vmatpush1.msra.mxu0 %v4147
    %4424 = vmatprep.subr.mxu0 %v4152
    %4425 = vmatpush1.msra.mxu0 %v4151
    %4426 = vmatprep.subr.mxu0 0.0
    %4427 = vmatpush1.msra.mxu0 0.0
    %4428 = vmatprep.subr.mxu0 0.0
    %4429 = vmatpush1.msra.mxu0 0.0
    %4430 = vmatprep.subr.mxu0 0.0
    %4431 = vmatpush1.msra.mxu0 0.0
    %4432 = vmatprep.subr.mxu0 0.0
    %4433 = vmatpush1.msra.mxu0 0.0
    %4434 = vmatprep.subr.mxu0 0.0
    %4435 = vmatpush1.msra.mxu0 0.0
    %4436 = vmatprep.subr.mxu0 0.0
    %4437 = vmatpush1.msra.mxu0 0.0
    %4438 = vmatprep.subr.mxu0 0.0
    %4439 = vmatpush1.msra.mxu0 0.0
    %4440 = vmatprep.subr.mxu0 0.0
    %4441 = vmatpush1.msra.mxu0 0.0
    %4442 = vmatprep.subr.mxu0 0.0
    %4443 = vmatpush1.msra.mxu0 0.0
    %4444 = vmatprep.subr.mxu0 0.0
    %4445 = vmatpush1.msra.mxu0 0.0
    %4446 = vmatprep.subr.mxu0 0.0
    %4447 = vmatpush1.msra.mxu0 0.0
    %4448 = vmatprep.subr.mxu0 0.0
    %4449 = vmatpush1.msra.mxu0 0.0
    %4450 = vmatprep.subr.mxu0 0.0
    %4451 = vmatpush1.msra.mxu0 0.0
    %4452 = vmatprep.subr.mxu0 0.0
    %4453 = vmatpush1.msra.mxu0 0.0
    %4454 = vmatprep.subr.mxu0 0.0
    %4455 = vmatpush1.msra.mxu0 0.0
    %4456 = vmatprep.subr.mxu0 0.0
    %4457 = vmatpush1.msra.mxu0 0.0
    %4458 = vmatprep.mubr.f32.mxu0 0.0
    %4459 = vmatmul.mubr.f32.gmra.mrb[0].mxu0 %v4316
    %v4460 = vpop.f32.mrb[0].mxu0
    %v4461 = vadd.f32 %v4321, %v4460
    %v4462 = vpop.f32.mrb[0].mxu0
    %v4463 = vadd.f32 %v4322, %v4462
    %4464 = vdwg.mxu0
    %v4465 = vmul.f32 %v4390, 0.5
    %v4466 = vmul.f32 %v4392, 0.5
    %v4467 = vmul.f32 %v4461, 0.5
    %v4468 = vtanh.pop %v4465
    %v4469 = vtanh.pop %v4466
    %v4470 = vtanh.pop %v4467
    %v4471 = vmul.f32 %v4468, 0.5
    %v4472 = vmul.f32 %v4469, 0.5
    %v4473 = vmul.f32 %v4470, 0.5
    %v4474 = vadd.f32 %v4471, 0.5
    %v4475 = vadd.f32 %v4472, 0.5
    %v4476 = vadd.f32 %v4473, 0.5
    %v4477 = vtanh.pop %v4463
    %v4478 = vmul.f32 %v4475, %v4314
    %v4479 = vmul.f32 %v4474, %v4477
    %v4480 = vadd.f32 %v4478, %v4479
    %v4481 = vtanh.pop %v4480
    %v4482 = vmul.f32 %v4476, %v4481
    %4483 = vst.msk [vmem:[%s912] sm:$0xff] %vm743, %v4482
    %4484 = vst.msk [vmem:[%s914] sm:$0xff] %vm746, %v4482
    %v4485 = vld [vmem:[%s465] sm:$0xff]
    %v4486 = vld [vmem:[%s465 + $0x8] sm:$0xff]
    %v4487 = vld [vmem:[%s465 + $0x10] sm:$0xff]
    %v4488 = vld [vmem:[%s465 + $0x18] sm:$0xff]
    %4489 = vmatprep.subr.mxu0 %v4090
    %4490 = vmatpush1.msra.mxu0 %v4089
    %4491 = vmatprep.subr.mxu0 %v4094
    %4492 = vmatpush1.msra.mxu0 %v4093
    %4493 = vmatprep.subr.mxu0 %v4098
    %4494 = vmatpush1.msra.mxu0 %v4097
    %4495 = vmatprep.subr.mxu0 %v4102
    %4496 = vmatpush1.msra.mxu0 %v4101
    %4497 = vmatprep.subr.mxu0 %v4106
    %4498 = vmatpush1.msra.mxu0 %v4105
    %4499 = vmatprep.subr.mxu0 %v4110
    %4500 = vmatpush1.msra.mxu0 %v4109
    %4501 = vmatprep.subr.mxu0 %v4114
    %4502 = vmatpush1.msra.mxu0 %v4113
    %4503 = vmatprep.subr.mxu0 %v4118
    %4504 = vmatpush1.msra.mxu0 %v4117
    %4505 = vmatprep.subr.mxu0 %v4122
    %4506 = vmatpush1.msra.mxu0 %v4121
    %4507 = vmatprep.subr.mxu0 %v4126
    %4508 = vmatpush1.msra.mxu0 %v4125
    %4509 = vmatprep.subr.mxu0 %v4130
    %4510 = vmatpush1.msra.mxu0 %v4129
    %4511 = vmatprep.subr.mxu0 %v4134
    %4512 = vmatpush1.msra.mxu0 %v4133
    %4513 = vmatprep.subr.mxu0 %v4138
    %4514 = vmatpush1.msra.mxu0 %v4137
    %4515 = vmatprep.subr.mxu0 %v4142
    %4516 = vmatpush1.msra.mxu0 %v4141
    %4517 = vmatprep.subr.mxu0 %v4146
    %4518 = vmatpush1.msra.mxu0 %v4145
    %4519 = vmatprep.subr.mxu0 %v4150
    %4520 = vmatpush1.msra.mxu0 %v4149
    %4521 = vmatprep.subr.mxu0 0.0
    %4522 = vmatpush1.msra.mxu0 0.0
    %4523 = vmatprep.subr.mxu0 0.0
    %4524 = vmatpush1.msra.mxu0 0.0
    %4525 = vmatprep.subr.mxu0 0.0
    %4526 = vmatpush1.msra.mxu0 0.0
    %4527 = vmatprep.subr.mxu0 0.0
    %4528 = vmatpush1.msra.mxu0 0.0
    %4529 = vmatprep.subr.mxu0 0.0
    %4530 = vmatpush1.msra.mxu0 0.0
    %4531 = vmatprep.subr.mxu0 0.0
    %4532 = vmatpush1.msra.mxu0 0.0
    %4533 = vmatprep.subr.mxu0 0.0
    %4534 = vmatpush1.msra.mxu0 0.0
    %4535 = vmatprep.subr.mxu0 0.0
    %4536 = vmatpush1.msra.mxu0 0.0
    %4537 = vmatprep.subr.mxu0 0.0
    %4538 = vmatpush1.msra.mxu0 0.0
    %4539 = vmatprep.subr.mxu0 0.0
    %4540 = vmatpush1.msra.mxu0 0.0
    %4541 = vmatprep.subr.mxu0 0.0
    %4542 = vmatpush1.msra.mxu0 0.0
    %4543 = vmatprep.subr.mxu0 0.0
    %4544 = vmatpush1.msra.mxu0 0.0
    %4545 = vmatprep.subr.mxu0 0.0
    %4546 = vmatpush1.msra.mxu0 0.0
    %4547 = vmatprep.subr.mxu0 0.0
    %4548 = vmatpush1.msra.mxu0 0.0
    %4549 = vmatprep.subr.mxu0 0.0
    %4550 = vmatpush1.msra.mxu0 0.0
    %4551 = vmatprep.subr.mxu0 0.0
    %4552 = vmatpush1.msra.mxu0 0.0
    %4553 = vmatprep.mubr.f32.mxu0 0.0
    %4554 = vmatmul.mubr.f32.gmra.mrb[0].mxu0 %v4482
    %v4555 = vpop.f32.mrb[0].mxu0
    %v4556 = vadd.f32 %v4485, %v4555
    %v4557 = vpop.f32.mrb[0].mxu0
    %v4558 = vadd.f32 %v4486, %v4557
    %4559 = vdwg.mxu0
    %4560 = vmatprep.subr.mxu0 %v4092
    %4561 = vmatpush1.msra.mxu0 %v4091
    %4562 = vmatprep.subr.mxu0 %v4096
    %4563 = vmatpush1.msra.mxu0 %v4095
    %4564 = vmatprep.subr.mxu0 %v4100
    %4565 = vmatpush1.msra.mxu0 %v4099
    %4566 = vmatprep.subr.mxu0 %v4104
    %4567 = vmatpush1.msra.mxu0 %v4103
    %4568 = vmatprep.subr.mxu0 %v4108
    %4569 = vmatpush1.msra.mxu0 %v4107
    %4570 = vmatprep.subr.mxu0 %v4112
    %4571 = vmatpush1.msra.mxu0 %v4111
    %4572 = vmatprep.subr.mxu0 %v4116
    %4573 = vmatpush1.msra.mxu0 %v4115
    %4574 = vmatprep.subr.mxu0 %v4120
    %4575 = vmatpush1.msra.mxu0 %v4119
    %4576 = vmatprep.subr.mxu0 %v4124
    %4577 = vmatpush1.msra.mxu0 %v4123
    %4578 = vmatprep.subr.mxu0 %v4128
    %4579 = vmatpush1.msra.mxu0 %v4127
    %4580 = vmatprep.subr.mxu0 %v4132
    %4581 = vmatpush1.msra.mxu0 %v4131
    %4582 = vmatprep.subr.mxu0 %v4136
    %4583 = vmatpush1.msra.mxu0 %v4135
    %4584 = vmatprep.subr.mxu0 %v4140
    %4585 = vmatpush1.msra.mxu0 %v4139
    %4586 = vmatprep.subr.mxu0 %v4144
    %4587 = vmatpush1.msra.mxu0 %v4143
    %4588 = vmatprep.subr.mxu0 %v4148
    %4589 = vmatpush1.msra.mxu0 %v4147
    %4590 = vmatprep.subr.mxu0 %v4152
    %4591 = vmatpush1.msra.mxu0 %v4151
    %4592 = vmatprep.subr.mxu0 0.0
    %4593 = vmatpush1.msra.mxu0 0.0
    %4594 = vmatprep.subr.mxu0 0.0
    %4595 = vmatpush1.msra.mxu0 0.0
    %4596 = vmatprep.subr.mxu0 0.0
    %4597 = vmatpush1.msra.mxu0 0.0
    %4598 = vmatprep.subr.mxu0 0.0
    %4599 = vmatpush1.msra.mxu0 0.0
    %4600 = vmatprep.subr.mxu0 0.0
    %4601 = vmatpush1.msra.mxu0 0.0
    %4602 = vmatprep.subr.mxu0 0.0
    %4603 = vmatpush1.msra.mxu0 0.0
    %4604 = vmatprep.subr.mxu0 0.0
    %4605 = vmatpush1.msra.mxu0 0.0
    %4606 = vmatprep.subr.mxu0 0.0
    %4607 = vmatpush1.msra.mxu0 0.0
    %4608 = vmatprep.subr.mxu0 0.0
    %4609 = vmatpush1.msra.mxu0 0.0
    %4610 = vmatprep.subr.mxu0 0.0
    %4611 = vmatpush1.msra.mxu0 0.0
    %4612 = vmatprep.subr.mxu0 0.0
    %4613 = vmatpush1.msra.mxu0 0.0
    %4614 = vmatprep.subr.mxu0 0.0
    %4615 = vmatpush1.msra.mxu0 0.0
    %4616 = vmatprep.subr.mxu0 0.0
    %4617 = vmatpush1.msra.mxu0 0.0
    %4618 = vmatprep.subr.mxu0 0.0
    %4619 = vmatpush1.msra.mxu0 0.0
    %4620 = vmatprep.subr.mxu0 0.0
    %4621 = vmatpush1.msra.mxu0 0.0
    %4622 = vmatprep.subr.mxu0 0.0
    %4623 = vmatpush1.msra.mxu0 0.0
    %4624 = vmatprep.mubr.f32.mxu0 0.0
    %4625 = vmatmul.mubr.f32.gmra.mrb[0].mxu0 %v4482
    %v4626 = vpop.f32.mrb[0].mxu0
    %v4627 = vadd.f32 %v4487, %v4626
    %v4628 = vpop.f32.mrb[0].mxu0
    %v4629 = vadd.f32 %v4488, %v4628
    %4630 = vdwg.mxu0
    %v4631 = vmul.f32 %v4556, 0.5
    %v4632 = vmul.f32 %v4558, 0.5
    %v4633 = vmul.f32 %v4627, 0.5
    %v4634 = vtanh.pop %v4631
    %v4635 = vtanh.pop %v4632
    %v4636 = vtanh.pop %v4633
    %v4637 = vmul.f32 %v4634, 0.5
    %v4638 = vmul.f32 %v4635, 0.5
    %v4639 = vmul.f32 %v4636, 0.5
    %v4640 = vadd.f32 %v4637, 0.5
    %v4641 = vadd.f32 %v4638, 0.5
    %v4642 = vadd.f32 %v4639, 0.5
    %v4643 = vtanh.pop %v4629
    %v4644 = vmul.f32 %v4641, %v4480
    %v4645 = vmul.f32 %v4640, %v4643
    %v4646 = vadd.f32 %v4644, %v4645
    %v4647 = vtanh.pop %v4646
    %v4648 = vmul.f32 %v4642, %v4647
    %4649 = vst.msk [vmem:[%s1080] sm:$0xff] %vm743, %v4648
    %4650 = vst.msk [vmem:[%s1082] sm:$0xff] %vm746, %v4648
    %v4651 = vld [vmem:[%s474] sm:$0xff]
    %v4652 = vld [vmem:[%s474 + $0x8] sm:$0xff]
    %v4653 = vld [vmem:[%s474 + $0x10] sm:$0xff]
    %v4654 = vld [vmem:[%s474 + $0x18] sm:$0xff]
    %4655 = vmatprep.subr.mxu0 %v4090
    %4656 = vmatpush1.msra.mxu0 %v4089
    %4657 = vmatprep.subr.mxu0 %v4094
    %4658 = vmatpush1.msra.mxu0 %v4093
    %4659 = vmatprep.subr.mxu0 %v4098
    %4660 = vmatpush1.msra.mxu0 %v4097
    %4661 = vmatprep.subr.mxu0 %v4102
    %4662 = vmatpush1.msra.mxu0 %v4101
    %4663 = vmatprep.subr.mxu0 %v4106
    %4664 = vmatpush1.msra.mxu0 %v4105
    %4665 = vmatprep.subr.mxu0 %v4110
    %4666 = vmatpush1.msra.mxu0 %v4109
    %4667 = vmatprep.subr.mxu0 %v4114
    %4668 = vmatpush1.msra.mxu0 %v4113
    %4669 = vmatprep.subr.mxu0 %v4118
    %4670 = vmatpush1.msra.mxu0 %v4117
    %4671 = vmatprep.subr.mxu0 %v4122
    %4672 = vmatpush1.msra.mxu0 %v4121
    %4673 = vmatprep.subr.mxu0 %v4126
    %4674 = vmatpush1.msra.mxu0 %v4125
    %4675 = vmatprep.subr.mxu0 %v4130
    %4676 = vmatpush1.msra.mxu0 %v4129
    %4677 = vmatprep.subr.mxu0 %v4134
    %4678 = vmatpush1.msra.mxu0 %v4133
    %4679 = vmatprep.subr.mxu0 %v4138
    %4680 = vmatpush1.msra.mxu0 %v4137
    %4681 = vmatprep.subr.mxu0 %v4142
    %4682 = vmatpush1.msra.mxu0 %v4141
    %4683 = vmatprep.subr.mxu0 %v4146
    %4684 = vmatpush1.msra.mxu0 %v4145
    %4685 = vmatprep.subr.mxu0 %v4150
    %4686 = vmatpush1.msra.mxu0 %v4149
    %4687 = vmatprep.subr.mxu0 0.0
    %4688 = vmatpush1.msra.mxu0 0.0
    %4689 = vmatprep.subr.mxu0 0.0
    %4690 = vmatpush1.msra.mxu0 0.0
    %4691 = vmatprep.subr.mxu0 0.0
    %4692 = vmatpush1.msra.mxu0 0.0
    %4693 = vmatprep.subr.mxu0 0.0
    %4694 = vmatpush1.msra.mxu0 0.0
    %4695 = vmatprep.subr.mxu0 0.0
    %4696 = vmatpush1.msra.mxu0 0.0
    %4697 = vmatprep.subr.mxu0 0.0
    %4698 = vmatpush1.msra.mxu0 0.0
    %4699 = vmatprep.subr.mxu0 0.0
    %4700 = vmatpush1.msra.mxu0 0.0
    %4701 = vmatprep.subr.mxu0 0.0
    %4702 = vmatpush1.msra.mxu0 0.0
    %4703 = vmatprep.subr.mxu0 0.0
    %4704 = vmatpush1.msra.mxu0 0.0
    %4705 = vmatprep.subr.mxu0 0.0
    %4706 = vmatpush1.msra.mxu0 0.0
    %4707 = vmatprep.subr.mxu0 0.0
    %4708 = vmatpush1.msra.mxu0 0.0
    %4709 = vmatprep.subr.mxu0 0.0
    %4710 = vmatpush1.msra.mxu0 0.0
    %4711 = vmatprep.subr.mxu0 0.0
    %4712 = vmatpush1.msra.mxu0 0.0
    %4713 = vmatprep.subr.mxu0 0.0
    %4714 = vmatpush1.msra.mxu0 0.0
    %4715 = vmatprep.subr.mxu0 0.0
    %4716 = vmatpush1.msra.mxu0 0.0
    %4717 = vmatprep.subr.mxu0 0.0
    %4718 = vmatpush1.msra.mxu0 0.0
    %4719 = vmatprep.mubr.f32.mxu0 0.0
    %4720 = vmatmul.mubr.f32.gmra.mrb[0].mxu0 %v4648
    %v4721 = vpop.f32.mrb[0].mxu0
    %v4722 = vadd.f32 %v4651, %v4721
    %v4723 = vpop.f32.mrb[0].mxu0
    %v4724 = vadd.f32 %v4652, %v4723
    %4725 = vdwg.mxu0
    %4726 = vmatprep.subr.mxu0 %v4092
    %4727 = vmatpush1.msra.mxu0 %v4091
    %4728 = vmatprep.subr.mxu0 %v4096
    %4729 = vmatpush1.msra.mxu0 %v4095
    %4730 = vmatprep.subr.mxu0 %v4100
    %4731 = vmatpush1.msra.mxu0 %v4099
    %4732 = vmatprep.subr.mxu0 %v4104
    %4733 = vmatpush1.msra.mxu0 %v4103
    %4734 = vmatprep.subr.mxu0 %v4108
    %4735 = vmatpush1.msra.mxu0 %v4107
    %4736 = vmatprep.subr.mxu0 %v4112
    %4737 = vmatpush1.msra.mxu0 %v4111
    %4738 = vmatprep.subr.mxu0 %v4116
    %4739 = vmatpush1.msra.mxu0 %v4115
    %4740 = vmatprep.subr.mxu0 %v4120
    %4741 = vmatpush1.msra.mxu0 %v4119
    %4742 = vmatprep.subr.mxu0 %v4124
    %4743 = vmatpush1.msra.mxu0 %v4123
    %4744 = vmatprep.subr.mxu0 %v4128
    %4745 = vmatpush1.msra.mxu0 %v4127
    %4746 = vmatprep.subr.mxu0 %v4132
    %4747 = vmatpush1.msra.mxu0 %v4131
    %4748 = vmatprep.subr.mxu0 %v4136
    %4749 = vmatpush1.msra.mxu0 %v4135
    %4750 = vmatprep.subr.mxu0 %v4140
    %4751 = vmatpush1.msra.mxu0 %v4139
    %4752 = vmatprep.subr.mxu0 %v4144
    %4753 = vmatpush1.msra.mxu0 %v4143
    %4754 = vmatprep.subr.mxu0 %v4148
    %4755 = vmatpush1.msra.mxu0 %v4147
    %4756 = vmatprep.subr.mxu0 %v4152
    %4757 = vmatpush1.msra.mxu0 %v4151
    %4758 = vmatprep.subr.mxu0 0.0
    %4759 = vmatpush1.msra.mxu0 0.0
    %4760 = vmatprep.subr.mxu0 0.0
    %4761 = vmatpush1.msra.mxu0 0.0
    %4762 = vmatprep.subr.mxu0 0.0
    %4763 = vmatpush1.msra.mxu0 0.0
    %4764 = vmatprep.subr.mxu0 0.0
    %4765 = vmatpush1.msra.mxu0 0.0
    %4766 = vmatprep.subr.mxu0 0.0
    %4767 = vmatpush1.msra.mxu0 0.0
    %4768 = vmatprep.subr.mxu0 0.0
    %4769 = vmatpush1.msra.mxu0 0.0
    %4770 = vmatprep.subr.mxu0 0.0
    %4771 = vmatpush1.msra.mxu0 0.0
    %4772 = vmatprep.subr.mxu0 0.0
    %4773 = vmatpush1.msra.mxu0 0.0
    %4774 = vmatprep.subr.mxu0 0.0
    %4775 = vmatpush1.msra.mxu0 0.0
    %4776 = vmatprep.subr.mxu0 0.0
    %4777 = vmatpush1.msra.mxu0 0.0
    %4778 = vmatprep.subr.mxu0 0.0
    %4779 = vmatpush1.msra.mxu0 0.0
    %4780 = vmatprep.subr.mxu0 0.0
    %4781 = vmatpush1.msra.mxu0 0.0
    %4782 = vmatprep.subr.mxu0 0.0
    %4783 = vmatpush1.msra.mxu0 0.0
    %4784 = vmatprep.subr.mxu0 0.0
    %4785 = vmatpush1.msra.mxu0 0.0
    %4786 = vmatprep.subr.mxu0 0.0
    %4787 = vmatpush1.msra.mxu0 0.0
    %4788 = vmatprep.subr.mxu0 0.0
    %4789 = vmatpush1.msra.mxu0 0.0
    %4790 = vmatprep.mubr.f32.mxu0 0.0
    %4791 = vmatmul.mubr.f32.gmra.mrb[0].mxu0 %v4648
    %v4792 = vpop.f32.mrb[0].mxu0
    %v4793 = vadd.f32 %v4653, %v4792
    %v4794 = vpop.f32.mrb[0].mxu0
    %v4795 = vadd.f32 %v4654, %v4794
    %4796 = vdwg.mxu0
    %v4797 = vmul.f32 %v4722, 0.5
    %v4798 = vmul.f32 %v4724, 0.5
    %v4799 = vmul.f32 %v4793, 0.5
    %v4800 = vtanh.pop %v4797
    %v4801 = vtanh.pop %v4798
    %v4802 = vtanh.pop %v4799
    %v4803 = vmul.f32 %v4800, 0.5
    %v4804 = vmul.f32 %v4801, 0.5
    %v4805 = vmul.f32 %v4802, 0.5
    %v4806 = vadd.f32 %v4803, 0.5
    %v4807 = vadd.f32 %v4804, 0.5
    %v4808 = vadd.f32 %v4805, 0.5
    %v4809 = vtanh.pop %v4795
    %v4810 = vmul.f32 %v4807, %v4646
    %v4811 = vmul.f32 %v4806, %v4809
    %v4812 = vadd.f32 %v4810, %v4811
    %v4813 = vtanh.pop %v4812
    %v4814 = vmul.f32 %v4808, %v4813
    %4815 = vst.msk [vmem:[%s1248] sm:$0xff] %vm743, %v4814
    %4816 = vst.msk [vmem:[%s1250] sm:$0xff] %vm746, %v4814
    %v4817 = vld [vmem:[%s483] sm:$0xff]
    %v4818 = vld [vmem:[%s483 + $0x8] sm:$0xff]
    %v4819 = vld [vmem:[%s483 + $0x10] sm:$0xff]
    %v4820 = vld [vmem:[%s483 + $0x18] sm:$0xff]
    %4821 = vmatprep.subr.mxu0 %v4090
    %4822 = vmatpush1.msra.mxu0 %v4089
    %4823 = vmatprep.subr.mxu0 %v4094
    %4824 = vmatpush1.msra.mxu0 %v4093
    %4825 = vmatprep.subr.mxu0 %v4098
    %4826 = vmatpush1.msra.mxu0 %v4097
    %4827 = vmatprep.subr.mxu0 %v4102
    %4828 = vmatpush1.msra.mxu0 %v4101
    %4829 = vmatprep.subr.mxu0 %v4106
    %4830 = vmatpush1.msra.mxu0 %v4105
    %4831 = vmatprep.subr.mxu0 %v4110
    %4832 = vmatpush1.msra.mxu0 %v4109
    %4833 = vmatprep.subr.mxu0 %v4114
    %4834 = vmatpush1.msra.mxu0 %v4113
    %4835 = vmatprep.subr.mxu0 %v4118
    %4836 = vmatpush1.msra.mxu0 %v4117
    %4837 = vmatprep.subr.mxu0 %v4122
    %4838 = vmatpush1.msra.mxu0 %v4121
    %4839 = vmatprep.subr.mxu0 %v4126
    %4840 = vmatpush1.msra.mxu0 %v4125
    %4841 = vmatprep.subr.mxu0 %v4130
    %4842 = vmatpush1.msra.mxu0 %v4129
    %4843 = vmatprep.subr.mxu0 %v4134
    %4844 = vmatpush1.msra.mxu0 %v4133
    %4845 = vmatprep.subr.mxu0 %v4138
    %4846 = vmatpush1.msra.mxu0 %v4137
    %4847 = vmatprep.subr.mxu0 %v4142
    %4848 = vmatpush1.msra.mxu0 %v4141
    %4849 = vmatprep.subr.mxu0 %v4146
    %4850 = vmatpush1.msra.mxu0 %v4145
    %4851 = vmatprep.subr.mxu0 %v4150
    %4852 = vmatpush1.msra.mxu0 %v4149
    %4853 = vmatprep.subr.mxu0 0.0
    %4854 = vmatpush1.msra.mxu0 0.0
    %4855 = vmatprep.subr.mxu0 0.0
    %4856 = vmatpush1.msra.mxu0 0.0
    %4857 = vmatprep.subr.mxu0 0.0
    %4858 = vmatpush1.msra.mxu0 0.0
    %4859 = vmatprep.subr.mxu0 0.0
    %4860 = vmatpush1.msra.mxu0 0.0
    %4861 = vmatprep.subr.mxu0 0.0
    %4862 = vmatpush1.msra.mxu0 0.0
    %4863 = vmatprep.subr.mxu0 0.0
    %4864 = vmatpush1.msra.mxu0 0.0
    %4865 = vmatprep.subr.mxu0 0.0
    %4866 = vmatpush1.msra.mxu0 0.0
    %4867 = vmatprep.subr.mxu0 0.0
    %4868 = vmatpush1.msra.mxu0 0.0
    %4869 = vmatprep.subr.mxu0 0.0
    %4870 = vmatpush1.msra.mxu0 0.0
    %4871 = vmatprep.subr.mxu0 0.0
    %4872 = vmatpush1.msra.mxu0 0.0
    %4873 = vmatprep.subr.mxu0 0.0
    %4874 = vmatpush1.msra.mxu0 0.0
    %4875 = vmatprep.subr.mxu0 0.0
    %4876 = vmatpush1.msra.mxu0 0.0
    %4877 = vmatprep.subr.mxu0 0.0
    %4878 = vmatpush1.msra.mxu0 0.0
    %4879 = vmatprep.subr.mxu0 0.0
    %4880 = vmatpush1.msra.mxu0 0.0
    %4881 = vmatprep.subr.mxu0 0.0
    %4882 = vmatpush1.msra.mxu0 0.0
    %4883 = vmatprep.subr.mxu0 0.0
    %4884 = vmatpush1.msra.mxu0 0.0
    %4885 = vmatprep.mubr.f32.mxu0 0.0
    %4886 = vmatmul.mubr.f32.gmra.mrb[0].mxu0 %v4814
    %v4887 = vpop.f32.mrb[0].mxu0
    %v4888 = vadd.f32 %v4817, %v4887
    %v4889 = vpop.f32.mrb[0].mxu0
    %v4890 = vadd.f32 %v4818, %v4889
    %4891 = vdwg.mxu0
    %4892 = vmatprep.subr.mxu0 %v4092
    %4893 = vmatpush1.msra.mxu0 %v4091
    %4894 = vmatprep.subr.mxu0 %v4096
    %4895 = vmatpush1.msra.mxu0 %v4095
    %4896 = vmatprep.subr.mxu0 %v4100
    %4897 = vmatpush1.msra.mxu0 %v4099
    %4898 = vmatprep.subr.mxu0 %v4104
    %4899 = vmatpush1.msra.mxu0 %v4103
    %4900 = vmatprep.subr.mxu0 %v4108
    %4901 = vmatpush1.msra.mxu0 %v4107
    %4902 = vmatprep.subr.mxu0 %v4112
    %4903 = vmatpush1.msra.mxu0 %v4111
    %4904 = vmatprep.subr.mxu0 %v4116
    %4905 = vmatpush1.msra.mxu0 %v4115
    %4906 = vmatprep.subr.mxu0 %v4120
    %4907 = vmatpush1.msra.mxu0 %v4119
    %4908 = vmatprep.subr.mxu0 %v4124
    %4909 = vmatpush1.msra.mxu0 %v4123
    %4910 = vmatprep.subr.mxu0 %v4128
    %4911 = vmatpush1.msra.mxu0 %v4127
    %4912 = vmatprep.subr.mxu0 %v4132
    %4913 = vmatpush1.msra.mxu0 %v4131
    %4914 = vmatprep.subr.mxu0 %v4136
    %4915 = vmatpush1.msra.mxu0 %v4135
    %4916 = vmatprep.subr.mxu0 %v4140
    %4917 = vmatpush1.msra.mxu0 %v4139
    %4918 = vmatprep.subr.mxu0 %v4144
    %4919 = vmatpush1.msra.mxu0 %v4143
    %4920 = vmatprep.subr.mxu0 %v4148
    %4921 = vmatpush1.msra.mxu0 %v4147
    %4922 = vmatprep.subr.mxu0 %v4152
    %4923 = vmatpush1.msra.mxu0 %v4151
    %4924 = vmatprep.subr.mxu0 0.0
    %4925 = vmatpush1.msra.mxu0 0.0
    %4926 = vmatprep.subr.mxu0 0.0
    %4927 = vmatpush1.msra.mxu0 0.0
    %4928 = vmatprep.subr.mxu0 0.0
    %4929 = vmatpush1.msra.mxu0 0.0
    %4930 = vmatprep.subr.mxu0 0.0
    %4931 = vmatpush1.msra.mxu0 0.0
    %4932 = vmatprep.subr.mxu0 0.0
    %4933 = vmatpush1.msra.mxu0 0.0
    %4934 = vmatprep.subr.mxu0 0.0
    %4935 = vmatpush1.msra.mxu0 0.0
    %4936 = vmatprep.subr.mxu0 0.0
    %4937 = vmatpush1.msra.mxu0 0.0
    %4938 = vmatprep.subr.mxu0 0.0
    %4939 = vmatpush1.msra.mxu0 0.0
    %4940 = vmatprep.subr.mxu0 0.0
    %4941 = vmatpush1.msra.mxu0 0.0
    %4942 = vmatprep.subr.mxu0 0.0
    %4943 = vmatpush1.msra.mxu0 0.0
    %4944 = vmatprep.subr.mxu0 0.0
    %4945 = vmatpush1.msra.mxu0 0.0
    %4946 = vmatprep.subr.mxu0 0.0
    %4947 = vmatpush1.msra.mxu0 0.0
    %4948 = vmatprep.subr.mxu0 0.0
    %4949 = vmatpush1.msra.mxu0 0.0
    %4950 = vmatprep.subr.mxu0 0.0
    %4951 = vmatpush1.msra.mxu0 0.0
    %4952 = vmatprep.subr.mxu0 0.0
    %4953 = vmatpush1.msra.mxu0 0.0
    %4954 = vmatprep.subr.mxu0 0.0
    %4955 = vmatpush1.msra.mxu0 0.0
    %4956 = vmatprep.mubr.f32.mxu0 0.0
    %4957 = vmatmul.mubr.f32.gmra.mrb[0].mxu0 %v4814
    %v4958 = vpop.f32.mrb[0].mxu0
    %v4959 = vadd.f32 %v4819, %v4958
    %v4960 = vpop.f32.mrb[0].mxu0
    %v4961 = vadd.f32 %v4820, %v4960
    %4962 = vdwg.mxu0
    %v4963 = vmul.f32 %v4888, 0.5
    %v4964 = vmul.f32 %v4890, 0.5
    %v4965 = vmul.f32 %v4959, 0.5
    %v4966 = vtanh.pop %v4963
    %v4967 = vtanh.pop %v4964
    %v4968 = vtanh.pop %v4965
    %v4969 = vmul.f32 %v4966, 0.5
    %v4970 = vmul.f32 %v4967, 0.5
    %v4971 = vmul.f32 %v4968, 0.5
    %v4972 = vadd.f32 %v4969, 0.5
    %v4973 = vadd.f32 %v4970, 0.5
    %v4974 = vadd.f32 %v4971, 0.5
    %v4975 = vtanh.pop %v4961
    %v4976 = vmul.f32 %v4973, %v4812
    %v4977 = vmul.f32 %v4972, %v4975
    %v4978 = vadd.f32 %v4976, %v4977
    %v4979 = vtanh.pop %v4978
    %v4980 = vmul.f32 %v4974, %v4979
    %4981 = vst.msk [vmem:[%s1250] sm:$0xff] %vm743, %v4980
    %4982 = vst.msk [vmem:[%s1248] sm:$0xff] %vm746, %v4980
    %v4983 = vld [vmem:[%s492] sm:$0xff]
    %v4984 = vld [vmem:[%s492 + $0x8] sm:$0xff]
    %v4985 = vld [vmem:[%s492 + $0x10] sm:$0xff]
    %v4986 = vld [vmem:[%s492 + $0x18] sm:$0xff]
    %4987 = vmatprep.subr.mxu0 %v4090
    %4988 = vmatpush1.msra.mxu0 %v4089
    %4989 = vmatprep.subr.mxu0 %v4094
    %4990 = vmatpush1.msra.mxu0 %v4093
    %4991 = vmatprep.subr.mxu0 %v4098
    %4992 = vmatpush1.msra.mxu0 %v4097
    %4993 = vmatprep.subr.mxu0 %v4102
    %4994 = vmatpush1.msra.mxu0 %v4101
    %4995 = vmatprep.subr.mxu0 %v4106
    %4996 = vmatpush1.msra.mxu0 %v4105
    %4997 = vmatprep.subr.mxu0 %v4110
    %4998 = vmatpush1.msra.mxu0 %v4109
    %4999 = vmatprep.subr.mxu0 %v4114
    %5000 = vmatpush1.msra.mxu0 %v4113
    %5001 = vmatprep.subr.mxu0 %v4118
    %5002 = vmatpush1.msra.mxu0 %v4117
    %5003 = vmatprep.subr.mxu0 %v4122
    %5004 = vmatpush1.msra.mxu0 %v4121
    %5005 = vmatprep.subr.mxu0 %v4126
    %5006 = vmatpush1.msra.mxu0 %v4125
    %5007 = vmatprep.subr.mxu0 %v4130
    %5008 = vmatpush1.msra.mxu0 %v4129
    %5009 = vmatprep.subr.mxu0 %v4134
    %5010 = vmatpush1.msra.mxu0 %v4133
    %5011 = vmatprep.subr.mxu0 %v4138
    %5012 = vmatpush1.msra.mxu0 %v4137
    %5013 = vmatprep.subr.mxu0 %v4142
    %5014 = vmatpush1.msra.mxu0 %v4141
    %5015 = vmatprep.subr.mxu0 %v4146
    %5016 = vmatpush1.msra.mxu0 %v4145
    %5017 = vmatprep.subr.mxu0 %v4150
    %5018 = vmatpush1.msra.mxu0 %v4149
    %5019 = vmatprep.subr.mxu0 0.0
    %5020 = vmatpush1.msra.mxu0 0.0
    %5021 = vmatprep.subr.mxu0 0.0
    %5022 = vmatpush1.msra.mxu0 0.0
    %5023 = vmatprep.subr.mxu0 0.0
    %5024 = vmatpush1.msra.mxu0 0.0
    %5025 = vmatprep.subr.mxu0 0.0
    %5026 = vmatpush1.msra.mxu0 0.0
    %5027 = vmatprep.subr.mxu0 0.0
    %5028 = vmatpush1.msra.mxu0 0.0
    %5029 = vmatprep.subr.mxu0 0.0
    %5030 = vmatpush1.msra.mxu0 0.0
    %5031 = vmatprep.subr.mxu0 0.0
    %5032 = vmatpush1.msra.mxu0 0.0
    %5033 = vmatprep.subr.mxu0 0.0
    %5034 = vmatpush1.msra.mxu0 0.0
    %5035 = vmatprep.subr.mxu0 0.0
    %5036 = vmatpush1.msra.mxu0 0.0
    %5037 = vmatprep.subr.mxu0 0.0
    %5038 = vmatpush1.msra.mxu0 0.0
    %5039 = vmatprep.subr.mxu0 0.0
    %5040 = vmatpush1.msra.mxu0 0.0
    %5041 = vmatprep.subr.mxu0 0.0
    %5042 = vmatpush1.msra.mxu0 0.0
    %5043 = vmatprep.subr.mxu0 0.0
    %5044 = vmatpush1.msra.mxu0 0.0
    %5045 = vmatprep.subr.mxu0 0.0
    %5046 = vmatpush1.msra.mxu0 0.0
    %5047 = vmatprep.subr.mxu0 0.0
    %5048 = vmatpush1.msra.mxu0 0.0
    %5049 = vmatprep.subr.mxu0 0.0
    %5050 = vmatpush1.msra.mxu0 0.0
    %5051 = vmatprep.mubr.f32.mxu0 0.0
    %5052 = vmatmul.mubr.f32.gmra.mrb[0].mxu0 %v4980
    %v5053 = vpop.f32.mrb[0].mxu0
    %v5054 = vadd.f32 %v4983, %v5053
    %v5055 = vpop.f32.mrb[0].mxu0
    %v5056 = vadd.f32 %v4984, %v5055
    %5057 = vdwg.mxu0
    %5058 = vmatprep.subr.mxu0 %v4092
    %5059 = vmatpush1.msra.mxu0 %v4091
    %5060 = vmatprep.subr.mxu0 %v4096
    %5061 = vmatpush1.msra.mxu0 %v4095
    %5062 = vmatprep.subr.mxu0 %v4100
    %5063 = vmatpush1.msra.mxu0 %v4099
    %5064 = vmatprep.subr.mxu0 %v4104
    %5065 = vmatpush1.msra.mxu0 %v4103
    %5066 = vmatprep.subr.mxu0 %v4108
    %5067 = vmatpush1.msra.mxu0 %v4107
    %5068 = vmatprep.subr.mxu0 %v4112
    %5069 = vmatpush1.msra.mxu0 %v4111
    %5070 = vmatprep.subr.mxu0 %v4116
    %5071 = vmatpush1.msra.mxu0 %v4115
    %5072 = vmatprep.subr.mxu0 %v4120
    %5073 = vmatpush1.msra.mxu0 %v4119
    %5074 = vmatprep.subr.mxu0 %v4124
    %5075 = vmatpush1.msra.mxu0 %v4123
    %5076 = vmatprep.subr.mxu0 %v4128
    %5077 = vmatpush1.msra.mxu0 %v4127
    %5078 = vmatprep.subr.mxu0 %v4132
    %5079 = vmatpush1.msra.mxu0 %v4131
    %5080 = vmatprep.subr.mxu0 %v4136
    %5081 = vmatpush1.msra.mxu0 %v4135
    %5082 = vmatprep.subr.mxu0 %v4140
    %5083 = vmatpush1.msra.mxu0 %v4139
    %5084 = vmatprep.subr.mxu0 %v4144
    %5085 = vmatpush1.msra.mxu0 %v4143
    %5086 = vmatprep.subr.mxu0 %v4148
    %5087 = vmatpush1.msra.mxu0 %v4147
    %5088 = vmatprep.subr.mxu0 %v4152
    %5089 = vmatpush1.msra.mxu0 %v4151
    %5090 = vmatprep.subr.mxu0 0.0
    %5091 = vmatpush1.msra.mxu0 0.0
    %5092 = vmatprep.subr.mxu0 0.0
    %5093 = vmatpush1.msra.mxu0 0.0
    %5094 = vmatprep.subr.mxu0 0.0
    %5095 = vmatpush1.msra.mxu0 0.0
    %5096 = vmatprep.subr.mxu0 0.0
    %5097 = vmatpush1.msra.mxu0 0.0
    %5098 = vmatprep.subr.mxu0 0.0
    %5099 = vmatpush1.msra.mxu0 0.0
    %5100 = vmatprep.subr.mxu0 0.0
    %5101 = vmatpush1.msra.mxu0 0.0
    %5102 = vmatprep.subr.mxu0 0.0
    %5103 = vmatpush1.msra.mxu0 0.0
    %5104 = vmatprep.subr.mxu0 0.0
    %5105 = vmatpush1.msra.mxu0 0.0
    %5106 = vmatprep.subr.mxu0 0.0
    %5107 = vmatpush1.msra.mxu0 0.0
    %5108 = vmatprep.subr.mxu0 0.0
    %5109 = vmatpush1.msra.mxu0 0.0
    %5110 = vmatprep.subr.mxu0 0.0
    %5111 = vmatpush1.msra.mxu0 0.0
    %5112 = vmatprep.subr.mxu0 0.0
    %5113 = vmatpush1.msra.mxu0 0.0
    %5114 = vmatprep.subr.mxu0 0.0
    %5115 = vmatpush1.msra.mxu0 0.0
    %5116 = vmatprep.subr.mxu0 0.0
    %5117 = vmatpush1.msra.mxu0 0.0
    %5118 = vmatprep.subr.mxu0 0.0
    %5119 = vmatpush1.msra.mxu0 0.0
    %5120 = vmatprep.subr.mxu0 0.0
    %5121 = vmatpush1.msra.mxu0 0.0
    %5122 = vmatprep.mubr.f32.mxu0 0.0
    %5123 = vmatmul.mubr.f32.gmra.mrb[0].mxu0 %v4980
    %v5124 = vpop.f32.mrb[0].mxu0
    %v5125 = vadd.f32 %v4985, %v5124
    %v5126 = vpop.f32.mrb[0].mxu0
    %v5127 = vadd.f32 %v4986, %v5126
    %5128 = vdwg.mxu0
    %v5129 = vmul.f32 %v5054, 0.5
    %v5130 = vmul.f32 %v5056, 0.5
    %v5131 = vmul.f32 %v5125, 0.5
    %v5132 = vtanh.pop %v5129
    %v5133 = vtanh.pop %v5130
    %v5134 = vtanh.pop %v5131
    %v5135 = vmul.f32 %v5132, 0.5
    %v5136 = vmul.f32 %v5133, 0.5
    %v5137 = vmul.f32 %v5134, 0.5
    %v5138 = vadd.f32 %v5135, 0.5
    %v5139 = vadd.f32 %v5136, 0.5
    %v5140 = vadd.f32 %v5137, 0.5
    %v5141 = vtanh.pop %v5127
    %v5142 = vmul.f32 %v5139, %v4978
    %v5143 = vmul.f32 %v5138, %v5141
    %v5144 = vadd.f32 %v5142, %v5143
    %v5145 = vtanh.pop %v5144
    %v5146 = vmul.f32 %v5140, %v5145
    %5147 = vst.msk [vmem:[%s1082] sm:$0xff] %vm743, %v5146
    %5148 = vst.msk [vmem:[%s1080] sm:$0xff] %vm746, %v5146
    %v5149 = vld [vmem:[%s501] sm:$0xff]
    %v5150 = vld [vmem:[%s501 + $0x8] sm:$0xff]
    %v5151 = vld [vmem:[%s501 + $0x10] sm:$0xff]
    %v5152 = vld [vmem:[%s501 + $0x18] sm:$0xff]
    %5153 = vmatprep.subr.mxu0 %v4090
    %5154 = vmatpush1.msra.mxu0 %v4089
    %5155 = vmatprep.subr.mxu0 %v4094
    %5156 = vmatpush1.msra.mxu0 %v4093
    %5157 = vmatprep.subr.mxu0 %v4098
    %5158 = vmatpush1.msra.mxu0 %v4097
    %5159 = vmatprep.subr.mxu0 %v4102
    %5160 = vmatpush1.msra.mxu0 %v4101
    %5161 = vmatprep.subr.mxu0 %v4106
    %5162 = vmatpush1.msra.mxu0 %v4105
    %5163 = vmatprep.subr.mxu0 %v4110
    %5164 = vmatpush1.msra.mxu0 %v4109
    %5165 = vmatprep.subr.mxu0 %v4114
    %5166 = vmatpush1.msra.mxu0 %v4113
    %5167 = vmatprep.subr.mxu0 %v4118
    %5168 = vmatpush1.msra.mxu0 %v4117
    %5169 = vmatprep.subr.mxu0 %v4122
    %5170 = vmatpush1.msra.mxu0 %v4121
    %5171 = vmatprep.subr.mxu0 %v4126
    %5172 = vmatpush1.msra.mxu0 %v4125
    %5173 = vmatprep.subr.mxu0 %v4130
    %5174 = vmatpush1.msra.mxu0 %v4129
    %5175 = vmatprep.subr.mxu0 %v4134
    %5176 = vmatpush1.msra.mxu0 %v4133
    %5177 = vmatprep.subr.mxu0 %v4138
    %5178 = vmatpush1.msra.mxu0 %v4137
    %5179 = vmatprep.subr.mxu0 %v4142
    %5180 = vmatpush1.msra.mxu0 %v4141
    %5181 = vmatprep.subr.mxu0 %v4146
    %5182 = vmatpush1.msra.mxu0 %v4145
    %5183 = vmatprep.subr.mxu0 %v4150
    %5184 = vmatpush1.msra.mxu0 %v4149
    %5185 = vmatprep.subr.mxu0 0.0
    %5186 = vmatpush1.msra.mxu0 0.0
    %5187 = vmatprep.subr.mxu0 0.0
    %5188 = vmatpush1.msra.mxu0 0.0
    %5189 = vmatprep.subr.mxu0 0.0
    %5190 = vmatpush1.msra.mxu0 0.0
    %5191 = vmatprep.subr.mxu0 0.0
    %5192 = vmatpush1.msra.mxu0 0.0
    %5193 = vmatprep.subr.mxu0 0.0
    %5194 = vmatpush1.msra.mxu0 0.0
    %5195 = vmatprep.subr.mxu0 0.0
    %5196 = vmatpush1.msra.mxu0 0.0
    %5197 = vmatprep.subr.mxu0 0.0
    %5198 = vmatpush1.msra.mxu0 0.0
    %5199 = vmatprep.subr.mxu0 0.0
    %5200 = vmatpush1.msra.mxu0 0.0
    %5201 = vmatprep.subr.mxu0 0.0
    %5202 = vmatpush1.msra.mxu0 0.0
    %5203 = vmatprep.subr.mxu0 0.0
    %5204 = vmatpush1.msra.mxu0 0.0
    %5205 = vmatprep.subr.mxu0 0.0
    %5206 = vmatpush1.msra.mxu0 0.0
    %5207 = vmatprep.subr.mxu0 0.0
    %5208 = vmatpush1.msra.mxu0 0.0
    %5209 = vmatprep.subr.mxu0 0.0
    %5210 = vmatpush1.msra.mxu0 0.0
    %5211 = vmatprep.subr.mxu0 0.0
    %5212 = vmatpush1.msra.mxu0 0.0
    %5213 = vmatprep.subr.mxu0 0.0
    %5214 = vmatpush1.msra.mxu0 0.0
    %5215 = vmatprep.subr.mxu0 0.0
    %5216 = vmatpush1.msra.mxu0 0.0
    %5217 = vmatprep.mubr.f32.mxu0 0.0
    %5218 = vmatmul.mubr.f32.gmra.mrb[0].mxu0 %v5146
    %v5219 = vpop.f32.mrb[0].mxu0
    %v5220 = vadd.f32 %v5149, %v5219
    %v5221 = vpop.f32.mrb[0].mxu0
    %v5222 = vadd.f32 %v5150, %v5221
    %5223 = vdwg.mxu0
    %5224 = vmatprep.subr.mxu0 %v4092
    %5225 = vmatpush1.msra.mxu0 %v4091
    %5226 = vmatprep.subr.mxu0 %v4096
    %5227 = vmatpush1.msra.mxu0 %v4095
    %5228 = vmatprep.subr.mxu0 %v4100
    %5229 = vmatpush1.msra.mxu0 %v4099
    %5230 = vmatprep.subr.mxu0 %v4104
    %5231 = vmatpush1.msra.mxu0 %v4103
    %5232 = vmatprep.subr.mxu0 %v4108
    %5233 = vmatpush1.msra.mxu0 %v4107
    %5234 = vmatprep.subr.mxu0 %v4112
    %5235 = vmatpush1.msra.mxu0 %v4111
    %5236 = vmatprep.subr.mxu0 %v4116
    %5237 = vmatpush1.msra.mxu0 %v4115
    %5238 = vmatprep.subr.mxu0 %v4120
    %5239 = vmatpush1.msra.mxu0 %v4119
    %5240 = vmatprep.subr.mxu0 %v4124
    %5241 = vmatpush1.msra.mxu0 %v4123
    %5242 = vmatprep.subr.mxu0 %v4128
    %5243 = vmatpush1.msra.mxu0 %v4127
    %5244 = vmatprep.subr.mxu0 %v4132
    %5245 = vmatpush1.msra.mxu0 %v4131
    %5246 = vmatprep.subr.mxu0 %v4136
    %5247 = vmatpush1.msra.mxu0 %v4135
    %5248 = vmatprep.subr.mxu0 %v4140
    %5249 = vmatpush1.msra.mxu0 %v4139
    %5250 = vmatprep.subr.mxu0 %v4144
    %5251 = vmatpush1.msra.mxu0 %v4143
    %5252 = vmatprep.subr.mxu0 %v4148
    %5253 = vmatpush1.msra.mxu0 %v4147
    %5254 = vmatprep.subr.mxu0 %v4152
    %5255 = vmatpush1.msra.mxu0 %v4151
    %5256 = vmatprep.subr.mxu0 0.0
    %5257 = vmatpush1.msra.mxu0 0.0
    %5258 = vmatprep.subr.mxu0 0.0
    %5259 = vmatpush1.msra.mxu0 0.0
    %5260 = vmatprep.subr.mxu0 0.0
    %5261 = vmatpush1.msra.mxu0 0.0
    %5262 = vmatprep.subr.mxu0 0.0
    %5263 = vmatpush1.msra.mxu0 0.0
    %5264 = vmatprep.subr.mxu0 0.0
    %5265 = vmatpush1.msra.mxu0 0.0
    %5266 = vmatprep.subr.mxu0 0.0
    %5267 = vmatpush1.msra.mxu0 0.0
    %5268 = vmatprep.subr.mxu0 0.0
    %5269 = vmatpush1.msra.mxu0 0.0
    %5270 = vmatprep.subr.mxu0 0.0
    %5271 = vmatpush1.msra.mxu0 0.0
    %5272 = vmatprep.subr.mxu0 0.0
    %5273 = vmatpush1.msra.mxu0 0.0
    %5274 = vmatprep.subr.mxu0 0.0
    %5275 = vmatpush1.msra.mxu0 0.0
    %5276 = vmatprep.subr.mxu0 0.0
    %5277 = vmatpush1.msra.mxu0 0.0
    %5278 = vmatprep.subr.mxu0 0.0
    %5279 = vmatpush1.msra.mxu0 0.0
    %5280 = vmatprep.subr.mxu0 0.0
    %5281 = vmatpush1.msra.mxu0 0.0
    %5282 = vmatprep.subr.mxu0 0.0
    %5283 = vmatpush1.msra.mxu0 0.0
    %5284 = vmatprep.subr.mxu0 0.0
    %5285 = vmatpush1.msra.mxu0 0.0
    %5286 = vmatprep.subr.mxu0 0.0
    %5287 = vmatpush1.msra.mxu0 0.0
    %5288 = vmatprep.mubr.f32.mxu0 0.0
    %5289 = vmatmul.mubr.f32.gmra.mrb[0].mxu0 %v5146
    %v5290 = vpop.f32.mrb[0].mxu0
    %v5291 = vadd.f32 %v5151, %v5290
    %v5292 = vpop.f32.mrb[0].mxu0
    %v5293 = vadd.f32 %v5152, %v5292
    %5294 = vdwg.mxu0
    %v5295 = vmul.f32 %v5220, 0.5
    %v5296 = vmul.f32 %v5222, 0.5
    %v5297 = vmul.f32 %v5291, 0.5
    %v5298 = vtanh.pop %v5295
    %v5299 = vtanh.pop %v5296
    %v5300 = vtanh.pop %v5297
    %v5301 = vmul.f32 %v5298, 0.5
    %v5302 = vmul.f32 %v5299, 0.5
    %v5303 = vmul.f32 %v5300, 0.5
    %v5304 = vadd.f32 %v5301, 0.5
    %v5305 = vadd.f32 %v5302, 0.5
    %v5306 = vadd.f32 %v5303, 0.5
    %v5307 = vtanh.pop %v5293
    %v5308 = vmul.f32 %v5305, %v5144
    %v5309 = vmul.f32 %v5304, %v5307
    %v5310 = vadd.f32 %v5308, %v5309
    %v5311 = vtanh.pop %v5310
    %v5312 = vmul.f32 %v5306, %v5311
    %5313 = vst.msk [vmem:[%s914] sm:$0xff] %vm743, %v5312
    %5314 = vst.msk [vmem:[%s912] sm:$0xff] %vm746, %v5312
    %v5315 = vld [vmem:[%s510] sm:$0xff]
    %v5316 = vld [vmem:[%s510 + $0x8] sm:$0xff]
    %v5317 = vld [vmem:[%s510 + $0x10] sm:$0xff]
    %v5318 = vld [vmem:[%s510 + $0x18] sm:$0xff]
    %5319 = vmatprep.subr.mxu0 %v4090
    %5320 = vmatpush1.msra.mxu0 %v4089
    %5321 = vmatprep.subr.mxu0 %v4094
    %5322 = vmatpush1.msra.mxu0 %v4093
    %5323 = vmatprep.subr.mxu0 %v4098
    %5324 = vmatpush1.msra.mxu0 %v4097
    %5325 = vmatprep.subr.mxu0 %v4102
    %5326 = vmatpush1.msra.mxu0 %v4101
    %5327 = vmatprep.subr.mxu0 %v4106
    %5328 = vmatpush1.msra.mxu0 %v4105
    %5329 = vmatprep.subr.mxu0 %v4110
    %5330 = vmatpush1.msra.mxu0 %v4109
    %5331 = vmatprep.subr.mxu0 %v4114
    %5332 = vmatpush1.msra.mxu0 %v4113
    %5333 = vmatprep.subr.mxu0 %v4118
    %5334 = vmatpush1.msra.mxu0 %v4117
    %5335 = vmatprep.subr.mxu0 %v4122
    %5336 = vmatpush1.msra.mxu0 %v4121
    %5337 = vmatprep.subr.mxu0 %v4126
    %5338 = vmatpush1.msra.mxu0 %v4125
    %5339 = vmatprep.subr.mxu0 %v4130
    %5340 = vmatpush1.msra.mxu0 %v4129
    %5341 = vmatprep.subr.mxu0 %v4134
    %5342 = vmatpush1.msra.mxu0 %v4133
    %5343 = vmatprep.subr.mxu0 %v4138
    %5344 = vmatpush1.msra.mxu0 %v4137
    %5345 = vmatprep.subr.mxu0 %v4142
    %5346 = vmatpush1.msra.mxu0 %v4141
    %5347 = vmatprep.subr.mxu0 %v4146
    %5348 = vmatpush1.msra.mxu0 %v4145
    %5349 = vmatprep.subr.mxu0 %v4150
    %5350 = vmatpush1.msra.mxu0 %v4149
    %5351 = vmatprep.subr.mxu0 0.0
    %5352 = vmatpush1.msra.mxu0 0.0
    %5353 = vmatprep.subr.mxu0 0.0
    %5354 = vmatpush1.msra.mxu0 0.0
    %5355 = vmatprep.subr.mxu0 0.0
    %5356 = vmatpush1.msra.mxu0 0.0
    %5357 = vmatprep.subr.mxu0 0.0
    %5358 = vmatpush1.msra.mxu0 0.0
    %5359 = vmatprep.subr.mxu0 0.0
    %5360 = vmatpush1.msra.mxu0 0.0
    %5361 = vmatprep.subr.mxu0 0.0
    %5362 = vmatpush1.msra.mxu0 0.0
    %5363 = vmatprep.subr.mxu0 0.0
    %5364 = vmatpush1.msra.mxu0 0.0
    %5365 = vmatprep.subr.mxu0 0.0
    %5366 = vmatpush1.msra.mxu0 0.0
    %5367 = vmatprep.subr.mxu0 0.0
    %5368 = vmatpush1.msra.mxu0 0.0
    %5369 = vmatprep.subr.mxu0 0.0
    %5370 = vmatpush1.msra.mxu0 0.0
    %5371 = vmatprep.subr.mxu0 0.0
    %5372 = vmatpush1.msra.mxu0 0.0
    %5373 = vmatprep.subr.mxu0 0.0
    %5374 = vmatpush1.msra.mxu0 0.0
    %5375 = vmatprep.subr.mxu0 0.0
    %5376 = vmatpush1.msra.mxu0 0.0
    %5377 = vmatprep.subr.mxu0 0.0
    %5378 = vmatpush1.msra.mxu0 0.0
    %5379 = vmatprep.subr.mxu0 0.0
    %5380 = vmatpush1.msra.mxu0 0.0
    %5381 = vmatprep.subr.mxu0 0.0
    %5382 = vmatpush1.msra.mxu0 0.0
    %5383 = vmatprep.mubr.f32.mxu0 0.0
    %5384 = vmatmul.mubr.f32.gmra.mrb[0].mxu0 %v5312
    %v5385 = vpop.f32.mrb[0].mxu0
    %v5386 = vadd.f32 %v5315, %v5385
    %v5387 = vpop.f32.mrb[0].mxu0
    %v5388 = vadd.f32 %v5316, %v5387
    %5389 = vdwg.mxu0
    %5390 = vmatprep.subr.mxu0 %v4092
    %5391 = vmatpush1.msra.mxu0 %v4091
    %5392 = vmatprep.subr.mxu0 %v4096
    %5393 = vmatpush1.msra.mxu0 %v4095
    %5394 = vmatprep.subr.mxu0 %v4100
    %5395 = vmatpush1.msra.mxu0 %v4099
    %5396 = vmatprep.subr.mxu0 %v4104
    %5397 = vmatpush1.msra.mxu0 %v4103
    %5398 = vmatprep.subr.mxu0 %v4108
    %5399 = vmatpush1.msra.mxu0 %v4107
    %5400 = vmatprep.subr.mxu0 %v4112
    %5401 = vmatpush1.msra.mxu0 %v4111
    %5402 = vmatprep.subr.mxu0 %v4116
    %5403 = vmatpush1.msra.mxu0 %v4115
    %5404 = vmatprep.subr.mxu0 %v4120
    %5405 = vmatpush1.msra.mxu0 %v4119
    %5406 = vmatprep.subr.mxu0 %v4124
    %5407 = vmatpush1.msra.mxu0 %v4123
    %5408 = vmatprep.subr.mxu0 %v4128
    %5409 = vmatpush1.msra.mxu0 %v4127
    %5410 = vmatprep.subr.mxu0 %v4132
    %5411 = vmatpush1.msra.mxu0 %v4131
    %5412 = vmatprep.subr.mxu0 %v4136
    %5413 = vmatpush1.msra.mxu0 %v4135
    %5414 = vmatprep.subr.mxu0 %v4140
    %5415 = vmatpush1.msra.mxu0 %v4139
    %5416 = vmatprep.subr.mxu0 %v4144
    %5417 = vmatpush1.msra.mxu0 %v4143
    %5418 = vmatprep.subr.mxu0 %v4148
    %5419 = vmatpush1.msra.mxu0 %v4147
    %5420 = vmatprep.subr.mxu0 %v4152
    %5421 = vmatpush1.msra.mxu0 %v4151
    %5422 = vmatprep.subr.mxu0 0.0
    %5423 = vmatpush1.msra.mxu0 0.0
    %5424 = vmatprep.subr.mxu0 0.0
    %5425 = vmatpush1.msra.mxu0 0.0
    %5426 = vmatprep.subr.mxu0 0.0
    %5427 = vmatpush1.msra.mxu0 0.0
    %5428 = vmatprep.subr.mxu0 0.0
    %5429 = vmatpush1.msra.mxu0 0.0
    %5430 = vmatprep.subr.mxu0 0.0
    %5431 = vmatpush1.msra.mxu0 0.0
    %5432 = vmatprep.subr.mxu0 0.0
    %5433 = vmatpush1.msra.mxu0 0.0
    %5434 = vmatprep.subr.mxu0 0.0
    %5435 = vmatpush1.msra.mxu0 0.0
    %5436 = vmatprep.subr.mxu0 0.0
    %5437 = vmatpush1.msra.mxu0 0.0
    %5438 = vmatprep.subr.mxu0 0.0
    %5439 = vmatpush1.msra.mxu0 0.0
    %5440 = vmatprep.subr.mxu0 0.0
    %5441 = vmatpush1.msra.mxu0 0.0
    %5442 = vmatprep.subr.mxu0 0.0
    %5443 = vmatpush1.msra.mxu0 0.0
    %5444 = vmatprep.subr.mxu0 0.0
    %5445 = vmatpush1.msra.mxu0 0.0
    %5446 = vmatprep.subr.mxu0 0.0
    %5447 = vmatpush1.msra.mxu0 0.0
    %5448 = vmatprep.subr.mxu0 0.0
    %5449 = vmatpush1.msra.mxu0 0.0
    %5450 = vmatprep.subr.mxu0 0.0
    %5451 = vmatpush1.msra.mxu0 0.0
    %5452 = vmatprep.subr.mxu0 0.0
    %5453 = vmatpush1.msra.mxu0 0.0
    %5454 = vmatprep.mubr.f32.mxu0 0.0
    %5455 = vmatmul.mubr.f32.gmra.mrb[0].mxu0 %v5312
    %v5456 = vpop.f32.mrb[0].mxu0
    %v5457 = vadd.f32 %v5317, %v5456
    %v5458 = vpop.f32.mrb[0].mxu0
    %v5459 = vadd.f32 %v5318, %v5458
    %5460 = vdwg.mxu0
    %v5461 = vmul.f32 %v5386, 0.5
    %v5462 = vmul.f32 %v5388, 0.5
    %v5463 = vmul.f32 %v5457, 0.5
    %v5464 = vtanh.pop %v5461
    %v5465 = vtanh.pop %v5462
    %v5466 = vtanh.pop %v5463
    %v5467 = vmul.f32 %v5464, 0.5
    %v5468 = vmul.f32 %v5465, 0.5
    %v5469 = vmul.f32 %v5466, 0.5
    %v5470 = vadd.f32 %v5467, 0.5
    %v5471 = vadd.f32 %v5468, 0.5
    %v5472 = vadd.f32 %v5469, 0.5
    %v5473 = vtanh.pop %v5459
    %v5474 = vmul.f32 %v5471, %v5310
    %v5475 = vmul.f32 %v5470, %v5473
    %v5476 = vadd.f32 %v5474, %v5475
    %v5477 = vtanh.pop %v5476
    %v5478 = vmul.f32 %v5472, %v5477
    %5479 = vst.msk [vmem:[%s745] sm:$0xff] %vm743, %v5478
    %5480 = vst.msk [vmem:[#allocation2] sm:$0xff] %vm746, %v5478
    %v5481 = vld [vmem:[#allocation2] sm:$0xff]
    %v5482 = vld [vmem:[#allocation2 + $0x8] sm:$0xff]
    %v5483 = vld [vmem:[#allocation2 + $0x10] sm:$0xff]
    %v5484 = vld [vmem:[#allocation2 + $0x18] sm:$0xff]
    %v5485 = vld [vmem:[#allocation2 + $0x20] sm:$0xff]
    %v5486 = vld [vmem:[#allocation2 + $0x28] sm:$0xff]
    %v5487 = vld [vmem:[#allocation2 + $0x30] sm:$0xff]
    %v5488 = vld [vmem:[#allocation2 + $0x38] sm:$0xff]
    %v5489 = vld [vmem:[%s4] sm:$0xff]
    %v5490 = vld [vmem:[%s4 + $0x8] sm:$0xff]
    %v5491 = vld [vmem:[%s4 + $0x10] sm:$0xff]
    %v5492 = vld [vmem:[%s4 + $0x18] sm:$0xff]
    %v5493 = vld [vmem:[%s4 + $0x20] sm:$0xff]
    %v5494 = vld [vmem:[%s4 + $0x28] sm:$0xff]
    %v5495 = vld [vmem:[%s4 + $0x30] sm:$0xff]
    %v5496 = vld [vmem:[%s4 + $0x38] sm:$0xff]
    %v5497 = vld [vmem:[%s4 + $0x40] sm:$0xff]
    %v5498 = vld [vmem:[%s4 + $0x48] sm:$0xff]
    %v5499 = vld [vmem:[%s4 + $0x50] sm:$0xff]
    %v5500 = vld [vmem:[%s4 + $0x58] sm:$0xff]
    %v5501 = vld [vmem:[%s4 + $0x60] sm:$0xff]
    %v5502 = vld [vmem:[%s4 + $0x68] sm:$0xff]
    %v5503 = vld [vmem:[%s4 + $0x70] sm:$0xff]
    %v5504 = vld [vmem:[%s4 + $0x78] sm:$0xff]
    %v5505 = vld [vmem:[#allocation5] sm:$0x1]
    %v5507 = vlaneseq
    %v5508 = vshrl.u32 %v5507, 7
    %v5509 = vsub.s32 0, %v5508
    %v5510 = vrot.slane %v5505, %v5509
    %5512 = vmatprep.subr.mxu0 0.0
    %5513 = vmatpush1.msra.mxu0 %v5489
    %5514 = vmatprep.subr.mxu0 0.0
    %5515 = vmatpush1.msra.mxu0 %v5490
    %5516 = vmatprep.subr.mxu0 0.0
    %5517 = vmatpush1.msra.mxu0 %v5491
    %5518 = vmatprep.subr.mxu0 0.0
    %5519 = vmatpush1.msra.mxu0 %v5492
    %5520 = vmatprep.subr.mxu0 0.0
    %5521 = vmatpush1.msra.mxu0 %v5493
    %5522 = vmatprep.subr.mxu0 0.0
    %5523 = vmatpush1.msra.mxu0 %v5494
    %5524 = vmatprep.subr.mxu0 0.0
    %5525 = vmatpush1.msra.mxu0 %v5495
    %5526 = vmatprep.subr.mxu0 0.0
    %5527 = vmatpush1.msra.mxu0 %v5496
    %5528 = vmatprep.subr.mxu0 0.0
    %5529 = vmatpush1.msra.mxu0 %v5497
    %5530 = vmatprep.subr.mxu0 0.0
    %5531 = vmatpush1.msra.mxu0 %v5498
    %5532 = vmatprep.subr.mxu0 0.0
    %5533 = vmatpush1.msra.mxu0 %v5499
    %5534 = vmatprep.subr.mxu0 0.0
    %5535 = vmatpush1.msra.mxu0 %v5500
    %5536 = vmatprep.subr.mxu0 0.0
    %5537 = vmatpush1.msra.mxu0 %v5501
    %5538 = vmatprep.subr.mxu0 0.0
    %5539 = vmatpush1.msra.mxu0 %v5502
    %5540 = vmatprep.subr.mxu0 0.0
    %5541 = vmatpush1.msra.mxu0 %v5503
    %5542 = vmatprep.subr.mxu0 0.0
    %5543 = vmatpush1.msra.mxu0 %v5504
    %5544 = vmatprep.subr.mxu0 0.0
    %5545 = vmatpush1.msra.mxu0 0.0
    %5546 = vmatprep.subr.mxu0 0.0
    %5547 = vmatpush1.msra.mxu0 0.0
    %5548 = vmatprep.subr.mxu0 0.0
    %5549 = vmatpush1.msra.mxu0 0.0
    %5550 = vmatprep.subr.mxu0 0.0
    %5551 = vmatpush1.msra.mxu0 0.0
    %5552 = vmatprep.subr.mxu0 0.0
    %5553 = vmatpush1.msra.mxu0 0.0
    %5554 = vmatprep.subr.mxu0 0.0
    %5555 = vmatpush1.msra.mxu0 0.0
    %5556 = vmatprep.subr.mxu0 0.0
    %5557 = vmatpush1.msra.mxu0 0.0
    %5558 = vmatprep.subr.mxu0 0.0
    %5559 = vmatpush1.msra.mxu0 0.0
    %5560 = vmatprep.subr.mxu0 0.0
    %5561 = vmatpush1.msra.mxu0 0.0
    %5562 = vmatprep.subr.mxu0 0.0
    %5563 = vmatpush1.msra.mxu0 0.0
    %5564 = vmatprep.subr.mxu0 0.0
    %5565 = vmatpush1.msra.mxu0 0.0
    %5566 = vmatprep.subr.mxu0 0.0
    %5567 = vmatpush1.msra.mxu0 0.0
    %5568 = vmatprep.subr.mxu0 0.0
    %5569 = vmatpush1.msra.mxu0 0.0
    %5570 = vmatprep.subr.mxu0 0.0
    %5571 = vmatpush1.msra.mxu0 0.0
    %5572 = vmatprep.subr.mxu0 0.0
    %5573 = vmatpush1.msra.mxu0 0.0
    %5574 = vmatprep.subr.mxu0 0.0
    %5575 = vmatpush1.msra.mxu0 0.0
    %5576 = vmatprep.mubr.f32.mxu0 0.0
    %5577 = vmatmul.mubr.f32.gmra.mrb[0].mxu0 %v5481
    %v5578 = vpop.f32.mrb[0].mxu0
    %v5579 = vadd.f32 %v5510, %v5578
    %v5580 = vpop.f32.mrb[0].mxu0
    %5581 = vmatprep.mubr.f32.mxu0 0.0
    %5582 = vmatmul.mubr.f32.gmra.mrb[0].mxu0 %v5482
    %v5583 = vpop.f32.mrb[0].mxu0
    %v5584 = vadd.f32 %v5510, %v5583
    %v5585 = vpop.f32.mrb[0].mxu0
    %5586 = vmatprep.mubr.f32.mxu0 0.0
    %5587 = vmatmul.mubr.f32.gmra.mrb[0].mxu0 %v5483
    %v5588 = vpop.f32.mrb[0].mxu0
    %v5589 = vadd.f32 %v5510, %v5588
    %v5590 = vpop.f32.mrb[0].mxu0
    %5591 = vmatprep.mubr.f32.mxu0 0.0
    %5592 = vmatmul.mubr.f32.gmra.mrb[0].mxu0 %v5484
    %v5593 = vpop.f32.mrb[0].mxu0
    %v5594 = vadd.f32 %v5510, %v5593
    %v5595 = vpop.f32.mrb[0].mxu0
    %5596 = vmatprep.mubr.f32.mxu0 0.0
    %5597 = vmatmul.mubr.f32.gmra.mrb[0].mxu0 %v5485
    %v5598 = vpop.f32.mrb[0].mxu0
    %v5599 = vadd.f32 %v5510, %v5598
    %v5600 = vpop.f32.mrb[0].mxu0
    %5601 = vmatprep.mubr.f32.mxu0 0.0
    %5602 = vmatmul.mubr.f32.gmra.mrb[0].mxu0 %v5486
    %v5603 = vpop.f32.mrb[0].mxu0
    %v5604 = vadd.f32 %v5510, %v5603
    %v5605 = vpop.f32.mrb[0].mxu0
    %5606 = vmatprep.mubr.f32.mxu0 0.0
    %5607 = vmatmul.mubr.f32.gmra.mrb[0].mxu0 %v5487
    %v5608 = vpop.f32.mrb[0].mxu0
    %v5609 = vadd.f32 %v5510, %v5608
    %v5610 = vpop.f32.mrb[0].mxu0
    %5611 = vmatprep.mubr.f32.mxu0 0.0
    %5612 = vmatmul.mubr.f32.gmra.mrb[0].mxu0 %v5488
    %v5613 = vpop.f32.mrb[0].mxu0
    %v5614 = vadd.f32 %v5510, %v5613
    %v5615 = vpop.f32.mrb[0].mxu0
    %5616 = vdwg.mxu0
    %vm5617 = vcmask 7168
    %v5618 = vsel %vm5617, %v5579, -inf
    %v5619 = vsel %vm5617, %v5584, -inf
    %v5620 = vsel %vm5617, %v5589, -inf
    %v5621 = vsel %vm5617, %v5594, -inf
    %v5622 = vsel %vm5617, %v5599, -inf
    %v5623 = vmax.f32 %v5618, %v5622
    %v5624 = vsel %vm5617, %v5604, -inf
    %v5625 = vmax.f32 %v5619, %v5624
    %v5626 = vsel %vm5617, %v5609, -inf
    %v5627 = vmax.f32 %v5620, %v5626
    %v5628 = vsel %vm5617, %v5614, -inf
    %v5629 = vmax.f32 %v5621, %v5628
    %v5630 = vmax.f32 %v5623, %v5625
    %v5631 = vmax.f32 %v5627, %v5629
    %v5632 = vmax.f32 %v5630, %v5631
    %v5633 = vsub.f32 %v5579, %v5632
    %v5634 = vsub.f32 %v5584, %v5632
    %v5635 = vsub.f32 %v5589, %v5632
    %v5636 = vsub.f32 %v5594, %v5632
    %v5637 = vsub.f32 %v5599, %v5632
    %v5638 = vsub.f32 %v5604, %v5632
    %v5639 = vsub.f32 %v5609, %v5632
    %v5640 = vsub.f32 %v5614, %v5632
    %v5641 = vmul.f32 %v5633, 1.442695
    %v5642 = vpow.pop %v5641
    %v5643 = vmul.f32 %v5634, 1.442695
    %v5644 = vpow.pop %v5643
    %v5645 = vmul.f32 %v5635, 1.442695
    %v5646 = vpow.pop %v5645
    %v5647 = vmul.f32 %v5636, 1.442695
    %v5648 = vpow.pop %v5647
    %v5649 = vmul.f32 %v5637, 1.442695
    %v5650 = vpow.pop %v5649
    %v5651 = vmul.f32 %v5638, 1.442695
    %v5652 = vpow.pop %v5651
    %v5653 = vmul.f32 %v5639, 1.442695
    %v5654 = vpow.pop %v5653
    %v5655 = vmul.f32 %v5640, 1.442695
    %v5656 = vpow.pop %v5655
    %v5657 = vsel %vm5617, %v5642, 0.0
    %v5658 = vsel %vm5617, %v5644, 0.0
    %v5659 = vadd.f32 %v5657, %v5658
    %v5660 = vsel %vm5617, %v5646, 0.0
    %v5661 = vadd.f32 %v5659, %v5660
    %v5662 = vsel %vm5617, %v5648, 0.0
    %v5663 = vadd.f32 %v5661, %v5662
    %v5664 = vsel %vm5617, %v5650, 0.0
    %v5665 = vadd.f32 %v5663, %v5664
    %v5666 = vsel %vm5617, %v5652, 0.0
    %v5667 = vadd.f32 %v5665, %v5666
    %v5668 = vsel %vm5617, %v5654, 0.0
    %v5669 = vadd.f32 %v5667, %v5668
    %v5670 = vsel %vm5617, %v5656, 0.0
    %v5671 = vadd.f32 %v5669, %v5670
    %v5672 = vrcp.pop %v5671
    %v5673 = vmul.f32 %v5642, %v5672
    %v5674 = vmul.f32 %v5644, %v5672
    %v5675 = vmul.f32 %v5646, %v5672
    %v5676 = vmul.f32 %v5648, %v5672
    %v5677 = vmul.f32 %v5650, %v5672
    %v5678 = vmul.f32 %v5652, %v5672
    %v5679 = vmul.f32 %v5654, %v5672
    %v5680 = vmul.f32 %v5656, %v5672
    %5682 = vset.pattern.permute.xlu0 0
    %5683 = vperm.xlu0 %5682, %v5673
    %v5684 = vpop.permute.xlu0 %5683
    %5687 = vset.pattern.permute.xlu0 0
    %5688 = vperm.xlu0 %5687, %v5674
    %v5689 = vpop.permute.xlu0 %5688
    %5692 = vset.pattern.permute.xlu0 0
    %5693 = vperm.xlu0 %5692, %v5675
    %v5694 = vpop.permute.xlu0 %5693
    %5697 = vset.pattern.permute.xlu0 0
    %5698 = vperm.xlu0 %5697, %v5676
    %v5699 = vpop.permute.xlu0 %5698
    %5702 = vset.pattern.permute.xlu0 0
    %5703 = vperm.xlu0 %5702, %v5677
    %v5704 = vpop.permute.xlu0 %5703
    %5707 = vset.pattern.permute.xlu0 0
    %5708 = vperm.xlu0 %5707, %v5678
    %v5709 = vpop.permute.xlu0 %5708
    %5712 = vset.pattern.permute.xlu0 0
    %5713 = vperm.xlu0 %5712, %v5679
    %v5714 = vpop.permute.xlu0 %5713
    %5717 = vset.pattern.permute.xlu0 0
    %5718 = vperm.xlu0 %5717, %v5680
    %v5719 = vpop.permute.xlu0 %5718
    %v5721 = vmul.f32 %v5684, %v5481
    %v5722 = vmul.f32 %v5689, %v5482
    %v5723 = vmul.f32 %v5694, %v5483
    %v5724 = vmul.f32 %v5699, %v5484
    %v5725 = vmul.f32 %v5704, %v5485
    %v5726 = vmul.f32 %v5709, %v5486
    %v5727 = vmul.f32 %v5714, %v5487
    %v5728 = vmul.f32 %v5719, %v5488
    %v5729 = vadd.f32 %v5721, %v5722
    %v5730 = vadd.f32 %v5729, %v5723
    %v5731 = vadd.f32 %v5730, %v5724
    %v5732 = vadd.f32 %v5731, %v5725
    %v5733 = vadd.f32 %v5732, %v5726
    %v5734 = vadd.f32 %v5733, %v5727
    %v5735 = vadd.f32 %v5734, %v5728
    %v5736 = vld [vmem:[%s6] sm:$0xff]
    %v5737 = vld [vmem:[%s6 + $0x8] sm:$0xff]
    %v5738 = vld [vmem:[%s6 + $0x10] sm:$0xff]
    %v5739 = vld [vmem:[%s6 + $0x18] sm:$0xff]
    %v5740 = vld [vmem:[%s6 + $0x20] sm:$0xff]
    %v5741 = vld [vmem:[%s6 + $0x28] sm:$0xff]
    %v5742 = vld [vmem:[%s6 + $0x30] sm:$0xff]
    %v5743 = vld [vmem:[%s6 + $0x38] sm:$0xff]
    %v5744 = vld [vmem:[%s6 + $0x40] sm:$0xff]
    %v5745 = vld [vmem:[%s6 + $0x48] sm:$0xff]
    %v5746 = vld [vmem:[%s6 + $0x50] sm:$0xff]
    %v5747 = vld [vmem:[%s6 + $0x58] sm:$0xff]
    %v5748 = vld [vmem:[%s6 + $0x60] sm:$0xff]
    %v5749 = vld [vmem:[%s6 + $0x68] sm:$0xff]
    %v5750 = vld [vmem:[%s6 + $0x70] sm:$0xff]
    %v5751 = vld [vmem:[%s6 + $0x78] sm:$0xff]
    %v5752 = vld [vmem:[%s7] sm:$0x1]
    %v5754 = vlaneseq
    %v5755 = vshrl.u32 %v5754, 7
    %v5756 = vsub.s32 0, %v5755
    %v5757 = vrot.slane %v5752, %v5756
    %5759 = vmatprep.subr.mxu0 0.0
    %5760 = vmatpush1.msra.mxu0 %v5736
    %5761 = vmatprep.subr.mxu0 0.0
    %5762 = vmatpush1.msra.mxu0 %v5737
    %5763 = vmatprep.subr.mxu0 0.0
    %5764 = vmatpush1.msra.mxu0 %v5738
    %5765 = vmatprep.subr.mxu0 0.0
    %5766 = vmatpush1.msra.mxu0 %v5739
    %5767 = vmatprep.subr.mxu0 0.0
    %5768 = vmatpush1.msra.mxu0 %v5740
    %5769 = vmatprep.subr.mxu0 0.0
    %5770 = vmatpush1.msra.mxu0 %v5741
    %5771 = vmatprep.subr.mxu0 0.0
    %5772 = vmatpush1.msra.mxu0 %v5742
    %5773 = vmatprep.subr.mxu0 0.0
    %5774 = vmatpush1.msra.mxu0 %v5743
    %5775 = vmatprep.subr.mxu0 0.0
    %5776 = vmatpush1.msra.mxu0 %v5744
    %5777 = vmatprep.subr.mxu0 0.0
    %5778 = vmatpush1.msra.mxu0 %v5745
    %5779 = vmatprep.subr.mxu0 0.0
    %5780 = vmatpush1.msra.mxu0 %v5746
    %5781 = vmatprep.subr.mxu0 0.0
    %5782 = vmatpush1.msra.mxu0 %v5747
    %5783 = vmatprep.subr.mxu0 0.0
    %5784 = vmatpush1.msra.mxu0 %v5748
    %5785 = vmatprep.subr.mxu0 0.0
    %5786 = vmatpush1.msra.mxu0 %v5749
    %5787 = vmatprep.subr.mxu0 0.0
    %5788 = vmatpush1.msra.mxu0 %v5750
    %5789 = vmatprep.subr.mxu0 0.0
    %5790 = vmatpush1.msra.mxu0 %v5751
    %5791 = vmatprep.subr.mxu0 0.0
    %5792 = vmatpush1.msra.mxu0 0.0
    %5793 = vmatprep.subr.mxu0 0.0
    %5794 = vmatpush1.msra.mxu0 0.0
    %5795 = vmatprep.subr.mxu0 0.0
    %5796 = vmatpush1.msra.mxu0 0.0
    %5797 = vmatprep.subr.mxu0 0.0
    %5798 = vmatpush1.msra.mxu0 0.0
    %5799 = vmatprep.subr.mxu0 0.0
    %5800 = vmatpush1.msra.mxu0 0.0
    %5801 = vmatprep.subr.mxu0 0.0
    %5802 = vmatpush1.msra.mxu0 0.0
    %5803 = vmatprep.subr.mxu0 0.0
    %5804 = vmatpush1.msra.mxu0 0.0
    %5805 = vmatprep.subr.mxu0 0.0
    %5806 = vmatpush1.msra.mxu0 0.0
    %5807 = vmatprep.subr.mxu0 0.0
    %5808 = vmatpush1.msra.mxu0 0.0
    %5809 = vmatprep.subr.mxu0 0.0
    %5810 = vmatpush1.msra.mxu0 0.0
    %5811 = vmatprep.subr.mxu0 0.0
    %5812 = vmatpush1.msra.mxu0 0.0
    %5813 = vmatprep.subr.mxu0 0.0
    %5814 = vmatpush1.msra.mxu0 0.0
    %5815 = vmatprep.subr.mxu0 0.0
    %5816 = vmatpush1.msra.mxu0 0.0
    %5817 = vmatprep.subr.mxu0 0.0
    %5818 = vmatpush1.msra.mxu0 0.0
    %5819 = vmatprep.subr.mxu0 0.0
    %5820 = vmatpush1.msra.mxu0 0.0
    %5821 = vmatprep.subr.mxu0 0.0
    %5822 = vmatpush1.msra.mxu0 0.0
    %5823 = vmatprep.mubr.f32.mxu0 0.0
    %5824 = vmatmul.mubr.f32.gmra.mrb[0].mxu0 %v5735
    %v5825 = vpop.f32.mrb[0].mxu0
    %v5826 = vadd.f32 %v5757, %v5825
    %v5827 = vpop.f32.mrb[0].mxu0
    %5828 = vdwg.mxu0
    %v5829 = vmax.f32 %v5826, 0.0
    %v5830 = vld [vmem:[%s8] sm:$0xff]
    %v5831 = vld [vmem:[%s8 + $0x8] sm:$0xff]
    %v5832 = vld [vmem:[%s8 + $0x10] sm:$0xff]
    %v5833 = vld [vmem:[%s8 + $0x18] sm:$0xff]
    %v5834 = vld [vmem:[%s8 + $0x20] sm:$0xff]
    %v5835 = vld [vmem:[%s8 + $0x28] sm:$0xff]
    %v5836 = vld [vmem:[%s8 + $0x30] sm:$0xff]
    %v5837 = vld [vmem:[%s8 + $0x38] sm:$0xff]
    %v5838 = vld [vmem:[%s8 + $0x40] sm:$0xff]
    %v5839 = vld [vmem:[%s8 + $0x48] sm:$0xff]
    %v5840 = vld [vmem:[%s8 + $0x50] sm:$0xff]
    %v5841 = vld [vmem:[%s8 + $0x58] sm:$0xff]
    %v5842 = vld [vmem:[%s8 + $0x60] sm:$0xff]
    %v5843 = vld [vmem:[%s8 + $0x68] sm:$0xff]
    %v5844 = vld [vmem:[%s8 + $0x70] sm:$0xff]
    %v5845 = vld [vmem:[%s8 + $0x78] sm:$0xff]
    %v5846 = vld [vmem:[#allocation6] sm:$0x1]
    %v5848 = vlaneseq
    %v5849 = vshrl.u32 %v5848, 7
    %v5850 = vsub.s32 0, %v5849
    %v5851 = vrot.slane %v5846, %v5850
    %5853 = vmatprep.subr.mxu0 0.0
    %5854 = vmatpush1.msra.mxu0 %v5830
    %5855 = vmatprep.subr.mxu0 0.0
    %5856 = vmatpush1.msra.mxu0 %v5831
    %5857 = vmatprep.subr.mxu0 0.0
    %5858 = vmatpush1.msra.mxu0 %v5832
    %5859 = vmatprep.subr.mxu0 0.0
    %5860 = vmatpush1.msra.mxu0 %v5833
    %5861 = vmatprep.subr.mxu0 0.0
    %5862 = vmatpush1.msra.mxu0 %v5834
    %5863 = vmatprep.subr.mxu0 0.0
    %5864 = vmatpush1.msra.mxu0 %v5835
    %5865 = vmatprep.subr.mxu0 0.0
    %5866 = vmatpush1.msra.mxu0 %v5836
    %5867 = vmatprep.subr.mxu0 0.0
    %5868 = vmatpush1.msra.mxu0 %v5837
    %5869 = vmatprep.subr.mxu0 0.0
    %5870 = vmatpush1.msra.mxu0 %v5838
    %5871 = vmatprep.subr.mxu0 0.0
    %5872 = vmatpush1.msra.mxu0 %v5839
    %5873 = vmatprep.subr.mxu0 0.0
    %5874 = vmatpush1.msra.mxu0 %v5840
    %5875 = vmatprep.subr.mxu0 0.0
    %5876 = vmatpush1.msra.mxu0 %v5841
    %5877 = vmatprep.subr.mxu0 0.0
    %5878 = vmatpush1.msra.mxu0 %v5842
    %5879 = vmatprep.subr.mxu0 0.0
    %5880 = vmatpush1.msra.mxu0 %v5843
    %5881 = vmatprep.subr.mxu0 0.0
    %5882 = vmatpush1.msra.mxu0 %v5844
    %5883 = vmatprep.subr.mxu0 0.0
    %5884 = vmatpush1.msra.mxu0 %v5845
    %5885 = vmatprep.subr.mxu0 0.0
    %5886 = vmatpush1.msra.mxu0 0.0
    %5887 = vmatprep.subr.mxu0 0.0
    %5888 = vmatpush1.msra.mxu0 0.0
    %5889 = vmatprep.subr.mxu0 0.0
    %5890 = vmatpush1.msra.mxu0 0.0
    %5891 = vmatprep.subr.mxu0 0.0
    %5892 = vmatpush1.msra.mxu0 0.0
    %5893 = vmatprep.subr.mxu0 0.0
    %5894 = vmatpush1.msra.mxu0 0.0
    %5895 = vmatprep.subr.mxu0 0.0
    %5896 = vmatpush1.msra.mxu0 0.0
    %5897 = vmatprep.subr.mxu0 0.0
    %5898 = vmatpush1.msra.mxu0 0.0
    %5899 = vmatprep.subr.mxu0 0.0
    %5900 = vmatpush1.msra.mxu0 0.0
    %5901 = vmatprep.subr.mxu0 0.0
    %5902 = vmatpush1.msra.mxu0 0.0
    %5903 = vmatprep.subr.mxu0 0.0
    %5904 = vmatpush1.msra.mxu0 0.0
    %5905 = vmatprep.subr.mxu0 0.0
    %5906 = vmatpush1.msra.mxu0 0.0
    %5907 = vmatprep.subr.mxu0 0.0
    %5908 = vmatpush1.msra.mxu0 0.0
    %5909 = vmatprep.subr.mxu0 0.0
    %5910 = vmatpush1.msra.mxu0 0.0
    %5911 = vmatprep.subr.mxu0 0.0
    %5912 = vmatpush1.msra.mxu0 0.0
    %5913 = vmatprep.subr.mxu0 0.0
    %5914 = vmatpush1.msra.mxu0 0.0
    %5915 = vmatprep.subr.mxu0 0.0
    %5916 = vmatpush1.msra.mxu0 0.0
    %5917 = vmatprep.mubr.f32.mxu0 0.0
    %5918 = vmatmul.mubr.f32.gmra.mrb[0].mxu0 %v5829
    %v5919 = vpop.f32.mrb[0].mxu0
    %v5920 = vadd.f32 %v5851, %v5919
    %v5921 = vpop.f32.mrb[0].mxu0
    %5922 = vdwg.mxu0
    %v5923 = vmul.f32 %v5920, 0.5
    %v5924 = vtanh.pop %v5923
    %v5925 = vmul.f32 %v5924, 0.5
    %v5926 = vadd.f32 %v5925, 0.5
    %5927 = vst.msk [vmem:[%s10] sm:$0xff] %vm5617, %v5926
    // Predicated region
    $region50: #{tpu_custom_call.1} parent=1 // pred_check
      _
    $region51: #{tpu_custom_call.1} parent=1 // pred_check_branch
      %5929 = sbr.rel (0) target = $region53
    $region52: #{tpu_custom_call.1} parent=1 // pred_region
      _
    $region53: #{tpu_custom_call.1} parent=1 // pred_fallthru
      _
    // Predicated region
    $region54: #{tpu_custom_call.1} parent=1 // pred_check
      _
    $region55: #{tpu_custom_call.1} parent=1 // pred_check_branch
      %5931 = sbr.rel (0) target = $region57
    $region56: #{tpu_custom_call.1} parent=1 // pred_region
      _
    $region57: #{tpu_custom_call.1} parent=1 // pred_fallthru
      _
    %5932 = vsyncpa [#allocation8], 1
    %5933 = vsyncpa [#allocation10], 1

</llo_original>
